<compile_context>
chip_gen: v6e
topology: v6e:2x2x1
jax: 0.10.0
libtpu: 0.0.40
codegen_flags: <defaults>
</compile_context>

<pallas_src>
import functools

import numpy as np
import jax
import jax.numpy as jnp
from jax.experimental import pallas as pl
from jax.experimental.pallas import tpu as pltpu


def _round_up(x, m):
    return (x + m - 1) // m * m


_SQRT_2_OVER_PI = 0.7978845608028654


def _gelu_tanh(x):
    # tanh-approximate GELU (routes to the EUP).
    return 0.5 * x * (1.0 + jnp.tanh(_SQRT_2_OVER_PI * (x + 0.044715 * x * x * x)))


# -----------------------------------------------------------------------------
# single fused kernel: conv1(im2col) -> GN+GELU -> conv2(9 taps) -> GN+GELU -> maxpool(2)
# -----------------------------------------------------------------------------
def _unet_down_kernel(x_ref, w1_ref, w2_ref, p1_ref, p2_ref, gmix_ref, sel_ref,
                      o_ref, h_scr, *, G, Pm, Wp, Co, Lp, ML, inv_n, eps, offsets):
    # x_ref : (1, Pm, CK)  bf16   im2col of conv1 in padded-frame row layout;
    #                              lane ML carries the row-validity mask (1.0 / 0.0)
    # w1_ref: (CK, Co)     bf16   conv1 taps folded along K
    # w2_ref: (9*Co, Co)   bf16   conv2 taps stacked (ky, kx) major
    # p*_ref: (3, Co)      f32    rows = [bias, gamma, beta]
    # gmix  : (Co, Co)     f32    1.0 where two real channels share a GroupNorm group
    # sel   : (HWo_p, Lp)  bf16   one-hot rows selecting the 2x2-pool anchor positions
    # h_scr : (2G+Pm, Co)  bf16   persistent halo scratch holding h1 for conv2
    xl = x_ref[0]                                                   # (Pm, CK) bf16
    mask_f = jax.lax.slice(xl, (0, ML), (Pm, ML + 1)).astype(jnp.float32)  # (Pm, 1)
    gmix = gmix_ref[...]                                            # (Co, Co) f32

    def gn_gelu(acc, p_ref, apply_mask):
        # acc: (Pm, Co) f32 conv output (no bias yet); rows outside the valid
        # interior are excluded from the statistics via mask_f.
        p = p_ref[...]                                              # (3, Co)
        acc = acc + p[0:1, :]                                       # conv bias
        xm = acc * mask_f
        s1 = jnp.sum(xm, axis=0, keepdims=True)                     # sum x   (1, Co)
        s2 = jnp.sum(xm * acc, axis=0, keepdims=True)               # sum x^2 (1, Co)
        g = jnp.dot(jnp.concatenate([s1, s2], axis=0), gmix,
                    preferred_element_type=jnp.float32)             # per-group sums
        mean = g[0:1, :] * inv_n
        var = g[1:2, :] * inv_n - mean * mean
        inv_std = jax.lax.rsqrt(var + eps)
        y = (acc - mean) * (inv_std * p[1:2, :]) + p[2:3, :]
        y = _gelu_tanh(y)
        return y * mask_f if apply_mask else y

    # ---- block 1: conv1 folded into ONE bf16 MXU matmul, then GN + GELU ----
    acc1 = jnp.dot(xl, w1_ref[...], preferred_element_type=jnp.float32)   # (Pm, Co)
    h1 = gn_gelu(acc1, p1_ref, apply_mask=True)      # invalid rows == 0 (conv2 padding)

    # ---- stage h1 into the bf16 halo scratch (halo zeroed every step) ----
    R = 2 * G + Pm
    h_scr[0:G, :] = jnp.zeros((G, Co), jnp.bfloat16)
    h_scr[G + Pm:R, :] = jnp.zeros((G, Co), jnp.bfloat16)
    h_scr[G:G + Pm, :] = h1.astype(jnp.bfloat16)

    # ---- block 2: conv2 as 9 accumulating matmuls on bf16 windows of the scratch ref ----
    acc2 = jnp.zeros((Pm, Co), jnp.float32)
    for k, d in enumerate(offsets):
        win = h_scr[G + d:G + d + Pm, :]                            # bf16 vld-at-offset
        wk = w2_ref[k * Co:(k + 1) * Co, :]                         # (Co, Co) bf16
        acc2 = acc2 + jnp.dot(win, wk, preferred_element_type=jnp.float32)
    h2 = gn_gelu(acc2, p2_ref, apply_mask=False)     # pool only reads valid rows

    # ---- fused MaxPool2d(2): max of 4 shifted views + bf16 one-hot row gather ----
    a00 = jax.lax.slice(h2, (0, 0), (Lp, Co))
    a01 = jax.lax.slice(h2, (1, 0), (Lp + 1, Co))
    a10 = jax.lax.slice(h2, (Wp, 0), (Lp + Wp, Co))
    a11 = jax.lax.slice(h2, (Wp + 1, 0), (Lp + Wp + 1, Co))
    mx = jnp.maximum(jnp.maximum(a00, a01), jnp.maximum(a10, a11)).astype(jnp.bfloat16)
    o_ref[0] = jnp.dot(sel_ref[...], mx, preferred_element_type=jnp.float32)


# -----------------------------------------------------------------------------
# wrapper: NCHW public API, builds layout/constant operands, one pallas_call
# -----------------------------------------------------------------------------
def unet_down(x, params, *, groups=4, eps=1e-5):
    """UnetDown forward: (Conv3x3+GN(4)+GELU) x2 -> MaxPool2d(2).  x is NCHW."""
    n, cin, hh, ww = x.shape
    w1, b1, g1, be1 = params["w1"], params["b1"], params["g1"], params["be1"]
    w2, b2, g2, be2 = params["w2"], params["b2"], params["g2"], params["be2"]
    cout = w1.shape[0]
    assert hh % 2 == 0 and ww % 2 == 0 and cout % groups == 0
    cg = cout // groups

    # ---- static geometry ----
    wp = _round_up(ww + 2, 8)                     # padded frame row stride (aligned taps)
    hp = hh + 2
    p_rows = hp * wp
    pm = _round_up(p_rows, 8)                     # matmul M dim (== p_rows, wp % 8 == 0)
    g_halo = _round_up(wp + 1, 8)                 # halo so every conv2 tap stays in-bounds
    r_rows = 2 * g_halo + pm
    ho, wo = hh // 2, ww // 2
    hwo_p = _round_up(ho * wo, 8)
    lp = _round_up((hh - 1) * wp + ww, 8)         # rows needed by the pool shifts
    assert lp + wp + 1 <= pm
    ml = 9 * cin                                  # lane carrying the row-validity mask
    ck1 = _round_up(ml + 1, 128)                  # folded conv1 K (lane dim), lane-padded
    co = _round_up(cout, 128)

    # ---- conv1 im2col + mask lane, embedded into the padded-frame row layout ----
    xh = jnp.transpose(x, (0, 2, 3, 1))                              # (N,H,W,Cin)
    xpad = jnp.pad(xh, ((0, 0), (1, 1), (1, 1), (0, 0)))             # (N,H+2,W+2,Cin)
    taps = [xpad[:, dy:dy + hh, dx:dx + ww, :]
            for dy in range(3) for dx in range(3)]                   # (ky,kx) major
    patches = jnp.concatenate(taps, axis=-1)                         # (N,H,W,9*Cin)
    ones = jnp.ones(patches.shape[:-1] + (1,), patches.dtype)        # mask lane
    patches = jnp.concatenate([patches, ones], axis=-1)              # (N,H,W,9*Cin+1)
    lhs = jnp.pad(patches, ((0, 0), (1, hp - 1 - hh), (1, wp - 1 - ww),
                            (0, ck1 - (ml + 1))))                    # zero frame + lanes
    lhs = lhs.reshape(n, p_rows, ck1)
    if pm > p_rows:
        lhs = jnp.pad(lhs, ((0, 0), (0, pm - p_rows), (0, 0)))
    lhs = lhs.astype(jnp.bfloat16)                                   # (N, Pm, CK)

    # ---- conv1 weights: fold the 9 taps along K -> (CK, Co) bf16 ----
    w1t = jnp.transpose(w1, (2, 3, 1, 0)).reshape(9 * cin, cout)     # (9*Cin, Cout)
    w1p = jnp.pad(w1t, ((0, ck1 - 9 * cin), (0, co - cout))).astype(jnp.bfloat16)

    # ---- conv2 weights: per-tap lane-padded -> (9*Co, Co) bf16, (ky,kx) major ----
    w2t = jnp.transpose(w2, (2, 3, 1, 0))                            # (3,3,Cout,Cout)
    w2t = jnp.pad(w2t, ((0, 0), (0, 0), (0, co - cout), (0, co - cout)))
    w2p = w2t.reshape(9 * co, co).astype(jnp.bfloat16)

    def pack_p(b, gm, bt):
        p = jnp.stack([b, gm, bt], axis=0).astype(jnp.float32)       # (3, Cout)
        return jnp.pad(p, ((0, 0), (0, co - cout)))

    p1 = pack_p(b1, g1, be1)
    p2 = pack_p(b2, g2, be2)

    # ---- static constants (folded into the executable) ----
    gmix_np = np.zeros((co, co), np.float32)
    for c in range(cout):
        g0 = (c // cg) * cg
        gmix_np[c, g0:g0 + cg] = 1.0
    gmix = jnp.asarray(gmix_np)

    sel_np = np.zeros((hwo_p, lp), np.float32)
    for yo in range(ho):
        for xo in range(wo):
            sel_np[yo * wo + xo, (2 * yo + 1) * wp + (2 * xo + 1)] = 1.0
    sel = jnp.asarray(sel_np).astype(jnp.bfloat16)

    offsets = tuple((ky - 1) * wp + (kx - 1) for ky in range(3) for kx in range(3))
    inv_n = 1.0 / float(cg * hh * ww)

    kernel = functools.partial(
        _unet_down_kernel, G=g_halo, Pm=pm, Wp=wp, Co=co, Lp=lp, ML=ml,
        inv_n=inv_n, eps=eps, offsets=offsets)

    pooled = pl.pallas_call(
        kernel,
        out_shape=jax.ShapeDtypeStruct((n, hwo_p, co), jnp.float32),
        grid=(n,),
        in_specs=[
            pl.BlockSpec((1, pm, ck1), lambda i: (i, 0, 0)),   # im2col input (per sample)
            pl.BlockSpec((ck1, co), lambda i: (0, 0)),         # conv1 weights (folded K)
            pl.BlockSpec((9 * co, co), lambda i: (0, 0)),      # conv2 weights
            pl.BlockSpec((3, co), lambda i: (0, 0)),           # bias/gamma/beta 1
            pl.BlockSpec((3, co), lambda i: (0, 0)),           # bias/gamma/beta 2
            pl.BlockSpec((co, co), lambda i: (0, 0)),          # group mixing matrix
            pl.BlockSpec((hwo_p, lp), lambda i: (0, 0)),       # pool anchor selector
        ],
        out_specs=pl.BlockSpec((1, hwo_p, co), lambda i: (i, 0, 0)),
        scratch_shapes=[pltpu.VMEM((r_rows, co), jnp.bfloat16)],   # h1 halo scratch
        compiler_params=pltpu.CompilerParams(
            dimension_semantics=("parallel",),
            vmem_limit_bytes=32 * 1024 * 1024),
    )(lhs, w1p, w2p, p1, p2, gmix, sel)

    # tiny final re-layout back to NCHW (only the pooled output touches HBM)
    out = pooled[:, :ho * wo, :cout].reshape(n, ho, wo, cout)
    return jnp.transpose(out, (0, 3, 1, 2))


# -----------------------------------------------------------------------------
# pure-JAX reference (same tanh-GELU) for a numerical sanity check
# -----------------------------------------------------------------------------
def unet_down_reference(x, params, *, groups=4, eps=1e-5):
    def conv_gn_gelu(h, w, b, gamma, beta):
        out = jax.lax.conv_general_dilated(
            h, w, window_strides=(1, 1), padding=((1, 1), (1, 1)),
            dimension_numbers=("NCHW", "OIHW", "NCHW"))
        out = out + b.reshape(1, -1, 1, 1)
        n, c, hh, ww = out.shape
        cg = c // groups
        o = out.reshape(n, groups, cg, hh, ww)
        mean = o.mean(axis=(2, 3, 4), keepdims=True)
        var = ((o - mean) ** 2).mean(axis=(2, 3, 4), keepdims=True)
        o = (o - mean) * jax.lax.rsqrt(var + eps)
        out = o.reshape(n, c, hh, ww) * gamma.reshape(1, -1, 1, 1) \
            + beta.reshape(1, -1, 1, 1)
        return _gelu_tanh(out)

    h = conv_gn_gelu(x, params["w1"], params["b1"], params["g1"], params["be1"])
    h = conv_gn_gelu(h, params["w2"], params["b2"], params["g2"], params["be2"])
    n, c, hh, ww = h.shape
    return h.reshape(n, c, hh // 2, 2, ww // 2, 2).max(axis=(3, 5))


# -----------------------------------------------------------------------------
# main
# -----------------------------------------------------------------------------
if __name__ == "__main__":
    batch, in_channels, out_channels, hw = 2, 4, 8, 16
    key = jax.random.PRNGKey(0)
    kx, kw1, kw2, kb1, kb2 = jax.random.split(key, 5)

    x = jax.random.normal(kx, (batch, in_channels, hw, hw), jnp.float32)
    params = dict(
        w1=jax.random.normal(kw1, (out_channels, in_channels, 3, 3), jnp.float32) * 0.15,
        b1=jax.random.normal(kb1, (out_channels,), jnp.float32) * 0.05,
        g1=jnp.full((out_channels,), 1.1, jnp.float32),
        be1=jnp.full((out_channels,), 0.05, jnp.float32),
        w2=jax.random.normal(kw2, (out_channels, out_channels, 3, 3), jnp.float32) * 0.10,
        b2=jax.random.normal(kb2, (out_channels,), jnp.float32) * 0.05,
        g2=jnp.full((out_channels,), 0.9, jnp.float32),
        be2=jnp.full((out_channels,), -0.02, jnp.float32),
    )

    fwd = jax.jit(unet_down)
    out = jax.block_until_ready(fwd(x, params))
    assert out.shape == (batch, out_channels, hw // 2, hw // 2), out.shape
    assert bool(jnp.all(jnp.isfinite(out)))

    ref = unet_down_reference(x, params)
    max_err = float(jnp.max(jnp.abs(out - ref)))
    # bf16 MXU inputs + bf16 pool gather (f32 accumulation) -> ~1e-2 abs vs f32 ref
    assert max_err < 0.15, max_err

    print("KERNEL_OK")
</pallas_src>

<mosaic_0001>
module attributes {stable_mosaic.version = 11 : i64} {
  func.func @_unet_down_kernel(%arg0: i32, %arg1: memref<1x432x128xbf16, #tpu.memory_space<vmem>>, %arg2: memref<128x128xbf16, #tpu.memory_space<vmem>>, %arg3: memref<1152x128xbf16, #tpu.memory_space<vmem>>, %arg4: memref<3x128xf32, #tpu.memory_space<vmem>>, %arg5: memref<3x128xf32, #tpu.memory_space<vmem>>, %arg6: memref<128x128xf32, #tpu.memory_space<vmem>>, %arg7: memref<64x376xbf16, #tpu.memory_space<vmem>>, %arg8: memref<1x64x128xf32, #tpu.memory_space<vmem>>, %arg9: memref<496x128xbf16, #tpu.memory_space<vmem>>) attributes {dimension_semantics = [#tpu.dimension_semantics<parallel>], iteration_bounds = array<i64: 2>, scalar_prefetch = 0 : i64, scratch_operands = 1 : i64, tpu.core_type = #tpu.core_type<tc>, window_params = [{transform_indices = @transform_0, window_bounds = array<i64: 1, 432, 128>}, {pipeline_mode = #tpu.pipeline_mode<synchronous>, transform_indices = @transform_1, window_bounds = array<i64: 128, 128>}, {pipeline_mode = #tpu.pipeline_mode<synchronous>, transform_indices = @transform_2, window_bounds = array<i64: 1152, 128>}, {pipeline_mode = #tpu.pipeline_mode<synchronous>, transform_indices = @transform_3, window_bounds = array<i64: 3, 128>}, {pipeline_mode = #tpu.pipeline_mode<synchronous>, transform_indices = @transform_4, window_bounds = array<i64: 3, 128>}, {pipeline_mode = #tpu.pipeline_mode<synchronous>, transform_indices = @transform_5, window_bounds = array<i64: 128, 128>}, {pipeline_mode = #tpu.pipeline_mode<synchronous>, transform_indices = @transform_6, window_bounds = array<i64: 64, 376>}, {transform_indices = @transform_7, window_bounds = array<i64: 1, 64, 128>}]} {
    %c0 = arith.constant 0 : index
    %c0_0 = arith.constant 0 : index
    %c0_1 = arith.constant 0 : index
    %0 = vector.load %arg1[%c0, %c0_0, %c0_1] : memref<1x432x128xbf16, #tpu.memory_space<vmem>>, vector<1x432x128xbf16>
    %1 = vector.shape_cast %0 : vector<1x432x128xbf16> to vector<432x128xbf16>
    %2 = vector.extract_strided_slice %1 {offsets = [0, 36], sizes = [432, 1], strides = [1, 1]} : vector<432x128xbf16> to vector<432x1xbf16>
    %3 = arith.extf %2 : vector<432x1xbf16> to vector<432x1xf32>
    %c0_2 = arith.constant 0 : index
    %c0_3 = arith.constant 0 : index
    %4 = vector.load %arg6[%c0_2, %c0_3] : memref<128x128xf32, #tpu.memory_space<vmem>>, vector<128x128xf32>
    %c0_4 = arith.constant 0 : index
    %c0_5 = arith.constant 0 : index
    %5 = vector.load %arg2[%c0_4, %c0_5] : memref<128x128xbf16, #tpu.memory_space<vmem>>, vector<128x128xbf16>
    %cst = arith.constant dense<0.000000e+00> : vector<432x128xf32>
    %6 = tpu.matmul %1, %5, %cst {dimension_numbers = #tpu.dot_dimension_numbers<[1], [0], [0], [1], [0, 0, 1, 1], [], []>} : vector<432x128xbf16>, vector<128x128xbf16>, vector<432x128xf32> -> vector<432x128xf32>
    %c0_6 = arith.constant 0 : index
    %c0_7 = arith.constant 0 : index
    %7 = vector.load %arg4[%c0_6, %c0_7] : memref<3x128xf32, #tpu.memory_space<vmem>>, vector<3x128xf32>
    %8 = vector.extract_strided_slice %7 {offsets = [0, 0], sizes = [1, 128], strides = [1, 1]} : vector<3x128xf32> to vector<1x128xf32>
    %9 = vector.broadcast %8 : vector<1x128xf32> to vector<432x128xf32>
    %10 = arith.addf %6, %9 : vector<432x128xf32>
    %11 = vector.broadcast %3 : vector<432x1xf32> to vector<432x128xf32>
    %12 = arith.mulf %10, %11 : vector<432x128xf32>
    %cst_8 = arith.constant dense<0.000000e+00> : vector<128xf32>
    %13 = vector.multi_reduction <add>, %12, %cst_8 [0] : vector<432x128xf32> to vector<128xf32>
    %14 = vector.shape_cast %13 : vector<128xf32> to vector<1x128xf32>
    %15 = arith.mulf %12, %10 : vector<432x128xf32>
    %cst_9 = arith.constant dense<0.000000e+00> : vector<128xf32>
    %16 = vector.multi_reduction <add>, %15, %cst_9 [0] : vector<432x128xf32> to vector<128xf32>
    %17 = vector.shape_cast %16 : vector<128xf32> to vector<1x128xf32>
    %18 = tpu.concatenate %14, %17 in 0 : vector<1x128xf32>, vector<1x128xf32> -> vector<2x128xf32>
    %cst_10 = arith.constant dense<0.000000e+00> : vector<2x128xf32>
    %19 = tpu.matmul %18, %4, %cst_10 {dimension_numbers = #tpu.dot_dimension_numbers<[1], [0], [0], [1], [0, 0, 1, 1], [], []>} : vector<2x128xf32>, vector<128x128xf32>, vector<2x128xf32> -> vector<2x128xf32>
    %20 = vector.extract_strided_slice %19 {offsets = [0, 0], sizes = [1, 128], strides = [1, 1]} : vector<2x128xf32> to vector<1x128xf32>
    %cst_11 = arith.constant 0.001953125 : f32
    %21 = vector.broadcast %cst_11 : f32 to vector<1x128xf32>
    %22 = arith.mulf %20, %21 : vector<1x128xf32>
    %23 = vector.extract_strided_slice %19 {offsets = [1, 0], sizes = [1, 128], strides = [1, 1]} : vector<2x128xf32> to vector<1x128xf32>
    %cst_12 = arith.constant 0.001953125 : f32
    %24 = vector.broadcast %cst_12 : f32 to vector<1x128xf32>
    %25 = arith.mulf %23, %24 : vector<1x128xf32>
    %26 = arith.mulf %22, %22 : vector<1x128xf32>
    %27 = arith.subf %25, %26 : vector<1x128xf32>
    %cst_13 = arith.constant 9.99999974E-6 : f32
    %28 = vector.broadcast %cst_13 : f32 to vector<1x128xf32>
    %29 = arith.addf %27, %28 : vector<1x128xf32>
    %30 = math.rsqrt %29 : vector<1x128xf32>
    %31 = vector.broadcast %22 : vector<1x128xf32> to vector<432x128xf32>
    %32 = arith.subf %10, %31 : vector<432x128xf32>
    %33 = vector.extract_strided_slice %7 {offsets = [1, 0], sizes = [1, 128], strides = [1, 1]} : vector<3x128xf32> to vector<1x128xf32>
    %34 = arith.mulf %30, %33 : vector<1x128xf32>
    %35 = vector.broadcast %34 : vector<1x128xf32> to vector<432x128xf32>
    %36 = arith.mulf %32, %35 : vector<432x128xf32>
    %37 = vector.extract_strided_slice %7 {offsets = [2, 0], sizes = [1, 128], strides = [1, 1]} : vector<3x128xf32> to vector<1x128xf32>
    %38 = vector.broadcast %37 : vector<1x128xf32> to vector<432x128xf32>
    %39 = arith.addf %36, %38 : vector<432x128xf32>
    %cst_14 = arith.constant 5.000000e-01 : f32
    %40 = vector.broadcast %cst_14 : f32 to vector<432x128xf32>
    %41 = arith.mulf %40, %39 : vector<432x128xf32>
    %cst_15 = arith.constant 4.471500e-02 : f32
    %42 = vector.broadcast %cst_15 : f32 to vector<432x128xf32>
    %43 = arith.mulf %42, %39 : vector<432x128xf32>
    %44 = arith.mulf %43, %39 : vector<432x128xf32>
    %45 = arith.mulf %44, %39 : vector<432x128xf32>
    %46 = arith.addf %39, %45 : vector<432x128xf32>
    %cst_16 = arith.constant 0.797884583 : f32
    %47 = vector.broadcast %cst_16 : f32 to vector<432x128xf32>
    %48 = arith.mulf %47, %46 : vector<432x128xf32>
    %49 = math.tanh %48 : vector<432x128xf32>
    %cst_17 = arith.constant 1.000000e+00 : f32
    %50 = vector.broadcast %cst_17 : f32 to vector<432x128xf32>
    %51 = arith.addf %50, %49 : vector<432x128xf32>
    %52 = arith.mulf %41, %51 : vector<432x128xf32>
    %53 = vector.broadcast %3 : vector<432x1xf32> to vector<432x128xf32>
    %54 = arith.mulf %52, %53 : vector<432x128xf32>
    %cst_18 = arith.constant 0.000000e+00 : bf16
    %55 = vector.broadcast %cst_18 : bf16 to vector<32x128xbf16>
    %c0_19 = arith.constant 0 : index
    %c0_20 = arith.constant 0 : index
    %56 = vector.load %arg9[%c0_19, %c0_20] : memref<496x128xbf16, #tpu.memory_space<vmem>>, vector<32x128xbf16>
    tpu.vector_store %arg9[%c0_19, %c0_20], %55 {strides = array<i32>} : memref<496x128xbf16, #tpu.memory_space<vmem>>, vector<32x128xbf16>,
    %cst_21 = arith.constant 0.000000e+00 : bf16
    %57 = vector.broadcast %cst_21 : bf16 to vector<32x128xbf16>
    %c464 = arith.constant 464 : index
    %c0_22 = arith.constant 0 : index
    %58 = vector.load %arg9[%c464, %c0_22] : memref<496x128xbf16, #tpu.memory_space<vmem>>, vector<32x128xbf16>
    tpu.vector_store %arg9[%c464, %c0_22], %57 {strides = array<i32>} : memref<496x128xbf16, #tpu.memory_space<vmem>>, vector<32x128xbf16>,
    %59 = arith.truncf %54 : vector<432x128xf32> to vector<432x128xbf16>
    %c32 = arith.constant 32 : index
    %c0_23 = arith.constant 0 : index
    %60 = vector.load %arg9[%c32, %c0_23] : memref<496x128xbf16, #tpu.memory_space<vmem>>, vector<432x128xbf16>
    tpu.vector_store %arg9[%c32, %c0_23], %59 {strides = array<i32>} : memref<496x128xbf16, #tpu.memory_space<vmem>>, vector<432x128xbf16>,
    %cst_24 = arith.constant 0.000000e+00 : f32
    %61 = vector.broadcast %cst_24 : f32 to vector<432x128xf32>
    %c7 = arith.constant 7 : index
    %c0_25 = arith.constant 0 : index
    %62 = vector.load %arg9[%c7, %c0_25] : memref<496x128xbf16, #tpu.memory_space<vmem>>, vector<432x128xbf16>
    %c0_26 = arith.constant 0 : index
    %c0_27 = arith.constant 0 : index
    %63 = vector.load %arg3[%c0_26, %c0_27] : memref<1152x128xbf16, #tpu.memory_space<vmem>>, vector<128x128xbf16>
    %cst_28 = arith.constant dense<0.000000e+00> : vector<432x128xf32>
    %64 = tpu.matmul %62, %63, %cst_28 {dimension_numbers = #tpu.dot_dimension_numbers<[1], [0], [0], [1], [0, 0, 1, 1], [], []>} : vector<432x128xbf16>, vector<128x128xbf16>, vector<432x128xf32> -> vector<432x128xf32>
    %65 = arith.addf %61, %64 : vector<432x128xf32>
    %c8 = arith.constant 8 : index
    %c0_29 = arith.constant 0 : index
    %66 = vector.load %arg9[%c8, %c0_29] : memref<496x128xbf16, #tpu.memory_space<vmem>>, vector<432x128xbf16>
    %c128 = arith.constant 128 : index
    %c0_30 = arith.constant 0 : index
    %67 = vector.load %arg3[%c128, %c0_30] : memref<1152x128xbf16, #tpu.memory_space<vmem>>, vector<128x128xbf16>
    %cst_31 = arith.constant dense<0.000000e+00> : vector<432x128xf32>
    %68 = tpu.matmul %66, %67, %cst_31 {dimension_numbers = #tpu.dot_dimension_numbers<[1], [0], [0], [1], [0, 0, 1, 1], [], []>} : vector<432x128xbf16>, vector<128x128xbf16>, vector<432x128xf32> -> vector<432x128xf32>
    %69 = arith.addf %65, %68 : vector<432x128xf32>
    %c9 = arith.constant 9 : index
    %c0_32 = arith.constant 0 : index
    %70 = vector.load %arg9[%c9, %c0_32] : memref<496x128xbf16, #tpu.memory_space<vmem>>, vector<432x128xbf16>
    %c256 = arith.constant 256 : index
    %c0_33 = arith.constant 0 : index
    %71 = vector.load %arg3[%c256, %c0_33] : memref<1152x128xbf16, #tpu.memory_space<vmem>>, vector<128x128xbf16>
    %cst_34 = arith.constant dense<0.000000e+00> : vector<432x128xf32>
    %72 = tpu.matmul %70, %71, %cst_34 {dimension_numbers = #tpu.dot_dimension_numbers<[1], [0], [0], [1], [0, 0, 1, 1], [], []>} : vector<432x128xbf16>, vector<128x128xbf16>, vector<432x128xf32> -> vector<432x128xf32>
    %73 = arith.addf %69, %72 : vector<432x128xf32>
    %c31 = arith.constant 31 : index
    %c0_35 = arith.constant 0 : index
    %74 = vector.load %arg9[%c31, %c0_35] : memref<496x128xbf16, #tpu.memory_space<vmem>>, vector<432x128xbf16>
    %c384 = arith.constant 384 : index
    %c0_36 = arith.constant 0 : index
    %75 = vector.load %arg3[%c384, %c0_36] : memref<1152x128xbf16, #tpu.memory_space<vmem>>, vector<128x128xbf16>
    %cst_37 = arith.constant dense<0.000000e+00> : vector<432x128xf32>
    %76 = tpu.matmul %74, %75, %cst_37 {dimension_numbers = #tpu.dot_dimension_numbers<[1], [0], [0], [1], [0, 0, 1, 1], [], []>} : vector<432x128xbf16>, vector<128x128xbf16>, vector<432x128xf32> -> vector<432x128xf32>
    %77 = arith.addf %73, %76 : vector<432x128xf32>
    %c32_38 = arith.constant 32 : index
    %c0_39 = arith.constant 0 : index
    %78 = vector.load %arg9[%c32_38, %c0_39] : memref<496x128xbf16, #tpu.memory_space<vmem>>, vector<432x128xbf16>
    %c512 = arith.constant 512 : index
    %c0_40 = arith.constant 0 : index
    %79 = vector.load %arg3[%c512, %c0_40] : memref<1152x128xbf16, #tpu.memory_space<vmem>>, vector<128x128xbf16>
    %cst_41 = arith.constant dense<0.000000e+00> : vector<432x128xf32>
    %80 = tpu.matmul %78, %79, %cst_41 {dimension_numbers = #tpu.dot_dimension_numbers<[1], [0], [0], [1], [0, 0, 1, 1], [], []>} : vector<432x128xbf16>, vector<128x128xbf16>, vector<432x128xf32> -> vector<432x128xf32>
    %81 = arith.addf %77, %80 : vector<432x128xf32>
    %c33 = arith.constant 33 : index
    %c0_42 = arith.constant 0 : index
    %82 = vector.load %arg9[%c33, %c0_42] : memref<496x128xbf16, #tpu.memory_space<vmem>>, vector<432x128xbf16>
    %c640 = arith.constant 640 : index
    %c0_43 = arith.constant 0 : index
    %83 = vector.load %arg3[%c640, %c0_43] : memref<1152x128xbf16, #tpu.memory_space<vmem>>, vector<128x128xbf16>
    %cst_44 = arith.constant dense<0.000000e+00> : vector<432x128xf32>
    %84 = tpu.matmul %82, %83, %cst_44 {dimension_numbers = #tpu.dot_dimension_numbers<[1], [0], [0], [1], [0, 0, 1, 1], [], []>} : vector<432x128xbf16>, vector<128x128xbf16>, vector<432x128xf32> -> vector<432x128xf32>
    %85 = arith.addf %81, %84 : vector<432x128xf32>
    %c55 = arith.constant 55 : index
    %c0_45 = arith.constant 0 : index
    %86 = vector.load %arg9[%c55, %c0_45] : memref<496x128xbf16, #tpu.memory_space<vmem>>, vector<432x128xbf16>
    %c768 = arith.constant 768 : index
    %c0_46 = arith.constant 0 : index
    %87 = vector.load %arg3[%c768, %c0_46] : memref<1152x128xbf16, #tpu.memory_space<vmem>>, vector<128x128xbf16>
    %cst_47 = arith.constant dense<0.000000e+00> : vector<432x128xf32>
    %88 = tpu.matmul %86, %87, %cst_47 {dimension_numbers = #tpu.dot_dimension_numbers<[1], [0], [0], [1], [0, 0, 1, 1], [], []>} : vector<432x128xbf16>, vector<128x128xbf16>, vector<432x128xf32> -> vector<432x128xf32>
    %89 = arith.addf %85, %88 : vector<432x128xf32>
    %c56 = arith.constant 56 : index
    %c0_48 = arith.constant 0 : index
    %90 = vector.load %arg9[%c56, %c0_48] : memref<496x128xbf16, #tpu.memory_space<vmem>>, vector<432x128xbf16>
    %c896 = arith.constant 896 : index
    %c0_49 = arith.constant 0 : index
    %91 = vector.load %arg3[%c896, %c0_49] : memref<1152x128xbf16, #tpu.memory_space<vmem>>, vector<128x128xbf16>
    %cst_50 = arith.constant dense<0.000000e+00> : vector<432x128xf32>
    %92 = tpu.matmul %90, %91, %cst_50 {dimension_numbers = #tpu.dot_dimension_numbers<[1], [0], [0], [1], [0, 0, 1, 1], [], []>} : vector<432x128xbf16>, vector<128x128xbf16>, vector<432x128xf32> -> vector<432x128xf32>
    %93 = arith.addf %89, %92 : vector<432x128xf32>
    %c57 = arith.constant 57 : index
    %c0_51 = arith.constant 0 : index
    %94 = vector.load %arg9[%c57, %c0_51] : memref<496x128xbf16, #tpu.memory_space<vmem>>, vector<432x128xbf16>
    %c1024 = arith.constant 1024 : index
    %c0_52 = arith.constant 0 : index
    %95 = vector.load %arg3[%c1024, %c0_52] : memref<1152x128xbf16, #tpu.memory_space<vmem>>, vector<128x128xbf16>
    %cst_53 = arith.constant dense<0.000000e+00> : vector<432x128xf32>
    %96 = tpu.matmul %94, %95, %cst_53 {dimension_numbers = #tpu.dot_dimension_numbers<[1], [0], [0], [1], [0, 0, 1, 1], [], []>} : vector<432x128xbf16>, vector<128x128xbf16>, vector<432x128xf32> -> vector<432x128xf32>
    %97 = arith.addf %93, %96 : vector<432x128xf32>
    %c0_54 = arith.constant 0 : index
    %c0_55 = arith.constant 0 : index
    %98 = vector.load %arg5[%c0_54, %c0_55] : memref<3x128xf32, #tpu.memory_space<vmem>>, vector<3x128xf32>
    %99 = vector.extract_strided_slice %98 {offsets = [0, 0], sizes = [1, 128], strides = [1, 1]} : vector<3x128xf32> to vector<1x128xf32>
    %100 = vector.broadcast %99 : vector<1x128xf32> to vector<432x128xf32>
    %101 = arith.addf %97, %100 : vector<432x128xf32>
    %102 = vector.broadcast %3 : vector<432x1xf32> to vector<432x128xf32>
    %103 = arith.mulf %101, %102 : vector<432x128xf32>
    %cst_56 = arith.constant dense<0.000000e+00> : vector<128xf32>
    %104 = vector.multi_reduction <add>, %103, %cst_56 [0] : vector<432x128xf32> to vector<128xf32>
    %105 = vector.shape_cast %104 : vector<128xf32> to vector<1x128xf32>
    %106 = arith.mulf %103, %101 : vector<432x128xf32>
    %cst_57 = arith.constant dense<0.000000e+00> : vector<128xf32>
    %107 = vector.multi_reduction <add>, %106, %cst_57 [0] : vector<432x128xf32> to vector<128xf32>
    %108 = vector.shape_cast %107 : vector<128xf32> to vector<1x128xf32>
    %109 = tpu.concatenate %105, %108 in 0 : vector<1x128xf32>, vector<1x128xf32> -> vector<2x128xf32>
    %cst_58 = arith.constant dense<0.000000e+00> : vector<2x128xf32>
    %110 = tpu.matmul %109, %4, %cst_58 {dimension_numbers = #tpu.dot_dimension_numbers<[1], [0], [0], [1], [0, 0, 1, 1], [], []>} : vector<2x128xf32>, vector<128x128xf32>, vector<2x128xf32> -> vector<2x128xf32>
    %111 = vector.extract_strided_slice %110 {offsets = [0, 0], sizes = [1, 128], strides = [1, 1]} : vector<2x128xf32> to vector<1x128xf32>
    %cst_59 = arith.constant 0.001953125 : f32
    %112 = vector.broadcast %cst_59 : f32 to vector<1x128xf32>
    %113 = arith.mulf %111, %112 : vector<1x128xf32>
    %114 = vector.extract_strided_slice %110 {offsets = [1, 0], sizes = [1, 128], strides = [1, 1]} : vector<2x128xf32> to vector<1x128xf32>
    %cst_60 = arith.constant 0.001953125 : f32
    %115 = vector.broadcast %cst_60 : f32 to vector<1x128xf32>
    %116 = arith.mulf %114, %115 : vector<1x128xf32>
    %117 = arith.mulf %113, %113 : vector<1x128xf32>
    %118 = arith.subf %116, %117 : vector<1x128xf32>
    %cst_61 = arith.constant 9.99999974E-6 : f32
    %119 = vector.broadcast %cst_61 : f32 to vector<1x128xf32>
    %120 = arith.addf %118, %119 : vector<1x128xf32>
    %121 = math.rsqrt %120 : vector<1x128xf32>
    %122 = vector.broadcast %113 : vector<1x128xf32> to vector<432x128xf32>
    %123 = arith.subf %101, %122 : vector<432x128xf32>
    %124 = vector.extract_strided_slice %98 {offsets = [1, 0], sizes = [1, 128], strides = [1, 1]} : vector<3x128xf32> to vector<1x128xf32>
    %125 = arith.mulf %121, %124 : vector<1x128xf32>
    %126 = vector.broadcast %125 : vector<1x128xf32> to vector<432x128xf32>
    %127 = arith.mulf %123, %126 : vector<432x128xf32>
    %128 = vector.extract_strided_slice %98 {offsets = [2, 0], sizes = [1, 128], strides = [1, 1]} : vector<3x128xf32> to vector<1x128xf32>
    %129 = vector.broadcast %128 : vector<1x128xf32> to vector<432x128xf32>
    %130 = arith.addf %127, %129 : vector<432x128xf32>
    %cst_62 = arith.constant 5.000000e-01 : f32
    %131 = vector.broadcast %cst_62 : f32 to vector<432x128xf32>
    %132 = arith.mulf %131, %130 : vector<432x128xf32>
    %cst_63 = arith.constant 4.471500e-02 : f32
    %133 = vector.broadcast %cst_63 : f32 to vector<432x128xf32>
    %134 = arith.mulf %133, %130 : vector<432x128xf32>
    %135 = arith.mulf %134, %130 : vector<432x128xf32>
    %136 = arith.mulf %135, %130 : vector<432x128xf32>
    %137 = arith.addf %130, %136 : vector<432x128xf32>
    %cst_64 = arith.constant 0.797884583 : f32
    %138 = vector.broadcast %cst_64 : f32 to vector<432x128xf32>
    %139 = arith.mulf %138, %137 : vector<432x128xf32>
    %140 = math.tanh %139 : vector<432x128xf32>
    %cst_65 = arith.constant 1.000000e+00 : f32
    %141 = vector.broadcast %cst_65 : f32 to vector<432x128xf32>
    %142 = arith.addf %141, %140 : vector<432x128xf32>
    %143 = arith.mulf %132, %142 : vector<432x128xf32>
    %144 = vector.extract_strided_slice %143 {offsets = [0, 0], sizes = [376, 128], strides = [1, 1]} : vector<432x128xf32> to vector<376x128xf32>
    %145 = vector.extract_strided_slice %143 {offsets = [1, 0], sizes = [376, 128], strides = [1, 1]} : vector<432x128xf32> to vector<376x128xf32>
    %146 = vector.extract_strided_slice %143 {offsets = [24, 0], sizes = [376, 128], strides = [1, 1]} : vector<432x128xf32> to vector<376x128xf32>
    %147 = vector.extract_strided_slice %143 {offsets = [25, 0], sizes = [376, 128], strides = [1, 1]} : vector<432x128xf32> to vector<376x128xf32>
    %148 = arith.maximumf %144, %145 : vector<376x128xf32>
    %149 = arith.maximumf %146, %147 : vector<376x128xf32>
    %150 = arith.maximumf %148, %149 : vector<376x128xf32>
    %151 = arith.truncf %150 : vector<376x128xf32> to vector<376x128xbf16>
    %c0_66 = arith.constant 0 : index
    %c0_67 = arith.constant 0 : index
    %152 = vector.load %arg7[%c0_66, %c0_67] : memref<64x376xbf16, #tpu.memory_space<vmem>>, vector<64x376xbf16>
    %cst_68 = arith.constant dense<0.000000e+00> : vector<64x128xf32>
    %153 = tpu.matmul %152, %151, %cst_68 {dimension_numbers = #tpu.dot_dimension_numbers<[1], [0], [0], [1], [0, 0, 1, 1], [], []>} : vector<64x376xbf16>, vector<376x128xbf16>, vector<64x128xf32> -> vector<64x128xf32>
    %c0_69 = arith.constant 0 : index
    %c0_70 = arith.constant 0 : index
    %c0_71 = arith.constant 0 : index
    %154 = vector.load %arg8[%c0_69, %c0_70, %c0_71] : memref<1x64x128xf32, #tpu.memory_space<vmem>>, vector<1x64x128xf32>
    %155 = vector.shape_cast %154 : vector<1x64x128xf32> to vector<64x128xf32>
    %156 = vector.shape_cast %153 : vector<64x128xf32> to vector<1x64x128xf32>
    tpu.vector_store %arg8[%c0_69, %c0_70, %c0_71], %156 {strides = array<i32>} : memref<1x64x128xf32, #tpu.memory_space<vmem>>, vector<1x64x128xf32>,
    return
  }
  func.func @transform_0(%arg0: i32) -> (i32, i32, i32) {
    %c0_i32 = arith.constant 0 : i32
    %c0_i32_0 = arith.constant 0 : i32
    %c0_i32_1 = arith.constant 0 : i32
    return %arg0, %c0_i32, %c0_i32_0 : i32, i32, i32
  }
  func.func @transform_1(%arg0: i32) -> (i32, i32) {
    %c0_i32 = arith.constant 0 : i32
    %c0_i32_0 = arith.constant 0 : i32
    %c0_i32_1 = arith.constant 0 : i32
    return %c0_i32, %c0_i32_0 : i32, i32
  }
  func.func @transform_2(%arg0: i32) -> (i32, i32) {
    %c0_i32 = arith.constant 0 : i32
    %c0_i32_0 = arith.constant 0 : i32
    %c0_i32_1 = arith.constant 0 : i32
    return %c0_i32, %c0_i32_0 : i32, i32
  }
  func.func @transform_3(%arg0: i32) -> (i32, i32) {
    %c0_i32 = arith.constant 0 : i32
    %c0_i32_0 = arith.constant 0 : i32
    %c0_i32_1 = arith.constant 0 : i32
    return %c0_i32, %c0_i32_0 : i32, i32
  }
  func.func @transform_4(%arg0: i32) -> (i32, i32) {
    %c0_i32 = arith.constant 0 : i32
    %c0_i32_0 = arith.constant 0 : i32
    %c0_i32_1 = arith.constant 0 : i32
    return %c0_i32, %c0_i32_0 : i32, i32
  }
  func.func @transform_5(%arg0: i32) -> (i32, i32) {
    %c0_i32 = arith.constant 0 : i32
    %c0_i32_0 = arith.constant 0 : i32
    %c0_i32_1 = arith.constant 0 : i32
    return %c0_i32, %c0_i32_0 : i32, i32
  }
  func.func @transform_6(%arg0: i32) -> (i32, i32) {
    %c0_i32 = arith.constant 0 : i32
    %c0_i32_0 = arith.constant 0 : i32
    %c0_i32_1 = arith.constant 0 : i32
    return %c0_i32, %c0_i32_0 : i32, i32
  }
  func.func @transform_7(%arg0: i32) -> (i32, i32, i32) {
    %c0_i32 = arith.constant 0 : i32
    %c0_i32_0 = arith.constant 0 : i32
    %c0_i32_1 = arith.constant 0 : i32
    return %arg0, %c0_i32, %c0_i32_0 : i32, i32, i32
  }
}

</mosaic_0001>

<llo_original>
// kernel: unet_down.1
$region0: #{unet_down.1}
  #allocation0 [shape = 'u32[]', space=smem, size = 0x4, offset = 0x4, fixed_abs, tag = 'smem constant byte address 0x4 - core index']
  #allocation1 [shape = 'u32[144,128]{1,0:T(1,128)}', space=vmem, size = 0x12000, scoped, tag = 'internal scratch']
  #allocation2 [shape = 'bf16[496,128]{1,0:T(8,128)(2,1)}', space=vmem, size = 0x1f000, scoped, tag = 'scratch operand']
  %s0 = inlined_call_operand.vmem [shape: bf16[2,432,128], index: 0, kind: input, shape index: {}]
  %s1 = inlined_call_operand.vmem [shape: bf16[128,128], index: 1, kind: input, shape index: {}]
  %s2 = inlined_call_operand.vmem [shape: bf16[1152,128], index: 2, kind: input, shape index: {}]
  %s3 = inlined_call_operand.vmem [shape: f32[3,128], index: 3, kind: input, shape index: {}]
  %s4 = inlined_call_operand.vmem [shape: f32[3,128], index: 4, kind: input, shape index: {}]
  %s5 = inlined_call_operand.vmem [shape: f32[128,128], index: 5, kind: input, shape index: {}]
  %s6 = inlined_call_operand.vmem [shape: bf16[64,376], index: 6, kind: input, shape index: {}]
  %s7 = inlined_call_operand.vmem [shape: f32[2,64,128], index: 7, kind: output, shape index: {}]
  %s8 = sld [smem:[#allocation0]]
  $region61: #{unet_down.1} parent=0
    _
  %s10 = ssub.s32 1, %s8
  %s11 = scalar_select 0, %s10, %s8
  loop: start=0, step=1, limit=4
  $region2: #{unet_down.1} parent=0 // loop_pre_header
    _
  $region3: #{unet_down.1} parent=0 // loop_header
    %s13 = sphi 0, %s17
    %p14 = scmp.ge.s32.totalorder %s13, 4
    %s23 = sphi 0, %s25
    %s26 = sphi 0, %s23
    %s27 = sphi 0, %s26
    %s43 = sphi 0, %s27
    %s47 = sphi 0, %s47
    %s49 = sphi 0, %s47
    %s50 = sphi 0, %s49
    %s64 = sphi 0, %s50
    %s68 = sphi 0, %s68
    %s70 = sphi 0, %s68
    %s71 = sphi 0, %s70
    %s85 = sphi 0, %s71
    %s89 = sphi 0, %s89
    %s91 = sphi 0, %s89
    %s92 = sphi 0, %s91
    %s106 = sphi 0, %s92
    %s110 = sphi 0, %s110
    %s112 = sphi 0, %s110
    %s113 = sphi 0, %s112
    %s127 = sphi 0, %s113
    %s131 = sphi 0, %s131
    %s133 = sphi 0, %s131
    %s134 = sphi 0, %s133
    %s148 = sphi 0, %s134
    %s152 = sphi 0, %s152
    %s154 = sphi 0, %s152
    %s155 = sphi 0, %s154
    %s169 = sphi 0, %s155
    %s175 = sphi 0, %s177
    %s178 = sphi 0, %s175
    %s179 = sphi 0, %s178
    %s195 = sphi 0, %s179
  $region4: #{unet_down.1} parent=0 // loop_header_branch
    %16 = sbr.rel (%p14) target = $region8
  $region5: #{unet_down.1} parent=0 // loop_body
    %s18 = ssub.s32 %s13, 1
    %s19 = ssub.s32 %s13, 2
    %s20 = sadd.s32 %s13, 1
    %s21 = ssub.s32 %s13, %s20
    %p22 = scmp.eq.s32.totalorder %s21, 0
    %s24 = sadd.s32 %s23, 1
    %s25 = scalar_select %p22, %s23, %s24
    %p28 = pneg %p22
    %p29 = scmp.eq.s32.totalorder %s13, 1
    %p30 = por %p28, %p29
    %p31 = scmp.ne.s32.totalorder %s23, %s26
    %p32 = scmp.eq.s32.totalorder %s13, 0
    %p33 = por %p31, %p32
    %p34 = scmp.ne.s32.totalorder %s23, %s26
    %p35 = scmp.eq.s32.totalorder %s18, 1
    %p36 = por %p34, %p35
    %p37 = scmp.ne.s32.totalorder %s26, %s27
    %p38 = scmp.eq.s32.totalorder %s18, 0
    %p39 = por %p37, %p38
    %p40 = scmp.ne.s32.totalorder %s26, %s27
    %p41 = scmp.eq.s32.totalorder %s19, 1
    %p42 = por %p40, %p41
    %p44 = scmp.ne.s32.totalorder %s27, %s43
    %p45 = scmp.eq.s32.totalorder %s19, 0
    %p46 = por %p44, %p45
    %s48 = sadd.s32 %s47, 1
    %p51 = scmp.eq.s32.totalorder %s13, 1
    %p52 = scmp.ne.s32.totalorder %s47, %s49
    %p53 = scmp.eq.s32.totalorder %s13, 0
    %p54 = por %p52, %p53
    %p55 = scmp.ne.s32.totalorder %s47, %s49
    %p56 = scmp.eq.s32.totalorder %s18, 1
    %p57 = por %p55, %p56
    %p58 = scmp.ne.s32.totalorder %s49, %s50
    %p59 = scmp.eq.s32.totalorder %s18, 0
    %p60 = por %p58, %p59
    %p61 = scmp.ne.s32.totalorder %s49, %s50
    %p62 = scmp.eq.s32.totalorder %s19, 1
    %p63 = por %p61, %p62
    %p65 = scmp.ne.s32.totalorder %s50, %s64
    %p66 = scmp.eq.s32.totalorder %s19, 0
    %p67 = por %p65, %p66
    %s69 = sadd.s32 %s68, 1
    %p72 = scmp.eq.s32.totalorder %s13, 1
    %p73 = scmp.ne.s32.totalorder %s68, %s70
    %p74 = scmp.eq.s32.totalorder %s13, 0
    %p75 = por %p73, %p74
    %p76 = scmp.ne.s32.totalorder %s68, %s70
    %p77 = scmp.eq.s32.totalorder %s18, 1
    %p78 = por %p76, %p77
    %p79 = scmp.ne.s32.totalorder %s70, %s71
    %p80 = scmp.eq.s32.totalorder %s18, 0
    %p81 = por %p79, %p80
    %p82 = scmp.ne.s32.totalorder %s70, %s71
    %p83 = scmp.eq.s32.totalorder %s19, 1
    %p84 = por %p82, %p83
    %p86 = scmp.ne.s32.totalorder %s71, %s85
    %p87 = scmp.eq.s32.totalorder %s19, 0
    %p88 = por %p86, %p87
    %s90 = sadd.s32 %s89, 1
    %p93 = scmp.eq.s32.totalorder %s13, 1
    %p94 = scmp.ne.s32.totalorder %s89, %s91
    %p95 = scmp.eq.s32.totalorder %s13, 0
    %p96 = por %p94, %p95
    %p97 = scmp.ne.s32.totalorder %s89, %s91
    %p98 = scmp.eq.s32.totalorder %s18, 1
    %p99 = por %p97, %p98
    %p100 = scmp.ne.s32.totalorder %s91, %s92
    %p101 = scmp.eq.s32.totalorder %s18, 0
    %p102 = por %p100, %p101
    %p103 = scmp.ne.s32.totalorder %s91, %s92
    %p104 = scmp.eq.s32.totalorder %s19, 1
    %p105 = por %p103, %p104
    %p107 = scmp.ne.s32.totalorder %s92, %s106
    %p108 = scmp.eq.s32.totalorder %s19, 0
    %p109 = por %p107, %p108
    %s111 = sadd.s32 %s110, 1
    %p114 = scmp.eq.s32.totalorder %s13, 1
    %p115 = scmp.ne.s32.totalorder %s110, %s112
    %p116 = scmp.eq.s32.totalorder %s13, 0
    %p117 = por %p115, %p116
    %p118 = scmp.ne.s32.totalorder %s110, %s112
    %p119 = scmp.eq.s32.totalorder %s18, 1
    %p120 = por %p118, %p119
    %p121 = scmp.ne.s32.totalorder %s112, %s113
    %p122 = scmp.eq.s32.totalorder %s18, 0
    %p123 = por %p121, %p122
    %p124 = scmp.ne.s32.totalorder %s112, %s113
    %p125 = scmp.eq.s32.totalorder %s19, 1
    %p126 = por %p124, %p125
    %p128 = scmp.ne.s32.totalorder %s113, %s127
    %p129 = scmp.eq.s32.totalorder %s19, 0
    %p130 = por %p128, %p129
    %s132 = sadd.s32 %s131, 1
    %p135 = scmp.eq.s32.totalorder %s13, 1
    %p136 = scmp.ne.s32.totalorder %s131, %s133
    %p137 = scmp.eq.s32.totalorder %s13, 0
    %p138 = por %p136, %p137
    %p139 = scmp.ne.s32.totalorder %s131, %s133
    %p140 = scmp.eq.s32.totalorder %s18, 1
    %p141 = por %p139, %p140
    %p142 = scmp.ne.s32.totalorder %s133, %s134
    %p143 = scmp.eq.s32.totalorder %s18, 0
    %p144 = por %p142, %p143
    %p145 = scmp.ne.s32.totalorder %s133, %s134
    %p146 = scmp.eq.s32.totalorder %s19, 1
    %p147 = por %p145, %p146
    %p149 = scmp.ne.s32.totalorder %s134, %s148
    %p150 = scmp.eq.s32.totalorder %s19, 0
    %p151 = por %p149, %p150
    %s153 = sadd.s32 %s152, 1
    %p156 = scmp.eq.s32.totalorder %s13, 1
    %p157 = scmp.ne.s32.totalorder %s152, %s154
    %p158 = scmp.eq.s32.totalorder %s13, 0
    %p159 = por %p157, %p158
    %p160 = scmp.ne.s32.totalorder %s152, %s154
    %p161 = scmp.eq.s32.totalorder %s18, 1
    %p162 = por %p160, %p161
    %p163 = scmp.ne.s32.totalorder %s154, %s155
    %p164 = scmp.eq.s32.totalorder %s18, 0
    %p165 = por %p163, %p164
    %p166 = scmp.ne.s32.totalorder %s154, %s155
    %p167 = scmp.eq.s32.totalorder %s19, 1
    %p168 = por %p166, %p167
    %p170 = scmp.ne.s32.totalorder %s155, %s169
    %p171 = scmp.eq.s32.totalorder %s19, 0
    %p172 = por %p170, %p171
    %s173 = ssub.s32 %s13, %s20
    %p174 = scmp.eq.s32.totalorder %s173, 0
    %s176 = sadd.s32 %s175, 1
    %s177 = scalar_select %p174, %s175, %s176
    %p180 = pneg %p174
    %p181 = scmp.eq.s32.totalorder %s13, 1
    %p182 = por %p180, %p181
    %p183 = scmp.ne.s32.totalorder %s175, %s178
    %p184 = scmp.eq.s32.totalorder %s13, 0
    %p185 = por %p183, %p184
    %p186 = scmp.ne.s32.totalorder %s175, %s178
    %p187 = scmp.eq.s32.totalorder %s18, 1
    %p188 = por %p186, %p187
    %p189 = scmp.ne.s32.totalorder %s178, %s179
    %p190 = scmp.eq.s32.totalorder %s18, 0
    %p191 = por %p189, %p190
    %p192 = scmp.ne.s32.totalorder %s178, %s179
    %p193 = scmp.eq.s32.totalorder %s19, 1
    %p194 = por %p192, %p193
    %p196 = scmp.ne.s32.totalorder %s179, %s195
    %p197 = scmp.eq.s32.totalorder %s19, 0
    %p198 = por %p196, %p197
    %p199 = scmp.le.s32.totalorder 1, %s13
    %p200 = scmp.lt.s32.totalorder %s13, 3
    %p201 = pnand %p199, %p200
    %p202 = pneg %p201
    // Predicated region
    $region9: #{unet_down.1} parent=5 // pred_check
      _
    $region10: #{unet_down.1} parent=5 // pred_check_branch
      %204 = sbr.rel (%p201) target = $region12
    $region11: #{unet_down.1} parent=5 // pred_region
      %s205 = ssub.s32 %s13, 1
      // Predicated region
      $region13: #{unet_down.1} parent=11 // pred_check
        %p206 = pneg %p60
      $region14: #{unet_down.1} parent=11 // pred_check_branch
        %208 = sbr.rel (%p206) target = $region16
      $region15: #{unet_down.1} parent=11 // pred_region
        _
      $region16: #{unet_down.1} parent=11 // pred_fallthru
        _
      // Predicated region
      $region17: #{unet_down.1} parent=11 // pred_check
        %p209 = pneg %p81
      $region18: #{unet_down.1} parent=11 // pred_check_branch
        %211 = sbr.rel (%p209) target = $region20
      $region19: #{unet_down.1} parent=11 // pred_region
        _
      $region20: #{unet_down.1} parent=11 // pred_fallthru
        _
      // Predicated region
      $region21: #{unet_down.1} parent=11 // pred_check
        %p212 = pneg %p102
      $region22: #{unet_down.1} parent=11 // pred_check_branch
        %214 = sbr.rel (%p212) target = $region24
      $region23: #{unet_down.1} parent=11 // pred_region
        _
      $region24: #{unet_down.1} parent=11 // pred_fallthru
        _
      // Predicated region
      $region25: #{unet_down.1} parent=11 // pred_check
        %p215 = pneg %p123
      $region26: #{unet_down.1} parent=11 // pred_check_branch
        %217 = sbr.rel (%p215) target = $region28
      $region27: #{unet_down.1} parent=11 // pred_region
        _
      $region28: #{unet_down.1} parent=11 // pred_fallthru
        _
      // Predicated region
      $region29: #{unet_down.1} parent=11 // pred_check
        %p218 = pneg %p144
      $region30: #{unet_down.1} parent=11 // pred_check_branch
        %220 = sbr.rel (%p218) target = $region32
      $region31: #{unet_down.1} parent=11 // pred_region
        _
      $region32: #{unet_down.1} parent=11 // pred_fallthru
        _
      // Predicated region
      $region33: #{unet_down.1} parent=11 // pred_check
        %p221 = pneg %p165
      $region34: #{unet_down.1} parent=11 // pred_check_branch
        %223 = sbr.rel (%p221) target = $region36
      $region35: #{unet_down.1} parent=11 // pred_region
        _
      $region36: #{unet_down.1} parent=11 // pred_fallthru
        _
    $region12: #{unet_down.1} parent=5 // pred_fallthru
      _
    %p224 = scmp.lt.s32.totalorder %s13, 2
    // Predicated region
    $region37: #{unet_down.1} parent=5 // pred_check
      %p225 = pneg %p224
    $region38: #{unet_down.1} parent=5 // pred_check_branch
      %227 = sbr.rel (%p225) target = $region40
    $region39: #{unet_down.1} parent=5 // pred_region
      // Predicated region
      $region41: #{unet_down.1} parent=39 // pred_check
        %p228 = pneg %p33
      $region42: #{unet_down.1} parent=39 // pred_check_branch
        %230 = sbr.rel (%p228) target = $region44
      $region43: #{unet_down.1} parent=39 // pred_region
        %p231 = scmp.lt.s32.totalorder %s13, 1
        %s232 = scalar_select %p231, %s13, 1
        %s233 = smul.addr %s232, 54
        %s234 = smul.addr %s233, 4
        %s235 = scalar_lea.vmem %s0, %s234
      $region44: #{unet_down.1} parent=39 // pred_fallthru
        _
    $region40: #{unet_down.1} parent=5 // pred_fallthru
      _
    %p236 = scmp.le.s32.totalorder 1, %s13
    %p237 = scmp.lt.s32.totalorder %s13, 3
    %p238 = pnand %p236, %p237
    %p239 = pneg %p238
    // Predicated region
    $region45: #{unet_down.1} parent=5 // pred_check
      _
    $region46: #{unet_down.1} parent=5 // pred_check_branch
      %241 = sbr.rel (%p238) target = $region48
    $region47: #{unet_down.1} parent=5 // pred_region
      %s242 = ssub.s32 %s13, 1
      %p243 = scmp.lt.s32.totalorder %s18, 1
      %s244 = scalar_select %p243, %s18, 1
      %s245 = smul.addr %s244, 54
      %s246 = smul.addr %s245, 4
      %s247 = scalar_lea.vmem %s0, %s246
      %p248 = pneg %p39
      %p249 = pneg %p36
      %p250 = pneg %p60
      %p251 = pneg %p57
      %p252 = pneg %p81
      %p253 = pneg %p78
      %p254 = pneg %p102
      %p255 = pneg %p99
      %p256 = pneg %p123
      %p257 = pneg %p120
      %p258 = pneg %p144
      %p259 = pneg %p141
      %p260 = pneg %p165
      %p261 = pneg %p162
      %p262 = pneg %p191
      %p263 = pneg %p188
      %p264 = scmp.lt.s32.totalorder %s18, 1
      %s265 = scalar_select %p264, %s18, 1
      %s266 = smul.addr %s265, 8
      %s267 = smul.addr %s266, 8
      %s268 = scalar_lea.vmem %s7, %s267
      %p269 = scmp.lt.s32.totalorder %s18, 1
      %s270 = scalar_select %p269, %s18, 1
      %s271 = smul.addr %s270, 54
      %s272 = smul.addr %s271, 4
      %s273 = scalar_lea.vmem %s0, %s272
      %p274 = scmp.lt.s32.totalorder %s18, 1
      %s275 = scalar_select %p274, %s18, 1
      %s276 = smul.addr %s275, 8
      %s277 = smul.addr %s276, 8
      %s278 = scalar_lea.vmem %s7, %s277
      %v280 = vld [vmem:[%s273] sm:$0xf]
      %v281 = vld [vmem:[%s273 + $0x4] sm:$0xf]
      %v282 = vld [vmem:[%s273 + $0x8] sm:$0xf]
      %v283 = vld [vmem:[%s273 + $0xc] sm:$0xf]
      %v284 = vld [vmem:[%s273 + $0x10] sm:$0xf]
      %v285 = vld [vmem:[%s273 + $0x14] sm:$0xf]
      %v286 = vld [vmem:[%s273 + $0x18] sm:$0xf]
      %v287 = vld [vmem:[%s273 + $0x1c] sm:$0xf]
      %v288 = vld [vmem:[%s273 + $0x20] sm:$0xf]
      %v289 = vld [vmem:[%s273 + $0x24] sm:$0xf]
      %v290 = vld [vmem:[%s273 + $0x28] sm:$0xf]
      %v291 = vld [vmem:[%s273 + $0x2c] sm:$0xf]
      %v292 = vld [vmem:[%s273 + $0x30] sm:$0xf]
      %v293 = vld [vmem:[%s273 + $0x34] sm:$0xf]
      %v294 = vld [vmem:[%s273 + $0x38] sm:$0xf]
      %v295 = vld [vmem:[%s273 + $0x3c] sm:$0xf]
      %v296 = vld [vmem:[%s273 + $0x40] sm:$0xf]
      %v297 = vld [vmem:[%s273 + $0x44] sm:$0xf]
      %v298 = vld [vmem:[%s273 + $0x48] sm:$0xf]
      %v299 = vld [vmem:[%s273 + $0x4c] sm:$0xf]
      %v300 = vld [vmem:[%s273 + $0x50] sm:$0xf]
      %v301 = vld [vmem:[%s273 + $0x54] sm:$0xf]
      %v302 = vld [vmem:[%s273 + $0x58] sm:$0xf]
      %v303 = vld [vmem:[%s273 + $0x5c] sm:$0xf]
      %v304 = vld [vmem:[%s273 + $0x60] sm:$0xf]
      %v305 = vld [vmem:[%s273 + $0x64] sm:$0xf]
      %v306 = vld [vmem:[%s273 + $0x68] sm:$0xf]
      %v307 = vld [vmem:[%s273 + $0x6c] sm:$0xf]
      %v308 = vld [vmem:[%s273 + $0x70] sm:$0xf]
      %v309 = vld [vmem:[%s273 + $0x74] sm:$0xf]
      %v310 = vld [vmem:[%s273 + $0x78] sm:$0xf]
      %v311 = vld [vmem:[%s273 + $0x7c] sm:$0xf]
      %v312 = vld [vmem:[%s273 + $0x80] sm:$0xf]
      %v313 = vld [vmem:[%s273 + $0x84] sm:$0xf]
      %v314 = vld [vmem:[%s273 + $0x88] sm:$0xf]
      %v315 = vld [vmem:[%s273 + $0x8c] sm:$0xf]
      %v316 = vld [vmem:[%s273 + $0x90] sm:$0xf]
      %v317 = vld [vmem:[%s273 + $0x94] sm:$0xf]
      %v318 = vld [vmem:[%s273 + $0x98] sm:$0xf]
      %v319 = vld [vmem:[%s273 + $0x9c] sm:$0xf]
      %v320 = vld [vmem:[%s273 + $0xa0] sm:$0xf]
      %v321 = vld [vmem:[%s273 + $0xa4] sm:$0xf]
      %v322 = vld [vmem:[%s273 + $0xa8] sm:$0xf]
      %v323 = vld [vmem:[%s273 + $0xac] sm:$0xf]
      %v324 = vld [vmem:[%s273 + $0xb0] sm:$0xf]
      %v325 = vld [vmem:[%s273 + $0xb4] sm:$0xf]
      %v326 = vld [vmem:[%s273 + $0xb8] sm:$0xf]
      %v327 = vld [vmem:[%s273 + $0xbc] sm:$0xf]
      %v328 = vld [vmem:[%s273 + $0xc0] sm:$0xf]
      %v329 = vld [vmem:[%s273 + $0xc4] sm:$0xf]
      %v330 = vld [vmem:[%s273 + $0xc8] sm:$0xf]
      %v331 = vld [vmem:[%s273 + $0xcc] sm:$0xf]
      %v332 = vld [vmem:[%s273 + $0xd0] sm:$0xf]
      %v333 = vld [vmem:[%s273 + $0xd4] sm:$0xf]
      %v334 = vunpack.c.l.bf16 %v280
      %v335 = vunpack.c.l.bf16 %v281
      %v336 = vunpack.c.l.bf16 %v282
      %v337 = vunpack.c.l.bf16 %v283
      %v338 = vunpack.c.l.bf16 %v284
      %v339 = vunpack.c.l.bf16 %v285
      %v340 = vunpack.c.l.bf16 %v286
      %v341 = vunpack.c.l.bf16 %v287
      %v342 = vunpack.c.l.bf16 %v288
      %v343 = vunpack.c.l.bf16 %v289
      %v344 = vunpack.c.l.bf16 %v290
      %v345 = vunpack.c.l.bf16 %v291
      %v346 = vunpack.c.l.bf16 %v292
      %v347 = vunpack.c.l.bf16 %v293
      %v348 = vunpack.c.l.bf16 %v294
      %v349 = vunpack.c.l.bf16 %v295
      %v350 = vunpack.c.l.bf16 %v296
      %v351 = vunpack.c.l.bf16 %v297
      %v352 = vunpack.c.l.bf16 %v298
      %v353 = vunpack.c.l.bf16 %v299
      %v354 = vunpack.c.l.bf16 %v300
      %v355 = vunpack.c.l.bf16 %v301
      %v356 = vunpack.c.l.bf16 %v302
      %v357 = vunpack.c.l.bf16 %v303
      %v358 = vunpack.c.l.bf16 %v304
      %v359 = vunpack.c.l.bf16 %v305
      %v360 = vunpack.c.l.bf16 %v306
      %v361 = vunpack.c.l.bf16 %v307
      %v362 = vunpack.c.l.bf16 %v308
      %v363 = vunpack.c.l.bf16 %v309
      %v364 = vunpack.c.l.bf16 %v310
      %v365 = vunpack.c.l.bf16 %v311
      %v366 = vunpack.c.l.bf16 %v312
      %v367 = vunpack.c.l.bf16 %v313
      %v368 = vunpack.c.l.bf16 %v314
      %v369 = vunpack.c.l.bf16 %v315
      %v370 = vunpack.c.l.bf16 %v316
      %v371 = vunpack.c.l.bf16 %v317
      %v372 = vunpack.c.l.bf16 %v318
      %v373 = vunpack.c.l.bf16 %v319
      %v374 = vunpack.c.l.bf16 %v320
      %v375 = vunpack.c.l.bf16 %v321
      %v376 = vunpack.c.l.bf16 %v322
      %v377 = vunpack.c.l.bf16 %v323
      %v378 = vunpack.c.l.bf16 %v324
      %v379 = vunpack.c.l.bf16 %v325
      %v380 = vunpack.c.l.bf16 %v326
      %v381 = vunpack.c.l.bf16 %v327
      %v382 = vunpack.c.l.bf16 %v328
      %v383 = vunpack.c.l.bf16 %v329
      %v384 = vunpack.c.l.bf16 %v330
      %v385 = vunpack.c.l.bf16 %v331
      %v386 = vunpack.c.l.bf16 %v332
      %v387 = vunpack.c.l.bf16 %v333
      %v388 = vld [vmem:[%s5] sm:$0xff]
      %v389 = vld [vmem:[%s5 + $0x8] sm:$0xff]
      %v390 = vld [vmem:[%s5 + $0x10] sm:$0xff]
      %v391 = vld [vmem:[%s5 + $0x18] sm:$0xff]
      %v392 = vld [vmem:[%s5 + $0x20] sm:$0xff]
      %v393 = vld [vmem:[%s5 + $0x28] sm:$0xff]
      %v394 = vld [vmem:[%s5 + $0x30] sm:$0xff]
      %v395 = vld [vmem:[%s5 + $0x38] sm:$0xff]
      %v396 = vld [vmem:[%s5 + $0x40] sm:$0xff]
      %v397 = vld [vmem:[%s5 + $0x48] sm:$0xff]
      %v398 = vld [vmem:[%s5 + $0x50] sm:$0xff]
      %v399 = vld [vmem:[%s5 + $0x58] sm:$0xff]
      %v400 = vld [vmem:[%s5 + $0x60] sm:$0xff]
      %v401 = vld [vmem:[%s5 + $0x68] sm:$0xff]
      %v402 = vld [vmem:[%s5 + $0x70] sm:$0xff]
      %v403 = vld [vmem:[%s5 + $0x78] sm:$0xff]
      %v404 = vld [vmem:[%s1] sm:$0xf]
      %v405 = vld [vmem:[%s1 + $0x4] sm:$0xf]
      %v406 = vld [vmem:[%s1 + $0x8] sm:$0xf]
      %v407 = vld [vmem:[%s1 + $0xc] sm:$0xf]
      %v408 = vld [vmem:[%s1 + $0x10] sm:$0xf]
      %v409 = vld [vmem:[%s1 + $0x14] sm:$0xf]
      %v410 = vld [vmem:[%s1 + $0x18] sm:$0xf]
      %v411 = vld [vmem:[%s1 + $0x1c] sm:$0xf]
      %v412 = vld [vmem:[%s1 + $0x20] sm:$0xf]
      %v413 = vld [vmem:[%s1 + $0x24] sm:$0xf]
      %v414 = vld [vmem:[%s1 + $0x28] sm:$0xf]
      %v415 = vld [vmem:[%s1 + $0x2c] sm:$0xf]
      %v416 = vld [vmem:[%s1 + $0x30] sm:$0xf]
      %v417 = vld [vmem:[%s1 + $0x34] sm:$0xf]
      %v418 = vld [vmem:[%s1 + $0x38] sm:$0xf]
      %v419 = vld [vmem:[%s1 + $0x3c] sm:$0xf]
      %v420 = vld [vmem:[%s3] sm:$0x7]
      %v421 = vlaneseq
      %v422 = vshrl.u32 %v421, 7
      %v423 = vsub.s32 0, %v422
      %v424 = vrot.slane %v420, %v423
      %v479 = vunpack.c.l.b16 %v280
      %v480 = vunpack.c.l.b16 %v281
      %v481 = vunpack.c.l.b16 %v282
      %v482 = vunpack.c.l.b16 %v283
      %v483 = vunpack.c.l.b16 %v284
      %v484 = vunpack.c.l.b16 %v285
      %v485 = vunpack.c.l.b16 %v286
      %v486 = vunpack.c.l.b16 %v287
      %v487 = vunpack.c.l.b16 %v288
      %v488 = vunpack.c.l.b16 %v289
      %v489 = vunpack.c.l.b16 %v290
      %v490 = vunpack.c.l.b16 %v291
      %v491 = vunpack.c.l.b16 %v292
      %v492 = vunpack.c.l.b16 %v293
      %v493 = vunpack.c.l.b16 %v294
      %v494 = vunpack.c.l.b16 %v295
      %v495 = vunpack.c.l.b16 %v296
      %v496 = vunpack.c.l.b16 %v297
      %v497 = vunpack.c.l.b16 %v298
      %v498 = vunpack.c.l.b16 %v299
      %v499 = vunpack.c.l.b16 %v300
      %v500 = vunpack.c.l.b16 %v301
      %v501 = vunpack.c.l.b16 %v302
      %v502 = vunpack.c.l.b16 %v303
      %v503 = vunpack.c.l.b16 %v304
      %v504 = vunpack.c.l.b16 %v305
      %v505 = vunpack.c.l.b16 %v306
      %v506 = vunpack.c.l.b16 %v307
      %v507 = vunpack.c.l.b16 %v308
      %v508 = vunpack.c.l.b16 %v309
      %v509 = vunpack.c.l.b16 %v310
      %v510 = vunpack.c.l.b16 %v311
      %v511 = vunpack.c.l.b16 %v312
      %v512 = vunpack.c.l.b16 %v313
      %v513 = vunpack.c.l.b16 %v314
      %v514 = vunpack.c.l.b16 %v315
      %v515 = vunpack.c.l.b16 %v316
      %v516 = vunpack.c.l.b16 %v317
      %v517 = vunpack.c.l.b16 %v318
      %v518 = vunpack.c.l.b16 %v319
      %v519 = vunpack.c.l.b16 %v320
      %v520 = vunpack.c.l.b16 %v321
      %v521 = vunpack.c.l.b16 %v322
      %v522 = vunpack.c.l.b16 %v323
      %v523 = vunpack.c.l.b16 %v324
      %v524 = vunpack.c.l.b16 %v325
      %v525 = vunpack.c.l.b16 %v326
      %v526 = vunpack.c.l.b16 %v327
      %v527 = vunpack.c.l.b16 %v328
      %v528 = vunpack.c.l.b16 %v329
      %v529 = vunpack.c.l.b16 %v330
      %v530 = vunpack.c.l.b16 %v331
      %v531 = vunpack.c.l.b16 %v332
      %v532 = vunpack.c.l.b16 %v333
      %v533 = vpack.c.b16 %v480, %v479
      %v534 = vpack.c.b16 %v482, %v481
      %v535 = vpack.c.b16 %v484, %v483
      %v536 = vpack.c.b16 %v486, %v485
      %v537 = vpack.c.b16 %v488, %v487
      %v538 = vpack.c.b16 %v490, %v489
      %v539 = vpack.c.b16 %v492, %v491
      %v540 = vpack.c.b16 %v494, %v493
      %v541 = vpack.c.b16 %v496, %v495
      %v542 = vpack.c.b16 %v498, %v497
      %v543 = vpack.c.b16 %v500, %v499
      %v544 = vpack.c.b16 %v502, %v501
      %v545 = vpack.c.b16 %v504, %v503
      %v546 = vpack.c.b16 %v506, %v505
      %v547 = vpack.c.b16 %v508, %v507
      %v548 = vpack.c.b16 %v510, %v509
      %v549 = vpack.c.b16 %v512, %v511
      %v550 = vpack.c.b16 %v514, %v513
      %v551 = vpack.c.b16 %v516, %v515
      %v552 = vpack.c.b16 %v518, %v517
      %v553 = vpack.c.b16 %v520, %v519
      %v554 = vpack.c.b16 %v522, %v521
      %v555 = vpack.c.b16 %v524, %v523
      %v556 = vpack.c.b16 %v526, %v525
      %v557 = vpack.c.b16 %v528, %v527
      %v558 = vpack.c.b16 %v530, %v529
      %v559 = vpack.c.b16 %v532, %v531
      %v603 = vunpack.c.l.b16 %v404
      %v604 = vunpack.c.l.b16 %v405
      %v605 = vunpack.c.l.b16 %v406
      %v606 = vunpack.c.l.b16 %v407
      %v607 = vunpack.c.l.b16 %v408
      %v608 = vunpack.c.l.b16 %v409
      %v609 = vunpack.c.l.b16 %v410
      %v610 = vunpack.c.l.b16 %v411
      %v611 = vunpack.c.l.b16 %v412
      %v612 = vunpack.c.l.b16 %v413
      %v613 = vunpack.c.l.b16 %v414
      %v614 = vunpack.c.l.b16 %v415
      %v615 = vunpack.c.l.b16 %v416
      %v616 = vunpack.c.l.b16 %v417
      %v617 = vunpack.c.l.b16 %v418
      %v618 = vunpack.c.l.b16 %v419
      %v619 = vpack.c.b16 %v604, %v603
      %v620 = vpack.c.b16 %v606, %v605
      %v621 = vpack.c.b16 %v608, %v607
      %v622 = vpack.c.b16 %v610, %v609
      %v623 = vpack.c.b16 %v612, %v611
      %v624 = vpack.c.b16 %v614, %v613
      %v625 = vpack.c.b16 %v616, %v615
      %v626 = vpack.c.b16 %v618, %v617
      %635 = vmatprep.subr.bf16.mxu0 0
      %636 = vmatpush1.bf16.msra.mxu0 %v626
      %637 = vmatprep.subr.bf16.mxu0 0
      %638 = vmatpush1.bf16.msra.mxu0 %v625
      %639 = vmatprep.subr.bf16.mxu0 0
      %640 = vmatpush1.bf16.msra.mxu0 %v624
      %641 = vmatprep.subr.bf16.mxu0 0
      %642 = vmatpush1.bf16.msra.mxu0 %v623
      %643 = vmatprep.subr.bf16.mxu0 0
      %644 = vmatpush1.bf16.msra.mxu0 %v622
      %645 = vmatprep.subr.bf16.mxu0 0
      %646 = vmatpush1.bf16.msra.mxu0 %v621
      %647 = vmatprep.subr.bf16.mxu0 0
      %648 = vmatpush1.bf16.msra.mxu0 %v620
      %649 = vmatprep.subr.bf16.mxu0 0
      %650 = vmatpush1.bf16.msra.mxu0 %v619
      %651 = vmatprep.subr.bf16.mxu0 0
      %652 = vmatpush2.bf16.msra.mxu0 0
      %653 = vmatprep.subr.bf16.mxu0 0
      %654 = vmatpush2.bf16.msra.mxu0 0
      %655 = vmatprep.subr.bf16.mxu0 0
      %656 = vmatpush2.bf16.msra.mxu0 0
      %657 = vmatprep.subr.bf16.mxu0 0
      %658 = vmatpush2.bf16.msra.mxu0 0
      %659 = vmatprep.subr.bf16.mxu0 0
      %660 = vmatpush2.bf16.msra.mxu0 0
      %661 = vmatprep.subr.bf16.mxu0 0
      %662 = vmatpush2.bf16.msra.mxu0 0
      %663 = vmatprep.subr.bf16.mxu0 0
      %664 = vmatpush2.bf16.msra.mxu0 0
      %665 = vmatprep.subr.bf16.mxu0 0
      %666 = vmatpush2.bf16.msra.mxu0 0
      %667 = vmatprep.mubr.bf16.mxu0 0
      %668 = vmatmul.mubr.bf16.gmra.mxu0 %v533
      %v669 = vpop.f32.mrf.mxu0
      %v670 = vadd.f32 %v424, %v669
      %v671 = vpop.f32.mrf.mxu0
      %v672 = vpop.f32.mrf.mxu0
      %v673 = vadd.f32 %v424, %v672
      %v674 = vpop.f32.mrf.mxu0
      %675 = vmatprep.mubr.bf16.mxu0 0
      %676 = vmatmul.mubr.bf16.gmra.mxu0 %v534
      %v677 = vpop.f32.mrf.mxu0
      %v678 = vadd.f32 %v424, %v677
      %v679 = vpop.f32.mrf.mxu0
      %v680 = vpop.f32.mrf.mxu0
      %v681 = vadd.f32 %v424, %v680
      %v682 = vpop.f32.mrf.mxu0
      %683 = vmatprep.mubr.bf16.mxu0 0
      %684 = vmatmul.mubr.bf16.gmra.mxu0 %v535
      %v685 = vpop.f32.mrf.mxu0
      %v686 = vadd.f32 %v424, %v685
      %v687 = vpop.f32.mrf.mxu0
      %v688 = vpop.f32.mrf.mxu0
      %v689 = vadd.f32 %v424, %v688
      %v690 = vpop.f32.mrf.mxu0
      %691 = vmatprep.mubr.bf16.mxu0 0
      %692 = vmatmul.mubr.bf16.gmra.mxu0 %v536
      %v693 = vpop.f32.mrf.mxu0
      %v694 = vadd.f32 %v424, %v693
      %v695 = vpop.f32.mrf.mxu0
      %v696 = vpop.f32.mrf.mxu0
      %v697 = vadd.f32 %v424, %v696
      %v698 = vpop.f32.mrf.mxu0
      %699 = vmatprep.mubr.bf16.mxu0 0
      %700 = vmatmul.mubr.bf16.gmra.mxu0 %v537
      %v701 = vpop.f32.mrf.mxu0
      %v702 = vadd.f32 %v424, %v701
      %v703 = vpop.f32.mrf.mxu0
      %v704 = vpop.f32.mrf.mxu0
      %v705 = vadd.f32 %v424, %v704
      %v706 = vpop.f32.mrf.mxu0
      %707 = vmatprep.mubr.bf16.mxu0 0
      %708 = vmatmul.mubr.bf16.gmra.mxu0 %v538
      %v709 = vpop.f32.mrf.mxu0
      %v710 = vadd.f32 %v424, %v709
      %v711 = vpop.f32.mrf.mxu0
      %v712 = vpop.f32.mrf.mxu0
      %v713 = vadd.f32 %v424, %v712
      %v714 = vpop.f32.mrf.mxu0
      %715 = vmatprep.mubr.bf16.mxu0 0
      %716 = vmatmul.mubr.bf16.gmra.mxu0 %v539
      %v717 = vpop.f32.mrf.mxu0
      %v718 = vadd.f32 %v424, %v717
      %v719 = vpop.f32.mrf.mxu0
      %v720 = vpop.f32.mrf.mxu0
      %v721 = vadd.f32 %v424, %v720
      %v722 = vpop.f32.mrf.mxu0
      %723 = vmatprep.mubr.bf16.mxu0 0
      %724 = vmatmul.mubr.bf16.gmra.mxu0 %v540
      %v725 = vpop.f32.mrf.mxu0
      %v726 = vadd.f32 %v424, %v725
      %v727 = vpop.f32.mrf.mxu0
      %v728 = vpop.f32.mrf.mxu0
      %v729 = vadd.f32 %v424, %v728
      %v730 = vpop.f32.mrf.mxu0
      %731 = vmatprep.mubr.bf16.mxu0 0
      %732 = vmatmul.mubr.bf16.gmra.mxu0 %v541
      %v733 = vpop.f32.mrf.mxu0
      %v734 = vadd.f32 %v424, %v733
      %v735 = vpop.f32.mrf.mxu0
      %v736 = vpop.f32.mrf.mxu0
      %v737 = vadd.f32 %v424, %v736
      %v738 = vpop.f32.mrf.mxu0
      %739 = vmatprep.mubr.bf16.mxu0 0
      %740 = vmatmul.mubr.bf16.gmra.mxu0 %v542
      %v741 = vpop.f32.mrf.mxu0
      %v742 = vadd.f32 %v424, %v741
      %v743 = vpop.f32.mrf.mxu0
      %v744 = vpop.f32.mrf.mxu0
      %v745 = vadd.f32 %v424, %v744
      %v746 = vpop.f32.mrf.mxu0
      %747 = vmatprep.mubr.bf16.mxu0 0
      %748 = vmatmul.mubr.bf16.gmra.mxu0 %v543
      %v749 = vpop.f32.mrf.mxu0
      %v750 = vadd.f32 %v424, %v749
      %v751 = vpop.f32.mrf.mxu0
      %v752 = vpop.f32.mrf.mxu0
      %v753 = vadd.f32 %v424, %v752
      %v754 = vpop.f32.mrf.mxu0
      %755 = vmatprep.mubr.bf16.mxu0 0
      %756 = vmatmul.mubr.bf16.gmra.mxu0 %v544
      %v757 = vpop.f32.mrf.mxu0
      %v758 = vadd.f32 %v424, %v757
      %v759 = vpop.f32.mrf.mxu0
      %v760 = vpop.f32.mrf.mxu0
      %v761 = vadd.f32 %v424, %v760
      %v762 = vpop.f32.mrf.mxu0
      %763 = vmatprep.mubr.bf16.mxu0 0
      %764 = vmatmul.mubr.bf16.gmra.mxu0 %v545
      %v765 = vpop.f32.mrf.mxu0
      %v766 = vadd.f32 %v424, %v765
      %v767 = vpop.f32.mrf.mxu0
      %v768 = vpop.f32.mrf.mxu0
      %v769 = vadd.f32 %v424, %v768
      %v770 = vpop.f32.mrf.mxu0
      %771 = vmatprep.mubr.bf16.mxu0 0
      %772 = vmatmul.mubr.bf16.gmra.mxu0 %v546
      %v773 = vpop.f32.mrf.mxu0
      %v774 = vadd.f32 %v424, %v773
      %v775 = vpop.f32.mrf.mxu0
      %v776 = vpop.f32.mrf.mxu0
      %v777 = vadd.f32 %v424, %v776
      %v778 = vpop.f32.mrf.mxu0
      %779 = vmatprep.mubr.bf16.mxu0 0
      %780 = vmatmul.mubr.bf16.gmra.mxu0 %v547
      %v781 = vpop.f32.mrf.mxu0
      %v782 = vadd.f32 %v424, %v781
      %v783 = vpop.f32.mrf.mxu0
      %v784 = vpop.f32.mrf.mxu0
      %v785 = vadd.f32 %v424, %v784
      %v786 = vpop.f32.mrf.mxu0
      %787 = vmatprep.mubr.bf16.mxu0 0
      %788 = vmatmul.mubr.bf16.gmra.mxu0 %v548
      %v789 = vpop.f32.mrf.mxu0
      %v790 = vadd.f32 %v424, %v789
      %v791 = vpop.f32.mrf.mxu0
      %v792 = vpop.f32.mrf.mxu0
      %v793 = vadd.f32 %v424, %v792
      %v794 = vpop.f32.mrf.mxu0
      %795 = vmatprep.mubr.bf16.mxu0 0
      %796 = vmatmul.mubr.bf16.gmra.mxu0 %v549
      %v797 = vpop.f32.mrf.mxu0
      %v798 = vadd.f32 %v424, %v797
      %v799 = vpop.f32.mrf.mxu0
      %v800 = vpop.f32.mrf.mxu0
      %v801 = vadd.f32 %v424, %v800
      %v802 = vpop.f32.mrf.mxu0
      %803 = vmatprep.mubr.bf16.mxu0 0
      %804 = vmatmul.mubr.bf16.gmra.mxu0 %v550
      %v805 = vpop.f32.mrf.mxu0
      %v806 = vadd.f32 %v424, %v805
      %v807 = vpop.f32.mrf.mxu0
      %v808 = vpop.f32.mrf.mxu0
      %v809 = vadd.f32 %v424, %v808
      %v810 = vpop.f32.mrf.mxu0
      %811 = vmatprep.mubr.bf16.mxu0 0
      %812 = vmatmul.mubr.bf16.gmra.mxu0 %v551
      %v813 = vpop.f32.mrf.mxu0
      %v814 = vadd.f32 %v424, %v813
      %v815 = vpop.f32.mrf.mxu0
      %v816 = vpop.f32.mrf.mxu0
      %v817 = vadd.f32 %v424, %v816
      %v818 = vpop.f32.mrf.mxu0
      %819 = vmatprep.mubr.bf16.mxu0 0
      %820 = vmatmul.mubr.bf16.gmra.mxu0 %v552
      %v821 = vpop.f32.mrf.mxu0
      %v822 = vadd.f32 %v424, %v821
      %v823 = vpop.f32.mrf.mxu0
      %v824 = vpop.f32.mrf.mxu0
      %v825 = vadd.f32 %v424, %v824
      %v826 = vpop.f32.mrf.mxu0
      %827 = vmatprep.mubr.bf16.mxu0 0
      %828 = vmatmul.mubr.bf16.gmra.mxu0 %v553
      %v829 = vpop.f32.mrf.mxu0
      %v830 = vadd.f32 %v424, %v829
      %v831 = vpop.f32.mrf.mxu0
      %v832 = vpop.f32.mrf.mxu0
      %v833 = vadd.f32 %v424, %v832
      %v834 = vpop.f32.mrf.mxu0
      %835 = vmatprep.mubr.bf16.mxu0 0
      %836 = vmatmul.mubr.bf16.gmra.mxu0 %v554
      %v837 = vpop.f32.mrf.mxu0
      %v838 = vadd.f32 %v424, %v837
      %v839 = vpop.f32.mrf.mxu0
      %v840 = vpop.f32.mrf.mxu0
      %v841 = vadd.f32 %v424, %v840
      %v842 = vpop.f32.mrf.mxu0
      %843 = vmatprep.mubr.bf16.mxu0 0
      %844 = vmatmul.mubr.bf16.gmra.mxu0 %v555
      %v845 = vpop.f32.mrf.mxu0
      %v846 = vadd.f32 %v424, %v845
      %v847 = vpop.f32.mrf.mxu0
      %v848 = vpop.f32.mrf.mxu0
      %v849 = vadd.f32 %v424, %v848
      %v850 = vpop.f32.mrf.mxu0
      %851 = vmatprep.mubr.bf16.mxu0 0
      %852 = vmatmul.mubr.bf16.gmra.mxu0 %v556
      %v853 = vpop.f32.mrf.mxu0
      %v854 = vadd.f32 %v424, %v853
      %v855 = vpop.f32.mrf.mxu0
      %v856 = vpop.f32.mrf.mxu0
      %v857 = vadd.f32 %v424, %v856
      %v858 = vpop.f32.mrf.mxu0
      %859 = vmatprep.mubr.bf16.mxu0 0
      %860 = vmatmul.mubr.bf16.gmra.mxu0 %v557
      %v861 = vpop.f32.mrf.mxu0
      %v862 = vadd.f32 %v424, %v861
      %v863 = vpop.f32.mrf.mxu0
      %v864 = vpop.f32.mrf.mxu0
      %v865 = vadd.f32 %v424, %v864
      %v866 = vpop.f32.mrf.mxu0
      %867 = vmatprep.mubr.bf16.mxu0 0
      %868 = vmatmul.mubr.bf16.gmra.mxu0 %v558
      %v869 = vpop.f32.mrf.mxu0
      %v870 = vadd.f32 %v424, %v869
      %v871 = vpop.f32.mrf.mxu0
      %v872 = vpop.f32.mrf.mxu0
      %v873 = vadd.f32 %v424, %v872
      %v874 = vpop.f32.mrf.mxu0
      %875 = vmatprep.mubr.bf16.mxu0 0
      %876 = vmatmul.mubr.bf16.gmra.mxu0 %v559
      %v877 = vpop.f32.mrf.mxu0
      %v878 = vadd.f32 %v424, %v877
      %v879 = vpop.f32.mrf.mxu0
      %v880 = vpop.f32.mrf.mxu0
      %v881 = vadd.f32 %v424, %v880
      %v882 = vpop.f32.mrf.mxu0
      %883 = vdwg.mxu0
      %885 = vset.pattern.permute.xlu0 36
      %886 = vperm.xlu0 %885, %v334
      %v887 = vpop.permute.xlu0 %886
      %890 = vset.pattern.permute.xlu0 36
      %891 = vperm.xlu0 %890, %v335
      %v892 = vpop.permute.xlu0 %891
      %895 = vset.pattern.permute.xlu0 36
      %896 = vperm.xlu0 %895, %v336
      %v897 = vpop.permute.xlu0 %896
      %900 = vset.pattern.permute.xlu0 36
      %901 = vperm.xlu0 %900, %v337
      %v902 = vpop.permute.xlu0 %901
      %905 = vset.pattern.permute.xlu0 36
      %906 = vperm.xlu0 %905, %v338
      %v907 = vpop.permute.xlu0 %906
      %910 = vset.pattern.permute.xlu0 36
      %911 = vperm.xlu0 %910, %v339
      %v912 = vpop.permute.xlu0 %911
      %915 = vset.pattern.permute.xlu0 36
      %916 = vperm.xlu0 %915, %v340
      %v917 = vpop.permute.xlu0 %916
      %920 = vset.pattern.permute.xlu0 36
      %921 = vperm.xlu0 %920, %v341
      %v922 = vpop.permute.xlu0 %921
      %925 = vset.pattern.permute.xlu0 36
      %926 = vperm.xlu0 %925, %v342
      %v927 = vpop.permute.xlu0 %926
      %930 = vset.pattern.permute.xlu0 36
      %931 = vperm.xlu0 %930, %v343
      %v932 = vpop.permute.xlu0 %931
      %935 = vset.pattern.permute.xlu0 36
      %936 = vperm.xlu0 %935, %v344
      %v937 = vpop.permute.xlu0 %936
      %940 = vset.pattern.permute.xlu0 36
      %941 = vperm.xlu0 %940, %v345
      %v942 = vpop.permute.xlu0 %941
      %945 = vset.pattern.permute.xlu0 36
      %946 = vperm.xlu0 %945, %v346
      %v947 = vpop.permute.xlu0 %946
      %950 = vset.pattern.permute.xlu0 36
      %951 = vperm.xlu0 %950, %v347
      %v952 = vpop.permute.xlu0 %951
      %955 = vset.pattern.permute.xlu0 36
      %956 = vperm.xlu0 %955, %v348
      %v957 = vpop.permute.xlu0 %956
      %960 = vset.pattern.permute.xlu0 36
      %961 = vperm.xlu0 %960, %v349
      %v962 = vpop.permute.xlu0 %961
      %965 = vset.pattern.permute.xlu0 36
      %966 = vperm.xlu0 %965, %v350
      %v967 = vpop.permute.xlu0 %966
      %970 = vset.pattern.permute.xlu0 36
      %971 = vperm.xlu0 %970, %v351
      %v972 = vpop.permute.xlu0 %971
      %975 = vset.pattern.permute.xlu0 36
      %976 = vperm.xlu0 %975, %v352
      %v977 = vpop.permute.xlu0 %976
      %980 = vset.pattern.permute.xlu0 36
      %981 = vperm.xlu0 %980, %v353
      %v982 = vpop.permute.xlu0 %981
      %985 = vset.pattern.permute.xlu0 36
      %986 = vperm.xlu0 %985, %v354
      %v987 = vpop.permute.xlu0 %986
      %990 = vset.pattern.permute.xlu0 36
      %991 = vperm.xlu0 %990, %v355
      %v992 = vpop.permute.xlu0 %991
      %995 = vset.pattern.permute.xlu0 36
      %996 = vperm.xlu0 %995, %v356
      %v997 = vpop.permute.xlu0 %996
      %1000 = vset.pattern.permute.xlu0 36
      %1001 = vperm.xlu0 %1000, %v357
      %v1002 = vpop.permute.xlu0 %1001
      %1005 = vset.pattern.permute.xlu0 36
      %1006 = vperm.xlu0 %1005, %v358
      %v1007 = vpop.permute.xlu0 %1006
      %1010 = vset.pattern.permute.xlu0 36
      %1011 = vperm.xlu0 %1010, %v359
      %v1012 = vpop.permute.xlu0 %1011
      %1015 = vset.pattern.permute.xlu0 36
      %1016 = vperm.xlu0 %1015, %v360
      %v1017 = vpop.permute.xlu0 %1016
      %1020 = vset.pattern.permute.xlu0 36
      %1021 = vperm.xlu0 %1020, %v361
      %v1022 = vpop.permute.xlu0 %1021
      %1025 = vset.pattern.permute.xlu0 36
      %1026 = vperm.xlu0 %1025, %v362
      %v1027 = vpop.permute.xlu0 %1026
      %1030 = vset.pattern.permute.xlu0 36
      %1031 = vperm.xlu0 %1030, %v363
      %v1032 = vpop.permute.xlu0 %1031
      %1035 = vset.pattern.permute.xlu0 36
      %1036 = vperm.xlu0 %1035, %v364
      %v1037 = vpop.permute.xlu0 %1036
      %1040 = vset.pattern.permute.xlu0 36
      %1041 = vperm.xlu0 %1040, %v365
      %v1042 = vpop.permute.xlu0 %1041
      %1045 = vset.pattern.permute.xlu0 36
      %1046 = vperm.xlu0 %1045, %v366
      %v1047 = vpop.permute.xlu0 %1046
      %1050 = vset.pattern.permute.xlu0 36
      %1051 = vperm.xlu0 %1050, %v367
      %v1052 = vpop.permute.xlu0 %1051
      %1055 = vset.pattern.permute.xlu0 36
      %1056 = vperm.xlu0 %1055, %v368
      %v1057 = vpop.permute.xlu0 %1056
      %1060 = vset.pattern.permute.xlu0 36
      %1061 = vperm.xlu0 %1060, %v369
      %v1062 = vpop.permute.xlu0 %1061
      %1065 = vset.pattern.permute.xlu0 36
      %1066 = vperm.xlu0 %1065, %v370
      %v1067 = vpop.permute.xlu0 %1066
      %1070 = vset.pattern.permute.xlu0 36
      %1071 = vperm.xlu0 %1070, %v371
      %v1072 = vpop.permute.xlu0 %1071
      %1075 = vset.pattern.permute.xlu0 36
      %1076 = vperm.xlu0 %1075, %v372
      %v1077 = vpop.permute.xlu0 %1076
      %1080 = vset.pattern.permute.xlu0 36
      %1081 = vperm.xlu0 %1080, %v373
      %v1082 = vpop.permute.xlu0 %1081
      %1085 = vset.pattern.permute.xlu0 36
      %1086 = vperm.xlu0 %1085, %v374
      %v1087 = vpop.permute.xlu0 %1086
      %1090 = vset.pattern.permute.xlu0 36
      %1091 = vperm.xlu0 %1090, %v375
      %v1092 = vpop.permute.xlu0 %1091
      %1095 = vset.pattern.permute.xlu0 36
      %1096 = vperm.xlu0 %1095, %v376
      %v1097 = vpop.permute.xlu0 %1096
      %1100 = vset.pattern.permute.xlu0 36
      %1101 = vperm.xlu0 %1100, %v377
      %v1102 = vpop.permute.xlu0 %1101
      %1105 = vset.pattern.permute.xlu0 36
      %1106 = vperm.xlu0 %1105, %v378
      %v1107 = vpop.permute.xlu0 %1106
      %1110 = vset.pattern.permute.xlu0 36
      %1111 = vperm.xlu0 %1110, %v379
      %v1112 = vpop.permute.xlu0 %1111
      %1115 = vset.pattern.permute.xlu0 36
      %1116 = vperm.xlu0 %1115, %v380
      %v1117 = vpop.permute.xlu0 %1116
      %1120 = vset.pattern.permute.xlu0 36
      %1121 = vperm.xlu0 %1120, %v381
      %v1122 = vpop.permute.xlu0 %1121
      %1125 = vset.pattern.permute.xlu0 36
      %1126 = vperm.xlu0 %1125, %v382
      %v1127 = vpop.permute.xlu0 %1126
      %1130 = vset.pattern.permute.xlu0 36
      %1131 = vperm.xlu0 %1130, %v383
      %v1132 = vpop.permute.xlu0 %1131
      %1135 = vset.pattern.permute.xlu0 36
      %1136 = vperm.xlu0 %1135, %v384
      %v1137 = vpop.permute.xlu0 %1136
      %1140 = vset.pattern.permute.xlu0 36
      %1141 = vperm.xlu0 %1140, %v385
      %v1142 = vpop.permute.xlu0 %1141
      %1145 = vset.pattern.permute.xlu0 36
      %1146 = vperm.xlu0 %1145, %v386
      %v1147 = vpop.permute.xlu0 %1146
      %1150 = vset.pattern.permute.xlu0 36
      %1151 = vperm.xlu0 %1150, %v387
      %v1152 = vpop.permute.xlu0 %1151
      %v1154 = vmul.f32 %v670, %v887
      %v1155 = vmul.f32 %v673, %v892
      %v1156 = vmul.f32 %v678, %v897
      %v1157 = vmul.f32 %v681, %v902
      %v1158 = vmul.f32 %v686, %v907
      %v1159 = vmul.f32 %v689, %v912
      %v1160 = vmul.f32 %v694, %v917
      %v1161 = vmul.f32 %v697, %v922
      %v1162 = vmul.f32 %v702, %v927
      %v1163 = vmul.f32 %v705, %v932
      %v1164 = vmul.f32 %v710, %v937
      %v1165 = vmul.f32 %v713, %v942
      %v1166 = vmul.f32 %v718, %v947
      %v1167 = vmul.f32 %v721, %v952
      %v1168 = vmul.f32 %v726, %v957
      %v1169 = vmul.f32 %v729, %v962
      %v1170 = vmul.f32 %v734, %v967
      %v1171 = vmul.f32 %v737, %v972
      %v1172 = vmul.f32 %v742, %v977
      %v1173 = vmul.f32 %v745, %v982
      %v1174 = vmul.f32 %v750, %v987
      %v1175 = vmul.f32 %v753, %v992
      %v1176 = vmul.f32 %v758, %v997
      %v1177 = vmul.f32 %v761, %v1002
      %v1178 = vmul.f32 %v766, %v1007
      %v1179 = vmul.f32 %v769, %v1012
      %v1180 = vmul.f32 %v774, %v1017
      %v1181 = vmul.f32 %v777, %v1022
      %v1182 = vmul.f32 %v782, %v1027
      %v1183 = vmul.f32 %v785, %v1032
      %v1184 = vmul.f32 %v790, %v1037
      %v1185 = vmul.f32 %v793, %v1042
      %v1186 = vmul.f32 %v798, %v1047
      %v1187 = vmul.f32 %v801, %v1052
      %v1188 = vmul.f32 %v806, %v1057
      %v1189 = vmul.f32 %v809, %v1062
      %v1190 = vmul.f32 %v814, %v1067
      %v1191 = vmul.f32 %v817, %v1072
      %v1192 = vmul.f32 %v822, %v1077
      %v1193 = vmul.f32 %v825, %v1082
      %v1194 = vmul.f32 %v830, %v1087
      %v1195 = vmul.f32 %v833, %v1092
      %v1196 = vmul.f32 %v838, %v1097
      %v1197 = vmul.f32 %v841, %v1102
      %v1198 = vmul.f32 %v846, %v1107
      %v1199 = vmul.f32 %v849, %v1112
      %v1200 = vmul.f32 %v854, %v1117
      %v1201 = vmul.f32 %v857, %v1122
      %v1202 = vmul.f32 %v862, %v1127
      %v1203 = vmul.f32 %v865, %v1132
      %v1204 = vmul.f32 %v870, %v1137
      %v1205 = vmul.f32 %v873, %v1142
      %v1206 = vmul.f32 %v878, %v1147
      %v1207 = vmul.f32 %v881, %v1152
      %v1208 = vadd.f32 %v1154, %v1155
      %v1209 = vadd.f32 %v1208, %v1156
      %v1210 = vadd.f32 %v1209, %v1157
      %v1211 = vadd.f32 %v1210, %v1158
      %v1212 = vadd.f32 %v1211, %v1159
      %v1213 = vadd.f32 %v1212, %v1160
      %v1214 = vadd.f32 %v1213, %v1161
      %v1215 = vadd.f32 %v1214, %v1162
      %v1216 = vadd.f32 %v1215, %v1163
      %v1217 = vadd.f32 %v1216, %v1164
      %v1218 = vadd.f32 %v1217, %v1165
      %v1219 = vadd.f32 %v1218, %v1166
      %v1220 = vadd.f32 %v1219, %v1167
      %v1221 = vadd.f32 %v1220, %v1168
      %v1222 = vadd.f32 %v1221, %v1169
      %v1223 = vadd.f32 %v1222, %v1170
      %v1224 = vadd.f32 %v1223, %v1171
      %v1225 = vadd.f32 %v1224, %v1172
      %v1226 = vadd.f32 %v1225, %v1173
      %v1227 = vadd.f32 %v1226, %v1174
      %v1228 = vadd.f32 %v1227, %v1175
      %v1229 = vadd.f32 %v1228, %v1176
      %v1230 = vadd.f32 %v1229, %v1177
      %v1231 = vadd.f32 %v1230, %v1178
      %v1232 = vadd.f32 %v1231, %v1179
      %v1233 = vadd.f32 %v1232, %v1180
      %v1234 = vadd.f32 %v1233, %v1181
      %v1235 = vadd.f32 %v1234, %v1182
      %v1236 = vadd.f32 %v1235, %v1183
      %v1237 = vadd.f32 %v1236, %v1184
      %v1238 = vadd.f32 %v1237, %v1185
      %v1239 = vadd.f32 %v1238, %v1186
      %v1240 = vadd.f32 %v1239, %v1187
      %v1241 = vadd.f32 %v1240, %v1188
      %v1242 = vadd.f32 %v1241, %v1189
      %v1243 = vadd.f32 %v1242, %v1190
      %v1244 = vadd.f32 %v1243, %v1191
      %v1245 = vadd.f32 %v1244, %v1192
      %v1246 = vadd.f32 %v1245, %v1193
      %v1247 = vadd.f32 %v1246, %v1194
      %v1248 = vadd.f32 %v1247, %v1195
      %v1249 = vadd.f32 %v1248, %v1196
      %v1250 = vadd.f32 %v1249, %v1197
      %v1251 = vadd.f32 %v1250, %v1198
      %v1252 = vadd.f32 %v1251, %v1199
      %v1253 = vadd.f32 %v1252, %v1200
      %v1254 = vadd.f32 %v1253, %v1201
      %v1255 = vadd.f32 %v1254, %v1202
      %v1256 = vadd.f32 %v1255, %v1203
      %v1257 = vadd.f32 %v1256, %v1204
      %v1258 = vadd.f32 %v1257, %v1205
      %v1259 = vadd.f32 %v1258, %v1206
      %v1260 = vadd.f32 %v1259, %v1207
      %v1261 = vrot.slane %v1260, 4
      %v1262 = vadd.f32 %v1260, %v1261
      %v1263 = vrot.slane %v1262, 2
      %v1264 = vadd.f32 %v1262, %v1263
      %v1265 = vrot.slane %v1264, 1
      %v1266 = vadd.f32 %v1264, %v1265
      %v1267 = vmul.f32 %v1154, %v670
      %v1268 = vmul.f32 %v1155, %v673
      %v1269 = vmul.f32 %v1156, %v678
      %v1270 = vmul.f32 %v1157, %v681
      %v1271 = vmul.f32 %v1158, %v686
      %v1272 = vmul.f32 %v1159, %v689
      %v1273 = vmul.f32 %v1160, %v694
      %v1274 = vmul.f32 %v1161, %v697
      %v1275 = vmul.f32 %v1162, %v702
      %v1276 = vmul.f32 %v1163, %v705
      %v1277 = vmul.f32 %v1164, %v710
      %v1278 = vmul.f32 %v1165, %v713
      %v1279 = vmul.f32 %v1166, %v718
      %v1280 = vmul.f32 %v1167, %v721
      %v1281 = vmul.f32 %v1168, %v726
      %v1282 = vmul.f32 %v1169, %v729
      %v1283 = vmul.f32 %v1170, %v734
      %v1284 = vmul.f32 %v1171, %v737
      %v1285 = vmul.f32 %v1172, %v742
      %v1286 = vmul.f32 %v1173, %v745
      %v1287 = vmul.f32 %v1174, %v750
      %v1288 = vmul.f32 %v1175, %v753
      %v1289 = vmul.f32 %v1176, %v758
      %v1290 = vmul.f32 %v1177, %v761
      %v1291 = vmul.f32 %v1178, %v766
      %v1292 = vmul.f32 %v1179, %v769
      %v1293 = vmul.f32 %v1180, %v774
      %v1294 = vmul.f32 %v1181, %v777
      %v1295 = vmul.f32 %v1182, %v782
      %v1296 = vmul.f32 %v1183, %v785
      %v1297 = vmul.f32 %v1184, %v790
      %v1298 = vmul.f32 %v1185, %v793
      %v1299 = vmul.f32 %v1186, %v798
      %v1300 = vmul.f32 %v1187, %v801
      %v1301 = vmul.f32 %v1188, %v806
      %v1302 = vmul.f32 %v1189, %v809
      %v1303 = vmul.f32 %v1190, %v814
      %v1304 = vmul.f32 %v1191, %v817
      %v1305 = vmul.f32 %v1192, %v822
      %v1306 = vmul.f32 %v1193, %v825
      %v1307 = vmul.f32 %v1194, %v830
      %v1308 = vmul.f32 %v1195, %v833
      %v1309 = vmul.f32 %v1196, %v838
      %v1310 = vmul.f32 %v1197, %v841
      %v1311 = vmul.f32 %v1198, %v846
      %v1312 = vmul.f32 %v1199, %v849
      %v1313 = vmul.f32 %v1200, %v854
      %v1314 = vmul.f32 %v1201, %v857
      %v1315 = vmul.f32 %v1202, %v862
      %v1316 = vmul.f32 %v1203, %v865
      %v1317 = vmul.f32 %v1204, %v870
      %v1318 = vmul.f32 %v1205, %v873
      %v1319 = vmul.f32 %v1206, %v878
      %v1320 = vmul.f32 %v1207, %v881
      %v1321 = vadd.f32 %v1267, %v1268
      %v1322 = vadd.f32 %v1321, %v1269
      %v1323 = vadd.f32 %v1322, %v1270
      %v1324 = vadd.f32 %v1323, %v1271
      %v1325 = vadd.f32 %v1324, %v1272
      %v1326 = vadd.f32 %v1325, %v1273
      %v1327 = vadd.f32 %v1326, %v1274
      %v1328 = vadd.f32 %v1327, %v1275
      %v1329 = vadd.f32 %v1328, %v1276
      %v1330 = vadd.f32 %v1329, %v1277
      %v1331 = vadd.f32 %v1330, %v1278
      %v1332 = vadd.f32 %v1331, %v1279
      %v1333 = vadd.f32 %v1332, %v1280
      %v1334 = vadd.f32 %v1333, %v1281
      %v1335 = vadd.f32 %v1334, %v1282
      %v1336 = vadd.f32 %v1335, %v1283
      %v1337 = vadd.f32 %v1336, %v1284
      %v1338 = vadd.f32 %v1337, %v1285
      %v1339 = vadd.f32 %v1338, %v1286
      %v1340 = vadd.f32 %v1339, %v1287
      %v1341 = vadd.f32 %v1340, %v1288
      %v1342 = vadd.f32 %v1341, %v1289
      %v1343 = vadd.f32 %v1342, %v1290
      %v1344 = vadd.f32 %v1343, %v1291
      %v1345 = vadd.f32 %v1344, %v1292
      %v1346 = vadd.f32 %v1345, %v1293
      %v1347 = vadd.f32 %v1346, %v1294
      %v1348 = vadd.f32 %v1347, %v1295
      %v1349 = vadd.f32 %v1348, %v1296
      %v1350 = vadd.f32 %v1349, %v1297
      %v1351 = vadd.f32 %v1350, %v1298
      %v1352 = vadd.f32 %v1351, %v1299
      %v1353 = vadd.f32 %v1352, %v1300
      %v1354 = vadd.f32 %v1353, %v1301
      %v1355 = vadd.f32 %v1354, %v1302
      %v1356 = vadd.f32 %v1355, %v1303
      %v1357 = vadd.f32 %v1356, %v1304
      %v1358 = vadd.f32 %v1357, %v1305
      %v1359 = vadd.f32 %v1358, %v1306
      %v1360 = vadd.f32 %v1359, %v1307
      %v1361 = vadd.f32 %v1360, %v1308
      %v1362 = vadd.f32 %v1361, %v1309
      %v1363 = vadd.f32 %v1362, %v1310
      %v1364 = vadd.f32 %v1363, %v1311
      %v1365 = vadd.f32 %v1364, %v1312
      %v1366 = vadd.f32 %v1365, %v1313
      %v1367 = vadd.f32 %v1366, %v1314
      %v1368 = vadd.f32 %v1367, %v1315
      %v1369 = vadd.f32 %v1368, %v1316
      %v1370 = vadd.f32 %v1369, %v1317
      %v1371 = vadd.f32 %v1370, %v1318
      %v1372 = vadd.f32 %v1371, %v1319
      %v1373 = vadd.f32 %v1372, %v1320
      %v1374 = vrot.slane %v1373, 4
      %v1375 = vadd.f32 %v1373, %v1374
      %v1376 = vrot.slane %v1375, 2
      %v1377 = vadd.f32 %v1375, %v1376
      %v1378 = vrot.slane %v1377, 1
      %v1379 = vadd.f32 %v1377, %v1378
      %vm1380 = vcmask 1040384
      %v1381 = vsel %vm1380, %v1266, %v1379
      %1382 = vmatprep.subr.mxu0 0.0
      %1383 = vmatpush1.msra.mxu0 %v403
      %1384 = vmatprep.subr.mxu0 0.0
      %1385 = vmatpush1.msra.mxu0 %v402
      %1386 = vmatprep.subr.mxu0 0.0
      %1387 = vmatpush1.msra.mxu0 %v401
      %1388 = vmatprep.subr.mxu0 0.0
      %1389 = vmatpush1.msra.mxu0 %v400
      %1390 = vmatprep.subr.mxu0 0.0
      %1391 = vmatpush1.msra.mxu0 %v399
      %1392 = vmatprep.subr.mxu0 0.0
      %1393 = vmatpush1.msra.mxu0 %v398
      %1394 = vmatprep.subr.mxu0 0.0
      %1395 = vmatpush1.msra.mxu0 %v397
      %1396 = vmatprep.subr.mxu0 0.0
      %1397 = vmatpush1.msra.mxu0 %v396
      %1398 = vmatprep.subr.mxu0 0.0
      %1399 = vmatpush1.msra.mxu0 %v395
      %1400 = vmatprep.subr.mxu0 0.0
      %1401 = vmatpush1.msra.mxu0 %v394
      %1402 = vmatprep.subr.mxu0 0.0
      %1403 = vmatpush1.msra.mxu0 %v393
      %1404 = vmatprep.subr.mxu0 0.0
      %1405 = vmatpush1.msra.mxu0 %v392
      %1406 = vmatprep.subr.mxu0 0.0
      %1407 = vmatpush1.msra.mxu0 %v391
      %1408 = vmatprep.subr.mxu0 0.0
      %1409 = vmatpush1.msra.mxu0 %v390
      %1410 = vmatprep.subr.mxu0 0.0
      %1411 = vmatpush1.msra.mxu0 %v389
      %1412 = vmatprep.subr.mxu0 0.0
      %1413 = vmatpush1.msra.mxu0 %v388
      %1414 = vmatprep.subr.mxu0 0.0
      %1415 = vmatpush2.msra.mxu0 0.0
      %1416 = vmatprep.subr.mxu0 0.0
      %1417 = vmatpush2.msra.mxu0 0.0
      %1418 = vmatprep.subr.mxu0 0.0
      %1419 = vmatpush2.msra.mxu0 0.0
      %1420 = vmatprep.subr.mxu0 0.0
      %1421 = vmatpush2.msra.mxu0 0.0
      %1422 = vmatprep.subr.mxu0 0.0
      %1423 = vmatpush2.msra.mxu0 0.0
      %1424 = vmatprep.subr.mxu0 0.0
      %1425 = vmatpush2.msra.mxu0 0.0
      %1426 = vmatprep.subr.mxu0 0.0
      %1427 = vmatpush2.msra.mxu0 0.0
      %1428 = vmatprep.subr.mxu0 0.0
      %1429 = vmatpush2.msra.mxu0 0.0
      %1430 = vmatprep.subr.mxu0 0.0
      %1431 = vmatpush2.msra.mxu0 0.0
      %1432 = vmatprep.subr.mxu0 0.0
      %1433 = vmatpush2.msra.mxu0 0.0
      %1434 = vmatprep.subr.mxu0 0.0
      %1435 = vmatpush2.msra.mxu0 0.0
      %1436 = vmatprep.subr.mxu0 0.0
      %1437 = vmatpush2.msra.mxu0 0.0
      %1438 = vmatprep.subr.mxu0 0.0
      %1439 = vmatpush2.msra.mxu0 0.0
      %1440 = vmatprep.subr.mxu0 0.0
      %1441 = vmatpush2.msra.mxu0 0.0
      %1442 = vmatprep.subr.mxu0 0.0
      %1443 = vmatpush2.msra.mxu0 0.0
      %1444 = vmatprep.subr.mxu0 0.0
      %1445 = vmatpush2.msra.mxu0 0.0
      %1446 = vmatprep.mubr.f32.mxu0 0.0
      %1447 = vmatmul.mubr.f32.gmra.mxu0 %v1381
      %v1448 = vpop.f32.mrf.mxu0
      %v1449 = vadd.f32 0.0, %v1448
      %v1450 = vpop.f32.mrf.mxu0
      %1451 = vdwg.mxu0
      %v1452 = vmul.f32 %v1449, 0.001953125
      %v1453 = vmul.f32 %v1452, %v1452
      %v1455 = vrot.slane %v1453, 7
      %v1457 = vsub.f32 %v1452, %v1455
      %v1458 = vadd.f32 %v1457, 1e-05
      %v1459 = vrsqrt.pop %v1458
      %v1460 = vlaneseq
      %v1461 = vshrl.u32 %v1460, 7
      %v1462 = vsub.s32 0, %v1461
      %v1463 = vrot.slane %v1452, %v1462
      %v1464 = vsub.f32 %v670, %v1463
      %v1465 = vsub.f32 %v673, %v1463
      %v1466 = vsub.f32 %v678, %v1463
      %v1467 = vsub.f32 %v681, %v1463
      %v1468 = vsub.f32 %v686, %v1463
      %v1469 = vsub.f32 %v689, %v1463
      %v1470 = vsub.f32 %v694, %v1463
      %v1471 = vsub.f32 %v697, %v1463
      %v1472 = vsub.f32 %v702, %v1463
      %v1473 = vsub.f32 %v705, %v1463
      %v1474 = vsub.f32 %v710, %v1463
      %v1475 = vsub.f32 %v713, %v1463
      %v1476 = vsub.f32 %v718, %v1463
      %v1477 = vsub.f32 %v721, %v1463
      %v1478 = vsub.f32 %v726, %v1463
      %v1479 = vsub.f32 %v729, %v1463
      %v1480 = vsub.f32 %v734, %v1463
      %v1481 = vsub.f32 %v737, %v1463
      %v1482 = vsub.f32 %v742, %v1463
      %v1483 = vsub.f32 %v745, %v1463
      %v1484 = vsub.f32 %v750, %v1463
      %v1485 = vsub.f32 %v753, %v1463
      %v1486 = vsub.f32 %v758, %v1463
      %v1487 = vsub.f32 %v761, %v1463
      %v1488 = vsub.f32 %v766, %v1463
      %v1489 = vsub.f32 %v769, %v1463
      %v1490 = vsub.f32 %v774, %v1463
      %v1491 = vsub.f32 %v777, %v1463
      %v1492 = vsub.f32 %v782, %v1463
      %v1493 = vsub.f32 %v785, %v1463
      %v1494 = vsub.f32 %v790, %v1463
      %v1495 = vsub.f32 %v793, %v1463
      %v1496 = vsub.f32 %v798, %v1463
      %v1497 = vsub.f32 %v801, %v1463
      %v1498 = vsub.f32 %v806, %v1463
      %v1499 = vsub.f32 %v809, %v1463
      %v1500 = vsub.f32 %v814, %v1463
      %v1501 = vsub.f32 %v817, %v1463
      %v1502 = vsub.f32 %v822, %v1463
      %v1503 = vsub.f32 %v825, %v1463
      %v1504 = vsub.f32 %v830, %v1463
      %v1505 = vsub.f32 %v833, %v1463
      %v1506 = vsub.f32 %v838, %v1463
      %v1507 = vsub.f32 %v841, %v1463
      %v1508 = vsub.f32 %v846, %v1463
      %v1509 = vsub.f32 %v849, %v1463
      %v1510 = vsub.f32 %v854, %v1463
      %v1511 = vsub.f32 %v857, %v1463
      %v1512 = vsub.f32 %v862, %v1463
      %v1513 = vsub.f32 %v865, %v1463
      %v1514 = vsub.f32 %v870, %v1463
      %v1515 = vsub.f32 %v873, %v1463
      %v1516 = vsub.f32 %v878, %v1463
      %v1517 = vsub.f32 %v881, %v1463
      %v1518 = vmul.f32 %v1459, %v420
      %v1519 = vlaneseq
      %v1520 = vshrl.u32 %v1519, 7
      %v1521 = vsub.s32 1, %v1520
      %v1522 = vrot.slane %v1518, %v1521
      %v1523 = vmul.f32 %v1464, %v1522
      %v1524 = vmul.f32 %v1465, %v1522
      %v1525 = vmul.f32 %v1466, %v1522
      %v1526 = vmul.f32 %v1467, %v1522
      %v1527 = vmul.f32 %v1468, %v1522
      %v1528 = vmul.f32 %v1469, %v1522
      %v1529 = vmul.f32 %v1470, %v1522
      %v1530 = vmul.f32 %v1471, %v1522
      %v1531 = vmul.f32 %v1472, %v1522
      %v1532 = vmul.f32 %v1473, %v1522
      %v1533 = vmul.f32 %v1474, %v1522
      %v1534 = vmul.f32 %v1475, %v1522
      %v1535 = vmul.f32 %v1476, %v1522
      %v1536 = vmul.f32 %v1477, %v1522
      %v1537 = vmul.f32 %v1478, %v1522
      %v1538 = vmul.f32 %v1479, %v1522
      %v1539 = vmul.f32 %v1480, %v1522
      %v1540 = vmul.f32 %v1481, %v1522
      %v1541 = vmul.f32 %v1482, %v1522
      %v1542 = vmul.f32 %v1483, %v1522
      %v1543 = vmul.f32 %v1484, %v1522
      %v1544 = vmul.f32 %v1485, %v1522
      %v1545 = vmul.f32 %v1486, %v1522
      %v1546 = vmul.f32 %v1487, %v1522
      %v1547 = vmul.f32 %v1488, %v1522
      %v1548 = vmul.f32 %v1489, %v1522
      %v1549 = vmul.f32 %v1490, %v1522
      %v1550 = vmul.f32 %v1491, %v1522
      %v1551 = vmul.f32 %v1492, %v1522
      %v1552 = vmul.f32 %v1493, %v1522
      %v1553 = vmul.f32 %v1494, %v1522
      %v1554 = vmul.f32 %v1495, %v1522
      %v1555 = vmul.f32 %v1496, %v1522
      %v1556 = vmul.f32 %v1497, %v1522
      %v1557 = vmul.f32 %v1498, %v1522
      %v1558 = vmul.f32 %v1499, %v1522
      %v1559 = vmul.f32 %v1500, %v1522
      %v1560 = vmul.f32 %v1501, %v1522
      %v1561 = vmul.f32 %v1502, %v1522
      %v1562 = vmul.f32 %v1503, %v1522
      %v1563 = vmul.f32 %v1504, %v1522
      %v1564 = vmul.f32 %v1505, %v1522
      %v1565 = vmul.f32 %v1506, %v1522
      %v1566 = vmul.f32 %v1507, %v1522
      %v1567 = vmul.f32 %v1508, %v1522
      %v1568 = vmul.f32 %v1509, %v1522
      %v1569 = vmul.f32 %v1510, %v1522
      %v1570 = vmul.f32 %v1511, %v1522
      %v1571 = vmul.f32 %v1512, %v1522
      %v1572 = vmul.f32 %v1513, %v1522
      %v1573 = vmul.f32 %v1514, %v1522
      %v1574 = vmul.f32 %v1515, %v1522
      %v1575 = vmul.f32 %v1516, %v1522
      %v1576 = vmul.f32 %v1517, %v1522
      %v1577 = vlaneseq
      %v1578 = vshrl.u32 %v1577, 7
      %v1579 = vsub.s32 2, %v1578
      %v1580 = vrot.slane %v420, %v1579
      %v1581 = vadd.f32 %v1523, %v1580
      %v1582 = vadd.f32 %v1524, %v1580
      %v1583 = vadd.f32 %v1525, %v1580
      %v1584 = vadd.f32 %v1526, %v1580
      %v1585 = vadd.f32 %v1527, %v1580
      %v1586 = vadd.f32 %v1528, %v1580
      %v1587 = vadd.f32 %v1529, %v1580
      %v1588 = vadd.f32 %v1530, %v1580
      %v1589 = vadd.f32 %v1531, %v1580
      %v1590 = vadd.f32 %v1532, %v1580
      %v1591 = vadd.f32 %v1533, %v1580
      %v1592 = vadd.f32 %v1534, %v1580
      %v1593 = vadd.f32 %v1535, %v1580
      %v1594 = vadd.f32 %v1536, %v1580
      %v1595 = vadd.f32 %v1537, %v1580
      %v1596 = vadd.f32 %v1538, %v1580
      %v1597 = vadd.f32 %v1539, %v1580
      %v1598 = vadd.f32 %v1540, %v1580
      %v1599 = vadd.f32 %v1541, %v1580
      %v1600 = vadd.f32 %v1542, %v1580
      %v1601 = vadd.f32 %v1543, %v1580
      %v1602 = vadd.f32 %v1544, %v1580
      %v1603 = vadd.f32 %v1545, %v1580
      %v1604 = vadd.f32 %v1546, %v1580
      %v1605 = vadd.f32 %v1547, %v1580
      %v1606 = vadd.f32 %v1548, %v1580
      %v1607 = vadd.f32 %v1549, %v1580
      %v1608 = vadd.f32 %v1550, %v1580
      %v1609 = vadd.f32 %v1551, %v1580
      %v1610 = vadd.f32 %v1552, %v1580
      %v1611 = vadd.f32 %v1553, %v1580
      %v1612 = vadd.f32 %v1554, %v1580
      %v1613 = vadd.f32 %v1555, %v1580
      %v1614 = vadd.f32 %v1556, %v1580
      %v1615 = vadd.f32 %v1557, %v1580
      %v1616 = vadd.f32 %v1558, %v1580
      %v1617 = vadd.f32 %v1559, %v1580
      %v1618 = vadd.f32 %v1560, %v1580
      %v1619 = vadd.f32 %v1561, %v1580
      %v1620 = vadd.f32 %v1562, %v1580
      %v1621 = vadd.f32 %v1563, %v1580
      %v1622 = vadd.f32 %v1564, %v1580
      %v1623 = vadd.f32 %v1565, %v1580
      %v1624 = vadd.f32 %v1566, %v1580
      %v1625 = vadd.f32 %v1567, %v1580
      %v1626 = vadd.f32 %v1568, %v1580
      %v1627 = vadd.f32 %v1569, %v1580
      %v1628 = vadd.f32 %v1570, %v1580
      %v1629 = vadd.f32 %v1571, %v1580
      %v1630 = vadd.f32 %v1572, %v1580
      %v1631 = vadd.f32 %v1573, %v1580
      %v1632 = vadd.f32 %v1574, %v1580
      %v1633 = vadd.f32 %v1575, %v1580
      %v1634 = vadd.f32 %v1576, %v1580
      %v1635 = vmul.f32 %v1581, 0.5
      %v1636 = vmul.f32 %v1582, 0.5
      %v1637 = vmul.f32 %v1583, 0.5
      %v1638 = vmul.f32 %v1584, 0.5
      %v1639 = vmul.f32 %v1585, 0.5
      %v1640 = vmul.f32 %v1586, 0.5
      %v1641 = vmul.f32 %v1587, 0.5
      %v1642 = vmul.f32 %v1588, 0.5
      %v1643 = vmul.f32 %v1589, 0.5
      %v1644 = vmul.f32 %v1590, 0.5
      %v1645 = vmul.f32 %v1591, 0.5
      %v1646 = vmul.f32 %v1592, 0.5
      %v1647 = vmul.f32 %v1593, 0.5
      %v1648 = vmul.f32 %v1594, 0.5
      %v1649 = vmul.f32 %v1595, 0.5
      %v1650 = vmul.f32 %v1596, 0.5
      %v1651 = vmul.f32 %v1597, 0.5
      %v1652 = vmul.f32 %v1598, 0.5
      %v1653 = vmul.f32 %v1599, 0.5
      %v1654 = vmul.f32 %v1600, 0.5
      %v1655 = vmul.f32 %v1601, 0.5
      %v1656 = vmul.f32 %v1602, 0.5
      %v1657 = vmul.f32 %v1603, 0.5
      %v1658 = vmul.f32 %v1604, 0.5
      %v1659 = vmul.f32 %v1605, 0.5
      %v1660 = vmul.f32 %v1606, 0.5
      %v1661 = vmul.f32 %v1607, 0.5
      %v1662 = vmul.f32 %v1608, 0.5
      %v1663 = vmul.f32 %v1609, 0.5
      %v1664 = vmul.f32 %v1610, 0.5
      %v1665 = vmul.f32 %v1611, 0.5
      %v1666 = vmul.f32 %v1612, 0.5
      %v1667 = vmul.f32 %v1613, 0.5
      %v1668 = vmul.f32 %v1614, 0.5
      %v1669 = vmul.f32 %v1615, 0.5
      %v1670 = vmul.f32 %v1616, 0.5
      %v1671 = vmul.f32 %v1617, 0.5
      %v1672 = vmul.f32 %v1618, 0.5
      %v1673 = vmul.f32 %v1619, 0.5
      %v1674 = vmul.f32 %v1620, 0.5
      %v1675 = vmul.f32 %v1621, 0.5
      %v1676 = vmul.f32 %v1622, 0.5
      %v1677 = vmul.f32 %v1623, 0.5
      %v1678 = vmul.f32 %v1624, 0.5
      %v1679 = vmul.f32 %v1625, 0.5
      %v1680 = vmul.f32 %v1626, 0.5
      %v1681 = vmul.f32 %v1627, 0.5
      %v1682 = vmul.f32 %v1628, 0.5
      %v1683 = vmul.f32 %v1629, 0.5
      %v1684 = vmul.f32 %v1630, 0.5
      %v1685 = vmul.f32 %v1631, 0.5
      %v1686 = vmul.f32 %v1632, 0.5
      %v1687 = vmul.f32 %v1633, 0.5
      %v1688 = vmul.f32 %v1634, 0.5
      %v1689 = vmul.f32 %v1581, 0.044715
      %v1690 = vmul.f32 %v1582, 0.044715
      %v1691 = vmul.f32 %v1583, 0.044715
      %v1692 = vmul.f32 %v1584, 0.044715
      %v1693 = vmul.f32 %v1585, 0.044715
      %v1694 = vmul.f32 %v1586, 0.044715
      %v1695 = vmul.f32 %v1587, 0.044715
      %v1696 = vmul.f32 %v1588, 0.044715
      %v1697 = vmul.f32 %v1589, 0.044715
      %v1698 = vmul.f32 %v1590, 0.044715
      %v1699 = vmul.f32 %v1591, 0.044715
      %v1700 = vmul.f32 %v1592, 0.044715
      %v1701 = vmul.f32 %v1593, 0.044715
      %v1702 = vmul.f32 %v1594, 0.044715
      %v1703 = vmul.f32 %v1595, 0.044715
      %v1704 = vmul.f32 %v1596, 0.044715
      %v1705 = vmul.f32 %v1597, 0.044715
      %v1706 = vmul.f32 %v1598, 0.044715
      %v1707 = vmul.f32 %v1599, 0.044715
      %v1708 = vmul.f32 %v1600, 0.044715
      %v1709 = vmul.f32 %v1601, 0.044715
      %v1710 = vmul.f32 %v1602, 0.044715
      %v1711 = vmul.f32 %v1603, 0.044715
      %v1712 = vmul.f32 %v1604, 0.044715
      %v1713 = vmul.f32 %v1605, 0.044715
      %v1714 = vmul.f32 %v1606, 0.044715
      %v1715 = vmul.f32 %v1607, 0.044715
      %v1716 = vmul.f32 %v1608, 0.044715
      %v1717 = vmul.f32 %v1609, 0.044715
      %v1718 = vmul.f32 %v1610, 0.044715
      %v1719 = vmul.f32 %v1611, 0.044715
      %v1720 = vmul.f32 %v1612, 0.044715
      %v1721 = vmul.f32 %v1613, 0.044715
      %v1722 = vmul.f32 %v1614, 0.044715
      %v1723 = vmul.f32 %v1615, 0.044715
      %v1724 = vmul.f32 %v1616, 0.044715
      %v1725 = vmul.f32 %v1617, 0.044715
      %v1726 = vmul.f32 %v1618, 0.044715
      %v1727 = vmul.f32 %v1619, 0.044715
      %v1728 = vmul.f32 %v1620, 0.044715
      %v1729 = vmul.f32 %v1621, 0.044715
      %v1730 = vmul.f32 %v1622, 0.044715
      %v1731 = vmul.f32 %v1623, 0.044715
      %v1732 = vmul.f32 %v1624, 0.044715
      %v1733 = vmul.f32 %v1625, 0.044715
      %v1734 = vmul.f32 %v1626, 0.044715
      %v1735 = vmul.f32 %v1627, 0.044715
      %v1736 = vmul.f32 %v1628, 0.044715
      %v1737 = vmul.f32 %v1629, 0.044715
      %v1738 = vmul.f32 %v1630, 0.044715
      %v1739 = vmul.f32 %v1631, 0.044715
      %v1740 = vmul.f32 %v1632, 0.044715
      %v1741 = vmul.f32 %v1633, 0.044715
      %v1742 = vmul.f32 %v1634, 0.044715
      %v1743 = vmul.f32 %v1689, %v1581
      %v1744 = vmul.f32 %v1690, %v1582
      %v1745 = vmul.f32 %v1691, %v1583
      %v1746 = vmul.f32 %v1692, %v1584
      %v1747 = vmul.f32 %v1693, %v1585
      %v1748 = vmul.f32 %v1694, %v1586
      %v1749 = vmul.f32 %v1695, %v1587
      %v1750 = vmul.f32 %v1696, %v1588
      %v1751 = vmul.f32 %v1697, %v1589
      %v1752 = vmul.f32 %v1698, %v1590
      %v1753 = vmul.f32 %v1699, %v1591
      %v1754 = vmul.f32 %v1700, %v1592
      %v1755 = vmul.f32 %v1701, %v1593
      %v1756 = vmul.f32 %v1702, %v1594
      %v1757 = vmul.f32 %v1703, %v1595
      %v1758 = vmul.f32 %v1704, %v1596
      %v1759 = vmul.f32 %v1705, %v1597
      %v1760 = vmul.f32 %v1706, %v1598
      %v1761 = vmul.f32 %v1707, %v1599
      %v1762 = vmul.f32 %v1708, %v1600
      %v1763 = vmul.f32 %v1709, %v1601
      %v1764 = vmul.f32 %v1710, %v1602
      %v1765 = vmul.f32 %v1711, %v1603
      %v1766 = vmul.f32 %v1712, %v1604
      %v1767 = vmul.f32 %v1713, %v1605
      %v1768 = vmul.f32 %v1714, %v1606
      %v1769 = vmul.f32 %v1715, %v1607
      %v1770 = vmul.f32 %v1716, %v1608
      %v1771 = vmul.f32 %v1717, %v1609
      %v1772 = vmul.f32 %v1718, %v1610
      %v1773 = vmul.f32 %v1719, %v1611
      %v1774 = vmul.f32 %v1720, %v1612
      %v1775 = vmul.f32 %v1721, %v1613
      %v1776 = vmul.f32 %v1722, %v1614
      %v1777 = vmul.f32 %v1723, %v1615
      %v1778 = vmul.f32 %v1724, %v1616
      %v1779 = vmul.f32 %v1725, %v1617
      %v1780 = vmul.f32 %v1726, %v1618
      %v1781 = vmul.f32 %v1727, %v1619
      %v1782 = vmul.f32 %v1728, %v1620
      %v1783 = vmul.f32 %v1729, %v1621
      %v1784 = vmul.f32 %v1730, %v1622
      %v1785 = vmul.f32 %v1731, %v1623
      %v1786 = vmul.f32 %v1732, %v1624
      %v1787 = vmul.f32 %v1733, %v1625
      %v1788 = vmul.f32 %v1734, %v1626
      %v1789 = vmul.f32 %v1735, %v1627
      %v1790 = vmul.f32 %v1736, %v1628
      %v1791 = vmul.f32 %v1737, %v1629
      %v1792 = vmul.f32 %v1738, %v1630
      %v1793 = vmul.f32 %v1739, %v1631
      %v1794 = vmul.f32 %v1740, %v1632
      %v1795 = vmul.f32 %v1741, %v1633
      %v1796 = vmul.f32 %v1742, %v1634
      %v1797 = vmul.f32 %v1743, %v1581
      %v1798 = vmul.f32 %v1744, %v1582
      %v1799 = vmul.f32 %v1745, %v1583
      %v1800 = vmul.f32 %v1746, %v1584
      %v1801 = vmul.f32 %v1747, %v1585
      %v1802 = vmul.f32 %v1748, %v1586
      %v1803 = vmul.f32 %v1749, %v1587
      %v1804 = vmul.f32 %v1750, %v1588
      %v1805 = vmul.f32 %v1751, %v1589
      %v1806 = vmul.f32 %v1752, %v1590
      %v1807 = vmul.f32 %v1753, %v1591
      %v1808 = vmul.f32 %v1754, %v1592
      %v1809 = vmul.f32 %v1755, %v1593
      %v1810 = vmul.f32 %v1756, %v1594
      %v1811 = vmul.f32 %v1757, %v1595
      %v1812 = vmul.f32 %v1758, %v1596
      %v1813 = vmul.f32 %v1759, %v1597
      %v1814 = vmul.f32 %v1760, %v1598
      %v1815 = vmul.f32 %v1761, %v1599
      %v1816 = vmul.f32 %v1762, %v1600
      %v1817 = vmul.f32 %v1763, %v1601
      %v1818 = vmul.f32 %v1764, %v1602
      %v1819 = vmul.f32 %v1765, %v1603
      %v1820 = vmul.f32 %v1766, %v1604
      %v1821 = vmul.f32 %v1767, %v1605
      %v1822 = vmul.f32 %v1768, %v1606
      %v1823 = vmul.f32 %v1769, %v1607
      %v1824 = vmul.f32 %v1770, %v1608
      %v1825 = vmul.f32 %v1771, %v1609
      %v1826 = vmul.f32 %v1772, %v1610
      %v1827 = vmul.f32 %v1773, %v1611
      %v1828 = vmul.f32 %v1774, %v1612
      %v1829 = vmul.f32 %v1775, %v1613
      %v1830 = vmul.f32 %v1776, %v1614
      %v1831 = vmul.f32 %v1777, %v1615
      %v1832 = vmul.f32 %v1778, %v1616
      %v1833 = vmul.f32 %v1779, %v1617
      %v1834 = vmul.f32 %v1780, %v1618
      %v1835 = vmul.f32 %v1781, %v1619
      %v1836 = vmul.f32 %v1782, %v1620
      %v1837 = vmul.f32 %v1783, %v1621
      %v1838 = vmul.f32 %v1784, %v1622
      %v1839 = vmul.f32 %v1785, %v1623
      %v1840 = vmul.f32 %v1786, %v1624
      %v1841 = vmul.f32 %v1787, %v1625
      %v1842 = vmul.f32 %v1788, %v1626
      %v1843 = vmul.f32 %v1789, %v1627
      %v1844 = vmul.f32 %v1790, %v1628
      %v1845 = vmul.f32 %v1791, %v1629
      %v1846 = vmul.f32 %v1792, %v1630
      %v1847 = vmul.f32 %v1793, %v1631
      %v1848 = vmul.f32 %v1794, %v1632
      %v1849 = vmul.f32 %v1795, %v1633
      %v1850 = vmul.f32 %v1796, %v1634
      %v1851 = vadd.f32 %v1581, %v1797
      %v1852 = vadd.f32 %v1582, %v1798
      %v1853 = vadd.f32 %v1583, %v1799
      %v1854 = vadd.f32 %v1584, %v1800
      %v1855 = vadd.f32 %v1585, %v1801
      %v1856 = vadd.f32 %v1586, %v1802
      %v1857 = vadd.f32 %v1587, %v1803
      %v1858 = vadd.f32 %v1588, %v1804
      %v1859 = vadd.f32 %v1589, %v1805
      %v1860 = vadd.f32 %v1590, %v1806
      %v1861 = vadd.f32 %v1591, %v1807
      %v1862 = vadd.f32 %v1592, %v1808
      %v1863 = vadd.f32 %v1593, %v1809
      %v1864 = vadd.f32 %v1594, %v1810
      %v1865 = vadd.f32 %v1595, %v1811
      %v1866 = vadd.f32 %v1596, %v1812
      %v1867 = vadd.f32 %v1597, %v1813
      %v1868 = vadd.f32 %v1598, %v1814
      %v1869 = vadd.f32 %v1599, %v1815
      %v1870 = vadd.f32 %v1600, %v1816
      %v1871 = vadd.f32 %v1601, %v1817
      %v1872 = vadd.f32 %v1602, %v1818
      %v1873 = vadd.f32 %v1603, %v1819
      %v1874 = vadd.f32 %v1604, %v1820
      %v1875 = vadd.f32 %v1605, %v1821
      %v1876 = vadd.f32 %v1606, %v1822
      %v1877 = vadd.f32 %v1607, %v1823
      %v1878 = vadd.f32 %v1608, %v1824
      %v1879 = vadd.f32 %v1609, %v1825
      %v1880 = vadd.f32 %v1610, %v1826
      %v1881 = vadd.f32 %v1611, %v1827
      %v1882 = vadd.f32 %v1612, %v1828
      %v1883 = vadd.f32 %v1613, %v1829
      %v1884 = vadd.f32 %v1614, %v1830
      %v1885 = vadd.f32 %v1615, %v1831
      %v1886 = vadd.f32 %v1616, %v1832
      %v1887 = vadd.f32 %v1617, %v1833
      %v1888 = vadd.f32 %v1618, %v1834
      %v1889 = vadd.f32 %v1619, %v1835
      %v1890 = vadd.f32 %v1620, %v1836
      %v1891 = vadd.f32 %v1621, %v1837
      %v1892 = vadd.f32 %v1622, %v1838
      %v1893 = vadd.f32 %v1623, %v1839
      %v1894 = vadd.f32 %v1624, %v1840
      %v1895 = vadd.f32 %v1625, %v1841
      %v1896 = vadd.f32 %v1626, %v1842
      %v1897 = vadd.f32 %v1627, %v1843
      %v1898 = vadd.f32 %v1628, %v1844
      %v1899 = vadd.f32 %v1629, %v1845
      %v1900 = vadd.f32 %v1630, %v1846
      %v1901 = vadd.f32 %v1631, %v1847
      %v1902 = vadd.f32 %v1632, %v1848
      %v1903 = vadd.f32 %v1633, %v1849
      %v1904 = vadd.f32 %v1634, %v1850
      %v1905 = vmul.f32 %v1851, 0.7978846
      %v1906 = vmul.f32 %v1852, 0.7978846
      %v1907 = vmul.f32 %v1853, 0.7978846
      %v1908 = vmul.f32 %v1854, 0.7978846
      %v1909 = vmul.f32 %v1855, 0.7978846
      %v1910 = vmul.f32 %v1856, 0.7978846
      %v1911 = vmul.f32 %v1857, 0.7978846
      %v1912 = vmul.f32 %v1858, 0.7978846
      %v1913 = vmul.f32 %v1859, 0.7978846
      %v1914 = vmul.f32 %v1860, 0.7978846
      %v1915 = vmul.f32 %v1861, 0.7978846
      %v1916 = vmul.f32 %v1862, 0.7978846
      %v1917 = vmul.f32 %v1863, 0.7978846
      %v1918 = vmul.f32 %v1864, 0.7978846
      %v1919 = vmul.f32 %v1865, 0.7978846
      %v1920 = vmul.f32 %v1866, 0.7978846
      %v1921 = vmul.f32 %v1867, 0.7978846
      %v1922 = vmul.f32 %v1868, 0.7978846
      %v1923 = vmul.f32 %v1869, 0.7978846
      %v1924 = vmul.f32 %v1870, 0.7978846
      %v1925 = vmul.f32 %v1871, 0.7978846
      %v1926 = vmul.f32 %v1872, 0.7978846
      %v1927 = vmul.f32 %v1873, 0.7978846
      %v1928 = vmul.f32 %v1874, 0.7978846
      %v1929 = vmul.f32 %v1875, 0.7978846
      %v1930 = vmul.f32 %v1876, 0.7978846
      %v1931 = vmul.f32 %v1877, 0.7978846
      %v1932 = vmul.f32 %v1878, 0.7978846
      %v1933 = vmul.f32 %v1879, 0.7978846
      %v1934 = vmul.f32 %v1880, 0.7978846
      %v1935 = vmul.f32 %v1881, 0.7978846
      %v1936 = vmul.f32 %v1882, 0.7978846
      %v1937 = vmul.f32 %v1883, 0.7978846
      %v1938 = vmul.f32 %v1884, 0.7978846
      %v1939 = vmul.f32 %v1885, 0.7978846
      %v1940 = vmul.f32 %v1886, 0.7978846
      %v1941 = vmul.f32 %v1887, 0.7978846
      %v1942 = vmul.f32 %v1888, 0.7978846
      %v1943 = vmul.f32 %v1889, 0.7978846
      %v1944 = vmul.f32 %v1890, 0.7978846
      %v1945 = vmul.f32 %v1891, 0.7978846
      %v1946 = vmul.f32 %v1892, 0.7978846
      %v1947 = vmul.f32 %v1893, 0.7978846
      %v1948 = vmul.f32 %v1894, 0.7978846
      %v1949 = vmul.f32 %v1895, 0.7978846
      %v1950 = vmul.f32 %v1896, 0.7978846
      %v1951 = vmul.f32 %v1897, 0.7978846
      %v1952 = vmul.f32 %v1898, 0.7978846
      %v1953 = vmul.f32 %v1899, 0.7978846
      %v1954 = vmul.f32 %v1900, 0.7978846
      %v1955 = vmul.f32 %v1901, 0.7978846
      %v1956 = vmul.f32 %v1902, 0.7978846
      %v1957 = vmul.f32 %v1903, 0.7978846
      %v1958 = vmul.f32 %v1904, 0.7978846
      %v1959 = vtanh.pop %v1905
      %v1960 = vtanh.pop %v1906
      %v1961 = vtanh.pop %v1907
      %v1962 = vtanh.pop %v1908
      %v1963 = vtanh.pop %v1909
      %v1964 = vtanh.pop %v1910
      %v1965 = vtanh.pop %v1911
      %v1966 = vtanh.pop %v1912
      %v1967 = vtanh.pop %v1913
      %v1968 = vtanh.pop %v1914
      %v1969 = vtanh.pop %v1915
      %v1970 = vtanh.pop %v1916
      %v1971 = vtanh.pop %v1917
      %v1972 = vtanh.pop %v1918
      %v1973 = vtanh.pop %v1919
      %v1974 = vtanh.pop %v1920
      %v1975 = vtanh.pop %v1921
      %v1976 = vtanh.pop %v1922
      %v1977 = vtanh.pop %v1923
      %v1978 = vtanh.pop %v1924
      %v1979 = vtanh.pop %v1925
      %v1980 = vtanh.pop %v1926
      %v1981 = vtanh.pop %v1927
      %v1982 = vtanh.pop %v1928
      %v1983 = vtanh.pop %v1929
      %v1984 = vtanh.pop %v1930
      %v1985 = vtanh.pop %v1931
      %v1986 = vtanh.pop %v1932
      %v1987 = vtanh.pop %v1933
      %v1988 = vtanh.pop %v1934
      %v1989 = vtanh.pop %v1935
      %v1990 = vtanh.pop %v1936
      %v1991 = vtanh.pop %v1937
      %v1992 = vtanh.pop %v1938
      %v1993 = vtanh.pop %v1939
      %v1994 = vtanh.pop %v1940
      %v1995 = vtanh.pop %v1941
      %v1996 = vtanh.pop %v1942
      %v1997 = vtanh.pop %v1943
      %v1998 = vtanh.pop %v1944
      %v1999 = vtanh.pop %v1945
      %v2000 = vtanh.pop %v1946
      %v2001 = vtanh.pop %v1947
      %v2002 = vtanh.pop %v1948
      %v2003 = vtanh.pop %v1949
      %v2004 = vtanh.pop %v1950
      %v2005 = vtanh.pop %v1951
      %v2006 = vtanh.pop %v1952
      %v2007 = vtanh.pop %v1953
      %v2008 = vtanh.pop %v1954
      %v2009 = vtanh.pop %v1955
      %v2010 = vtanh.pop %v1956
      %v2011 = vtanh.pop %v1957
      %v2012 = vtanh.pop %v1958
      %v2013 = vadd.f32 %v1959, 1.0
      %v2014 = vadd.f32 %v1960, 1.0
      %v2015 = vadd.f32 %v1961, 1.0
      %v2016 = vadd.f32 %v1962, 1.0
      %v2017 = vadd.f32 %v1963, 1.0
      %v2018 = vadd.f32 %v1964, 1.0
      %v2019 = vadd.f32 %v1965, 1.0
      %v2020 = vadd.f32 %v1966, 1.0
      %v2021 = vadd.f32 %v1967, 1.0
      %v2022 = vadd.f32 %v1968, 1.0
      %v2023 = vadd.f32 %v1969, 1.0
      %v2024 = vadd.f32 %v1970, 1.0
      %v2025 = vadd.f32 %v1971, 1.0
      %v2026 = vadd.f32 %v1972, 1.0
      %v2027 = vadd.f32 %v1973, 1.0
      %v2028 = vadd.f32 %v1974, 1.0
      %v2029 = vadd.f32 %v1975, 1.0
      %v2030 = vadd.f32 %v1976, 1.0
      %v2031 = vadd.f32 %v1977, 1.0
      %v2032 = vadd.f32 %v1978, 1.0
      %v2033 = vadd.f32 %v1979, 1.0
      %v2034 = vadd.f32 %v1980, 1.0
      %v2035 = vadd.f32 %v1981, 1.0
      %v2036 = vadd.f32 %v1982, 1.0
      %v2037 = vadd.f32 %v1983, 1.0
      %v2038 = vadd.f32 %v1984, 1.0
      %v2039 = vadd.f32 %v1985, 1.0
      %v2040 = vadd.f32 %v1986, 1.0
      %v2041 = vadd.f32 %v1987, 1.0
      %v2042 = vadd.f32 %v1988, 1.0
      %v2043 = vadd.f32 %v1989, 1.0
      %v2044 = vadd.f32 %v1990, 1.0
      %v2045 = vadd.f32 %v1991, 1.0
      %v2046 = vadd.f32 %v1992, 1.0
      %v2047 = vadd.f32 %v1993, 1.0
      %v2048 = vadd.f32 %v1994, 1.0
      %v2049 = vadd.f32 %v1995, 1.0
      %v2050 = vadd.f32 %v1996, 1.0
      %v2051 = vadd.f32 %v1997, 1.0
      %v2052 = vadd.f32 %v1998, 1.0
      %v2053 = vadd.f32 %v1999, 1.0
      %v2054 = vadd.f32 %v2000, 1.0
      %v2055 = vadd.f32 %v2001, 1.0
      %v2056 = vadd.f32 %v2002, 1.0
      %v2057 = vadd.f32 %v2003, 1.0
      %v2058 = vadd.f32 %v2004, 1.0
      %v2059 = vadd.f32 %v2005, 1.0
      %v2060 = vadd.f32 %v2006, 1.0
      %v2061 = vadd.f32 %v2007, 1.0
      %v2062 = vadd.f32 %v2008, 1.0
      %v2063 = vadd.f32 %v2009, 1.0
      %v2064 = vadd.f32 %v2010, 1.0
      %v2065 = vadd.f32 %v2011, 1.0
      %v2066 = vadd.f32 %v2012, 1.0
      %v2067 = vmul.f32 %v1635, %v2013
      %v2068 = vmul.f32 %v1636, %v2014
      %v2069 = vmul.f32 %v1637, %v2015
      %v2070 = vmul.f32 %v1638, %v2016
      %v2071 = vmul.f32 %v1639, %v2017
      %v2072 = vmul.f32 %v1640, %v2018
      %v2073 = vmul.f32 %v1641, %v2019
      %v2074 = vmul.f32 %v1642, %v2020
      %v2075 = vmul.f32 %v1643, %v2021
      %v2076 = vmul.f32 %v1644, %v2022
      %v2077 = vmul.f32 %v1645, %v2023
      %v2078 = vmul.f32 %v1646, %v2024
      %v2079 = vmul.f32 %v1647, %v2025
      %v2080 = vmul.f32 %v1648, %v2026
      %v2081 = vmul.f32 %v1649, %v2027
      %v2082 = vmul.f32 %v1650, %v2028
      %v2083 = vmul.f32 %v1651, %v2029
      %v2084 = vmul.f32 %v1652, %v2030
      %v2085 = vmul.f32 %v1653, %v2031
      %v2086 = vmul.f32 %v1654, %v2032
      %v2087 = vmul.f32 %v1655, %v2033
      %v2088 = vmul.f32 %v1656, %v2034
      %v2089 = vmul.f32 %v1657, %v2035
      %v2090 = vmul.f32 %v1658, %v2036
      %v2091 = vmul.f32 %v1659, %v2037
      %v2092 = vmul.f32 %v1660, %v2038
      %v2093 = vmul.f32 %v1661, %v2039
      %v2094 = vmul.f32 %v1662, %v2040
      %v2095 = vmul.f32 %v1663, %v2041
      %v2096 = vmul.f32 %v1664, %v2042
      %v2097 = vmul.f32 %v1665, %v2043
      %v2098 = vmul.f32 %v1666, %v2044
      %v2099 = vmul.f32 %v1667, %v2045
      %v2100 = vmul.f32 %v1668, %v2046
      %v2101 = vmul.f32 %v1669, %v2047
      %v2102 = vmul.f32 %v1670, %v2048
      %v2103 = vmul.f32 %v1671, %v2049
      %v2104 = vmul.f32 %v1672, %v2050
      %v2105 = vmul.f32 %v1673, %v2051
      %v2106 = vmul.f32 %v1674, %v2052
      %v2107 = vmul.f32 %v1675, %v2053
      %v2108 = vmul.f32 %v1676, %v2054
      %v2109 = vmul.f32 %v1677, %v2055
      %v2110 = vmul.f32 %v1678, %v2056
      %v2111 = vmul.f32 %v1679, %v2057
      %v2112 = vmul.f32 %v1680, %v2058
      %v2113 = vmul.f32 %v1681, %v2059
      %v2114 = vmul.f32 %v1682, %v2060
      %v2115 = vmul.f32 %v1683, %v2061
      %v2116 = vmul.f32 %v1684, %v2062
      %v2117 = vmul.f32 %v1685, %v2063
      %v2118 = vmul.f32 %v1686, %v2064
      %v2119 = vmul.f32 %v1687, %v2065
      %v2120 = vmul.f32 %v1688, %v2066
      %v2121 = vmul.f32 %v2067, %v887
      %v2122 = vmul.f32 %v2068, %v892
      %v2123 = vmul.f32 %v2069, %v897
      %v2124 = vmul.f32 %v2070, %v902
      %v2125 = vmul.f32 %v2071, %v907
      %v2126 = vmul.f32 %v2072, %v912
      %v2127 = vmul.f32 %v2073, %v917
      %v2128 = vmul.f32 %v2074, %v922
      %v2129 = vmul.f32 %v2075, %v927
      %v2130 = vmul.f32 %v2076, %v932
      %v2131 = vmul.f32 %v2077, %v937
      %v2132 = vmul.f32 %v2078, %v942
      %v2133 = vmul.f32 %v2079, %v947
      %v2134 = vmul.f32 %v2080, %v952
      %v2135 = vmul.f32 %v2081, %v957
      %v2136 = vmul.f32 %v2082, %v962
      %v2137 = vmul.f32 %v2083, %v967
      %v2138 = vmul.f32 %v2084, %v972
      %v2139 = vmul.f32 %v2085, %v977
      %v2140 = vmul.f32 %v2086, %v982
      %v2141 = vmul.f32 %v2087, %v987
      %v2142 = vmul.f32 %v2088, %v992
      %v2143 = vmul.f32 %v2089, %v997
      %v2144 = vmul.f32 %v2090, %v1002
      %v2145 = vmul.f32 %v2091, %v1007
      %v2146 = vmul.f32 %v2092, %v1012
      %v2147 = vmul.f32 %v2093, %v1017
      %v2148 = vmul.f32 %v2094, %v1022
      %v2149 = vmul.f32 %v2095, %v1027
      %v2150 = vmul.f32 %v2096, %v1032
      %v2151 = vmul.f32 %v2097, %v1037
      %v2152 = vmul.f32 %v2098, %v1042
      %v2153 = vmul.f32 %v2099, %v1047
      %v2154 = vmul.f32 %v2100, %v1052
      %v2155 = vmul.f32 %v2101, %v1057
      %v2156 = vmul.f32 %v2102, %v1062
      %v2157 = vmul.f32 %v2103, %v1067
      %v2158 = vmul.f32 %v2104, %v1072
      %v2159 = vmul.f32 %v2105, %v1077
      %v2160 = vmul.f32 %v2106, %v1082
      %v2161 = vmul.f32 %v2107, %v1087
      %v2162 = vmul.f32 %v2108, %v1092
      %v2163 = vmul.f32 %v2109, %v1097
      %v2164 = vmul.f32 %v2110, %v1102
      %v2165 = vmul.f32 %v2111, %v1107
      %v2166 = vmul.f32 %v2112, %v1112
      %v2167 = vmul.f32 %v2113, %v1117
      %v2168 = vmul.f32 %v2114, %v1122
      %v2169 = vmul.f32 %v2115, %v1127
      %v2170 = vmul.f32 %v2116, %v1132
      %v2171 = vmul.f32 %v2117, %v1137
      %v2172 = vmul.f32 %v2118, %v1142
      %v2173 = vmul.f32 %v2119, %v1147
      %v2174 = vmul.f32 %v2120, %v1152
      %2175 = vst [vmem:[#allocation2] sm:$0xf] 0
      %2176 = vst [vmem:[#allocation2 + $0x4] sm:$0xf] 0
      %2177 = vst [vmem:[#allocation2 + $0x8] sm:$0xf] 0
      %2178 = vst [vmem:[#allocation2 + $0xc] sm:$0xf] 0
      %2179 = vst [vmem:[#allocation2 + $0xe8] sm:$0xf] 0
      %2180 = vst [vmem:[#allocation2 + $0xec] sm:$0xf] 0
      %2181 = vst [vmem:[#allocation2 + $0xf0] sm:$0xf] 0
      %2182 = vst [vmem:[#allocation2 + $0xf4] sm:$0xf] 0
      %v2183 = vpack.c.bf16 %v2122, %v2121
      %v2184 = vpack.c.bf16 %v2124, %v2123
      %v2185 = vpack.c.bf16 %v2126, %v2125
      %v2186 = vpack.c.bf16 %v2128, %v2127
      %v2187 = vpack.c.bf16 %v2130, %v2129
      %v2188 = vpack.c.bf16 %v2132, %v2131
      %v2189 = vpack.c.bf16 %v2134, %v2133
      %v2190 = vpack.c.bf16 %v2136, %v2135
      %v2191 = vpack.c.bf16 %v2138, %v2137
      %v2192 = vpack.c.bf16 %v2140, %v2139
      %v2193 = vpack.c.bf16 %v2142, %v2141
      %v2194 = vpack.c.bf16 %v2144, %v2143
      %v2195 = vpack.c.bf16 %v2146, %v2145
      %v2196 = vpack.c.bf16 %v2148, %v2147
      %v2197 = vpack.c.bf16 %v2150, %v2149
      %v2198 = vpack.c.bf16 %v2152, %v2151
      %v2199 = vpack.c.bf16 %v2154, %v2153
      %v2200 = vpack.c.bf16 %v2156, %v2155
      %v2201 = vpack.c.bf16 %v2158, %v2157
      %v2202 = vpack.c.bf16 %v2160, %v2159
      %v2203 = vpack.c.bf16 %v2162, %v2161
      %v2204 = vpack.c.bf16 %v2164, %v2163
      %v2205 = vpack.c.bf16 %v2166, %v2165
      %v2206 = vpack.c.bf16 %v2168, %v2167
      %v2207 = vpack.c.bf16 %v2170, %v2169
      %v2208 = vpack.c.bf16 %v2172, %v2171
      %v2209 = vpack.c.bf16 %v2174, %v2173
      %v2237 = vunpack.c.l.b16 %v2183
      %v2238 = vunpack.c.h.b16 %v2183
      %v2239 = vunpack.c.l.b16 %v2184
      %v2240 = vunpack.c.h.b16 %v2184
      %v2241 = vunpack.c.l.b16 %v2185
      %v2242 = vunpack.c.h.b16 %v2185
      %v2243 = vunpack.c.l.b16 %v2186
      %v2244 = vunpack.c.h.b16 %v2186
      %v2245 = vunpack.c.l.b16 %v2187
      %v2246 = vunpack.c.h.b16 %v2187
      %v2247 = vunpack.c.l.b16 %v2188
      %v2248 = vunpack.c.h.b16 %v2188
      %v2249 = vunpack.c.l.b16 %v2189
      %v2250 = vunpack.c.h.b16 %v2189
      %v2251 = vunpack.c.l.b16 %v2190
      %v2252 = vunpack.c.h.b16 %v2190
      %v2253 = vunpack.c.l.b16 %v2191
      %v2254 = vunpack.c.h.b16 %v2191
      %v2255 = vunpack.c.l.b16 %v2192
      %v2256 = vunpack.c.h.b16 %v2192
      %v2257 = vunpack.c.l.b16 %v2193
      %v2258 = vunpack.c.h.b16 %v2193
      %v2259 = vunpack.c.l.b16 %v2194
      %v2260 = vunpack.c.h.b16 %v2194
      %v2261 = vunpack.c.l.b16 %v2195
      %v2262 = vunpack.c.h.b16 %v2195
      %v2263 = vunpack.c.l.b16 %v2196
      %v2264 = vunpack.c.h.b16 %v2196
      %v2265 = vunpack.c.l.b16 %v2197
      %v2266 = vunpack.c.h.b16 %v2197
      %v2267 = vunpack.c.l.b16 %v2198
      %v2268 = vunpack.c.h.b16 %v2198
      %v2269 = vunpack.c.l.b16 %v2199
      %v2270 = vunpack.c.h.b16 %v2199
      %v2271 = vunpack.c.l.b16 %v2200
      %v2272 = vunpack.c.h.b16 %v2200
      %v2273 = vunpack.c.l.b16 %v2201
      %v2274 = vunpack.c.h.b16 %v2201
      %v2275 = vunpack.c.l.b16 %v2202
      %v2276 = vunpack.c.h.b16 %v2202
      %v2277 = vunpack.c.l.b16 %v2203
      %v2278 = vunpack.c.h.b16 %v2203
      %v2279 = vunpack.c.l.b16 %v2204
      %v2280 = vunpack.c.h.b16 %v2204
      %v2281 = vunpack.c.l.b16 %v2205
      %v2282 = vunpack.c.h.b16 %v2205
      %v2283 = vunpack.c.l.b16 %v2206
      %v2284 = vunpack.c.h.b16 %v2206
      %v2285 = vunpack.c.l.b16 %v2207
      %v2286 = vunpack.c.h.b16 %v2207
      %v2287 = vunpack.c.l.b16 %v2208
      %v2288 = vunpack.c.h.b16 %v2208
      %v2289 = vunpack.c.l.b16 %v2209
      %v2290 = vunpack.c.h.b16 %v2209
      %v2291 = vpack.c.b16 %v2237, %v2237
      %v2292 = vpack.c.b16 %v2238, %v2238
      %v2293 = vpack.c.b16 %v2239, %v2239
      %v2294 = vpack.c.b16 %v2240, %v2240
      %v2295 = vpack.c.b16 %v2241, %v2241
      %v2296 = vpack.c.b16 %v2242, %v2242
      %v2297 = vpack.c.b16 %v2243, %v2243
      %v2298 = vpack.c.b16 %v2244, %v2244
      %v2299 = vpack.c.b16 %v2245, %v2245
      %v2300 = vpack.c.b16 %v2246, %v2246
      %v2301 = vpack.c.b16 %v2247, %v2247
      %v2302 = vpack.c.b16 %v2248, %v2248
      %v2303 = vpack.c.b16 %v2249, %v2249
      %v2304 = vpack.c.b16 %v2250, %v2250
      %v2305 = vpack.c.b16 %v2251, %v2251
      %v2306 = vpack.c.b16 %v2252, %v2252
      %v2307 = vpack.c.b16 %v2253, %v2253
      %v2308 = vpack.c.b16 %v2254, %v2254
      %v2309 = vpack.c.b16 %v2255, %v2255
      %v2310 = vpack.c.b16 %v2256, %v2256
      %v2311 = vpack.c.b16 %v2257, %v2257
      %v2312 = vpack.c.b16 %v2258, %v2258
      %v2313 = vpack.c.b16 %v2259, %v2259
      %v2314 = vpack.c.b16 %v2260, %v2260
      %v2315 = vpack.c.b16 %v2261, %v2261
      %v2316 = vpack.c.b16 %v2262, %v2262
      %v2317 = vpack.c.b16 %v2263, %v2263
      %v2318 = vpack.c.b16 %v2264, %v2264
      %v2319 = vpack.c.b16 %v2265, %v2265
      %v2320 = vpack.c.b16 %v2266, %v2266
      %v2321 = vpack.c.b16 %v2267, %v2267
      %v2322 = vpack.c.b16 %v2268, %v2268
      %v2323 = vpack.c.b16 %v2269, %v2269
      %v2324 = vpack.c.b16 %v2270, %v2270
      %v2325 = vpack.c.b16 %v2271, %v2271
      %v2326 = vpack.c.b16 %v2272, %v2272
      %v2327 = vpack.c.b16 %v2273, %v2273
      %v2328 = vpack.c.b16 %v2274, %v2274
      %v2329 = vpack.c.b16 %v2275, %v2275
      %v2330 = vpack.c.b16 %v2276, %v2276
      %v2331 = vpack.c.b16 %v2277, %v2277
      %v2332 = vpack.c.b16 %v2278, %v2278
      %v2333 = vpack.c.b16 %v2279, %v2279
      %v2334 = vpack.c.b16 %v2280, %v2280
      %v2335 = vpack.c.b16 %v2281, %v2281
      %v2336 = vpack.c.b16 %v2282, %v2282
      %v2337 = vpack.c.b16 %v2283, %v2283
      %v2338 = vpack.c.b16 %v2284, %v2284
      %v2339 = vpack.c.b16 %v2285, %v2285
      %v2340 = vpack.c.b16 %v2286, %v2286
      %v2341 = vpack.c.b16 %v2287, %v2287
      %v2342 = vpack.c.b16 %v2288, %v2288
      %v2343 = vpack.c.b16 %v2289, %v2289
      %v2344 = vpack.c.b16 %v2290, %v2290
      %2399 = vst [vmem:[#allocation2 + $0x10] sm:$0xf] %v2291
      %2400 = vst [vmem:[#allocation2 + $0x14] sm:$0xf] %v2292
      %2401 = vst [vmem:[#allocation2 + $0x18] sm:$0xf] %v2293
      %2402 = vst [vmem:[#allocation2 + $0x1c] sm:$0xf] %v2294
      %2403 = vst [vmem:[#allocation2 + $0x20] sm:$0xf] %v2295
      %2404 = vst [vmem:[#allocation2 + $0x24] sm:$0xf] %v2296
      %2405 = vst [vmem:[#allocation2 + $0x28] sm:$0xf] %v2297
      %2406 = vst [vmem:[#allocation2 + $0x2c] sm:$0xf] %v2298
      %2407 = vst [vmem:[#allocation2 + $0x30] sm:$0xf] %v2299
      %2408 = vst [vmem:[#allocation2 + $0x34] sm:$0xf] %v2300
      %2409 = vst [vmem:[#allocation2 + $0x38] sm:$0xf] %v2301
      %2410 = vst [vmem:[#allocation2 + $0x3c] sm:$0xf] %v2302
      %2411 = vst [vmem:[#allocation2 + $0x40] sm:$0xf] %v2303
      %2412 = vst [vmem:[#allocation2 + $0x44] sm:$0xf] %v2304
      %2413 = vst [vmem:[#allocation2 + $0x48] sm:$0xf] %v2305
      %2414 = vst [vmem:[#allocation2 + $0x4c] sm:$0xf] %v2306
      %2415 = vst [vmem:[#allocation2 + $0x50] sm:$0xf] %v2307
      %2416 = vst [vmem:[#allocation2 + $0x54] sm:$0xf] %v2308
      %2417 = vst [vmem:[#allocation2 + $0x58] sm:$0xf] %v2309
      %2418 = vst [vmem:[#allocation2 + $0x5c] sm:$0xf] %v2310
      %2419 = vst [vmem:[#allocation2 + $0x60] sm:$0xf] %v2311
      %2420 = vst [vmem:[#allocation2 + $0x64] sm:$0xf] %v2312
      %2421 = vst [vmem:[#allocation2 + $0x68] sm:$0xf] %v2313
      %2422 = vst [vmem:[#allocation2 + $0x6c] sm:$0xf] %v2314
      %2423 = vst [vmem:[#allocation2 + $0x70] sm:$0xf] %v2315
      %2424 = vst [vmem:[#allocation2 + $0x74] sm:$0xf] %v2316
      %2425 = vst [vmem:[#allocation2 + $0x78] sm:$0xf] %v2317
      %2426 = vst [vmem:[#allocation2 + $0x7c] sm:$0xf] %v2318
      %2427 = vst [vmem:[#allocation2 + $0x80] sm:$0xf] %v2319
      %2428 = vst [vmem:[#allocation2 + $0x84] sm:$0xf] %v2320
      %2429 = vst [vmem:[#allocation2 + $0x88] sm:$0xf] %v2321
      %2430 = vst [vmem:[#allocation2 + $0x8c] sm:$0xf] %v2322
      %2431 = vst [vmem:[#allocation2 + $0x90] sm:$0xf] %v2323
      %2432 = vst [vmem:[#allocation2 + $0x94] sm:$0xf] %v2324
      %2433 = vst [vmem:[#allocation2 + $0x98] sm:$0xf] %v2325
      %2434 = vst [vmem:[#allocation2 + $0x9c] sm:$0xf] %v2326
      %2435 = vst [vmem:[#allocation2 + $0xa0] sm:$0xf] %v2327
      %2436 = vst [vmem:[#allocation2 + $0xa4] sm:$0xf] %v2328
      %2437 = vst [vmem:[#allocation2 + $0xa8] sm:$0xf] %v2329
      %2438 = vst [vmem:[#allocation2 + $0xac] sm:$0xf] %v2330
      %2439 = vst [vmem:[#allocation2 + $0xb0] sm:$0xf] %v2331
      %2440 = vst [vmem:[#allocation2 + $0xb4] sm:$0xf] %v2332
      %2441 = vst [vmem:[#allocation2 + $0xb8] sm:$0xf] %v2333
      %2442 = vst [vmem:[#allocation2 + $0xbc] sm:$0xf] %v2334
      %2443 = vst [vmem:[#allocation2 + $0xc0] sm:$0xf] %v2335
      %2444 = vst [vmem:[#allocation2 + $0xc4] sm:$0xf] %v2336
      %2445 = vst [vmem:[#allocation2 + $0xc8] sm:$0xf] %v2337
      %2446 = vst [vmem:[#allocation2 + $0xcc] sm:$0xf] %v2338
      %2447 = vst [vmem:[#allocation2 + $0xd0] sm:$0xf] %v2339
      %2448 = vst [vmem:[#allocation2 + $0xd4] sm:$0xf] %v2340
      %2449 = vst [vmem:[#allocation2 + $0xd8] sm:$0xf] %v2341
      %2450 = vst [vmem:[#allocation2 + $0xdc] sm:$0xf] %v2342
      %2451 = vst [vmem:[#allocation2 + $0xe0] sm:$0xf] %v2343
      %2452 = vst [vmem:[#allocation2 + $0xe4] sm:$0xf] %v2344
      %v2453 = vld [vmem:[#allocation2] sm:$0x8]
      %v2454 = vld [vmem:[#allocation2 + $0x4] sm:$0xf]
      %v2455 = vld [vmem:[#allocation2 + $0x8] sm:$0xf]
      %v2456 = vld [vmem:[#allocation2 + $0xc] sm:$0xf]
      %v2457 = vld [vmem:[#allocation2 + $0x10] sm:$0xf]
      %v2458 = vld [vmem:[#allocation2 + $0x14] sm:$0xf]
      %v2459 = vld [vmem:[#allocation2 + $0x18] sm:$0xf]
      %v2460 = vld [vmem:[#allocation2 + $0x1c] sm:$0xf]
      %v2461 = vld [vmem:[#allocation2 + $0x20] sm:$0xf]
      %v2462 = vld [vmem:[#allocation2 + $0x24] sm:$0xf]
      %v2463 = vld [vmem:[#allocation2 + $0x28] sm:$0xf]
      %v2464 = vld [vmem:[#allocation2 + $0x2c] sm:$0xf]
      %v2465 = vld [vmem:[#allocation2 + $0x30] sm:$0xf]
      %v2466 = vld [vmem:[#allocation2 + $0x34] sm:$0xf]
      %v2467 = vld [vmem:[#allocation2 + $0x38] sm:$0xf]
      %v2468 = vld [vmem:[#allocation2 + $0x3c] sm:$0xf]
      %v2469 = vld [vmem:[#allocation2 + $0x40] sm:$0xf]
      %v2470 = vld [vmem:[#allocation2 + $0x44] sm:$0xf]
      %v2471 = vld [vmem:[#allocation2 + $0x48] sm:$0xf]
      %v2472 = vld [vmem:[#allocation2 + $0x4c] sm:$0xf]
      %v2473 = vld [vmem:[#allocation2 + $0x50] sm:$0xf]
      %v2474 = vld [vmem:[#allocation2 + $0x54] sm:$0xf]
      %v2475 = vld [vmem:[#allocation2 + $0x58] sm:$0xf]
      %v2476 = vld [vmem:[#allocation2 + $0x5c] sm:$0xf]
      %v2477 = vld [vmem:[#allocation2 + $0x60] sm:$0xf]
      %v2478 = vld [vmem:[#allocation2 + $0x64] sm:$0xf]
      %v2479 = vld [vmem:[#allocation2 + $0x68] sm:$0xf]
      %v2480 = vld [vmem:[#allocation2 + $0x6c] sm:$0xf]
      %v2481 = vld [vmem:[#allocation2 + $0x70] sm:$0xf]
      %v2482 = vld [vmem:[#allocation2 + $0x74] sm:$0xf]
      %v2483 = vld [vmem:[#allocation2 + $0x78] sm:$0xf]
      %v2484 = vld [vmem:[#allocation2 + $0x7c] sm:$0xf]
      %v2485 = vld [vmem:[#allocation2 + $0x80] sm:$0xf]
      %v2486 = vld [vmem:[#allocation2 + $0x84] sm:$0xf]
      %v2487 = vld [vmem:[#allocation2 + $0x88] sm:$0xf]
      %v2488 = vld [vmem:[#allocation2 + $0x8c] sm:$0xf]
      %v2489 = vld [vmem:[#allocation2 + $0x90] sm:$0xf]
      %v2490 = vld [vmem:[#allocation2 + $0x94] sm:$0xf]
      %v2491 = vld [vmem:[#allocation2 + $0x98] sm:$0xf]
      %v2492 = vld [vmem:[#allocation2 + $0x9c] sm:$0xf]
      %v2493 = vld [vmem:[#allocation2 + $0xa0] sm:$0xf]
      %v2494 = vld [vmem:[#allocation2 + $0xa4] sm:$0xf]
      %v2495 = vld [vmem:[#allocation2 + $0xa8] sm:$0xf]
      %v2496 = vld [vmem:[#allocation2 + $0xac] sm:$0xf]
      %v2497 = vld [vmem:[#allocation2 + $0xb0] sm:$0xf]
      %v2498 = vld [vmem:[#allocation2 + $0xb4] sm:$0xf]
      %v2499 = vld [vmem:[#allocation2 + $0xb8] sm:$0xf]
      %v2500 = vld [vmem:[#allocation2 + $0xbc] sm:$0xf]
      %v2501 = vld [vmem:[#allocation2 + $0xc0] sm:$0xf]
      %v2502 = vld [vmem:[#allocation2 + $0xc4] sm:$0xf]
      %v2503 = vld [vmem:[#allocation2 + $0xc8] sm:$0xf]
      %v2504 = vld [vmem:[#allocation2 + $0xcc] sm:$0xf]
      %v2505 = vld [vmem:[#allocation2 + $0xd0] sm:$0xf]
      %v2506 = vld [vmem:[#allocation2 + $0xd4] sm:$0xf]
      %v2507 = vld [vmem:[#allocation2 + $0xd8] sm:$0xf]
      %v2508 = vld [vmem:[%s2] sm:$0xf]
      %v2509 = vld [vmem:[%s2 + $0x4] sm:$0xf]
      %v2510 = vld [vmem:[%s2 + $0x8] sm:$0xf]
      %v2511 = vld [vmem:[%s2 + $0xc] sm:$0xf]
      %v2512 = vld [vmem:[%s2 + $0x10] sm:$0xf]
      %v2513 = vld [vmem:[%s2 + $0x14] sm:$0xf]
      %v2514 = vld [vmem:[%s2 + $0x18] sm:$0xf]
      %v2515 = vld [vmem:[%s2 + $0x1c] sm:$0xf]
      %v2516 = vld [vmem:[%s2 + $0x20] sm:$0xf]
      %v2517 = vld [vmem:[%s2 + $0x24] sm:$0xf]
      %v2518 = vld [vmem:[%s2 + $0x28] sm:$0xf]
      %v2519 = vld [vmem:[%s2 + $0x2c] sm:$0xf]
      %v2520 = vld [vmem:[%s2 + $0x30] sm:$0xf]
      %v2521 = vld [vmem:[%s2 + $0x34] sm:$0xf]
      %v2522 = vld [vmem:[%s2 + $0x38] sm:$0xf]
      %v2523 = vld [vmem:[%s2 + $0x3c] sm:$0xf]
      %v2524 = vld [vmem:[%s2 + $0x40] sm:$0xf]
      %v2525 = vld [vmem:[%s2 + $0x44] sm:$0xf]
      %v2526 = vld [vmem:[%s2 + $0x48] sm:$0xf]
      %v2527 = vld [vmem:[%s2 + $0x4c] sm:$0xf]
      %v2528 = vld [vmem:[%s2 + $0x50] sm:$0xf]
      %v2529 = vld [vmem:[%s2 + $0x54] sm:$0xf]
      %v2530 = vld [vmem:[%s2 + $0x58] sm:$0xf]
      %v2531 = vld [vmem:[%s2 + $0x5c] sm:$0xf]
      %v2532 = vld [vmem:[%s2 + $0x60] sm:$0xf]
      %v2533 = vld [vmem:[%s2 + $0x64] sm:$0xf]
      %v2534 = vld [vmem:[%s2 + $0x68] sm:$0xf]
      %v2535 = vld [vmem:[%s2 + $0x6c] sm:$0xf]
      %v2536 = vld [vmem:[%s2 + $0x70] sm:$0xf]
      %v2537 = vld [vmem:[%s2 + $0x74] sm:$0xf]
      %v2538 = vld [vmem:[%s2 + $0x78] sm:$0xf]
      %v2539 = vld [vmem:[%s2 + $0x7c] sm:$0xf]
      %v2594 = vunpack.c.l.b16 %v2454
      %v2595 = vunpack.c.l.b16 %v2455
      %v2596 = vunpack.c.l.b16 %v2456
      %v2597 = vunpack.c.l.b16 %v2457
      %v2598 = vunpack.c.l.b16 %v2458
      %v2599 = vunpack.c.l.b16 %v2459
      %v2600 = vunpack.c.l.b16 %v2460
      %v2601 = vunpack.c.l.b16 %v2461
      %v2602 = vunpack.c.l.b16 %v2462
      %v2603 = vunpack.c.l.b16 %v2463
      %v2604 = vunpack.c.l.b16 %v2464
      %v2605 = vunpack.c.l.b16 %v2465
      %v2606 = vunpack.c.l.b16 %v2466
      %v2607 = vunpack.c.l.b16 %v2467
      %v2608 = vunpack.c.l.b16 %v2468
      %v2609 = vunpack.c.l.b16 %v2469
      %v2610 = vunpack.c.l.b16 %v2470
      %v2611 = vunpack.c.l.b16 %v2471
      %v2612 = vunpack.c.l.b16 %v2472
      %v2613 = vunpack.c.l.b16 %v2473
      %v2614 = vunpack.c.l.b16 %v2474
      %v2615 = vunpack.c.l.b16 %v2475
      %v2616 = vunpack.c.l.b16 %v2476
      %v2617 = vunpack.c.l.b16 %v2477
      %v2618 = vunpack.c.l.b16 %v2478
      %v2619 = vunpack.c.l.b16 %v2479
      %v2620 = vunpack.c.l.b16 %v2480
      %v2621 = vunpack.c.l.b16 %v2481
      %v2622 = vunpack.c.l.b16 %v2482
      %v2623 = vunpack.c.l.b16 %v2483
      %v2624 = vunpack.c.l.b16 %v2484
      %v2625 = vunpack.c.l.b16 %v2485
      %v2626 = vunpack.c.l.b16 %v2486
      %v2627 = vunpack.c.l.b16 %v2487
      %v2628 = vunpack.c.l.b16 %v2488
      %v2629 = vunpack.c.l.b16 %v2489
      %v2630 = vunpack.c.l.b16 %v2490
      %v2631 = vunpack.c.l.b16 %v2491
      %v2632 = vunpack.c.l.b16 %v2492
      %v2633 = vunpack.c.l.b16 %v2493
      %v2634 = vunpack.c.l.b16 %v2494
      %v2635 = vunpack.c.l.b16 %v2495
      %v2636 = vunpack.c.l.b16 %v2496
      %v2637 = vunpack.c.l.b16 %v2497
      %v2638 = vunpack.c.l.b16 %v2498
      %v2639 = vunpack.c.l.b16 %v2499
      %v2640 = vunpack.c.l.b16 %v2500
      %v2641 = vunpack.c.l.b16 %v2501
      %v2642 = vunpack.c.l.b16 %v2502
      %v2643 = vunpack.c.l.b16 %v2503
      %v2644 = vunpack.c.l.b16 %v2504
      %v2645 = vunpack.c.l.b16 %v2505
      %v2646 = vunpack.c.l.b16 %v2506
      %v2647 = vunpack.c.l.b16 %v2507
      %v2648 = vpack.c.b16 %v2595, %v2594
      %v2649 = vpack.c.b16 %v2597, %v2596
      %v2650 = vpack.c.b16 %v2599, %v2598
      %v2651 = vpack.c.b16 %v2601, %v2600
      %v2652 = vpack.c.b16 %v2603, %v2602
      %v2653 = vpack.c.b16 %v2605, %v2604
      %v2654 = vpack.c.b16 %v2607, %v2606
      %v2655 = vpack.c.b16 %v2609, %v2608
      %v2656 = vpack.c.b16 %v2611, %v2610
      %v2657 = vpack.c.b16 %v2613, %v2612
      %v2658 = vpack.c.b16 %v2615, %v2614
      %v2659 = vpack.c.b16 %v2617, %v2616
      %v2660 = vpack.c.b16 %v2619, %v2618
      %v2661 = vpack.c.b16 %v2621, %v2620
      %v2662 = vpack.c.b16 %v2623, %v2622
      %v2663 = vpack.c.b16 %v2625, %v2624
      %v2664 = vpack.c.b16 %v2627, %v2626
      %v2665 = vpack.c.b16 %v2629, %v2628
      %v2666 = vpack.c.b16 %v2631, %v2630
      %v2667 = vpack.c.b16 %v2633, %v2632
      %v2668 = vpack.c.b16 %v2635, %v2634
      %v2669 = vpack.c.b16 %v2637, %v2636
      %v2670 = vpack.c.b16 %v2639, %v2638
      %v2671 = vpack.c.b16 %v2641, %v2640
      %v2672 = vpack.c.b16 %v2643, %v2642
      %v2673 = vpack.c.b16 %v2645, %v2644
      %v2674 = vpack.c.b16 %v2647, %v2646
      %v2718 = vunpack.c.l.b16 %v2524
      %v2719 = vunpack.c.l.b16 %v2525
      %v2720 = vunpack.c.l.b16 %v2526
      %v2721 = vunpack.c.l.b16 %v2527
      %v2722 = vunpack.c.l.b16 %v2528
      %v2723 = vunpack.c.l.b16 %v2529
      %v2724 = vunpack.c.l.b16 %v2530
      %v2725 = vunpack.c.l.b16 %v2531
      %v2726 = vunpack.c.l.b16 %v2532
      %v2727 = vunpack.c.l.b16 %v2533
      %v2728 = vunpack.c.l.b16 %v2534
      %v2729 = vunpack.c.l.b16 %v2535
      %v2730 = vunpack.c.l.b16 %v2536
      %v2731 = vunpack.c.l.b16 %v2537
      %v2732 = vunpack.c.l.b16 %v2538
      %v2733 = vunpack.c.l.b16 %v2539
      %v2734 = vpack.c.b16 %v2719, %v2718
      %v2735 = vpack.c.b16 %v2721, %v2720
      %v2736 = vpack.c.b16 %v2723, %v2722
      %v2737 = vpack.c.b16 %v2725, %v2724
      %v2738 = vpack.c.b16 %v2727, %v2726
      %v2739 = vpack.c.b16 %v2729, %v2728
      %v2740 = vpack.c.b16 %v2731, %v2730
      %v2741 = vpack.c.b16 %v2733, %v2732
      %2750 = vmatprep.subr.bf16.mxu0 0
      %2751 = vmatpush1.bf16.msra.mxu0 %v2741
      %2752 = vmatprep.subr.bf16.mxu0 0
      %2753 = vmatpush1.bf16.msra.mxu0 %v2740
      %2754 = vmatprep.subr.bf16.mxu0 0
      %2755 = vmatpush1.bf16.msra.mxu0 %v2739
      %2756 = vmatprep.subr.bf16.mxu0 0
      %2757 = vmatpush1.bf16.msra.mxu0 %v2738
      %2758 = vmatprep.subr.bf16.mxu0 0
      %2759 = vmatpush1.bf16.msra.mxu0 %v2737
      %2760 = vmatprep.subr.bf16.mxu0 0
      %2761 = vmatpush1.bf16.msra.mxu0 %v2736
      %2762 = vmatprep.subr.bf16.mxu0 0
      %2763 = vmatpush1.bf16.msra.mxu0 %v2735
      %2764 = vmatprep.subr.bf16.mxu0 0
      %2765 = vmatpush1.bf16.msra.mxu0 %v2734
      %2766 = vmatprep.subr.bf16.mxu0 0
      %2767 = vmatpush2.bf16.msra.mxu0 0
      %2768 = vmatprep.subr.bf16.mxu0 0
      %2769 = vmatpush2.bf16.msra.mxu0 0
      %2770 = vmatprep.subr.bf16.mxu0 0
      %2771 = vmatpush2.bf16.msra.mxu0 0
      %2772 = vmatprep.subr.bf16.mxu0 0
      %2773 = vmatpush2.bf16.msra.mxu0 0
      %2774 = vmatprep.subr.bf16.mxu0 0
      %2775 = vmatpush2.bf16.msra.mxu0 0
      %2776 = vmatprep.subr.bf16.mxu0 0
      %2777 = vmatpush2.bf16.msra.mxu0 0
      %2778 = vmatprep.subr.bf16.mxu0 0
      %2779 = vmatpush2.bf16.msra.mxu0 0
      %2780 = vmatprep.subr.bf16.mxu0 0
      %2781 = vmatpush2.bf16.msra.mxu0 0
      %2782 = vmatprep.mubr.bf16.mxu0 0
      %2783 = vmatmul.mubr.bf16.gmra.mxu0 %v2648
      %v2784 = vpop.f32.mrf.mxu0
      %v2785 = vadd.f32 0.0, %v2784
      %v2786 = vpop.f32.mrf.mxu0
      %v2787 = vpop.f32.mrf.mxu0
      %v2788 = vadd.f32 0.0, %v2787
      %v2789 = vpop.f32.mrf.mxu0
      %2790 = vmatprep.mubr.bf16.mxu0 0
      %2791 = vmatmul.mubr.bf16.gmra.mxu0 %v2649
      %v2792 = vpop.f32.mrf.mxu0
      %v2793 = vadd.f32 0.0, %v2792
      %v2794 = vpop.f32.mrf.mxu0
      %v2795 = vpop.f32.mrf.mxu0
      %v2796 = vadd.f32 0.0, %v2795
      %v2797 = vpop.f32.mrf.mxu0
      %2798 = vmatprep.mubr.bf16.mxu0 0
      %2799 = vmatmul.mubr.bf16.gmra.mxu0 %v2650
      %v2800 = vpop.f32.mrf.mxu0
      %v2801 = vadd.f32 0.0, %v2800
      %v2802 = vpop.f32.mrf.mxu0
      %v2803 = vpop.f32.mrf.mxu0
      %v2804 = vadd.f32 0.0, %v2803
      %v2805 = vpop.f32.mrf.mxu0
      %2806 = vmatprep.mubr.bf16.mxu0 0
      %2807 = vmatmul.mubr.bf16.gmra.mxu0 %v2651
      %v2808 = vpop.f32.mrf.mxu0
      %v2809 = vadd.f32 0.0, %v2808
      %v2810 = vpop.f32.mrf.mxu0
      %v2811 = vpop.f32.mrf.mxu0
      %v2812 = vadd.f32 0.0, %v2811
      %v2813 = vpop.f32.mrf.mxu0
      %2814 = vmatprep.mubr.bf16.mxu0 0
      %2815 = vmatmul.mubr.bf16.gmra.mxu0 %v2652
      %v2816 = vpop.f32.mrf.mxu0
      %v2817 = vadd.f32 0.0, %v2816
      %v2818 = vpop.f32.mrf.mxu0
      %v2819 = vpop.f32.mrf.mxu0
      %v2820 = vadd.f32 0.0, %v2819
      %v2821 = vpop.f32.mrf.mxu0
      %2822 = vmatprep.mubr.bf16.mxu0 0
      %2823 = vmatmul.mubr.bf16.gmra.mxu0 %v2653
      %v2824 = vpop.f32.mrf.mxu0
      %v2825 = vadd.f32 0.0, %v2824
      %v2826 = vpop.f32.mrf.mxu0
      %v2827 = vpop.f32.mrf.mxu0
      %v2828 = vadd.f32 0.0, %v2827
      %v2829 = vpop.f32.mrf.mxu0
      %2830 = vmatprep.mubr.bf16.mxu0 0
      %2831 = vmatmul.mubr.bf16.gmra.mxu0 %v2654
      %v2832 = vpop.f32.mrf.mxu0
      %v2833 = vadd.f32 0.0, %v2832
      %v2834 = vpop.f32.mrf.mxu0
      %v2835 = vpop.f32.mrf.mxu0
      %v2836 = vadd.f32 0.0, %v2835
      %v2837 = vpop.f32.mrf.mxu0
      %2838 = vmatprep.mubr.bf16.mxu0 0
      %2839 = vmatmul.mubr.bf16.gmra.mxu0 %v2655
      %v2840 = vpop.f32.mrf.mxu0
      %v2841 = vadd.f32 0.0, %v2840
      %v2842 = vpop.f32.mrf.mxu0
      %v2843 = vpop.f32.mrf.mxu0
      %v2844 = vadd.f32 0.0, %v2843
      %v2845 = vpop.f32.mrf.mxu0
      %2846 = vmatprep.mubr.bf16.mxu0 0
      %2847 = vmatmul.mubr.bf16.gmra.mxu0 %v2656
      %v2848 = vpop.f32.mrf.mxu0
      %v2849 = vadd.f32 0.0, %v2848
      %v2850 = vpop.f32.mrf.mxu0
      %v2851 = vpop.f32.mrf.mxu0
      %v2852 = vadd.f32 0.0, %v2851
      %v2853 = vpop.f32.mrf.mxu0
      %2854 = vmatprep.mubr.bf16.mxu0 0
      %2855 = vmatmul.mubr.bf16.gmra.mxu0 %v2657
      %v2856 = vpop.f32.mrf.mxu0
      %v2857 = vadd.f32 0.0, %v2856
      %v2858 = vpop.f32.mrf.mxu0
      %v2859 = vpop.f32.mrf.mxu0
      %v2860 = vadd.f32 0.0, %v2859
      %v2861 = vpop.f32.mrf.mxu0
      %2862 = vmatprep.mubr.bf16.mxu0 0
      %2863 = vmatmul.mubr.bf16.gmra.mxu0 %v2658
      %v2864 = vpop.f32.mrf.mxu0
      %v2865 = vadd.f32 0.0, %v2864
      %v2866 = vpop.f32.mrf.mxu0
      %v2867 = vpop.f32.mrf.mxu0
      %v2868 = vadd.f32 0.0, %v2867
      %v2869 = vpop.f32.mrf.mxu0
      %2870 = vmatprep.mubr.bf16.mxu0 0
      %2871 = vmatmul.mubr.bf16.gmra.mxu0 %v2659
      %v2872 = vpop.f32.mrf.mxu0
      %v2873 = vadd.f32 0.0, %v2872
      %v2874 = vpop.f32.mrf.mxu0
      %v2875 = vpop.f32.mrf.mxu0
      %v2876 = vadd.f32 0.0, %v2875
      %v2877 = vpop.f32.mrf.mxu0
      %2878 = vmatprep.mubr.bf16.mxu0 0
      %2879 = vmatmul.mubr.bf16.gmra.mxu0 %v2660
      %v2880 = vpop.f32.mrf.mxu0
      %v2881 = vadd.f32 0.0, %v2880
      %v2882 = vpop.f32.mrf.mxu0
      %v2883 = vpop.f32.mrf.mxu0
      %v2884 = vadd.f32 0.0, %v2883
      %v2885 = vpop.f32.mrf.mxu0
      %2886 = vmatprep.mubr.bf16.mxu0 0
      %2887 = vmatmul.mubr.bf16.gmra.mxu0 %v2661
      %v2888 = vpop.f32.mrf.mxu0
      %v2889 = vadd.f32 0.0, %v2888
      %v2890 = vpop.f32.mrf.mxu0
      %v2891 = vpop.f32.mrf.mxu0
      %v2892 = vadd.f32 0.0, %v2891
      %v2893 = vpop.f32.mrf.mxu0
      %2894 = vmatprep.mubr.bf16.mxu0 0
      %2895 = vmatmul.mubr.bf16.gmra.mxu0 %v2662
      %v2896 = vpop.f32.mrf.mxu0
      %v2897 = vadd.f32 0.0, %v2896
      %v2898 = vpop.f32.mrf.mxu0
      %v2899 = vpop.f32.mrf.mxu0
      %v2900 = vadd.f32 0.0, %v2899
      %v2901 = vpop.f32.mrf.mxu0
      %2902 = vmatprep.mubr.bf16.mxu0 0
      %2903 = vmatmul.mubr.bf16.gmra.mxu0 %v2663
      %v2904 = vpop.f32.mrf.mxu0
      %v2905 = vadd.f32 0.0, %v2904
      %v2906 = vpop.f32.mrf.mxu0
      %v2907 = vpop.f32.mrf.mxu0
      %v2908 = vadd.f32 0.0, %v2907
      %v2909 = vpop.f32.mrf.mxu0
      %2910 = vmatprep.mubr.bf16.mxu0 0
      %2911 = vmatmul.mubr.bf16.gmra.mxu0 %v2664
      %v2912 = vpop.f32.mrf.mxu0
      %v2913 = vadd.f32 0.0, %v2912
      %v2914 = vpop.f32.mrf.mxu0
      %v2915 = vpop.f32.mrf.mxu0
      %v2916 = vadd.f32 0.0, %v2915
      %v2917 = vpop.f32.mrf.mxu0
      %2918 = vmatprep.mubr.bf16.mxu0 0
      %2919 = vmatmul.mubr.bf16.gmra.mxu0 %v2665
      %v2920 = vpop.f32.mrf.mxu0
      %v2921 = vadd.f32 0.0, %v2920
      %v2922 = vpop.f32.mrf.mxu0
      %v2923 = vpop.f32.mrf.mxu0
      %v2924 = vadd.f32 0.0, %v2923
      %v2925 = vpop.f32.mrf.mxu0
      %2926 = vmatprep.mubr.bf16.mxu0 0
      %2927 = vmatmul.mubr.bf16.gmra.mxu0 %v2666
      %v2928 = vpop.f32.mrf.mxu0
      %v2929 = vadd.f32 0.0, %v2928
      %v2930 = vpop.f32.mrf.mxu0
      %v2931 = vpop.f32.mrf.mxu0
      %v2932 = vadd.f32 0.0, %v2931
      %v2933 = vpop.f32.mrf.mxu0
      %2934 = vmatprep.mubr.bf16.mxu0 0
      %2935 = vmatmul.mubr.bf16.gmra.mxu0 %v2667
      %v2936 = vpop.f32.mrf.mxu0
      %v2937 = vadd.f32 0.0, %v2936
      %v2938 = vpop.f32.mrf.mxu0
      %v2939 = vpop.f32.mrf.mxu0
      %v2940 = vadd.f32 0.0, %v2939
      %v2941 = vpop.f32.mrf.mxu0
      %2942 = vmatprep.mubr.bf16.mxu0 0
      %2943 = vmatmul.mubr.bf16.gmra.mxu0 %v2668
      %v2944 = vpop.f32.mrf.mxu0
      %v2945 = vadd.f32 0.0, %v2944
      %v2946 = vpop.f32.mrf.mxu0
      %v2947 = vpop.f32.mrf.mxu0
      %v2948 = vadd.f32 0.0, %v2947
      %v2949 = vpop.f32.mrf.mxu0
      %2950 = vmatprep.mubr.bf16.mxu0 0
      %2951 = vmatmul.mubr.bf16.gmra.mxu0 %v2669
      %v2952 = vpop.f32.mrf.mxu0
      %v2953 = vadd.f32 0.0, %v2952
      %v2954 = vpop.f32.mrf.mxu0
      %v2955 = vpop.f32.mrf.mxu0
      %v2956 = vadd.f32 0.0, %v2955
      %v2957 = vpop.f32.mrf.mxu0
      %2958 = vmatprep.mubr.bf16.mxu0 0
      %2959 = vmatmul.mubr.bf16.gmra.mxu0 %v2670
      %v2960 = vpop.f32.mrf.mxu0
      %v2961 = vadd.f32 0.0, %v2960
      %v2962 = vpop.f32.mrf.mxu0
      %v2963 = vpop.f32.mrf.mxu0
      %v2964 = vadd.f32 0.0, %v2963
      %v2965 = vpop.f32.mrf.mxu0
      %2966 = vmatprep.mubr.bf16.mxu0 0
      %2967 = vmatmul.mubr.bf16.gmra.mxu0 %v2671
      %v2968 = vpop.f32.mrf.mxu0
      %v2969 = vadd.f32 0.0, %v2968
      %v2970 = vpop.f32.mrf.mxu0
      %v2971 = vpop.f32.mrf.mxu0
      %v2972 = vadd.f32 0.0, %v2971
      %v2973 = vpop.f32.mrf.mxu0
      %2974 = vmatprep.mubr.bf16.mxu0 0
      %2975 = vmatmul.mubr.bf16.gmra.mxu0 %v2672
      %v2976 = vpop.f32.mrf.mxu0
      %v2977 = vadd.f32 0.0, %v2976
      %v2978 = vpop.f32.mrf.mxu0
      %v2979 = vpop.f32.mrf.mxu0
      %v2980 = vadd.f32 0.0, %v2979
      %v2981 = vpop.f32.mrf.mxu0
      %2982 = vmatprep.mubr.bf16.mxu0 0
      %2983 = vmatmul.mubr.bf16.gmra.mxu0 %v2673
      %v2984 = vpop.f32.mrf.mxu0
      %v2985 = vadd.f32 0.0, %v2984
      %v2986 = vpop.f32.mrf.mxu0
      %v2987 = vpop.f32.mrf.mxu0
      %v2988 = vadd.f32 0.0, %v2987
      %v2989 = vpop.f32.mrf.mxu0
      %2990 = vmatprep.mubr.bf16.mxu0 0
      %2991 = vmatmul.mubr.bf16.gmra.mxu0 %v2674
      %v2992 = vpop.f32.mrf.mxu0
      %v2993 = vadd.f32 0.0, %v2992
      %v2994 = vpop.f32.mrf.mxu0
      %v2995 = vpop.f32.mrf.mxu0
      %v2996 = vadd.f32 0.0, %v2995
      %v2997 = vpop.f32.mrf.mxu0
      %2998 = vdwg.mxu0
      %v3000 = vunpack.c.l.b16 %v2453
      %v3001 = vpack.c.b16 %v2594, %v3000
      %v3002 = vpack.c.b16 %v2596, %v2595
      %v3003 = vpack.c.b16 %v2598, %v2597
      %v3004 = vpack.c.b16 %v2600, %v2599
      %v3005 = vpack.c.b16 %v2602, %v2601
      %v3006 = vpack.c.b16 %v2604, %v2603
      %v3007 = vpack.c.b16 %v2606, %v2605
      %v3008 = vpack.c.b16 %v2608, %v2607
      %v3009 = vpack.c.b16 %v2610, %v2609
      %v3010 = vpack.c.b16 %v2612, %v2611
      %v3011 = vpack.c.b16 %v2614, %v2613
      %v3012 = vpack.c.b16 %v2616, %v2615
      %v3013 = vpack.c.b16 %v2618, %v2617
      %v3014 = vpack.c.b16 %v2620, %v2619
      %v3015 = vpack.c.b16 %v2622, %v2621
      %v3016 = vpack.c.b16 %v2624, %v2623
      %v3017 = vpack.c.b16 %v2626, %v2625
      %v3018 = vpack.c.b16 %v2628, %v2627
      %v3019 = vpack.c.b16 %v2630, %v2629
      %v3020 = vpack.c.b16 %v2632, %v2631
      %v3021 = vpack.c.b16 %v2634, %v2633
      %v3022 = vpack.c.b16 %v2636, %v2635
      %v3023 = vpack.c.b16 %v2638, %v2637
      %v3024 = vpack.c.b16 %v2640, %v2639
      %v3025 = vpack.c.b16 %v2642, %v2641
      %v3026 = vpack.c.b16 %v2644, %v2643
      %v3027 = vpack.c.b16 %v2646, %v2645
      %v3028 = vpack.c.b16 %v2647, %v2647
      %vm3029 = vsmask.f32 4352
      %v3031 = vshrl.u32 %v3001, 16
      %v3033 = vrot.slane %v3031, 3
      %v3034 = vshll.u32 %v3001, 16
      %v3036 = vrot.slane %v3034, 4
      %v3037 = vor.u32 %v3033, %v3036
      %v3039 = vshrl.u32 %v3002, 16
      %v3041 = vrot.slane %v3039, 3
      %v3042 = vshll.u32 %v3002, 16
      %v3044 = vrot.slane %v3042, 4
      %v3045 = vor.u32 %v3041, %v3044
      %v3046 = vsel %vm3029, %v3037, %v3045
      %v3048 = vshrl.u32 %v3003, 16
      %v3050 = vrot.slane %v3048, 3
      %v3051 = vshll.u32 %v3003, 16
      %v3053 = vrot.slane %v3051, 4
      %v3054 = vor.u32 %v3050, %v3053
      %v3055 = vsel %vm3029, %v3045, %v3054
      %v3057 = vshrl.u32 %v3004, 16
      %v3059 = vrot.slane %v3057, 3
      %v3060 = vshll.u32 %v3004, 16
      %v3062 = vrot.slane %v3060, 4
      %v3063 = vor.u32 %v3059, %v3062
      %v3064 = vsel %vm3029, %v3054, %v3063
      %v3066 = vshrl.u32 %v3005, 16
      %v3068 = vrot.slane %v3066, 3
      %v3069 = vshll.u32 %v3005, 16
      %v3071 = vrot.slane %v3069, 4
      %v3072 = vor.u32 %v3068, %v3071
      %v3073 = vsel %vm3029, %v3063, %v3072
      %v3075 = vshrl.u32 %v3006, 16
      %v3077 = vrot.slane %v3075, 3
      %v3078 = vshll.u32 %v3006, 16
      %v3080 = vrot.slane %v3078, 4
      %v3081 = vor.u32 %v3077, %v3080
      %v3082 = vsel %vm3029, %v3072, %v3081
      %v3084 = vshrl.u32 %v3007, 16
      %v3086 = vrot.slane %v3084, 3
      %v3087 = vshll.u32 %v3007, 16
      %v3089 = vrot.slane %v3087, 4
      %v3090 = vor.u32 %v3086, %v3089
      %v3091 = vsel %vm3029, %v3081, %v3090
      %v3093 = vshrl.u32 %v3008, 16
      %v3095 = vrot.slane %v3093, 3
      %v3096 = vshll.u32 %v3008, 16
      %v3098 = vrot.slane %v3096, 4
      %v3099 = vor.u32 %v3095, %v3098
      %v3100 = vsel %vm3029, %v3090, %v3099
      %v3102 = vshrl.u32 %v3009, 16
      %v3104 = vrot.slane %v3102, 3
      %v3105 = vshll.u32 %v3009, 16
      %v3107 = vrot.slane %v3105, 4
      %v3108 = vor.u32 %v3104, %v3107
      %v3109 = vsel %vm3029, %v3099, %v3108
      %v3111 = vshrl.u32 %v3010, 16
      %v3113 = vrot.slane %v3111, 3
      %v3114 = vshll.u32 %v3010, 16
      %v3116 = vrot.slane %v3114, 4
      %v3117 = vor.u32 %v3113, %v3116
      %v3118 = vsel %vm3029, %v3108, %v3117
      %v3120 = vshrl.u32 %v3011, 16
      %v3122 = vrot.slane %v3120, 3
      %v3123 = vshll.u32 %v3011, 16
      %v3125 = vrot.slane %v3123, 4
      %v3126 = vor.u32 %v3122, %v3125
      %v3127 = vsel %vm3029, %v3117, %v3126
      %v3129 = vshrl.u32 %v3012, 16
      %v3131 = vrot.slane %v3129, 3
      %v3132 = vshll.u32 %v3012, 16
      %v3134 = vrot.slane %v3132, 4
      %v3135 = vor.u32 %v3131, %v3134
      %v3136 = vsel %vm3029, %v3126, %v3135
      %v3138 = vshrl.u32 %v3013, 16
      %v3140 = vrot.slane %v3138, 3
      %v3141 = vshll.u32 %v3013, 16
      %v3143 = vrot.slane %v3141, 4
      %v3144 = vor.u32 %v3140, %v3143
      %v3145 = vsel %vm3029, %v3135, %v3144
      %v3147 = vshrl.u32 %v3014, 16
      %v3149 = vrot.slane %v3147, 3
      %v3150 = vshll.u32 %v3014, 16
      %v3152 = vrot.slane %v3150, 4
      %v3153 = vor.u32 %v3149, %v3152
      %v3154 = vsel %vm3029, %v3144, %v3153
      %v3156 = vshrl.u32 %v3015, 16
      %v3158 = vrot.slane %v3156, 3
      %v3159 = vshll.u32 %v3015, 16
      %v3161 = vrot.slane %v3159, 4
      %v3162 = vor.u32 %v3158, %v3161
      %v3163 = vsel %vm3029, %v3153, %v3162
      %v3165 = vshrl.u32 %v3016, 16
      %v3167 = vrot.slane %v3165, 3
      %v3168 = vshll.u32 %v3016, 16
      %v3170 = vrot.slane %v3168, 4
      %v3171 = vor.u32 %v3167, %v3170
      %v3172 = vsel %vm3029, %v3162, %v3171
      %v3174 = vshrl.u32 %v3017, 16
      %v3176 = vrot.slane %v3174, 3
      %v3177 = vshll.u32 %v3017, 16
      %v3179 = vrot.slane %v3177, 4
      %v3180 = vor.u32 %v3176, %v3179
      %v3181 = vsel %vm3029, %v3171, %v3180
      %v3183 = vshrl.u32 %v3018, 16
      %v3185 = vrot.slane %v3183, 3
      %v3186 = vshll.u32 %v3018, 16
      %v3188 = vrot.slane %v3186, 4
      %v3189 = vor.u32 %v3185, %v3188
      %v3190 = vsel %vm3029, %v3180, %v3189
      %v3192 = vshrl.u32 %v3019, 16
      %v3194 = vrot.slane %v3192, 3
      %v3195 = vshll.u32 %v3019, 16
      %v3197 = vrot.slane %v3195, 4
      %v3198 = vor.u32 %v3194, %v3197
      %v3199 = vsel %vm3029, %v3189, %v3198
      %v3201 = vshrl.u32 %v3020, 16
      %v3203 = vrot.slane %v3201, 3
      %v3204 = vshll.u32 %v3020, 16
      %v3206 = vrot.slane %v3204, 4
      %v3207 = vor.u32 %v3203, %v3206
      %v3208 = vsel %vm3029, %v3198, %v3207
      %v3210 = vshrl.u32 %v3021, 16
      %v3212 = vrot.slane %v3210, 3
      %v3213 = vshll.u32 %v3021, 16
      %v3215 = vrot.slane %v3213, 4
      %v3216 = vor.u32 %v3212, %v3215
      %v3217 = vsel %vm3029, %v3207, %v3216
      %v3219 = vshrl.u32 %v3022, 16
      %v3221 = vrot.slane %v3219, 3
      %v3222 = vshll.u32 %v3022, 16
      %v3224 = vrot.slane %v3222, 4
      %v3225 = vor.u32 %v3221, %v3224
      %v3226 = vsel %vm3029, %v3216, %v3225
      %v3228 = vshrl.u32 %v3023, 16
      %v3230 = vrot.slane %v3228, 3
      %v3231 = vshll.u32 %v3023, 16
      %v3233 = vrot.slane %v3231, 4
      %v3234 = vor.u32 %v3230, %v3233
      %v3235 = vsel %vm3029, %v3225, %v3234
      %v3237 = vshrl.u32 %v3024, 16
      %v3239 = vrot.slane %v3237, 3
      %v3240 = vshll.u32 %v3024, 16
      %v3242 = vrot.slane %v3240, 4
      %v3243 = vor.u32 %v3239, %v3242
      %v3244 = vsel %vm3029, %v3234, %v3243
      %v3246 = vshrl.u32 %v3025, 16
      %v3248 = vrot.slane %v3246, 3
      %v3249 = vshll.u32 %v3025, 16
      %v3251 = vrot.slane %v3249, 4
      %v3252 = vor.u32 %v3248, %v3251
      %v3253 = vsel %vm3029, %v3243, %v3252
      %v3255 = vshrl.u32 %v3026, 16
      %v3257 = vrot.slane %v3255, 3
      %v3258 = vshll.u32 %v3026, 16
      %v3260 = vrot.slane %v3258, 4
      %v3261 = vor.u32 %v3257, %v3260
      %v3262 = vsel %vm3029, %v3252, %v3261
      %v3264 = vshrl.u32 %v3027, 16
      %v3266 = vrot.slane %v3264, 3
      %v3267 = vshll.u32 %v3027, 16
      %v3269 = vrot.slane %v3267, 4
      %v3270 = vor.u32 %v3266, %v3269
      %v3271 = vsel %vm3029, %v3261, %v3270
      %v3273 = vshrl.u32 %v3028, 16
      %v3275 = vrot.slane %v3273, 3
      %v3276 = vshll.u32 %v3028, 16
      %v3278 = vrot.slane %v3276, 4
      %v3279 = vor.u32 %v3275, %v3278
      %v3280 = vsel %vm3029, %v3270, %v3279
      %v3324 = vunpack.c.l.b16 %v2508
      %v3325 = vunpack.c.l.b16 %v2509
      %v3326 = vunpack.c.l.b16 %v2510
      %v3327 = vunpack.c.l.b16 %v2511
      %v3328 = vunpack.c.l.b16 %v2512
      %v3329 = vunpack.c.l.b16 %v2513
      %v3330 = vunpack.c.l.b16 %v2514
      %v3331 = vunpack.c.l.b16 %v2515
      %v3332 = vunpack.c.l.b16 %v2516
      %v3333 = vunpack.c.l.b16 %v2517
      %v3334 = vunpack.c.l.b16 %v2518
      %v3335 = vunpack.c.l.b16 %v2519
      %v3336 = vunpack.c.l.b16 %v2520
      %v3337 = vunpack.c.l.b16 %v2521
      %v3338 = vunpack.c.l.b16 %v2522
      %v3339 = vunpack.c.l.b16 %v2523
      %v3340 = vpack.c.b16 %v3325, %v3324
      %v3341 = vpack.c.b16 %v3327, %v3326
      %v3342 = vpack.c.b16 %v3329, %v3328
      %v3343 = vpack.c.b16 %v3331, %v3330
      %v3344 = vpack.c.b16 %v3333, %v3332
      %v3345 = vpack.c.b16 %v3335, %v3334
      %v3346 = vpack.c.b16 %v3337, %v3336
      %v3347 = vpack.c.b16 %v3339, %v3338
      %3356 = vmatprep.subr.bf16.mxu0 0
      %3357 = vmatpush1.bf16.msra.mxu0 %v3347
      %3358 = vmatprep.subr.bf16.mxu0 0
      %3359 = vmatpush1.bf16.msra.mxu0 %v3346
      %3360 = vmatprep.subr.bf16.mxu0 0
      %3361 = vmatpush1.bf16.msra.mxu0 %v3345
      %3362 = vmatprep.subr.bf16.mxu0 0
      %3363 = vmatpush1.bf16.msra.mxu0 %v3344
      %3364 = vmatprep.subr.bf16.mxu0 0
      %3365 = vmatpush1.bf16.msra.mxu0 %v3343
      %3366 = vmatprep.subr.bf16.mxu0 0
      %3367 = vmatpush1.bf16.msra.mxu0 %v3342
      %3368 = vmatprep.subr.bf16.mxu0 0
      %3369 = vmatpush1.bf16.msra.mxu0 %v3341
      %3370 = vmatprep.subr.bf16.mxu0 0
      %3371 = vmatpush1.bf16.msra.mxu0 %v3340
      %3372 = vmatprep.subr.bf16.mxu0 0
      %3373 = vmatpush2.bf16.msra.mxu0 0
      %3374 = vmatprep.subr.bf16.mxu0 0
      %3375 = vmatpush2.bf16.msra.mxu0 0
      %3376 = vmatprep.subr.bf16.mxu0 0
      %3377 = vmatpush2.bf16.msra.mxu0 0
      %3378 = vmatprep.subr.bf16.mxu0 0
      %3379 = vmatpush2.bf16.msra.mxu0 0
      %3380 = vmatprep.subr.bf16.mxu0 0
      %3381 = vmatpush2.bf16.msra.mxu0 0
      %3382 = vmatprep.subr.bf16.mxu0 0
      %3383 = vmatpush2.bf16.msra.mxu0 0
      %3384 = vmatprep.subr.bf16.mxu0 0
      %3385 = vmatpush2.bf16.msra.mxu0 0
      %3386 = vmatprep.subr.bf16.mxu0 0
      %3387 = vmatpush2.bf16.msra.mxu0 0
      %3388 = vmatprep.mubr.bf16.mxu0 0
      %3389 = vmatmul.mubr.bf16.gmra.mxu0 %v3046
      %v3390 = vpop.f32.mrf.mxu0
      %v3391 = vadd.f32 %v2785, %v3390
      %v3392 = vpop.f32.mrf.mxu0
      %v3393 = vpop.f32.mrf.mxu0
      %v3394 = vadd.f32 %v2788, %v3393
      %v3395 = vpop.f32.mrf.mxu0
      %3396 = vmatprep.mubr.bf16.mxu0 0
      %3397 = vmatmul.mubr.bf16.gmra.mxu0 %v3055
      %v3398 = vpop.f32.mrf.mxu0
      %v3399 = vadd.f32 %v2793, %v3398
      %v3400 = vpop.f32.mrf.mxu0
      %v3401 = vpop.f32.mrf.mxu0
      %v3402 = vadd.f32 %v2796, %v3401
      %v3403 = vpop.f32.mrf.mxu0
      %3404 = vmatprep.mubr.bf16.mxu0 0
      %3405 = vmatmul.mubr.bf16.gmra.mxu0 %v3064
      %v3406 = vpop.f32.mrf.mxu0
      %v3407 = vadd.f32 %v2801, %v3406
      %v3408 = vpop.f32.mrf.mxu0
      %v3409 = vpop.f32.mrf.mxu0
      %v3410 = vadd.f32 %v2804, %v3409
      %v3411 = vpop.f32.mrf.mxu0
      %3412 = vmatprep.mubr.bf16.mxu0 0
      %3413 = vmatmul.mubr.bf16.gmra.mxu0 %v3073
      %v3414 = vpop.f32.mrf.mxu0
      %v3415 = vadd.f32 %v2809, %v3414
      %v3416 = vpop.f32.mrf.mxu0
      %v3417 = vpop.f32.mrf.mxu0
      %v3418 = vadd.f32 %v2812, %v3417
      %v3419 = vpop.f32.mrf.mxu0
      %3420 = vmatprep.mubr.bf16.mxu0 0
      %3421 = vmatmul.mubr.bf16.gmra.mxu0 %v3082
      %v3422 = vpop.f32.mrf.mxu0
      %v3423 = vadd.f32 %v2817, %v3422
      %v3424 = vpop.f32.mrf.mxu0
      %v3425 = vpop.f32.mrf.mxu0
      %v3426 = vadd.f32 %v2820, %v3425
      %v3427 = vpop.f32.mrf.mxu0
      %3428 = vmatprep.mubr.bf16.mxu0 0
      %3429 = vmatmul.mubr.bf16.gmra.mxu0 %v3091
      %v3430 = vpop.f32.mrf.mxu0
      %v3431 = vadd.f32 %v2825, %v3430
      %v3432 = vpop.f32.mrf.mxu0
      %v3433 = vpop.f32.mrf.mxu0
      %v3434 = vadd.f32 %v2828, %v3433
      %v3435 = vpop.f32.mrf.mxu0
      %3436 = vmatprep.mubr.bf16.mxu0 0
      %3437 = vmatmul.mubr.bf16.gmra.mxu0 %v3100
      %v3438 = vpop.f32.mrf.mxu0
      %v3439 = vadd.f32 %v2833, %v3438
      %v3440 = vpop.f32.mrf.mxu0
      %v3441 = vpop.f32.mrf.mxu0
      %v3442 = vadd.f32 %v2836, %v3441
      %v3443 = vpop.f32.mrf.mxu0
      %3444 = vmatprep.mubr.bf16.mxu0 0
      %3445 = vmatmul.mubr.bf16.gmra.mxu0 %v3109
      %v3446 = vpop.f32.mrf.mxu0
      %v3447 = vadd.f32 %v2841, %v3446
      %v3448 = vpop.f32.mrf.mxu0
      %v3449 = vpop.f32.mrf.mxu0
      %v3450 = vadd.f32 %v2844, %v3449
      %v3451 = vpop.f32.mrf.mxu0
      %3452 = vmatprep.mubr.bf16.mxu0 0
      %3453 = vmatmul.mubr.bf16.gmra.mxu0 %v3118
      %v3454 = vpop.f32.mrf.mxu0
      %v3455 = vadd.f32 %v2849, %v3454
      %v3456 = vpop.f32.mrf.mxu0
      %v3457 = vpop.f32.mrf.mxu0
      %v3458 = vadd.f32 %v2852, %v3457
      %v3459 = vpop.f32.mrf.mxu0
      %3460 = vmatprep.mubr.bf16.mxu0 0
      %3461 = vmatmul.mubr.bf16.gmra.mxu0 %v3127
      %v3462 = vpop.f32.mrf.mxu0
      %v3463 = vadd.f32 %v2857, %v3462
      %v3464 = vpop.f32.mrf.mxu0
      %v3465 = vpop.f32.mrf.mxu0
      %v3466 = vadd.f32 %v2860, %v3465
      %v3467 = vpop.f32.mrf.mxu0
      %3468 = vmatprep.mubr.bf16.mxu0 0
      %3469 = vmatmul.mubr.bf16.gmra.mxu0 %v3136
      %v3470 = vpop.f32.mrf.mxu0
      %v3471 = vadd.f32 %v2865, %v3470
      %v3472 = vpop.f32.mrf.mxu0
      %v3473 = vpop.f32.mrf.mxu0
      %v3474 = vadd.f32 %v2868, %v3473
      %v3475 = vpop.f32.mrf.mxu0
      %3476 = vmatprep.mubr.bf16.mxu0 0
      %3477 = vmatmul.mubr.bf16.gmra.mxu0 %v3145
      %v3478 = vpop.f32.mrf.mxu0
      %v3479 = vadd.f32 %v2873, %v3478
      %v3480 = vpop.f32.mrf.mxu0
      %v3481 = vpop.f32.mrf.mxu0
      %v3482 = vadd.f32 %v2876, %v3481
      %v3483 = vpop.f32.mrf.mxu0
      %3484 = vmatprep.mubr.bf16.mxu0 0
      %3485 = vmatmul.mubr.bf16.gmra.mxu0 %v3154
      %v3486 = vpop.f32.mrf.mxu0
      %v3487 = vadd.f32 %v2881, %v3486
      %v3488 = vpop.f32.mrf.mxu0
      %v3489 = vpop.f32.mrf.mxu0
      %v3490 = vadd.f32 %v2884, %v3489
      %v3491 = vpop.f32.mrf.mxu0
      %3492 = vmatprep.mubr.bf16.mxu0 0
      %3493 = vmatmul.mubr.bf16.gmra.mxu0 %v3163
      %v3494 = vpop.f32.mrf.mxu0
      %v3495 = vadd.f32 %v2889, %v3494
      %v3496 = vpop.f32.mrf.mxu0
      %v3497 = vpop.f32.mrf.mxu0
      %v3498 = vadd.f32 %v2892, %v3497
      %v3499 = vpop.f32.mrf.mxu0
      %3500 = vmatprep.mubr.bf16.mxu0 0
      %3501 = vmatmul.mubr.bf16.gmra.mxu0 %v3172
      %v3502 = vpop.f32.mrf.mxu0
      %v3503 = vadd.f32 %v2897, %v3502
      %v3504 = vpop.f32.mrf.mxu0
      %v3505 = vpop.f32.mrf.mxu0
      %v3506 = vadd.f32 %v2900, %v3505
      %v3507 = vpop.f32.mrf.mxu0
      %3508 = vmatprep.mubr.bf16.mxu0 0
      %3509 = vmatmul.mubr.bf16.gmra.mxu0 %v3181
      %v3510 = vpop.f32.mrf.mxu0
      %v3511 = vadd.f32 %v2905, %v3510
      %v3512 = vpop.f32.mrf.mxu0
      %v3513 = vpop.f32.mrf.mxu0
      %v3514 = vadd.f32 %v2908, %v3513
      %v3515 = vpop.f32.mrf.mxu0
      %3516 = vmatprep.mubr.bf16.mxu0 0
      %3517 = vmatmul.mubr.bf16.gmra.mxu0 %v3190
      %v3518 = vpop.f32.mrf.mxu0
      %v3519 = vadd.f32 %v2913, %v3518
      %v3520 = vpop.f32.mrf.mxu0
      %v3521 = vpop.f32.mrf.mxu0
      %v3522 = vadd.f32 %v2916, %v3521
      %v3523 = vpop.f32.mrf.mxu0
      %3524 = vmatprep.mubr.bf16.mxu0 0
      %3525 = vmatmul.mubr.bf16.gmra.mxu0 %v3199
      %v3526 = vpop.f32.mrf.mxu0
      %v3527 = vadd.f32 %v2921, %v3526
      %v3528 = vpop.f32.mrf.mxu0
      %v3529 = vpop.f32.mrf.mxu0
      %v3530 = vadd.f32 %v2924, %v3529
      %v3531 = vpop.f32.mrf.mxu0
      %3532 = vmatprep.mubr.bf16.mxu0 0
      %3533 = vmatmul.mubr.bf16.gmra.mxu0 %v3208
      %v3534 = vpop.f32.mrf.mxu0
      %v3535 = vadd.f32 %v2929, %v3534
      %v3536 = vpop.f32.mrf.mxu0
      %v3537 = vpop.f32.mrf.mxu0
      %v3538 = vadd.f32 %v2932, %v3537
      %v3539 = vpop.f32.mrf.mxu0
      %3540 = vmatprep.mubr.bf16.mxu0 0
      %3541 = vmatmul.mubr.bf16.gmra.mxu0 %v3217
      %v3542 = vpop.f32.mrf.mxu0
      %v3543 = vadd.f32 %v2937, %v3542
      %v3544 = vpop.f32.mrf.mxu0
      %v3545 = vpop.f32.mrf.mxu0
      %v3546 = vadd.f32 %v2940, %v3545
      %v3547 = vpop.f32.mrf.mxu0
      %3548 = vmatprep.mubr.bf16.mxu0 0
      %3549 = vmatmul.mubr.bf16.gmra.mxu0 %v3226
      %v3550 = vpop.f32.mrf.mxu0
      %v3551 = vadd.f32 %v2945, %v3550
      %v3552 = vpop.f32.mrf.mxu0
      %v3553 = vpop.f32.mrf.mxu0
      %v3554 = vadd.f32 %v2948, %v3553
      %v3555 = vpop.f32.mrf.mxu0
      %3556 = vmatprep.mubr.bf16.mxu0 0
      %3557 = vmatmul.mubr.bf16.gmra.mxu0 %v3235
      %v3558 = vpop.f32.mrf.mxu0
      %v3559 = vadd.f32 %v2953, %v3558
      %v3560 = vpop.f32.mrf.mxu0
      %v3561 = vpop.f32.mrf.mxu0
      %v3562 = vadd.f32 %v2956, %v3561
      %v3563 = vpop.f32.mrf.mxu0
      %3564 = vmatprep.mubr.bf16.mxu0 0
      %3565 = vmatmul.mubr.bf16.gmra.mxu0 %v3244
      %v3566 = vpop.f32.mrf.mxu0
      %v3567 = vadd.f32 %v2961, %v3566
      %v3568 = vpop.f32.mrf.mxu0
      %v3569 = vpop.f32.mrf.mxu0
      %v3570 = vadd.f32 %v2964, %v3569
      %v3571 = vpop.f32.mrf.mxu0
      %3572 = vmatprep.mubr.bf16.mxu0 0
      %3573 = vmatmul.mubr.bf16.gmra.mxu0 %v3253
      %v3574 = vpop.f32.mrf.mxu0
      %v3575 = vadd.f32 %v2969, %v3574
      %v3576 = vpop.f32.mrf.mxu0
      %v3577 = vpop.f32.mrf.mxu0
      %v3578 = vadd.f32 %v2972, %v3577
      %v3579 = vpop.f32.mrf.mxu0
      %3580 = vmatprep.mubr.bf16.mxu0 0
      %3581 = vmatmul.mubr.bf16.gmra.mxu0 %v3262
      %v3582 = vpop.f32.mrf.mxu0
      %v3583 = vadd.f32 %v2977, %v3582
      %v3584 = vpop.f32.mrf.mxu0
      %v3585 = vpop.f32.mrf.mxu0
      %v3586 = vadd.f32 %v2980, %v3585
      %v3587 = vpop.f32.mrf.mxu0
      %3588 = vmatprep.mubr.bf16.mxu0 0
      %3589 = vmatmul.mubr.bf16.gmra.mxu0 %v3271
      %v3590 = vpop.f32.mrf.mxu0
      %v3591 = vadd.f32 %v2985, %v3590
      %v3592 = vpop.f32.mrf.mxu0
      %v3593 = vpop.f32.mrf.mxu0
      %v3594 = vadd.f32 %v2988, %v3593
      %v3595 = vpop.f32.mrf.mxu0
      %3596 = vmatprep.mubr.bf16.mxu0 0
      %3597 = vmatmul.mubr.bf16.gmra.mxu0 %v3280
      %v3598 = vpop.f32.mrf.mxu0
      %v3599 = vadd.f32 %v2993, %v3598
      %v3600 = vpop.f32.mrf.mxu0
      %v3601 = vpop.f32.mrf.mxu0
      %v3602 = vadd.f32 %v2996, %v3601
      %v3603 = vpop.f32.mrf.mxu0
      %3604 = vdwg.mxu0
      %v3605 = vld [vmem:[#allocation2 + $0x4] sm:$0xf]
      %v3606 = vld [vmem:[#allocation2 + $0x8] sm:$0xf]
      %v3607 = vld [vmem:[#allocation2 + $0xc] sm:$0xf]
      %v3608 = vld [vmem:[#allocation2 + $0x10] sm:$0xf]
      %v3609 = vld [vmem:[#allocation2 + $0x14] sm:$0xf]
      %v3610 = vld [vmem:[#allocation2 + $0x18] sm:$0xf]
      %v3611 = vld [vmem:[#allocation2 + $0x1c] sm:$0xf]
      %v3612 = vld [vmem:[#allocation2 + $0x20] sm:$0xf]
      %v3613 = vld [vmem:[#allocation2 + $0x24] sm:$0xf]
      %v3614 = vld [vmem:[#allocation2 + $0x28] sm:$0xf]
      %v3615 = vld [vmem:[#allocation2 + $0x2c] sm:$0xf]
      %v3616 = vld [vmem:[#allocation2 + $0x30] sm:$0xf]
      %v3617 = vld [vmem:[#allocation2 + $0x34] sm:$0xf]
      %v3618 = vld [vmem:[#allocation2 + $0x38] sm:$0xf]
      %v3619 = vld [vmem:[#allocation2 + $0x3c] sm:$0xf]
      %v3620 = vld [vmem:[#allocation2 + $0x40] sm:$0xf]
      %v3621 = vld [vmem:[#allocation2 + $0x44] sm:$0xf]
      %v3622 = vld [vmem:[#allocation2 + $0x48] sm:$0xf]
      %v3623 = vld [vmem:[#allocation2 + $0x4c] sm:$0xf]
      %v3624 = vld [vmem:[#allocation2 + $0x50] sm:$0xf]
      %v3625 = vld [vmem:[#allocation2 + $0x54] sm:$0xf]
      %v3626 = vld [vmem:[#allocation2 + $0x58] sm:$0xf]
      %v3627 = vld [vmem:[#allocation2 + $0x5c] sm:$0xf]
      %v3628 = vld [vmem:[#allocation2 + $0x60] sm:$0xf]
      %v3629 = vld [vmem:[#allocation2 + $0x64] sm:$0xf]
      %v3630 = vld [vmem:[#allocation2 + $0x68] sm:$0xf]
      %v3631 = vld [vmem:[#allocation2 + $0x6c] sm:$0xf]
      %v3632 = vld [vmem:[#allocation2 + $0x70] sm:$0xf]
      %v3633 = vld [vmem:[#allocation2 + $0x74] sm:$0xf]
      %v3634 = vld [vmem:[#allocation2 + $0x78] sm:$0xf]
      %v3635 = vld [vmem:[#allocation2 + $0x7c] sm:$0xf]
      %v3636 = vld [vmem:[#allocation2 + $0x80] sm:$0xf]
      %v3637 = vld [vmem:[#allocation2 + $0x84] sm:$0xf]
      %v3638 = vld [vmem:[#allocation2 + $0x88] sm:$0xf]
      %v3639 = vld [vmem:[#allocation2 + $0x8c] sm:$0xf]
      %v3640 = vld [vmem:[#allocation2 + $0x90] sm:$0xf]
      %v3641 = vld [vmem:[#allocation2 + $0x94] sm:$0xf]
      %v3642 = vld [vmem:[#allocation2 + $0x98] sm:$0xf]
      %v3643 = vld [vmem:[#allocation2 + $0x9c] sm:$0xf]
      %v3644 = vld [vmem:[#allocation2 + $0xa0] sm:$0xf]
      %v3645 = vld [vmem:[#allocation2 + $0xa4] sm:$0xf]
      %v3646 = vld [vmem:[#allocation2 + $0xa8] sm:$0xf]
      %v3647 = vld [vmem:[#allocation2 + $0xac] sm:$0xf]
      %v3648 = vld [vmem:[#allocation2 + $0xb0] sm:$0xf]
      %v3649 = vld [vmem:[#allocation2 + $0xb4] sm:$0xf]
      %v3650 = vld [vmem:[#allocation2 + $0xb8] sm:$0xf]
      %v3651 = vld [vmem:[#allocation2 + $0xbc] sm:$0xf]
      %v3652 = vld [vmem:[#allocation2 + $0xc0] sm:$0xf]
      %v3653 = vld [vmem:[#allocation2 + $0xc4] sm:$0xf]
      %v3654 = vld [vmem:[#allocation2 + $0xc8] sm:$0xf]
      %v3655 = vld [vmem:[#allocation2 + $0xcc] sm:$0xf]
      %v3656 = vld [vmem:[#allocation2 + $0xd0] sm:$0xf]
      %v3657 = vld [vmem:[#allocation2 + $0xd4] sm:$0xf]
      %v3658 = vld [vmem:[#allocation2 + $0xd8] sm:$0xf]
      %v3659 = vld [vmem:[#allocation2 + $0xdc] sm:$0x1]
      %v3660 = vld [vmem:[%s2 + $0x80] sm:$0xf]
      %v3661 = vld [vmem:[%s2 + $0x84] sm:$0xf]
      %v3662 = vld [vmem:[%s2 + $0x88] sm:$0xf]
      %v3663 = vld [vmem:[%s2 + $0x8c] sm:$0xf]
      %v3664 = vld [vmem:[%s2 + $0x90] sm:$0xf]
      %v3665 = vld [vmem:[%s2 + $0x94] sm:$0xf]
      %v3666 = vld [vmem:[%s2 + $0x98] sm:$0xf]
      %v3667 = vld [vmem:[%s2 + $0x9c] sm:$0xf]
      %v3668 = vld [vmem:[%s2 + $0xa0] sm:$0xf]
      %v3669 = vld [vmem:[%s2 + $0xa4] sm:$0xf]
      %v3670 = vld [vmem:[%s2 + $0xa8] sm:$0xf]
      %v3671 = vld [vmem:[%s2 + $0xac] sm:$0xf]
      %v3672 = vld [vmem:[%s2 + $0xb0] sm:$0xf]
      %v3673 = vld [vmem:[%s2 + $0xb4] sm:$0xf]
      %v3674 = vld [vmem:[%s2 + $0xb8] sm:$0xf]
      %v3675 = vld [vmem:[%s2 + $0xbc] sm:$0xf]
      %v3731 = vunpack.c.l.b16 %v3605
      %v3732 = vunpack.c.l.b16 %v3606
      %v3733 = vunpack.c.l.b16 %v3607
      %v3734 = vunpack.c.l.b16 %v3608
      %v3735 = vunpack.c.l.b16 %v3609
      %v3736 = vunpack.c.l.b16 %v3610
      %v3737 = vunpack.c.l.b16 %v3611
      %v3738 = vunpack.c.l.b16 %v3612
      %v3739 = vunpack.c.l.b16 %v3613
      %v3740 = vunpack.c.l.b16 %v3614
      %v3741 = vunpack.c.l.b16 %v3615
      %v3742 = vunpack.c.l.b16 %v3616
      %v3743 = vunpack.c.l.b16 %v3617
      %v3744 = vunpack.c.l.b16 %v3618
      %v3745 = vunpack.c.l.b16 %v3619
      %v3746 = vunpack.c.l.b16 %v3620
      %v3747 = vunpack.c.l.b16 %v3621
      %v3748 = vunpack.c.l.b16 %v3622
      %v3749 = vunpack.c.l.b16 %v3623
      %v3750 = vunpack.c.l.b16 %v3624
      %v3751 = vunpack.c.l.b16 %v3625
      %v3752 = vunpack.c.l.b16 %v3626
      %v3753 = vunpack.c.l.b16 %v3627
      %v3754 = vunpack.c.l.b16 %v3628
      %v3755 = vunpack.c.l.b16 %v3629
      %v3756 = vunpack.c.l.b16 %v3630
      %v3757 = vunpack.c.l.b16 %v3631
      %v3758 = vunpack.c.l.b16 %v3632
      %v3759 = vunpack.c.l.b16 %v3633
      %v3760 = vunpack.c.l.b16 %v3634
      %v3761 = vunpack.c.l.b16 %v3635
      %v3762 = vunpack.c.l.b16 %v3636
      %v3763 = vunpack.c.l.b16 %v3637
      %v3764 = vunpack.c.l.b16 %v3638
      %v3765 = vunpack.c.l.b16 %v3639
      %v3766 = vunpack.c.l.b16 %v3640
      %v3767 = vunpack.c.l.b16 %v3641
      %v3768 = vunpack.c.l.b16 %v3642
      %v3769 = vunpack.c.l.b16 %v3643
      %v3770 = vunpack.c.l.b16 %v3644
      %v3771 = vunpack.c.l.b16 %v3645
      %v3772 = vunpack.c.l.b16 %v3646
      %v3773 = vunpack.c.l.b16 %v3647
      %v3774 = vunpack.c.l.b16 %v3648
      %v3775 = vunpack.c.l.b16 %v3649
      %v3776 = vunpack.c.l.b16 %v3650
      %v3777 = vunpack.c.l.b16 %v3651
      %v3778 = vunpack.c.l.b16 %v3652
      %v3779 = vunpack.c.l.b16 %v3653
      %v3780 = vunpack.c.l.b16 %v3654
      %v3781 = vunpack.c.l.b16 %v3655
      %v3782 = vunpack.c.l.b16 %v3656
      %v3783 = vunpack.c.l.b16 %v3657
      %v3784 = vunpack.c.l.b16 %v3658
      %v3785 = vunpack.c.l.b16 %v3659
      %v3786 = vpack.c.b16 %v3732, %v3731
      %v3787 = vpack.c.b16 %v3734, %v3733
      %v3788 = vpack.c.b16 %v3736, %v3735
      %v3789 = vpack.c.b16 %v3738, %v3737
      %v3790 = vpack.c.b16 %v3740, %v3739
      %v3791 = vpack.c.b16 %v3742, %v3741
      %v3792 = vpack.c.b16 %v3744, %v3743
      %v3793 = vpack.c.b16 %v3746, %v3745
      %v3794 = vpack.c.b16 %v3748, %v3747
      %v3795 = vpack.c.b16 %v3750, %v3749
      %v3796 = vpack.c.b16 %v3752, %v3751
      %v3797 = vpack.c.b16 %v3754, %v3753
      %v3798 = vpack.c.b16 %v3756, %v3755
      %v3799 = vpack.c.b16 %v3758, %v3757
      %v3800 = vpack.c.b16 %v3760, %v3759
      %v3801 = vpack.c.b16 %v3762, %v3761
      %v3802 = vpack.c.b16 %v3764, %v3763
      %v3803 = vpack.c.b16 %v3766, %v3765
      %v3804 = vpack.c.b16 %v3768, %v3767
      %v3805 = vpack.c.b16 %v3770, %v3769
      %v3806 = vpack.c.b16 %v3772, %v3771
      %v3807 = vpack.c.b16 %v3774, %v3773
      %v3808 = vpack.c.b16 %v3776, %v3775
      %v3809 = vpack.c.b16 %v3778, %v3777
      %v3810 = vpack.c.b16 %v3780, %v3779
      %v3811 = vpack.c.b16 %v3782, %v3781
      %v3812 = vpack.c.b16 %v3784, %v3783
      %v3813 = vpack.c.b16 %v3785, %v3785
      %vm3814 = vsmask.f32 7424
      %v3816 = vshrl.u32 %v3786, 16
      %v3818 = vshll.u32 %v3786, 16
      %v3820 = vrot.slane %v3818, 1
      %v3821 = vor.u32 %v3816, %v3820
      %v3823 = vshll.u32 %v3787, 16
      %v3825 = vrot.slane %v3823, 1
      %v3826 = vsel %vm3814, %v3821, %v3825
      %v3827 = vshrl.u32 %v3787, 16
      %v3829 = vor.u32 %v3827, %v3825
      %v3831 = vshll.u32 %v3788, 16
      %v3833 = vrot.slane %v3831, 1
      %v3834 = vsel %vm3814, %v3829, %v3833
      %v3835 = vshrl.u32 %v3788, 16
      %v3837 = vor.u32 %v3835, %v3833
      %v3839 = vshll.u32 %v3789, 16
      %v3841 = vrot.slane %v3839, 1
      %v3842 = vsel %vm3814, %v3837, %v3841
      %v3843 = vshrl.u32 %v3789, 16
      %v3845 = vor.u32 %v3843, %v3841
      %v3847 = vshll.u32 %v3790, 16
      %v3849 = vrot.slane %v3847, 1
      %v3850 = vsel %vm3814, %v3845, %v3849
      %v3851 = vshrl.u32 %v3790, 16
      %v3853 = vor.u32 %v3851, %v3849
      %v3855 = vshll.u32 %v3791, 16
      %v3857 = vrot.slane %v3855, 1
      %v3858 = vsel %vm3814, %v3853, %v3857
      %v3859 = vshrl.u32 %v3791, 16
      %v3861 = vor.u32 %v3859, %v3857
      %v3863 = vshll.u32 %v3792, 16
      %v3865 = vrot.slane %v3863, 1
      %v3866 = vsel %vm3814, %v3861, %v3865
      %v3867 = vshrl.u32 %v3792, 16
      %v3869 = vor.u32 %v3867, %v3865
      %v3871 = vshll.u32 %v3793, 16
      %v3873 = vrot.slane %v3871, 1
      %v3874 = vsel %vm3814, %v3869, %v3873
      %v3875 = vshrl.u32 %v3793, 16
      %v3877 = vor.u32 %v3875, %v3873
      %v3879 = vshll.u32 %v3794, 16
      %v3881 = vrot.slane %v3879, 1
      %v3882 = vsel %vm3814, %v3877, %v3881
      %v3883 = vshrl.u32 %v3794, 16
      %v3885 = vor.u32 %v3883, %v3881
      %v3887 = vshll.u32 %v3795, 16
      %v3889 = vrot.slane %v3887, 1
      %v3890 = vsel %vm3814, %v3885, %v3889
      %v3891 = vshrl.u32 %v3795, 16
      %v3893 = vor.u32 %v3891, %v3889
      %v3895 = vshll.u32 %v3796, 16
      %v3897 = vrot.slane %v3895, 1
      %v3898 = vsel %vm3814, %v3893, %v3897
      %v3899 = vshrl.u32 %v3796, 16
      %v3901 = vor.u32 %v3899, %v3897
      %v3903 = vshll.u32 %v3797, 16
      %v3905 = vrot.slane %v3903, 1
      %v3906 = vsel %vm3814, %v3901, %v3905
      %v3907 = vshrl.u32 %v3797, 16
      %v3909 = vor.u32 %v3907, %v3905
      %v3911 = vshll.u32 %v3798, 16
      %v3913 = vrot.slane %v3911, 1
      %v3914 = vsel %vm3814, %v3909, %v3913
      %v3915 = vshrl.u32 %v3798, 16
      %v3917 = vor.u32 %v3915, %v3913
      %v3919 = vshll.u32 %v3799, 16
      %v3921 = vrot.slane %v3919, 1
      %v3922 = vsel %vm3814, %v3917, %v3921
      %v3923 = vshrl.u32 %v3799, 16
      %v3925 = vor.u32 %v3923, %v3921
      %v3927 = vshll.u32 %v3800, 16
      %v3929 = vrot.slane %v3927, 1
      %v3930 = vsel %vm3814, %v3925, %v3929
      %v3931 = vshrl.u32 %v3800, 16
      %v3933 = vor.u32 %v3931, %v3929
      %v3935 = vshll.u32 %v3801, 16
      %v3937 = vrot.slane %v3935, 1
      %v3938 = vsel %vm3814, %v3933, %v3937
      %v3939 = vshrl.u32 %v3801, 16
      %v3941 = vor.u32 %v3939, %v3937
      %v3943 = vshll.u32 %v3802, 16
      %v3945 = vrot.slane %v3943, 1
      %v3946 = vsel %vm3814, %v3941, %v3945
      %v3947 = vshrl.u32 %v3802, 16
      %v3949 = vor.u32 %v3947, %v3945
      %v3951 = vshll.u32 %v3803, 16
      %v3953 = vrot.slane %v3951, 1
      %v3954 = vsel %vm3814, %v3949, %v3953
      %v3955 = vshrl.u32 %v3803, 16
      %v3957 = vor.u32 %v3955, %v3953
      %v3959 = vshll.u32 %v3804, 16
      %v3961 = vrot.slane %v3959, 1
      %v3962 = vsel %vm3814, %v3957, %v3961
      %v3963 = vshrl.u32 %v3804, 16
      %v3965 = vor.u32 %v3963, %v3961
      %v3967 = vshll.u32 %v3805, 16
      %v3969 = vrot.slane %v3967, 1
      %v3970 = vsel %vm3814, %v3965, %v3969
      %v3971 = vshrl.u32 %v3805, 16
      %v3973 = vor.u32 %v3971, %v3969
      %v3975 = vshll.u32 %v3806, 16
      %v3977 = vrot.slane %v3975, 1
      %v3978 = vsel %vm3814, %v3973, %v3977
      %v3979 = vshrl.u32 %v3806, 16
      %v3981 = vor.u32 %v3979, %v3977
      %v3983 = vshll.u32 %v3807, 16
      %v3985 = vrot.slane %v3983, 1
      %v3986 = vsel %vm3814, %v3981, %v3985
      %v3987 = vshrl.u32 %v3807, 16
      %v3989 = vor.u32 %v3987, %v3985
      %v3991 = vshll.u32 %v3808, 16
      %v3993 = vrot.slane %v3991, 1
      %v3994 = vsel %vm3814, %v3989, %v3993
      %v3995 = vshrl.u32 %v3808, 16
      %v3997 = vor.u32 %v3995, %v3993
      %v3999 = vshll.u32 %v3809, 16
      %v4001 = vrot.slane %v3999, 1
      %v4002 = vsel %vm3814, %v3997, %v4001
      %v4003 = vshrl.u32 %v3809, 16
      %v4005 = vor.u32 %v4003, %v4001
      %v4007 = vshll.u32 %v3810, 16
      %v4009 = vrot.slane %v4007, 1
      %v4010 = vsel %vm3814, %v4005, %v4009
      %v4011 = vshrl.u32 %v3810, 16
      %v4013 = vor.u32 %v4011, %v4009
      %v4015 = vshll.u32 %v3811, 16
      %v4017 = vrot.slane %v4015, 1
      %v4018 = vsel %vm3814, %v4013, %v4017
      %v4019 = vshrl.u32 %v3811, 16
      %v4021 = vor.u32 %v4019, %v4017
      %v4023 = vshll.u32 %v3812, 16
      %v4025 = vrot.slane %v4023, 1
      %v4026 = vsel %vm3814, %v4021, %v4025
      %v4027 = vshrl.u32 %v3812, 16
      %v4029 = vor.u32 %v4027, %v4025
      %v4031 = vshll.u32 %v3813, 16
      %v4033 = vrot.slane %v4031, 1
      %v4034 = vsel %vm3814, %v4029, %v4033
      %v4078 = vunpack.c.l.b16 %v3660
      %v4079 = vunpack.c.l.b16 %v3661
      %v4080 = vunpack.c.l.b16 %v3662
      %v4081 = vunpack.c.l.b16 %v3663
      %v4082 = vunpack.c.l.b16 %v3664
      %v4083 = vunpack.c.l.b16 %v3665
      %v4084 = vunpack.c.l.b16 %v3666
      %v4085 = vunpack.c.l.b16 %v3667
      %v4086 = vunpack.c.l.b16 %v3668
      %v4087 = vunpack.c.l.b16 %v3669
      %v4088 = vunpack.c.l.b16 %v3670
      %v4089 = vunpack.c.l.b16 %v3671
      %v4090 = vunpack.c.l.b16 %v3672
      %v4091 = vunpack.c.l.b16 %v3673
      %v4092 = vunpack.c.l.b16 %v3674
      %v4093 = vunpack.c.l.b16 %v3675
      %v4094 = vpack.c.b16 %v4079, %v4078
      %v4095 = vpack.c.b16 %v4081, %v4080
      %v4096 = vpack.c.b16 %v4083, %v4082
      %v4097 = vpack.c.b16 %v4085, %v4084
      %v4098 = vpack.c.b16 %v4087, %v4086
      %v4099 = vpack.c.b16 %v4089, %v4088
      %v4100 = vpack.c.b16 %v4091, %v4090
      %v4101 = vpack.c.b16 %v4093, %v4092
      %4110 = vmatprep.subr.bf16.mxu0 0
      %4111 = vmatpush1.bf16.msra.mxu0 %v4101
      %4112 = vmatprep.subr.bf16.mxu0 0
      %4113 = vmatpush1.bf16.msra.mxu0 %v4100
      %4114 = vmatprep.subr.bf16.mxu0 0
      %4115 = vmatpush1.bf16.msra.mxu0 %v4099
      %4116 = vmatprep.subr.bf16.mxu0 0
      %4117 = vmatpush1.bf16.msra.mxu0 %v4098
      %4118 = vmatprep.subr.bf16.mxu0 0
      %4119 = vmatpush1.bf16.msra.mxu0 %v4097
      %4120 = vmatprep.subr.bf16.mxu0 0
      %4121 = vmatpush1.bf16.msra.mxu0 %v4096
      %4122 = vmatprep.subr.bf16.mxu0 0
      %4123 = vmatpush1.bf16.msra.mxu0 %v4095
      %4124 = vmatprep.subr.bf16.mxu0 0
      %4125 = vmatpush1.bf16.msra.mxu0 %v4094
      %4126 = vmatprep.subr.bf16.mxu0 0
      %4127 = vmatpush2.bf16.msra.mxu0 0
      %4128 = vmatprep.subr.bf16.mxu0 0
      %4129 = vmatpush2.bf16.msra.mxu0 0
      %4130 = vmatprep.subr.bf16.mxu0 0
      %4131 = vmatpush2.bf16.msra.mxu0 0
      %4132 = vmatprep.subr.bf16.mxu0 0
      %4133 = vmatpush2.bf16.msra.mxu0 0
      %4134 = vmatprep.subr.bf16.mxu0 0
      %4135 = vmatpush2.bf16.msra.mxu0 0
      %4136 = vmatprep.subr.bf16.mxu0 0
      %4137 = vmatpush2.bf16.msra.mxu0 0
      %4138 = vmatprep.subr.bf16.mxu0 0
      %4139 = vmatpush2.bf16.msra.mxu0 0
      %4140 = vmatprep.subr.bf16.mxu0 0
      %4141 = vmatpush2.bf16.msra.mxu0 0
      %4142 = vmatprep.mubr.bf16.mxu0 0
      %4143 = vmatmul.mubr.bf16.gmra.mxu0 %v3826
      %v4144 = vpop.f32.mrf.mxu0
      %v4145 = vadd.f32 0.0, %v4144
      %v4146 = vpop.f32.mrf.mxu0
      %v4147 = vpop.f32.mrf.mxu0
      %v4148 = vadd.f32 0.0, %v4147
      %v4149 = vpop.f32.mrf.mxu0
      %4150 = vmatprep.mubr.bf16.mxu0 0
      %4151 = vmatmul.mubr.bf16.gmra.mxu0 %v3834
      %v4152 = vpop.f32.mrf.mxu0
      %v4153 = vadd.f32 0.0, %v4152
      %v4154 = vpop.f32.mrf.mxu0
      %v4155 = vpop.f32.mrf.mxu0
      %v4156 = vadd.f32 0.0, %v4155
      %v4157 = vpop.f32.mrf.mxu0
      %4158 = vmatprep.mubr.bf16.mxu0 0
      %4159 = vmatmul.mubr.bf16.gmra.mxu0 %v3842
      %v4160 = vpop.f32.mrf.mxu0
      %v4161 = vadd.f32 0.0, %v4160
      %v4162 = vpop.f32.mrf.mxu0
      %v4163 = vpop.f32.mrf.mxu0
      %v4164 = vadd.f32 0.0, %v4163
      %v4165 = vpop.f32.mrf.mxu0
      %4166 = vmatprep.mubr.bf16.mxu0 0
      %4167 = vmatmul.mubr.bf16.gmra.mxu0 %v3850
      %v4168 = vpop.f32.mrf.mxu0
      %v4169 = vadd.f32 0.0, %v4168
      %v4170 = vpop.f32.mrf.mxu0
      %v4171 = vpop.f32.mrf.mxu0
      %v4172 = vadd.f32 0.0, %v4171
      %v4173 = vpop.f32.mrf.mxu0
      %4174 = vmatprep.mubr.bf16.mxu0 0
      %4175 = vmatmul.mubr.bf16.gmra.mxu0 %v3858
      %v4176 = vpop.f32.mrf.mxu0
      %v4177 = vadd.f32 0.0, %v4176
      %v4178 = vpop.f32.mrf.mxu0
      %v4179 = vpop.f32.mrf.mxu0
      %v4180 = vadd.f32 0.0, %v4179
      %v4181 = vpop.f32.mrf.mxu0
      %4182 = vmatprep.mubr.bf16.mxu0 0
      %4183 = vmatmul.mubr.bf16.gmra.mxu0 %v3866
      %v4184 = vpop.f32.mrf.mxu0
      %v4185 = vadd.f32 0.0, %v4184
      %v4186 = vpop.f32.mrf.mxu0
      %v4187 = vpop.f32.mrf.mxu0
      %v4188 = vadd.f32 0.0, %v4187
      %v4189 = vpop.f32.mrf.mxu0
      %4190 = vmatprep.mubr.bf16.mxu0 0
      %4191 = vmatmul.mubr.bf16.gmra.mxu0 %v3874
      %v4192 = vpop.f32.mrf.mxu0
      %v4193 = vadd.f32 0.0, %v4192
      %v4194 = vpop.f32.mrf.mxu0
      %v4195 = vpop.f32.mrf.mxu0
      %v4196 = vadd.f32 0.0, %v4195
      %v4197 = vpop.f32.mrf.mxu0
      %4198 = vmatprep.mubr.bf16.mxu0 0
      %4199 = vmatmul.mubr.bf16.gmra.mxu0 %v3882
      %v4200 = vpop.f32.mrf.mxu0
      %v4201 = vadd.f32 0.0, %v4200
      %v4202 = vpop.f32.mrf.mxu0
      %v4203 = vpop.f32.mrf.mxu0
      %v4204 = vadd.f32 0.0, %v4203
      %v4205 = vpop.f32.mrf.mxu0
      %4206 = vmatprep.mubr.bf16.mxu0 0
      %4207 = vmatmul.mubr.bf16.gmra.mxu0 %v3890
      %v4208 = vpop.f32.mrf.mxu0
      %v4209 = vadd.f32 0.0, %v4208
      %v4210 = vpop.f32.mrf.mxu0
      %v4211 = vpop.f32.mrf.mxu0
      %v4212 = vadd.f32 0.0, %v4211
      %v4213 = vpop.f32.mrf.mxu0
      %4214 = vmatprep.mubr.bf16.mxu0 0
      %4215 = vmatmul.mubr.bf16.gmra.mxu0 %v3898
      %v4216 = vpop.f32.mrf.mxu0
      %v4217 = vadd.f32 0.0, %v4216
      %v4218 = vpop.f32.mrf.mxu0
      %v4219 = vpop.f32.mrf.mxu0
      %v4220 = vadd.f32 0.0, %v4219
      %v4221 = vpop.f32.mrf.mxu0
      %4222 = vmatprep.mubr.bf16.mxu0 0
      %4223 = vmatmul.mubr.bf16.gmra.mxu0 %v3906
      %v4224 = vpop.f32.mrf.mxu0
      %v4225 = vadd.f32 0.0, %v4224
      %v4226 = vpop.f32.mrf.mxu0
      %v4227 = vpop.f32.mrf.mxu0
      %v4228 = vadd.f32 0.0, %v4227
      %v4229 = vpop.f32.mrf.mxu0
      %4230 = vmatprep.mubr.bf16.mxu0 0
      %4231 = vmatmul.mubr.bf16.gmra.mxu0 %v3914
      %v4232 = vpop.f32.mrf.mxu0
      %v4233 = vadd.f32 0.0, %v4232
      %v4234 = vpop.f32.mrf.mxu0
      %v4235 = vpop.f32.mrf.mxu0
      %v4236 = vadd.f32 0.0, %v4235
      %v4237 = vpop.f32.mrf.mxu0
      %4238 = vmatprep.mubr.bf16.mxu0 0
      %4239 = vmatmul.mubr.bf16.gmra.mxu0 %v3922
      %v4240 = vpop.f32.mrf.mxu0
      %v4241 = vadd.f32 0.0, %v4240
      %v4242 = vpop.f32.mrf.mxu0
      %v4243 = vpop.f32.mrf.mxu0
      %v4244 = vadd.f32 0.0, %v4243
      %v4245 = vpop.f32.mrf.mxu0
      %4246 = vmatprep.mubr.bf16.mxu0 0
      %4247 = vmatmul.mubr.bf16.gmra.mxu0 %v3930
      %v4248 = vpop.f32.mrf.mxu0
      %v4249 = vadd.f32 0.0, %v4248
      %v4250 = vpop.f32.mrf.mxu0
      %v4251 = vpop.f32.mrf.mxu0
      %v4252 = vadd.f32 0.0, %v4251
      %v4253 = vpop.f32.mrf.mxu0
      %4254 = vmatprep.mubr.bf16.mxu0 0
      %4255 = vmatmul.mubr.bf16.gmra.mxu0 %v3938
      %v4256 = vpop.f32.mrf.mxu0
      %v4257 = vadd.f32 0.0, %v4256
      %v4258 = vpop.f32.mrf.mxu0
      %v4259 = vpop.f32.mrf.mxu0
      %v4260 = vadd.f32 0.0, %v4259
      %v4261 = vpop.f32.mrf.mxu0
      %4262 = vmatprep.mubr.bf16.mxu0 0
      %4263 = vmatmul.mubr.bf16.gmra.mxu0 %v3946
      %v4264 = vpop.f32.mrf.mxu0
      %v4265 = vadd.f32 0.0, %v4264
      %v4266 = vpop.f32.mrf.mxu0
      %v4267 = vpop.f32.mrf.mxu0
      %v4268 = vadd.f32 0.0, %v4267
      %v4269 = vpop.f32.mrf.mxu0
      %4270 = vmatprep.mubr.bf16.mxu0 0
      %4271 = vmatmul.mubr.bf16.gmra.mxu0 %v3954
      %v4272 = vpop.f32.mrf.mxu0
      %v4273 = vadd.f32 0.0, %v4272
      %v4274 = vpop.f32.mrf.mxu0
      %v4275 = vpop.f32.mrf.mxu0
      %v4276 = vadd.f32 0.0, %v4275
      %v4277 = vpop.f32.mrf.mxu0
      %4278 = vmatprep.mubr.bf16.mxu0 0
      %4279 = vmatmul.mubr.bf16.gmra.mxu0 %v3962
      %v4280 = vpop.f32.mrf.mxu0
      %v4281 = vadd.f32 0.0, %v4280
      %v4282 = vpop.f32.mrf.mxu0
      %v4283 = vpop.f32.mrf.mxu0
      %v4284 = vadd.f32 0.0, %v4283
      %v4285 = vpop.f32.mrf.mxu0
      %4286 = vmatprep.mubr.bf16.mxu0 0
      %4287 = vmatmul.mubr.bf16.gmra.mxu0 %v3970
      %v4288 = vpop.f32.mrf.mxu0
      %v4289 = vadd.f32 0.0, %v4288
      %v4290 = vpop.f32.mrf.mxu0
      %v4291 = vpop.f32.mrf.mxu0
      %v4292 = vadd.f32 0.0, %v4291
      %v4293 = vpop.f32.mrf.mxu0
      %4294 = vmatprep.mubr.bf16.mxu0 0
      %4295 = vmatmul.mubr.bf16.gmra.mxu0 %v3978
      %v4296 = vpop.f32.mrf.mxu0
      %v4297 = vadd.f32 0.0, %v4296
      %v4298 = vpop.f32.mrf.mxu0
      %v4299 = vpop.f32.mrf.mxu0
      %v4300 = vadd.f32 0.0, %v4299
      %v4301 = vpop.f32.mrf.mxu0
      %4302 = vmatprep.mubr.bf16.mxu0 0
      %4303 = vmatmul.mubr.bf16.gmra.mxu0 %v3986
      %v4304 = vpop.f32.mrf.mxu0
      %v4305 = vadd.f32 0.0, %v4304
      %v4306 = vpop.f32.mrf.mxu0
      %v4307 = vpop.f32.mrf.mxu0
      %v4308 = vadd.f32 0.0, %v4307
      %v4309 = vpop.f32.mrf.mxu0
      %4310 = vmatprep.mubr.bf16.mxu0 0
      %4311 = vmatmul.mubr.bf16.gmra.mxu0 %v3994
      %v4312 = vpop.f32.mrf.mxu0
      %v4313 = vadd.f32 0.0, %v4312
      %v4314 = vpop.f32.mrf.mxu0
      %v4315 = vpop.f32.mrf.mxu0
      %v4316 = vadd.f32 0.0, %v4315
      %v4317 = vpop.f32.mrf.mxu0
      %4318 = vmatprep.mubr.bf16.mxu0 0
      %4319 = vmatmul.mubr.bf16.gmra.mxu0 %v4002
      %v4320 = vpop.f32.mrf.mxu0
      %v4321 = vadd.f32 0.0, %v4320
      %v4322 = vpop.f32.mrf.mxu0
      %v4323 = vpop.f32.mrf.mxu0
      %v4324 = vadd.f32 0.0, %v4323
      %v4325 = vpop.f32.mrf.mxu0
      %4326 = vmatprep.mubr.bf16.mxu0 0
      %4327 = vmatmul.mubr.bf16.gmra.mxu0 %v4010
      %v4328 = vpop.f32.mrf.mxu0
      %v4329 = vadd.f32 0.0, %v4328
      %v4330 = vpop.f32.mrf.mxu0
      %v4331 = vpop.f32.mrf.mxu0
      %v4332 = vadd.f32 0.0, %v4331
      %v4333 = vpop.f32.mrf.mxu0
      %4334 = vmatprep.mubr.bf16.mxu0 0
      %4335 = vmatmul.mubr.bf16.gmra.mxu0 %v4018
      %v4336 = vpop.f32.mrf.mxu0
      %v4337 = vadd.f32 0.0, %v4336
      %v4338 = vpop.f32.mrf.mxu0
      %v4339 = vpop.f32.mrf.mxu0
      %v4340 = vadd.f32 0.0, %v4339
      %v4341 = vpop.f32.mrf.mxu0
      %4342 = vmatprep.mubr.bf16.mxu0 0
      %4343 = vmatmul.mubr.bf16.gmra.mxu0 %v4026
      %v4344 = vpop.f32.mrf.mxu0
      %v4345 = vadd.f32 0.0, %v4344
      %v4346 = vpop.f32.mrf.mxu0
      %v4347 = vpop.f32.mrf.mxu0
      %v4348 = vadd.f32 0.0, %v4347
      %v4349 = vpop.f32.mrf.mxu0
      %4350 = vmatprep.mubr.bf16.mxu0 0
      %4351 = vmatmul.mubr.bf16.gmra.mxu0 %v4034
      %v4352 = vpop.f32.mrf.mxu0
      %v4353 = vadd.f32 0.0, %v4352
      %v4354 = vpop.f32.mrf.mxu0
      %v4355 = vpop.f32.mrf.mxu0
      %v4356 = vadd.f32 0.0, %v4355
      %v4357 = vpop.f32.mrf.mxu0
      %4358 = vdwg.mxu0
      %v4359 = vadd.f32 %v3391, %v4145
      %v4360 = vadd.f32 %v3394, %v4148
      %v4361 = vadd.f32 %v3399, %v4153
      %v4362 = vadd.f32 %v3402, %v4156
      %v4363 = vadd.f32 %v3407, %v4161
      %v4364 = vadd.f32 %v3410, %v4164
      %v4365 = vadd.f32 %v3415, %v4169
      %v4366 = vadd.f32 %v3418, %v4172
      %v4367 = vadd.f32 %v3423, %v4177
      %v4368 = vadd.f32 %v3426, %v4180
      %v4369 = vadd.f32 %v3431, %v4185
      %v4370 = vadd.f32 %v3434, %v4188
      %v4371 = vadd.f32 %v3439, %v4193
      %v4372 = vadd.f32 %v3442, %v4196
      %v4373 = vadd.f32 %v3447, %v4201
      %v4374 = vadd.f32 %v3450, %v4204
      %v4375 = vadd.f32 %v3455, %v4209
      %v4376 = vadd.f32 %v3458, %v4212
      %v4377 = vadd.f32 %v3463, %v4217
      %v4378 = vadd.f32 %v3466, %v4220
      %v4379 = vadd.f32 %v3471, %v4225
      %v4380 = vadd.f32 %v3474, %v4228
      %v4381 = vadd.f32 %v3479, %v4233
      %v4382 = vadd.f32 %v3482, %v4236
      %v4383 = vadd.f32 %v3487, %v4241
      %v4384 = vadd.f32 %v3490, %v4244
      %v4385 = vadd.f32 %v3495, %v4249
      %v4386 = vadd.f32 %v3498, %v4252
      %v4387 = vadd.f32 %v3503, %v4257
      %v4388 = vadd.f32 %v3506, %v4260
      %v4389 = vadd.f32 %v3511, %v4265
      %v4390 = vadd.f32 %v3514, %v4268
      %v4391 = vadd.f32 %v3519, %v4273
      %v4392 = vadd.f32 %v3522, %v4276
      %v4393 = vadd.f32 %v3527, %v4281
      %v4394 = vadd.f32 %v3530, %v4284
      %v4395 = vadd.f32 %v3535, %v4289
      %v4396 = vadd.f32 %v3538, %v4292
      %v4397 = vadd.f32 %v3543, %v4297
      %v4398 = vadd.f32 %v3546, %v4300
      %v4399 = vadd.f32 %v3551, %v4305
      %v4400 = vadd.f32 %v3554, %v4308
      %v4401 = vadd.f32 %v3559, %v4313
      %v4402 = vadd.f32 %v3562, %v4316
      %v4403 = vadd.f32 %v3567, %v4321
      %v4404 = vadd.f32 %v3570, %v4324
      %v4405 = vadd.f32 %v3575, %v4329
      %v4406 = vadd.f32 %v3578, %v4332
      %v4407 = vadd.f32 %v3583, %v4337
      %v4408 = vadd.f32 %v3586, %v4340
      %v4409 = vadd.f32 %v3591, %v4345
      %v4410 = vadd.f32 %v3594, %v4348
      %v4411 = vadd.f32 %v3599, %v4353
      %v4412 = vadd.f32 %v3602, %v4356
      %v4413 = vld [vmem:[#allocation2 + $0xc] sm:$0x8]
      %v4414 = vld [vmem:[#allocation2 + $0x10] sm:$0xf]
      %v4415 = vld [vmem:[#allocation2 + $0x14] sm:$0xf]
      %v4416 = vld [vmem:[#allocation2 + $0x18] sm:$0xf]
      %v4417 = vld [vmem:[#allocation2 + $0x1c] sm:$0xf]
      %v4418 = vld [vmem:[#allocation2 + $0x20] sm:$0xf]
      %v4419 = vld [vmem:[#allocation2 + $0x24] sm:$0xf]
      %v4420 = vld [vmem:[#allocation2 + $0x28] sm:$0xf]
      %v4421 = vld [vmem:[#allocation2 + $0x2c] sm:$0xf]
      %v4422 = vld [vmem:[#allocation2 + $0x30] sm:$0xf]
      %v4423 = vld [vmem:[#allocation2 + $0x34] sm:$0xf]
      %v4424 = vld [vmem:[#allocation2 + $0x38] sm:$0xf]
      %v4425 = vld [vmem:[#allocation2 + $0x3c] sm:$0xf]
      %v4426 = vld [vmem:[#allocation2 + $0x40] sm:$0xf]
      %v4427 = vld [vmem:[#allocation2 + $0x44] sm:$0xf]
      %v4428 = vld [vmem:[#allocation2 + $0x48] sm:$0xf]
      %v4429 = vld [vmem:[#allocation2 + $0x4c] sm:$0xf]
      %v4430 = vld [vmem:[#allocation2 + $0x50] sm:$0xf]
      %v4431 = vld [vmem:[#allocation2 + $0x54] sm:$0xf]
      %v4432 = vld [vmem:[#allocation2 + $0x58] sm:$0xf]
      %v4433 = vld [vmem:[#allocation2 + $0x5c] sm:$0xf]
      %v4434 = vld [vmem:[#allocation2 + $0x60] sm:$0xf]
      %v4435 = vld [vmem:[#allocation2 + $0x64] sm:$0xf]
      %v4436 = vld [vmem:[#allocation2 + $0x68] sm:$0xf]
      %v4437 = vld [vmem:[#allocation2 + $0x6c] sm:$0xf]
      %v4438 = vld [vmem:[#allocation2 + $0x70] sm:$0xf]
      %v4439 = vld [vmem:[#allocation2 + $0x74] sm:$0xf]
      %v4440 = vld [vmem:[#allocation2 + $0x78] sm:$0xf]
      %v4441 = vld [vmem:[#allocation2 + $0x7c] sm:$0xf]
      %v4442 = vld [vmem:[#allocation2 + $0x80] sm:$0xf]
      %v4443 = vld [vmem:[#allocation2 + $0x84] sm:$0xf]
      %v4444 = vld [vmem:[#allocation2 + $0x88] sm:$0xf]
      %v4445 = vld [vmem:[#allocation2 + $0x8c] sm:$0xf]
      %v4446 = vld [vmem:[#allocation2 + $0x90] sm:$0xf]
      %v4447 = vld [vmem:[#allocation2 + $0x94] sm:$0xf]
      %v4448 = vld [vmem:[#allocation2 + $0x98] sm:$0xf]
      %v4449 = vld [vmem:[#allocation2 + $0x9c] sm:$0xf]
      %v4450 = vld [vmem:[#allocation2 + $0xa0] sm:$0xf]
      %v4451 = vld [vmem:[#allocation2 + $0xa4] sm:$0xf]
      %v4452 = vld [vmem:[#allocation2 + $0xa8] sm:$0xf]
      %v4453 = vld [vmem:[#allocation2 + $0xac] sm:$0xf]
      %v4454 = vld [vmem:[#allocation2 + $0xb0] sm:$0xf]
      %v4455 = vld [vmem:[#allocation2 + $0xb4] sm:$0xf]
      %v4456 = vld [vmem:[#allocation2 + $0xb8] sm:$0xf]
      %v4457 = vld [vmem:[#allocation2 + $0xbc] sm:$0xf]
      %v4458 = vld [vmem:[#allocation2 + $0xc0] sm:$0xf]
      %v4459 = vld [vmem:[#allocation2 + $0xc4] sm:$0xf]
      %v4460 = vld [vmem:[#allocation2 + $0xc8] sm:$0xf]
      %v4461 = vld [vmem:[#allocation2 + $0xcc] sm:$0xf]
      %v4462 = vld [vmem:[#allocation2 + $0xd0] sm:$0xf]
      %v4463 = vld [vmem:[#allocation2 + $0xd4] sm:$0xf]
      %v4464 = vld [vmem:[#allocation2 + $0xd8] sm:$0xf]
      %v4465 = vld [vmem:[#allocation2 + $0xdc] sm:$0xf]
      %v4466 = vld [vmem:[#allocation2 + $0xe0] sm:$0xf]
      %v4467 = vld [vmem:[#allocation2 + $0xe4] sm:$0xf]
      %v4468 = vld [vmem:[%s2 + $0xc0] sm:$0xf]
      %v4469 = vld [vmem:[%s2 + $0xc4] sm:$0xf]
      %v4470 = vld [vmem:[%s2 + $0xc8] sm:$0xf]
      %v4471 = vld [vmem:[%s2 + $0xcc] sm:$0xf]
      %v4472 = vld [vmem:[%s2 + $0xd0] sm:$0xf]
      %v4473 = vld [vmem:[%s2 + $0xd4] sm:$0xf]
      %v4474 = vld [vmem:[%s2 + $0xd8] sm:$0xf]
      %v4475 = vld [vmem:[%s2 + $0xdc] sm:$0xf]
      %v4476 = vld [vmem:[%s2 + $0xe0] sm:$0xf]
      %v4477 = vld [vmem:[%s2 + $0xe4] sm:$0xf]
      %v4478 = vld [vmem:[%s2 + $0xe8] sm:$0xf]
      %v4479 = vld [vmem:[%s2 + $0xec] sm:$0xf]
      %v4480 = vld [vmem:[%s2 + $0xf0] sm:$0xf]
      %v4481 = vld [vmem:[%s2 + $0xf4] sm:$0xf]
      %v4482 = vld [vmem:[%s2 + $0xf8] sm:$0xf]
      %v4483 = vld [vmem:[%s2 + $0xfc] sm:$0xf]
      %v4539 = vunpack.c.l.b16 %v4413
      %v4540 = vunpack.c.l.b16 %v4414
      %v4541 = vunpack.c.l.b16 %v4415
      %v4542 = vunpack.c.l.b16 %v4416
      %v4543 = vunpack.c.l.b16 %v4417
      %v4544 = vunpack.c.l.b16 %v4418
      %v4545 = vunpack.c.l.b16 %v4419
      %v4546 = vunpack.c.l.b16 %v4420
      %v4547 = vunpack.c.l.b16 %v4421
      %v4548 = vunpack.c.l.b16 %v4422
      %v4549 = vunpack.c.l.b16 %v4423
      %v4550 = vunpack.c.l.b16 %v4424
      %v4551 = vunpack.c.l.b16 %v4425
      %v4552 = vunpack.c.l.b16 %v4426
      %v4553 = vunpack.c.l.b16 %v4427
      %v4554 = vunpack.c.l.b16 %v4428
      %v4555 = vunpack.c.l.b16 %v4429
      %v4556 = vunpack.c.l.b16 %v4430
      %v4557 = vunpack.c.l.b16 %v4431
      %v4558 = vunpack.c.l.b16 %v4432
      %v4559 = vunpack.c.l.b16 %v4433
      %v4560 = vunpack.c.l.b16 %v4434
      %v4561 = vunpack.c.l.b16 %v4435
      %v4562 = vunpack.c.l.b16 %v4436
      %v4563 = vunpack.c.l.b16 %v4437
      %v4564 = vunpack.c.l.b16 %v4438
      %v4565 = vunpack.c.l.b16 %v4439
      %v4566 = vunpack.c.l.b16 %v4440
      %v4567 = vunpack.c.l.b16 %v4441
      %v4568 = vunpack.c.l.b16 %v4442
      %v4569 = vunpack.c.l.b16 %v4443
      %v4570 = vunpack.c.l.b16 %v4444
      %v4571 = vunpack.c.l.b16 %v4445
      %v4572 = vunpack.c.l.b16 %v4446
      %v4573 = vunpack.c.l.b16 %v4447
      %v4574 = vunpack.c.l.b16 %v4448
      %v4575 = vunpack.c.l.b16 %v4449
      %v4576 = vunpack.c.l.b16 %v4450
      %v4577 = vunpack.c.l.b16 %v4451
      %v4578 = vunpack.c.l.b16 %v4452
      %v4579 = vunpack.c.l.b16 %v4453
      %v4580 = vunpack.c.l.b16 %v4454
      %v4581 = vunpack.c.l.b16 %v4455
      %v4582 = vunpack.c.l.b16 %v4456
      %v4583 = vunpack.c.l.b16 %v4457
      %v4584 = vunpack.c.l.b16 %v4458
      %v4585 = vunpack.c.l.b16 %v4459
      %v4586 = vunpack.c.l.b16 %v4460
      %v4587 = vunpack.c.l.b16 %v4461
      %v4588 = vunpack.c.l.b16 %v4462
      %v4589 = vunpack.c.l.b16 %v4463
      %v4590 = vunpack.c.l.b16 %v4464
      %v4591 = vunpack.c.l.b16 %v4465
      %v4592 = vunpack.c.l.b16 %v4466
      %v4593 = vunpack.c.l.b16 %v4467
      %v4594 = vpack.c.b16 %v4540, %v4539
      %v4595 = vpack.c.b16 %v4542, %v4541
      %v4596 = vpack.c.b16 %v4544, %v4543
      %v4597 = vpack.c.b16 %v4546, %v4545
      %v4598 = vpack.c.b16 %v4548, %v4547
      %v4599 = vpack.c.b16 %v4550, %v4549
      %v4600 = vpack.c.b16 %v4552, %v4551
      %v4601 = vpack.c.b16 %v4554, %v4553
      %v4602 = vpack.c.b16 %v4556, %v4555
      %v4603 = vpack.c.b16 %v4558, %v4557
      %v4604 = vpack.c.b16 %v4560, %v4559
      %v4605 = vpack.c.b16 %v4562, %v4561
      %v4606 = vpack.c.b16 %v4564, %v4563
      %v4607 = vpack.c.b16 %v4566, %v4565
      %v4608 = vpack.c.b16 %v4568, %v4567
      %v4609 = vpack.c.b16 %v4570, %v4569
      %v4610 = vpack.c.b16 %v4572, %v4571
      %v4611 = vpack.c.b16 %v4574, %v4573
      %v4612 = vpack.c.b16 %v4576, %v4575
      %v4613 = vpack.c.b16 %v4578, %v4577
      %v4614 = vpack.c.b16 %v4580, %v4579
      %v4615 = vpack.c.b16 %v4582, %v4581
      %v4616 = vpack.c.b16 %v4584, %v4583
      %v4617 = vpack.c.b16 %v4586, %v4585
      %v4618 = vpack.c.b16 %v4588, %v4587
      %v4619 = vpack.c.b16 %v4590, %v4589
      %v4620 = vpack.c.b16 %v4592, %v4591
      %v4621 = vpack.c.b16 %v4593, %v4593
      %v4623 = vshrl.u32 %v4594, 16
      %v4625 = vrot.slane %v4623, 3
      %v4626 = vshll.u32 %v4594, 16
      %v4628 = vrot.slane %v4626, 4
      %v4629 = vor.u32 %v4625, %v4628
      %v4631 = vshrl.u32 %v4595, 16
      %v4633 = vrot.slane %v4631, 3
      %v4634 = vshll.u32 %v4595, 16
      %v4636 = vrot.slane %v4634, 4
      %v4637 = vor.u32 %v4633, %v4636
      %v4638 = vsel %vm3029, %v4629, %v4637
      %v4640 = vshrl.u32 %v4596, 16
      %v4642 = vrot.slane %v4640, 3
      %v4643 = vshll.u32 %v4596, 16
      %v4645 = vrot.slane %v4643, 4
      %v4646 = vor.u32 %v4642, %v4645
      %v4647 = vsel %vm3029, %v4637, %v4646
      %v4649 = vshrl.u32 %v4597, 16
      %v4651 = vrot.slane %v4649, 3
      %v4652 = vshll.u32 %v4597, 16
      %v4654 = vrot.slane %v4652, 4
      %v4655 = vor.u32 %v4651, %v4654
      %v4656 = vsel %vm3029, %v4646, %v4655
      %v4658 = vshrl.u32 %v4598, 16
      %v4660 = vrot.slane %v4658, 3
      %v4661 = vshll.u32 %v4598, 16
      %v4663 = vrot.slane %v4661, 4
      %v4664 = vor.u32 %v4660, %v4663
      %v4665 = vsel %vm3029, %v4655, %v4664
      %v4667 = vshrl.u32 %v4599, 16
      %v4669 = vrot.slane %v4667, 3
      %v4670 = vshll.u32 %v4599, 16
      %v4672 = vrot.slane %v4670, 4
      %v4673 = vor.u32 %v4669, %v4672
      %v4674 = vsel %vm3029, %v4664, %v4673
      %v4676 = vshrl.u32 %v4600, 16
      %v4678 = vrot.slane %v4676, 3
      %v4679 = vshll.u32 %v4600, 16
      %v4681 = vrot.slane %v4679, 4
      %v4682 = vor.u32 %v4678, %v4681
      %v4683 = vsel %vm3029, %v4673, %v4682
      %v4685 = vshrl.u32 %v4601, 16
      %v4687 = vrot.slane %v4685, 3
      %v4688 = vshll.u32 %v4601, 16
      %v4690 = vrot.slane %v4688, 4
      %v4691 = vor.u32 %v4687, %v4690
      %v4692 = vsel %vm3029, %v4682, %v4691
      %v4694 = vshrl.u32 %v4602, 16
      %v4696 = vrot.slane %v4694, 3
      %v4697 = vshll.u32 %v4602, 16
      %v4699 = vrot.slane %v4697, 4
      %v4700 = vor.u32 %v4696, %v4699
      %v4701 = vsel %vm3029, %v4691, %v4700
      %v4703 = vshrl.u32 %v4603, 16
      %v4705 = vrot.slane %v4703, 3
      %v4706 = vshll.u32 %v4603, 16
      %v4708 = vrot.slane %v4706, 4
      %v4709 = vor.u32 %v4705, %v4708
      %v4710 = vsel %vm3029, %v4700, %v4709
      %v4712 = vshrl.u32 %v4604, 16
      %v4714 = vrot.slane %v4712, 3
      %v4715 = vshll.u32 %v4604, 16
      %v4717 = vrot.slane %v4715, 4
      %v4718 = vor.u32 %v4714, %v4717
      %v4719 = vsel %vm3029, %v4709, %v4718
      %v4721 = vshrl.u32 %v4605, 16
      %v4723 = vrot.slane %v4721, 3
      %v4724 = vshll.u32 %v4605, 16
      %v4726 = vrot.slane %v4724, 4
      %v4727 = vor.u32 %v4723, %v4726
      %v4728 = vsel %vm3029, %v4718, %v4727
      %v4730 = vshrl.u32 %v4606, 16
      %v4732 = vrot.slane %v4730, 3
      %v4733 = vshll.u32 %v4606, 16
      %v4735 = vrot.slane %v4733, 4
      %v4736 = vor.u32 %v4732, %v4735
      %v4737 = vsel %vm3029, %v4727, %v4736
      %v4739 = vshrl.u32 %v4607, 16
      %v4741 = vrot.slane %v4739, 3
      %v4742 = vshll.u32 %v4607, 16
      %v4744 = vrot.slane %v4742, 4
      %v4745 = vor.u32 %v4741, %v4744
      %v4746 = vsel %vm3029, %v4736, %v4745
      %v4748 = vshrl.u32 %v4608, 16
      %v4750 = vrot.slane %v4748, 3
      %v4751 = vshll.u32 %v4608, 16
      %v4753 = vrot.slane %v4751, 4
      %v4754 = vor.u32 %v4750, %v4753
      %v4755 = vsel %vm3029, %v4745, %v4754
      %v4757 = vshrl.u32 %v4609, 16
      %v4759 = vrot.slane %v4757, 3
      %v4760 = vshll.u32 %v4609, 16
      %v4762 = vrot.slane %v4760, 4
      %v4763 = vor.u32 %v4759, %v4762
      %v4764 = vsel %vm3029, %v4754, %v4763
      %v4766 = vshrl.u32 %v4610, 16
      %v4768 = vrot.slane %v4766, 3
      %v4769 = vshll.u32 %v4610, 16
      %v4771 = vrot.slane %v4769, 4
      %v4772 = vor.u32 %v4768, %v4771
      %v4773 = vsel %vm3029, %v4763, %v4772
      %v4775 = vshrl.u32 %v4611, 16
      %v4777 = vrot.slane %v4775, 3
      %v4778 = vshll.u32 %v4611, 16
      %v4780 = vrot.slane %v4778, 4
      %v4781 = vor.u32 %v4777, %v4780
      %v4782 = vsel %vm3029, %v4772, %v4781
      %v4784 = vshrl.u32 %v4612, 16
      %v4786 = vrot.slane %v4784, 3
      %v4787 = vshll.u32 %v4612, 16
      %v4789 = vrot.slane %v4787, 4
      %v4790 = vor.u32 %v4786, %v4789
      %v4791 = vsel %vm3029, %v4781, %v4790
      %v4793 = vshrl.u32 %v4613, 16
      %v4795 = vrot.slane %v4793, 3
      %v4796 = vshll.u32 %v4613, 16
      %v4798 = vrot.slane %v4796, 4
      %v4799 = vor.u32 %v4795, %v4798
      %v4800 = vsel %vm3029, %v4790, %v4799
      %v4802 = vshrl.u32 %v4614, 16
      %v4804 = vrot.slane %v4802, 3
      %v4805 = vshll.u32 %v4614, 16
      %v4807 = vrot.slane %v4805, 4
      %v4808 = vor.u32 %v4804, %v4807
      %v4809 = vsel %vm3029, %v4799, %v4808
      %v4811 = vshrl.u32 %v4615, 16
      %v4813 = vrot.slane %v4811, 3
      %v4814 = vshll.u32 %v4615, 16
      %v4816 = vrot.slane %v4814, 4
      %v4817 = vor.u32 %v4813, %v4816
      %v4818 = vsel %vm3029, %v4808, %v4817
      %v4820 = vshrl.u32 %v4616, 16
      %v4822 = vrot.slane %v4820, 3
      %v4823 = vshll.u32 %v4616, 16
      %v4825 = vrot.slane %v4823, 4
      %v4826 = vor.u32 %v4822, %v4825
      %v4827 = vsel %vm3029, %v4817, %v4826
      %v4829 = vshrl.u32 %v4617, 16
      %v4831 = vrot.slane %v4829, 3
      %v4832 = vshll.u32 %v4617, 16
      %v4834 = vrot.slane %v4832, 4
      %v4835 = vor.u32 %v4831, %v4834
      %v4836 = vsel %vm3029, %v4826, %v4835
      %v4838 = vshrl.u32 %v4618, 16
      %v4840 = vrot.slane %v4838, 3
      %v4841 = vshll.u32 %v4618, 16
      %v4843 = vrot.slane %v4841, 4
      %v4844 = vor.u32 %v4840, %v4843
      %v4845 = vsel %vm3029, %v4835, %v4844
      %v4847 = vshrl.u32 %v4619, 16
      %v4849 = vrot.slane %v4847, 3
      %v4850 = vshll.u32 %v4619, 16
      %v4852 = vrot.slane %v4850, 4
      %v4853 = vor.u32 %v4849, %v4852
      %v4854 = vsel %vm3029, %v4844, %v4853
      %v4856 = vshrl.u32 %v4620, 16
      %v4858 = vrot.slane %v4856, 3
      %v4859 = vshll.u32 %v4620, 16
      %v4861 = vrot.slane %v4859, 4
      %v4862 = vor.u32 %v4858, %v4861
      %v4863 = vsel %vm3029, %v4853, %v4862
      %v4865 = vshrl.u32 %v4621, 16
      %v4867 = vrot.slane %v4865, 3
      %v4868 = vshll.u32 %v4621, 16
      %v4870 = vrot.slane %v4868, 4
      %v4871 = vor.u32 %v4867, %v4870
      %v4872 = vsel %vm3029, %v4862, %v4871
      %v4916 = vunpack.c.l.b16 %v4468
      %v4917 = vunpack.c.l.b16 %v4469
      %v4918 = vunpack.c.l.b16 %v4470
      %v4919 = vunpack.c.l.b16 %v4471
      %v4920 = vunpack.c.l.b16 %v4472
      %v4921 = vunpack.c.l.b16 %v4473
      %v4922 = vunpack.c.l.b16 %v4474
      %v4923 = vunpack.c.l.b16 %v4475
      %v4924 = vunpack.c.l.b16 %v4476
      %v4925 = vunpack.c.l.b16 %v4477
      %v4926 = vunpack.c.l.b16 %v4478
      %v4927 = vunpack.c.l.b16 %v4479
      %v4928 = vunpack.c.l.b16 %v4480
      %v4929 = vunpack.c.l.b16 %v4481
      %v4930 = vunpack.c.l.b16 %v4482
      %v4931 = vunpack.c.l.b16 %v4483
      %v4932 = vpack.c.b16 %v4917, %v4916
      %v4933 = vpack.c.b16 %v4919, %v4918
      %v4934 = vpack.c.b16 %v4921, %v4920
      %v4935 = vpack.c.b16 %v4923, %v4922
      %v4936 = vpack.c.b16 %v4925, %v4924
      %v4937 = vpack.c.b16 %v4927, %v4926
      %v4938 = vpack.c.b16 %v4929, %v4928
      %v4939 = vpack.c.b16 %v4931, %v4930
      %4948 = vmatprep.subr.bf16.mxu0 0
      %4949 = vmatpush1.bf16.msra.mxu0 %v4939
      %4950 = vmatprep.subr.bf16.mxu0 0
      %4951 = vmatpush1.bf16.msra.mxu0 %v4938
      %4952 = vmatprep.subr.bf16.mxu0 0
      %4953 = vmatpush1.bf16.msra.mxu0 %v4937
      %4954 = vmatprep.subr.bf16.mxu0 0
      %4955 = vmatpush1.bf16.msra.mxu0 %v4936
      %4956 = vmatprep.subr.bf16.mxu0 0
      %4957 = vmatpush1.bf16.msra.mxu0 %v4935
      %4958 = vmatprep.subr.bf16.mxu0 0
      %4959 = vmatpush1.bf16.msra.mxu0 %v4934
      %4960 = vmatprep.subr.bf16.mxu0 0
      %4961 = vmatpush1.bf16.msra.mxu0 %v4933
      %4962 = vmatprep.subr.bf16.mxu0 0
      %4963 = vmatpush1.bf16.msra.mxu0 %v4932
      %4964 = vmatprep.subr.bf16.mxu0 0
      %4965 = vmatpush2.bf16.msra.mxu0 0
      %4966 = vmatprep.subr.bf16.mxu0 0
      %4967 = vmatpush2.bf16.msra.mxu0 0
      %4968 = vmatprep.subr.bf16.mxu0 0
      %4969 = vmatpush2.bf16.msra.mxu0 0
      %4970 = vmatprep.subr.bf16.mxu0 0
      %4971 = vmatpush2.bf16.msra.mxu0 0
      %4972 = vmatprep.subr.bf16.mxu0 0
      %4973 = vmatpush2.bf16.msra.mxu0 0
      %4974 = vmatprep.subr.bf16.mxu0 0
      %4975 = vmatpush2.bf16.msra.mxu0 0
      %4976 = vmatprep.subr.bf16.mxu0 0
      %4977 = vmatpush2.bf16.msra.mxu0 0
      %4978 = vmatprep.subr.bf16.mxu0 0
      %4979 = vmatpush2.bf16.msra.mxu0 0
      %4980 = vmatprep.mubr.bf16.mxu0 0
      %4981 = vmatmul.mubr.bf16.gmra.mxu0 %v4638
      %v4982 = vpop.f32.mrf.mxu0
      %v4983 = vadd.f32 0.0, %v4982
      %v4984 = vpop.f32.mrf.mxu0
      %v4985 = vpop.f32.mrf.mxu0
      %v4986 = vadd.f32 0.0, %v4985
      %v4987 = vpop.f32.mrf.mxu0
      %4988 = vmatprep.mubr.bf16.mxu0 0
      %4989 = vmatmul.mubr.bf16.gmra.mxu0 %v4647
      %v4990 = vpop.f32.mrf.mxu0
      %v4991 = vadd.f32 0.0, %v4990
      %v4992 = vpop.f32.mrf.mxu0
      %v4993 = vpop.f32.mrf.mxu0
      %v4994 = vadd.f32 0.0, %v4993
      %v4995 = vpop.f32.mrf.mxu0
      %4996 = vmatprep.mubr.bf16.mxu0 0
      %4997 = vmatmul.mubr.bf16.gmra.mxu0 %v4656
      %v4998 = vpop.f32.mrf.mxu0
      %v4999 = vadd.f32 0.0, %v4998
      %v5000 = vpop.f32.mrf.mxu0
      %v5001 = vpop.f32.mrf.mxu0
      %v5002 = vadd.f32 0.0, %v5001
      %v5003 = vpop.f32.mrf.mxu0
      %5004 = vmatprep.mubr.bf16.mxu0 0
      %5005 = vmatmul.mubr.bf16.gmra.mxu0 %v4665
      %v5006 = vpop.f32.mrf.mxu0
      %v5007 = vadd.f32 0.0, %v5006
      %v5008 = vpop.f32.mrf.mxu0
      %v5009 = vpop.f32.mrf.mxu0
      %v5010 = vadd.f32 0.0, %v5009
      %v5011 = vpop.f32.mrf.mxu0
      %5012 = vmatprep.mubr.bf16.mxu0 0
      %5013 = vmatmul.mubr.bf16.gmra.mxu0 %v4674
      %v5014 = vpop.f32.mrf.mxu0
      %v5015 = vadd.f32 0.0, %v5014
      %v5016 = vpop.f32.mrf.mxu0
      %v5017 = vpop.f32.mrf.mxu0
      %v5018 = vadd.f32 0.0, %v5017
      %v5019 = vpop.f32.mrf.mxu0
      %5020 = vmatprep.mubr.bf16.mxu0 0
      %5021 = vmatmul.mubr.bf16.gmra.mxu0 %v4683
      %v5022 = vpop.f32.mrf.mxu0
      %v5023 = vadd.f32 0.0, %v5022
      %v5024 = vpop.f32.mrf.mxu0
      %v5025 = vpop.f32.mrf.mxu0
      %v5026 = vadd.f32 0.0, %v5025
      %v5027 = vpop.f32.mrf.mxu0
      %5028 = vmatprep.mubr.bf16.mxu0 0
      %5029 = vmatmul.mubr.bf16.gmra.mxu0 %v4692
      %v5030 = vpop.f32.mrf.mxu0
      %v5031 = vadd.f32 0.0, %v5030
      %v5032 = vpop.f32.mrf.mxu0
      %v5033 = vpop.f32.mrf.mxu0
      %v5034 = vadd.f32 0.0, %v5033
      %v5035 = vpop.f32.mrf.mxu0
      %5036 = vmatprep.mubr.bf16.mxu0 0
      %5037 = vmatmul.mubr.bf16.gmra.mxu0 %v4701
      %v5038 = vpop.f32.mrf.mxu0
      %v5039 = vadd.f32 0.0, %v5038
      %v5040 = vpop.f32.mrf.mxu0
      %v5041 = vpop.f32.mrf.mxu0
      %v5042 = vadd.f32 0.0, %v5041
      %v5043 = vpop.f32.mrf.mxu0
      %5044 = vmatprep.mubr.bf16.mxu0 0
      %5045 = vmatmul.mubr.bf16.gmra.mxu0 %v4710
      %v5046 = vpop.f32.mrf.mxu0
      %v5047 = vadd.f32 0.0, %v5046
      %v5048 = vpop.f32.mrf.mxu0
      %v5049 = vpop.f32.mrf.mxu0
      %v5050 = vadd.f32 0.0, %v5049
      %v5051 = vpop.f32.mrf.mxu0
      %5052 = vmatprep.mubr.bf16.mxu0 0
      %5053 = vmatmul.mubr.bf16.gmra.mxu0 %v4719
      %v5054 = vpop.f32.mrf.mxu0
      %v5055 = vadd.f32 0.0, %v5054
      %v5056 = vpop.f32.mrf.mxu0
      %v5057 = vpop.f32.mrf.mxu0
      %v5058 = vadd.f32 0.0, %v5057
      %v5059 = vpop.f32.mrf.mxu0
      %5060 = vmatprep.mubr.bf16.mxu0 0
      %5061 = vmatmul.mubr.bf16.gmra.mxu0 %v4728
      %v5062 = vpop.f32.mrf.mxu0
      %v5063 = vadd.f32 0.0, %v5062
      %v5064 = vpop.f32.mrf.mxu0
      %v5065 = vpop.f32.mrf.mxu0
      %v5066 = vadd.f32 0.0, %v5065
      %v5067 = vpop.f32.mrf.mxu0
      %5068 = vmatprep.mubr.bf16.mxu0 0
      %5069 = vmatmul.mubr.bf16.gmra.mxu0 %v4737
      %v5070 = vpop.f32.mrf.mxu0
      %v5071 = vadd.f32 0.0, %v5070
      %v5072 = vpop.f32.mrf.mxu0
      %v5073 = vpop.f32.mrf.mxu0
      %v5074 = vadd.f32 0.0, %v5073
      %v5075 = vpop.f32.mrf.mxu0
      %5076 = vmatprep.mubr.bf16.mxu0 0
      %5077 = vmatmul.mubr.bf16.gmra.mxu0 %v4746
      %v5078 = vpop.f32.mrf.mxu0
      %v5079 = vadd.f32 0.0, %v5078
      %v5080 = vpop.f32.mrf.mxu0
      %v5081 = vpop.f32.mrf.mxu0
      %v5082 = vadd.f32 0.0, %v5081
      %v5083 = vpop.f32.mrf.mxu0
      %5084 = vmatprep.mubr.bf16.mxu0 0
      %5085 = vmatmul.mubr.bf16.gmra.mxu0 %v4755
      %v5086 = vpop.f32.mrf.mxu0
      %v5087 = vadd.f32 0.0, %v5086
      %v5088 = vpop.f32.mrf.mxu0
      %v5089 = vpop.f32.mrf.mxu0
      %v5090 = vadd.f32 0.0, %v5089
      %v5091 = vpop.f32.mrf.mxu0
      %5092 = vmatprep.mubr.bf16.mxu0 0
      %5093 = vmatmul.mubr.bf16.gmra.mxu0 %v4764
      %v5094 = vpop.f32.mrf.mxu0
      %v5095 = vadd.f32 0.0, %v5094
      %v5096 = vpop.f32.mrf.mxu0
      %v5097 = vpop.f32.mrf.mxu0
      %v5098 = vadd.f32 0.0, %v5097
      %v5099 = vpop.f32.mrf.mxu0
      %5100 = vmatprep.mubr.bf16.mxu0 0
      %5101 = vmatmul.mubr.bf16.gmra.mxu0 %v4773
      %v5102 = vpop.f32.mrf.mxu0
      %v5103 = vadd.f32 0.0, %v5102
      %v5104 = vpop.f32.mrf.mxu0
      %v5105 = vpop.f32.mrf.mxu0
      %v5106 = vadd.f32 0.0, %v5105
      %v5107 = vpop.f32.mrf.mxu0
      %5108 = vmatprep.mubr.bf16.mxu0 0
      %5109 = vmatmul.mubr.bf16.gmra.mxu0 %v4782
      %v5110 = vpop.f32.mrf.mxu0
      %v5111 = vadd.f32 0.0, %v5110
      %v5112 = vpop.f32.mrf.mxu0
      %v5113 = vpop.f32.mrf.mxu0
      %v5114 = vadd.f32 0.0, %v5113
      %v5115 = vpop.f32.mrf.mxu0
      %5116 = vmatprep.mubr.bf16.mxu0 0
      %5117 = vmatmul.mubr.bf16.gmra.mxu0 %v4791
      %v5118 = vpop.f32.mrf.mxu0
      %v5119 = vadd.f32 0.0, %v5118
      %v5120 = vpop.f32.mrf.mxu0
      %v5121 = vpop.f32.mrf.mxu0
      %v5122 = vadd.f32 0.0, %v5121
      %v5123 = vpop.f32.mrf.mxu0
      %5124 = vmatprep.mubr.bf16.mxu0 0
      %5125 = vmatmul.mubr.bf16.gmra.mxu0 %v4800
      %v5126 = vpop.f32.mrf.mxu0
      %v5127 = vadd.f32 0.0, %v5126
      %v5128 = vpop.f32.mrf.mxu0
      %v5129 = vpop.f32.mrf.mxu0
      %v5130 = vadd.f32 0.0, %v5129
      %v5131 = vpop.f32.mrf.mxu0
      %5132 = vmatprep.mubr.bf16.mxu0 0
      %5133 = vmatmul.mubr.bf16.gmra.mxu0 %v4809
      %v5134 = vpop.f32.mrf.mxu0
      %v5135 = vadd.f32 0.0, %v5134
      %v5136 = vpop.f32.mrf.mxu0
      %v5137 = vpop.f32.mrf.mxu0
      %v5138 = vadd.f32 0.0, %v5137
      %v5139 = vpop.f32.mrf.mxu0
      %5140 = vmatprep.mubr.bf16.mxu0 0
      %5141 = vmatmul.mubr.bf16.gmra.mxu0 %v4818
      %v5142 = vpop.f32.mrf.mxu0
      %v5143 = vadd.f32 0.0, %v5142
      %v5144 = vpop.f32.mrf.mxu0
      %v5145 = vpop.f32.mrf.mxu0
      %v5146 = vadd.f32 0.0, %v5145
      %v5147 = vpop.f32.mrf.mxu0
      %5148 = vmatprep.mubr.bf16.mxu0 0
      %5149 = vmatmul.mubr.bf16.gmra.mxu0 %v4827
      %v5150 = vpop.f32.mrf.mxu0
      %v5151 = vadd.f32 0.0, %v5150
      %v5152 = vpop.f32.mrf.mxu0
      %v5153 = vpop.f32.mrf.mxu0
      %v5154 = vadd.f32 0.0, %v5153
      %v5155 = vpop.f32.mrf.mxu0
      %5156 = vmatprep.mubr.bf16.mxu0 0
      %5157 = vmatmul.mubr.bf16.gmra.mxu0 %v4836
      %v5158 = vpop.f32.mrf.mxu0
      %v5159 = vadd.f32 0.0, %v5158
      %v5160 = vpop.f32.mrf.mxu0
      %v5161 = vpop.f32.mrf.mxu0
      %v5162 = vadd.f32 0.0, %v5161
      %v5163 = vpop.f32.mrf.mxu0
      %5164 = vmatprep.mubr.bf16.mxu0 0
      %5165 = vmatmul.mubr.bf16.gmra.mxu0 %v4845
      %v5166 = vpop.f32.mrf.mxu0
      %v5167 = vadd.f32 0.0, %v5166
      %v5168 = vpop.f32.mrf.mxu0
      %v5169 = vpop.f32.mrf.mxu0
      %v5170 = vadd.f32 0.0, %v5169
      %v5171 = vpop.f32.mrf.mxu0
      %5172 = vmatprep.mubr.bf16.mxu0 0
      %5173 = vmatmul.mubr.bf16.gmra.mxu0 %v4854
      %v5174 = vpop.f32.mrf.mxu0
      %v5175 = vadd.f32 0.0, %v5174
      %v5176 = vpop.f32.mrf.mxu0
      %v5177 = vpop.f32.mrf.mxu0
      %v5178 = vadd.f32 0.0, %v5177
      %v5179 = vpop.f32.mrf.mxu0
      %5180 = vmatprep.mubr.bf16.mxu0 0
      %5181 = vmatmul.mubr.bf16.gmra.mxu0 %v4863
      %v5182 = vpop.f32.mrf.mxu0
      %v5183 = vadd.f32 0.0, %v5182
      %v5184 = vpop.f32.mrf.mxu0
      %v5185 = vpop.f32.mrf.mxu0
      %v5186 = vadd.f32 0.0, %v5185
      %v5187 = vpop.f32.mrf.mxu0
      %5188 = vmatprep.mubr.bf16.mxu0 0
      %5189 = vmatmul.mubr.bf16.gmra.mxu0 %v4872
      %v5190 = vpop.f32.mrf.mxu0
      %v5191 = vadd.f32 0.0, %v5190
      %v5192 = vpop.f32.mrf.mxu0
      %v5193 = vpop.f32.mrf.mxu0
      %v5194 = vadd.f32 0.0, %v5193
      %v5195 = vpop.f32.mrf.mxu0
      %5196 = vdwg.mxu0
      %v5197 = vadd.f32 %v4359, %v4983
      %v5198 = vadd.f32 %v4360, %v4986
      %v5199 = vadd.f32 %v4361, %v4991
      %v5200 = vadd.f32 %v4362, %v4994
      %v5201 = vadd.f32 %v4363, %v4999
      %v5202 = vadd.f32 %v4364, %v5002
      %v5203 = vadd.f32 %v4365, %v5007
      %v5204 = vadd.f32 %v4366, %v5010
      %v5205 = vadd.f32 %v4367, %v5015
      %v5206 = vadd.f32 %v4368, %v5018
      %v5207 = vadd.f32 %v4369, %v5023
      %v5208 = vadd.f32 %v4370, %v5026
      %v5209 = vadd.f32 %v4371, %v5031
      %v5210 = vadd.f32 %v4372, %v5034
      %v5211 = vadd.f32 %v4373, %v5039
      %v5212 = vadd.f32 %v4374, %v5042
      %v5213 = vadd.f32 %v4375, %v5047
      %v5214 = vadd.f32 %v4376, %v5050
      %v5215 = vadd.f32 %v4377, %v5055
      %v5216 = vadd.f32 %v4378, %v5058
      %v5217 = vadd.f32 %v4379, %v5063
      %v5218 = vadd.f32 %v4380, %v5066
      %v5219 = vadd.f32 %v4381, %v5071
      %v5220 = vadd.f32 %v4382, %v5074
      %v5221 = vadd.f32 %v4383, %v5079
      %v5222 = vadd.f32 %v4384, %v5082
      %v5223 = vadd.f32 %v4385, %v5087
      %v5224 = vadd.f32 %v4386, %v5090
      %v5225 = vadd.f32 %v4387, %v5095
      %v5226 = vadd.f32 %v4388, %v5098
      %v5227 = vadd.f32 %v4389, %v5103
      %v5228 = vadd.f32 %v4390, %v5106
      %v5229 = vadd.f32 %v4391, %v5111
      %v5230 = vadd.f32 %v4392, %v5114
      %v5231 = vadd.f32 %v4393, %v5119
      %v5232 = vadd.f32 %v4394, %v5122
      %v5233 = vadd.f32 %v4395, %v5127
      %v5234 = vadd.f32 %v4396, %v5130
      %v5235 = vadd.f32 %v4397, %v5135
      %v5236 = vadd.f32 %v4398, %v5138
      %v5237 = vadd.f32 %v4399, %v5143
      %v5238 = vadd.f32 %v4400, %v5146
      %v5239 = vadd.f32 %v4401, %v5151
      %v5240 = vadd.f32 %v4402, %v5154
      %v5241 = vadd.f32 %v4403, %v5159
      %v5242 = vadd.f32 %v4404, %v5162
      %v5243 = vadd.f32 %v4405, %v5167
      %v5244 = vadd.f32 %v4406, %v5170
      %v5245 = vadd.f32 %v4407, %v5175
      %v5246 = vadd.f32 %v4408, %v5178
      %v5247 = vadd.f32 %v4409, %v5183
      %v5248 = vadd.f32 %v4410, %v5186
      %v5249 = vadd.f32 %v4411, %v5191
      %v5250 = vadd.f32 %v4412, %v5194
      %v5251 = vld [vmem:[%s2 + $0x100] sm:$0xf]
      %v5252 = vld [vmem:[%s2 + $0x104] sm:$0xf]
      %v5253 = vld [vmem:[%s2 + $0x108] sm:$0xf]
      %v5254 = vld [vmem:[%s2 + $0x10c] sm:$0xf]
      %v5255 = vld [vmem:[%s2 + $0x110] sm:$0xf]
      %v5256 = vld [vmem:[%s2 + $0x114] sm:$0xf]
      %v5257 = vld [vmem:[%s2 + $0x118] sm:$0xf]
      %v5258 = vld [vmem:[%s2 + $0x11c] sm:$0xf]
      %v5259 = vld [vmem:[%s2 + $0x120] sm:$0xf]
      %v5260 = vld [vmem:[%s2 + $0x124] sm:$0xf]
      %v5261 = vld [vmem:[%s2 + $0x128] sm:$0xf]
      %v5262 = vld [vmem:[%s2 + $0x12c] sm:$0xf]
      %v5263 = vld [vmem:[%s2 + $0x130] sm:$0xf]
      %v5264 = vld [vmem:[%s2 + $0x134] sm:$0xf]
      %v5265 = vld [vmem:[%s2 + $0x138] sm:$0xf]
      %v5266 = vld [vmem:[%s2 + $0x13c] sm:$0xf]
      %v5267 = vpack.c.b16 %v4541, %v4540
      %v5268 = vpack.c.b16 %v4543, %v4542
      %v5269 = vpack.c.b16 %v4545, %v4544
      %v5270 = vpack.c.b16 %v4547, %v4546
      %v5271 = vpack.c.b16 %v4549, %v4548
      %v5272 = vpack.c.b16 %v4551, %v4550
      %v5273 = vpack.c.b16 %v4553, %v4552
      %v5274 = vpack.c.b16 %v4555, %v4554
      %v5275 = vpack.c.b16 %v4557, %v4556
      %v5276 = vpack.c.b16 %v4559, %v4558
      %v5277 = vpack.c.b16 %v4561, %v4560
      %v5278 = vpack.c.b16 %v4563, %v4562
      %v5279 = vpack.c.b16 %v4565, %v4564
      %v5280 = vpack.c.b16 %v4567, %v4566
      %v5281 = vpack.c.b16 %v4569, %v4568
      %v5282 = vpack.c.b16 %v4571, %v4570
      %v5283 = vpack.c.b16 %v4573, %v4572
      %v5284 = vpack.c.b16 %v4575, %v4574
      %v5285 = vpack.c.b16 %v4577, %v4576
      %v5286 = vpack.c.b16 %v4579, %v4578
      %v5287 = vpack.c.b16 %v4581, %v4580
      %v5288 = vpack.c.b16 %v4583, %v4582
      %v5289 = vpack.c.b16 %v4585, %v4584
      %v5290 = vpack.c.b16 %v4587, %v4586
      %v5291 = vpack.c.b16 %v4589, %v4588
      %v5292 = vpack.c.b16 %v4591, %v4590
      %v5293 = vpack.c.b16 %v4593, %v4592
      %v5337 = vunpack.c.l.b16 %v5251
      %v5338 = vunpack.c.l.b16 %v5252
      %v5339 = vunpack.c.l.b16 %v5253
      %v5340 = vunpack.c.l.b16 %v5254
      %v5341 = vunpack.c.l.b16 %v5255
      %v5342 = vunpack.c.l.b16 %v5256
      %v5343 = vunpack.c.l.b16 %v5257
      %v5344 = vunpack.c.l.b16 %v5258
      %v5345 = vunpack.c.l.b16 %v5259
      %v5346 = vunpack.c.l.b16 %v5260
      %v5347 = vunpack.c.l.b16 %v5261
      %v5348 = vunpack.c.l.b16 %v5262
      %v5349 = vunpack.c.l.b16 %v5263
      %v5350 = vunpack.c.l.b16 %v5264
      %v5351 = vunpack.c.l.b16 %v5265
      %v5352 = vunpack.c.l.b16 %v5266
      %v5353 = vpack.c.b16 %v5338, %v5337
      %v5354 = vpack.c.b16 %v5340, %v5339
      %v5355 = vpack.c.b16 %v5342, %v5341
      %v5356 = vpack.c.b16 %v5344, %v5343
      %v5357 = vpack.c.b16 %v5346, %v5345
      %v5358 = vpack.c.b16 %v5348, %v5347
      %v5359 = vpack.c.b16 %v5350, %v5349
      %v5360 = vpack.c.b16 %v5352, %v5351
      %5369 = vmatprep.subr.bf16.mxu0 0
      %5370 = vmatpush1.bf16.msra.mxu0 %v5360
      %5371 = vmatprep.subr.bf16.mxu0 0
      %5372 = vmatpush1.bf16.msra.mxu0 %v5359
      %5373 = vmatprep.subr.bf16.mxu0 0
      %5374 = vmatpush1.bf16.msra.mxu0 %v5358
      %5375 = vmatprep.subr.bf16.mxu0 0
      %5376 = vmatpush1.bf16.msra.mxu0 %v5357
      %5377 = vmatprep.subr.bf16.mxu0 0
      %5378 = vmatpush1.bf16.msra.mxu0 %v5356
      %5379 = vmatprep.subr.bf16.mxu0 0
      %5380 = vmatpush1.bf16.msra.mxu0 %v5355
      %5381 = vmatprep.subr.bf16.mxu0 0
      %5382 = vmatpush1.bf16.msra.mxu0 %v5354
      %5383 = vmatprep.subr.bf16.mxu0 0
      %5384 = vmatpush1.bf16.msra.mxu0 %v5353
      %5385 = vmatprep.subr.bf16.mxu0 0
      %5386 = vmatpush2.bf16.msra.mxu0 0
      %5387 = vmatprep.subr.bf16.mxu0 0
      %5388 = vmatpush2.bf16.msra.mxu0 0
      %5389 = vmatprep.subr.bf16.mxu0 0
      %5390 = vmatpush2.bf16.msra.mxu0 0
      %5391 = vmatprep.subr.bf16.mxu0 0
      %5392 = vmatpush2.bf16.msra.mxu0 0
      %5393 = vmatprep.subr.bf16.mxu0 0
      %5394 = vmatpush2.bf16.msra.mxu0 0
      %5395 = vmatprep.subr.bf16.mxu0 0
      %5396 = vmatpush2.bf16.msra.mxu0 0
      %5397 = vmatprep.subr.bf16.mxu0 0
      %5398 = vmatpush2.bf16.msra.mxu0 0
      %5399 = vmatprep.subr.bf16.mxu0 0
      %5400 = vmatpush2.bf16.msra.mxu0 0
      %5401 = vmatprep.mubr.bf16.mxu0 0
      %5402 = vmatmul.mubr.bf16.gmra.mxu0 %v5267
      %v5403 = vpop.f32.mrf.mxu0
      %v5404 = vadd.f32 0.0, %v5403
      %v5405 = vpop.f32.mrf.mxu0
      %v5406 = vpop.f32.mrf.mxu0
      %v5407 = vadd.f32 0.0, %v5406
      %v5408 = vpop.f32.mrf.mxu0
      %5409 = vmatprep.mubr.bf16.mxu0 0
      %5410 = vmatmul.mubr.bf16.gmra.mxu0 %v5268
      %v5411 = vpop.f32.mrf.mxu0
      %v5412 = vadd.f32 0.0, %v5411
      %v5413 = vpop.f32.mrf.mxu0
      %v5414 = vpop.f32.mrf.mxu0
      %v5415 = vadd.f32 0.0, %v5414
      %v5416 = vpop.f32.mrf.mxu0
      %5417 = vmatprep.mubr.bf16.mxu0 0
      %5418 = vmatmul.mubr.bf16.gmra.mxu0 %v5269
      %v5419 = vpop.f32.mrf.mxu0
      %v5420 = vadd.f32 0.0, %v5419
      %v5421 = vpop.f32.mrf.mxu0
      %v5422 = vpop.f32.mrf.mxu0
      %v5423 = vadd.f32 0.0, %v5422
      %v5424 = vpop.f32.mrf.mxu0
      %5425 = vmatprep.mubr.bf16.mxu0 0
      %5426 = vmatmul.mubr.bf16.gmra.mxu0 %v5270
      %v5427 = vpop.f32.mrf.mxu0
      %v5428 = vadd.f32 0.0, %v5427
      %v5429 = vpop.f32.mrf.mxu0
      %v5430 = vpop.f32.mrf.mxu0
      %v5431 = vadd.f32 0.0, %v5430
      %v5432 = vpop.f32.mrf.mxu0
      %5433 = vmatprep.mubr.bf16.mxu0 0
      %5434 = vmatmul.mubr.bf16.gmra.mxu0 %v5271
      %v5435 = vpop.f32.mrf.mxu0
      %v5436 = vadd.f32 0.0, %v5435
      %v5437 = vpop.f32.mrf.mxu0
      %v5438 = vpop.f32.mrf.mxu0
      %v5439 = vadd.f32 0.0, %v5438
      %v5440 = vpop.f32.mrf.mxu0
      %5441 = vmatprep.mubr.bf16.mxu0 0
      %5442 = vmatmul.mubr.bf16.gmra.mxu0 %v5272
      %v5443 = vpop.f32.mrf.mxu0
      %v5444 = vadd.f32 0.0, %v5443
      %v5445 = vpop.f32.mrf.mxu0
      %v5446 = vpop.f32.mrf.mxu0
      %v5447 = vadd.f32 0.0, %v5446
      %v5448 = vpop.f32.mrf.mxu0
      %5449 = vmatprep.mubr.bf16.mxu0 0
      %5450 = vmatmul.mubr.bf16.gmra.mxu0 %v5273
      %v5451 = vpop.f32.mrf.mxu0
      %v5452 = vadd.f32 0.0, %v5451
      %v5453 = vpop.f32.mrf.mxu0
      %v5454 = vpop.f32.mrf.mxu0
      %v5455 = vadd.f32 0.0, %v5454
      %v5456 = vpop.f32.mrf.mxu0
      %5457 = vmatprep.mubr.bf16.mxu0 0
      %5458 = vmatmul.mubr.bf16.gmra.mxu0 %v5274
      %v5459 = vpop.f32.mrf.mxu0
      %v5460 = vadd.f32 0.0, %v5459
      %v5461 = vpop.f32.mrf.mxu0
      %v5462 = vpop.f32.mrf.mxu0
      %v5463 = vadd.f32 0.0, %v5462
      %v5464 = vpop.f32.mrf.mxu0
      %5465 = vmatprep.mubr.bf16.mxu0 0
      %5466 = vmatmul.mubr.bf16.gmra.mxu0 %v5275
      %v5467 = vpop.f32.mrf.mxu0
      %v5468 = vadd.f32 0.0, %v5467
      %v5469 = vpop.f32.mrf.mxu0
      %v5470 = vpop.f32.mrf.mxu0
      %v5471 = vadd.f32 0.0, %v5470
      %v5472 = vpop.f32.mrf.mxu0
      %5473 = vmatprep.mubr.bf16.mxu0 0
      %5474 = vmatmul.mubr.bf16.gmra.mxu0 %v5276
      %v5475 = vpop.f32.mrf.mxu0
      %v5476 = vadd.f32 0.0, %v5475
      %v5477 = vpop.f32.mrf.mxu0
      %v5478 = vpop.f32.mrf.mxu0
      %v5479 = vadd.f32 0.0, %v5478
      %v5480 = vpop.f32.mrf.mxu0
      %5481 = vmatprep.mubr.bf16.mxu0 0
      %5482 = vmatmul.mubr.bf16.gmra.mxu0 %v5277
      %v5483 = vpop.f32.mrf.mxu0
      %v5484 = vadd.f32 0.0, %v5483
      %v5485 = vpop.f32.mrf.mxu0
      %v5486 = vpop.f32.mrf.mxu0
      %v5487 = vadd.f32 0.0, %v5486
      %v5488 = vpop.f32.mrf.mxu0
      %5489 = vmatprep.mubr.bf16.mxu0 0
      %5490 = vmatmul.mubr.bf16.gmra.mxu0 %v5278
      %v5491 = vpop.f32.mrf.mxu0
      %v5492 = vadd.f32 0.0, %v5491
      %v5493 = vpop.f32.mrf.mxu0
      %v5494 = vpop.f32.mrf.mxu0
      %v5495 = vadd.f32 0.0, %v5494
      %v5496 = vpop.f32.mrf.mxu0
      %5497 = vmatprep.mubr.bf16.mxu0 0
      %5498 = vmatmul.mubr.bf16.gmra.mxu0 %v5279
      %v5499 = vpop.f32.mrf.mxu0
      %v5500 = vadd.f32 0.0, %v5499
      %v5501 = vpop.f32.mrf.mxu0
      %v5502 = vpop.f32.mrf.mxu0
      %v5503 = vadd.f32 0.0, %v5502
      %v5504 = vpop.f32.mrf.mxu0
      %5505 = vmatprep.mubr.bf16.mxu0 0
      %5506 = vmatmul.mubr.bf16.gmra.mxu0 %v5280
      %v5507 = vpop.f32.mrf.mxu0
      %v5508 = vadd.f32 0.0, %v5507
      %v5509 = vpop.f32.mrf.mxu0
      %v5510 = vpop.f32.mrf.mxu0
      %v5511 = vadd.f32 0.0, %v5510
      %v5512 = vpop.f32.mrf.mxu0
      %5513 = vmatprep.mubr.bf16.mxu0 0
      %5514 = vmatmul.mubr.bf16.gmra.mxu0 %v5281
      %v5515 = vpop.f32.mrf.mxu0
      %v5516 = vadd.f32 0.0, %v5515
      %v5517 = vpop.f32.mrf.mxu0
      %v5518 = vpop.f32.mrf.mxu0
      %v5519 = vadd.f32 0.0, %v5518
      %v5520 = vpop.f32.mrf.mxu0
      %5521 = vmatprep.mubr.bf16.mxu0 0
      %5522 = vmatmul.mubr.bf16.gmra.mxu0 %v5282
      %v5523 = vpop.f32.mrf.mxu0
      %v5524 = vadd.f32 0.0, %v5523
      %v5525 = vpop.f32.mrf.mxu0
      %v5526 = vpop.f32.mrf.mxu0
      %v5527 = vadd.f32 0.0, %v5526
      %v5528 = vpop.f32.mrf.mxu0
      %5529 = vmatprep.mubr.bf16.mxu0 0
      %5530 = vmatmul.mubr.bf16.gmra.mxu0 %v5283
      %v5531 = vpop.f32.mrf.mxu0
      %v5532 = vadd.f32 0.0, %v5531
      %v5533 = vpop.f32.mrf.mxu0
      %v5534 = vpop.f32.mrf.mxu0
      %v5535 = vadd.f32 0.0, %v5534
      %v5536 = vpop.f32.mrf.mxu0
      %5537 = vmatprep.mubr.bf16.mxu0 0
      %5538 = vmatmul.mubr.bf16.gmra.mxu0 %v5284
      %v5539 = vpop.f32.mrf.mxu0
      %v5540 = vadd.f32 0.0, %v5539
      %v5541 = vpop.f32.mrf.mxu0
      %v5542 = vpop.f32.mrf.mxu0
      %v5543 = vadd.f32 0.0, %v5542
      %v5544 = vpop.f32.mrf.mxu0
      %5545 = vmatprep.mubr.bf16.mxu0 0
      %5546 = vmatmul.mubr.bf16.gmra.mxu0 %v5285
      %v5547 = vpop.f32.mrf.mxu0
      %v5548 = vadd.f32 0.0, %v5547
      %v5549 = vpop.f32.mrf.mxu0
      %v5550 = vpop.f32.mrf.mxu0
      %v5551 = vadd.f32 0.0, %v5550
      %v5552 = vpop.f32.mrf.mxu0
      %5553 = vmatprep.mubr.bf16.mxu0 0
      %5554 = vmatmul.mubr.bf16.gmra.mxu0 %v5286
      %v5555 = vpop.f32.mrf.mxu0
      %v5556 = vadd.f32 0.0, %v5555
      %v5557 = vpop.f32.mrf.mxu0
      %v5558 = vpop.f32.mrf.mxu0
      %v5559 = vadd.f32 0.0, %v5558
      %v5560 = vpop.f32.mrf.mxu0
      %5561 = vmatprep.mubr.bf16.mxu0 0
      %5562 = vmatmul.mubr.bf16.gmra.mxu0 %v5287
      %v5563 = vpop.f32.mrf.mxu0
      %v5564 = vadd.f32 0.0, %v5563
      %v5565 = vpop.f32.mrf.mxu0
      %v5566 = vpop.f32.mrf.mxu0
      %v5567 = vadd.f32 0.0, %v5566
      %v5568 = vpop.f32.mrf.mxu0
      %5569 = vmatprep.mubr.bf16.mxu0 0
      %5570 = vmatmul.mubr.bf16.gmra.mxu0 %v5288
      %v5571 = vpop.f32.mrf.mxu0
      %v5572 = vadd.f32 0.0, %v5571
      %v5573 = vpop.f32.mrf.mxu0
      %v5574 = vpop.f32.mrf.mxu0
      %v5575 = vadd.f32 0.0, %v5574
      %v5576 = vpop.f32.mrf.mxu0
      %5577 = vmatprep.mubr.bf16.mxu0 0
      %5578 = vmatmul.mubr.bf16.gmra.mxu0 %v5289
      %v5579 = vpop.f32.mrf.mxu0
      %v5580 = vadd.f32 0.0, %v5579
      %v5581 = vpop.f32.mrf.mxu0
      %v5582 = vpop.f32.mrf.mxu0
      %v5583 = vadd.f32 0.0, %v5582
      %v5584 = vpop.f32.mrf.mxu0
      %5585 = vmatprep.mubr.bf16.mxu0 0
      %5586 = vmatmul.mubr.bf16.gmra.mxu0 %v5290
      %v5587 = vpop.f32.mrf.mxu0
      %v5588 = vadd.f32 0.0, %v5587
      %v5589 = vpop.f32.mrf.mxu0
      %v5590 = vpop.f32.mrf.mxu0
      %v5591 = vadd.f32 0.0, %v5590
      %v5592 = vpop.f32.mrf.mxu0
      %5593 = vmatprep.mubr.bf16.mxu0 0
      %5594 = vmatmul.mubr.bf16.gmra.mxu0 %v5291
      %v5595 = vpop.f32.mrf.mxu0
      %v5596 = vadd.f32 0.0, %v5595
      %v5597 = vpop.f32.mrf.mxu0
      %v5598 = vpop.f32.mrf.mxu0
      %v5599 = vadd.f32 0.0, %v5598
      %v5600 = vpop.f32.mrf.mxu0
      %5601 = vmatprep.mubr.bf16.mxu0 0
      %5602 = vmatmul.mubr.bf16.gmra.mxu0 %v5292
      %v5603 = vpop.f32.mrf.mxu0
      %v5604 = vadd.f32 0.0, %v5603
      %v5605 = vpop.f32.mrf.mxu0
      %v5606 = vpop.f32.mrf.mxu0
      %v5607 = vadd.f32 0.0, %v5606
      %v5608 = vpop.f32.mrf.mxu0
      %5609 = vmatprep.mubr.bf16.mxu0 0
      %5610 = vmatmul.mubr.bf16.gmra.mxu0 %v5293
      %v5611 = vpop.f32.mrf.mxu0
      %v5612 = vadd.f32 0.0, %v5611
      %v5613 = vpop.f32.mrf.mxu0
      %v5614 = vpop.f32.mrf.mxu0
      %v5615 = vadd.f32 0.0, %v5614
      %v5616 = vpop.f32.mrf.mxu0
      %5617 = vdwg.mxu0
      %v5618 = vadd.f32 %v5197, %v5404
      %v5619 = vadd.f32 %v5198, %v5407
      %v5620 = vadd.f32 %v5199, %v5412
      %v5621 = vadd.f32 %v5200, %v5415
      %v5622 = vadd.f32 %v5201, %v5420
      %v5623 = vadd.f32 %v5202, %v5423
      %v5624 = vadd.f32 %v5203, %v5428
      %v5625 = vadd.f32 %v5204, %v5431
      %v5626 = vadd.f32 %v5205, %v5436
      %v5627 = vadd.f32 %v5206, %v5439
      %v5628 = vadd.f32 %v5207, %v5444
      %v5629 = vadd.f32 %v5208, %v5447
      %v5630 = vadd.f32 %v5209, %v5452
      %v5631 = vadd.f32 %v5210, %v5455
      %v5632 = vadd.f32 %v5211, %v5460
      %v5633 = vadd.f32 %v5212, %v5463
      %v5634 = vadd.f32 %v5213, %v5468
      %v5635 = vadd.f32 %v5214, %v5471
      %v5636 = vadd.f32 %v5215, %v5476
      %v5637 = vadd.f32 %v5216, %v5479
      %v5638 = vadd.f32 %v5217, %v5484
      %v5639 = vadd.f32 %v5218, %v5487
      %v5640 = vadd.f32 %v5219, %v5492
      %v5641 = vadd.f32 %v5220, %v5495
      %v5642 = vadd.f32 %v5221, %v5500
      %v5643 = vadd.f32 %v5222, %v5503
      %v5644 = vadd.f32 %v5223, %v5508
      %v5645 = vadd.f32 %v5224, %v5511
      %v5646 = vadd.f32 %v5225, %v5516
      %v5647 = vadd.f32 %v5226, %v5519
      %v5648 = vadd.f32 %v5227, %v5524
      %v5649 = vadd.f32 %v5228, %v5527
      %v5650 = vadd.f32 %v5229, %v5532
      %v5651 = vadd.f32 %v5230, %v5535
      %v5652 = vadd.f32 %v5231, %v5540
      %v5653 = vadd.f32 %v5232, %v5543
      %v5654 = vadd.f32 %v5233, %v5548
      %v5655 = vadd.f32 %v5234, %v5551
      %v5656 = vadd.f32 %v5235, %v5556
      %v5657 = vadd.f32 %v5236, %v5559
      %v5658 = vadd.f32 %v5237, %v5564
      %v5659 = vadd.f32 %v5238, %v5567
      %v5660 = vadd.f32 %v5239, %v5572
      %v5661 = vadd.f32 %v5240, %v5575
      %v5662 = vadd.f32 %v5241, %v5580
      %v5663 = vadd.f32 %v5242, %v5583
      %v5664 = vadd.f32 %v5243, %v5588
      %v5665 = vadd.f32 %v5244, %v5591
      %v5666 = vadd.f32 %v5245, %v5596
      %v5667 = vadd.f32 %v5246, %v5599
      %v5668 = vadd.f32 %v5247, %v5604
      %v5669 = vadd.f32 %v5248, %v5607
      %v5670 = vadd.f32 %v5249, %v5612
      %v5671 = vadd.f32 %v5250, %v5615
      %v5672 = vld [vmem:[#allocation2 + $0x10] sm:$0xf]
      %v5673 = vld [vmem:[#allocation2 + $0x14] sm:$0xf]
      %v5674 = vld [vmem:[#allocation2 + $0x18] sm:$0xf]
      %v5675 = vld [vmem:[#allocation2 + $0x1c] sm:$0xf]
      %v5676 = vld [vmem:[#allocation2 + $0x20] sm:$0xf]
      %v5677 = vld [vmem:[#allocation2 + $0x24] sm:$0xf]
      %v5678 = vld [vmem:[#allocation2 + $0x28] sm:$0xf]
      %v5679 = vld [vmem:[#allocation2 + $0x2c] sm:$0xf]
      %v5680 = vld [vmem:[#allocation2 + $0x30] sm:$0xf]
      %v5681 = vld [vmem:[#allocation2 + $0x34] sm:$0xf]
      %v5682 = vld [vmem:[#allocation2 + $0x38] sm:$0xf]
      %v5683 = vld [vmem:[#allocation2 + $0x3c] sm:$0xf]
      %v5684 = vld [vmem:[#allocation2 + $0x40] sm:$0xf]
      %v5685 = vld [vmem:[#allocation2 + $0x44] sm:$0xf]
      %v5686 = vld [vmem:[#allocation2 + $0x48] sm:$0xf]
      %v5687 = vld [vmem:[#allocation2 + $0x4c] sm:$0xf]
      %v5688 = vld [vmem:[#allocation2 + $0x50] sm:$0xf]
      %v5689 = vld [vmem:[#allocation2 + $0x54] sm:$0xf]
      %v5690 = vld [vmem:[#allocation2 + $0x58] sm:$0xf]
      %v5691 = vld [vmem:[#allocation2 + $0x5c] sm:$0xf]
      %v5692 = vld [vmem:[#allocation2 + $0x60] sm:$0xf]
      %v5693 = vld [vmem:[#allocation2 + $0x64] sm:$0xf]
      %v5694 = vld [vmem:[#allocation2 + $0x68] sm:$0xf]
      %v5695 = vld [vmem:[#allocation2 + $0x6c] sm:$0xf]
      %v5696 = vld [vmem:[#allocation2 + $0x70] sm:$0xf]
      %v5697 = vld [vmem:[#allocation2 + $0x74] sm:$0xf]
      %v5698 = vld [vmem:[#allocation2 + $0x78] sm:$0xf]
      %v5699 = vld [vmem:[#allocation2 + $0x7c] sm:$0xf]
      %v5700 = vld [vmem:[#allocation2 + $0x80] sm:$0xf]
      %v5701 = vld [vmem:[#allocation2 + $0x84] sm:$0xf]
      %v5702 = vld [vmem:[#allocation2 + $0x88] sm:$0xf]
      %v5703 = vld [vmem:[#allocation2 + $0x8c] sm:$0xf]
      %v5704 = vld [vmem:[#allocation2 + $0x90] sm:$0xf]
      %v5705 = vld [vmem:[#allocation2 + $0x94] sm:$0xf]
      %v5706 = vld [vmem:[#allocation2 + $0x98] sm:$0xf]
      %v5707 = vld [vmem:[#allocation2 + $0x9c] sm:$0xf]
      %v5708 = vld [vmem:[#allocation2 + $0xa0] sm:$0xf]
      %v5709 = vld [vmem:[#allocation2 + $0xa4] sm:$0xf]
      %v5710 = vld [vmem:[#allocation2 + $0xa8] sm:$0xf]
      %v5711 = vld [vmem:[#allocation2 + $0xac] sm:$0xf]
      %v5712 = vld [vmem:[#allocation2 + $0xb0] sm:$0xf]
      %v5713 = vld [vmem:[#allocation2 + $0xb4] sm:$0xf]
      %v5714 = vld [vmem:[#allocation2 + $0xb8] sm:$0xf]
      %v5715 = vld [vmem:[#allocation2 + $0xbc] sm:$0xf]
      %v5716 = vld [vmem:[#allocation2 + $0xc0] sm:$0xf]
      %v5717 = vld [vmem:[#allocation2 + $0xc4] sm:$0xf]
      %v5718 = vld [vmem:[#allocation2 + $0xc8] sm:$0xf]
      %v5719 = vld [vmem:[#allocation2 + $0xcc] sm:$0xf]
      %v5720 = vld [vmem:[#allocation2 + $0xd0] sm:$0xf]
      %v5721 = vld [vmem:[#allocation2 + $0xd4] sm:$0xf]
      %v5722 = vld [vmem:[#allocation2 + $0xd8] sm:$0xf]
      %v5723 = vld [vmem:[#allocation2 + $0xdc] sm:$0xf]
      %v5724 = vld [vmem:[#allocation2 + $0xe0] sm:$0xf]
      %v5725 = vld [vmem:[#allocation2 + $0xe4] sm:$0xf]
      %v5726 = vld [vmem:[#allocation2 + $0xe8] sm:$0x1]
      %v5727 = vld [vmem:[%s2 + $0x140] sm:$0xf]
      %v5728 = vld [vmem:[%s2 + $0x144] sm:$0xf]
      %v5729 = vld [vmem:[%s2 + $0x148] sm:$0xf]
      %v5730 = vld [vmem:[%s2 + $0x14c] sm:$0xf]
      %v5731 = vld [vmem:[%s2 + $0x150] sm:$0xf]
      %v5732 = vld [vmem:[%s2 + $0x154] sm:$0xf]
      %v5733 = vld [vmem:[%s2 + $0x158] sm:$0xf]
      %v5734 = vld [vmem:[%s2 + $0x15c] sm:$0xf]
      %v5735 = vld [vmem:[%s2 + $0x160] sm:$0xf]
      %v5736 = vld [vmem:[%s2 + $0x164] sm:$0xf]
      %v5737 = vld [vmem:[%s2 + $0x168] sm:$0xf]
      %v5738 = vld [vmem:[%s2 + $0x16c] sm:$0xf]
      %v5739 = vld [vmem:[%s2 + $0x170] sm:$0xf]
      %v5740 = vld [vmem:[%s2 + $0x174] sm:$0xf]
      %v5741 = vld [vmem:[%s2 + $0x178] sm:$0xf]
      %v5742 = vld [vmem:[%s2 + $0x17c] sm:$0xf]
      %v5798 = vunpack.c.l.b16 %v5672
      %v5799 = vunpack.c.l.b16 %v5673
      %v5800 = vunpack.c.l.b16 %v5674
      %v5801 = vunpack.c.l.b16 %v5675
      %v5802 = vunpack.c.l.b16 %v5676
      %v5803 = vunpack.c.l.b16 %v5677
      %v5804 = vunpack.c.l.b16 %v5678
      %v5805 = vunpack.c.l.b16 %v5679
      %v5806 = vunpack.c.l.b16 %v5680
      %v5807 = vunpack.c.l.b16 %v5681
      %v5808 = vunpack.c.l.b16 %v5682
      %v5809 = vunpack.c.l.b16 %v5683
      %v5810 = vunpack.c.l.b16 %v5684
      %v5811 = vunpack.c.l.b16 %v5685
      %v5812 = vunpack.c.l.b16 %v5686
      %v5813 = vunpack.c.l.b16 %v5687
      %v5814 = vunpack.c.l.b16 %v5688
      %v5815 = vunpack.c.l.b16 %v5689
      %v5816 = vunpack.c.l.b16 %v5690
      %v5817 = vunpack.c.l.b16 %v5691
      %v5818 = vunpack.c.l.b16 %v5692
      %v5819 = vunpack.c.l.b16 %v5693
      %v5820 = vunpack.c.l.b16 %v5694
      %v5821 = vunpack.c.l.b16 %v5695
      %v5822 = vunpack.c.l.b16 %v5696
      %v5823 = vunpack.c.l.b16 %v5697
      %v5824 = vunpack.c.l.b16 %v5698
      %v5825 = vunpack.c.l.b16 %v5699
      %v5826 = vunpack.c.l.b16 %v5700
      %v5827 = vunpack.c.l.b16 %v5701
      %v5828 = vunpack.c.l.b16 %v5702
      %v5829 = vunpack.c.l.b16 %v5703
      %v5830 = vunpack.c.l.b16 %v5704
      %v5831 = vunpack.c.l.b16 %v5705
      %v5832 = vunpack.c.l.b16 %v5706
      %v5833 = vunpack.c.l.b16 %v5707
      %v5834 = vunpack.c.l.b16 %v5708
      %v5835 = vunpack.c.l.b16 %v5709
      %v5836 = vunpack.c.l.b16 %v5710
      %v5837 = vunpack.c.l.b16 %v5711
      %v5838 = vunpack.c.l.b16 %v5712
      %v5839 = vunpack.c.l.b16 %v5713
      %v5840 = vunpack.c.l.b16 %v5714
      %v5841 = vunpack.c.l.b16 %v5715
      %v5842 = vunpack.c.l.b16 %v5716
      %v5843 = vunpack.c.l.b16 %v5717
      %v5844 = vunpack.c.l.b16 %v5718
      %v5845 = vunpack.c.l.b16 %v5719
      %v5846 = vunpack.c.l.b16 %v5720
      %v5847 = vunpack.c.l.b16 %v5721
      %v5848 = vunpack.c.l.b16 %v5722
      %v5849 = vunpack.c.l.b16 %v5723
      %v5850 = vunpack.c.l.b16 %v5724
      %v5851 = vunpack.c.l.b16 %v5725
      %v5852 = vunpack.c.l.b16 %v5726
      %v5853 = vpack.c.b16 %v5799, %v5798
      %v5854 = vpack.c.b16 %v5801, %v5800
      %v5855 = vpack.c.b16 %v5803, %v5802
      %v5856 = vpack.c.b16 %v5805, %v5804
      %v5857 = vpack.c.b16 %v5807, %v5806
      %v5858 = vpack.c.b16 %v5809, %v5808
      %v5859 = vpack.c.b16 %v5811, %v5810
      %v5860 = vpack.c.b16 %v5813, %v5812
      %v5861 = vpack.c.b16 %v5815, %v5814
      %v5862 = vpack.c.b16 %v5817, %v5816
      %v5863 = vpack.c.b16 %v5819, %v5818
      %v5864 = vpack.c.b16 %v5821, %v5820
      %v5865 = vpack.c.b16 %v5823, %v5822
      %v5866 = vpack.c.b16 %v5825, %v5824
      %v5867 = vpack.c.b16 %v5827, %v5826
      %v5868 = vpack.c.b16 %v5829, %v5828
      %v5869 = vpack.c.b16 %v5831, %v5830
      %v5870 = vpack.c.b16 %v5833, %v5832
      %v5871 = vpack.c.b16 %v5835, %v5834
      %v5872 = vpack.c.b16 %v5837, %v5836
      %v5873 = vpack.c.b16 %v5839, %v5838
      %v5874 = vpack.c.b16 %v5841, %v5840
      %v5875 = vpack.c.b16 %v5843, %v5842
      %v5876 = vpack.c.b16 %v5845, %v5844
      %v5877 = vpack.c.b16 %v5847, %v5846
      %v5878 = vpack.c.b16 %v5849, %v5848
      %v5879 = vpack.c.b16 %v5851, %v5850
      %v5880 = vpack.c.b16 %v5852, %v5852
      %v5882 = vshrl.u32 %v5853, 16
      %v5884 = vshll.u32 %v5853, 16
      %v5886 = vrot.slane %v5884, 1
      %v5887 = vor.u32 %v5882, %v5886
      %v5889 = vshll.u32 %v5854, 16
      %v5891 = vrot.slane %v5889, 1
      %v5892 = vsel %vm3814, %v5887, %v5891
      %v5893 = vshrl.u32 %v5854, 16
      %v5895 = vor.u32 %v5893, %v5891
      %v5897 = vshll.u32 %v5855, 16
      %v5899 = vrot.slane %v5897, 1
      %v5900 = vsel %vm3814, %v5895, %v5899
      %v5901 = vshrl.u32 %v5855, 16
      %v5903 = vor.u32 %v5901, %v5899
      %v5905 = vshll.u32 %v5856, 16
      %v5907 = vrot.slane %v5905, 1
      %v5908 = vsel %vm3814, %v5903, %v5907
      %v5909 = vshrl.u32 %v5856, 16
      %v5911 = vor.u32 %v5909, %v5907
      %v5913 = vshll.u32 %v5857, 16
      %v5915 = vrot.slane %v5913, 1
      %v5916 = vsel %vm3814, %v5911, %v5915
      %v5917 = vshrl.u32 %v5857, 16
      %v5919 = vor.u32 %v5917, %v5915
      %v5921 = vshll.u32 %v5858, 16
      %v5923 = vrot.slane %v5921, 1
      %v5924 = vsel %vm3814, %v5919, %v5923
      %v5925 = vshrl.u32 %v5858, 16
      %v5927 = vor.u32 %v5925, %v5923
      %v5929 = vshll.u32 %v5859, 16
      %v5931 = vrot.slane %v5929, 1
      %v5932 = vsel %vm3814, %v5927, %v5931
      %v5933 = vshrl.u32 %v5859, 16
      %v5935 = vor.u32 %v5933, %v5931
      %v5937 = vshll.u32 %v5860, 16
      %v5939 = vrot.slane %v5937, 1
      %v5940 = vsel %vm3814, %v5935, %v5939
      %v5941 = vshrl.u32 %v5860, 16
      %v5943 = vor.u32 %v5941, %v5939
      %v5945 = vshll.u32 %v5861, 16
      %v5947 = vrot.slane %v5945, 1
      %v5948 = vsel %vm3814, %v5943, %v5947
      %v5949 = vshrl.u32 %v5861, 16
      %v5951 = vor.u32 %v5949, %v5947
      %v5953 = vshll.u32 %v5862, 16
      %v5955 = vrot.slane %v5953, 1
      %v5956 = vsel %vm3814, %v5951, %v5955
      %v5957 = vshrl.u32 %v5862, 16
      %v5959 = vor.u32 %v5957, %v5955
      %v5961 = vshll.u32 %v5863, 16
      %v5963 = vrot.slane %v5961, 1
      %v5964 = vsel %vm3814, %v5959, %v5963
      %v5965 = vshrl.u32 %v5863, 16
      %v5967 = vor.u32 %v5965, %v5963
      %v5969 = vshll.u32 %v5864, 16
      %v5971 = vrot.slane %v5969, 1
      %v5972 = vsel %vm3814, %v5967, %v5971
      %v5973 = vshrl.u32 %v5864, 16
      %v5975 = vor.u32 %v5973, %v5971
      %v5977 = vshll.u32 %v5865, 16
      %v5979 = vrot.slane %v5977, 1
      %v5980 = vsel %vm3814, %v5975, %v5979
      %v5981 = vshrl.u32 %v5865, 16
      %v5983 = vor.u32 %v5981, %v5979
      %v5985 = vshll.u32 %v5866, 16
      %v5987 = vrot.slane %v5985, 1
      %v5988 = vsel %vm3814, %v5983, %v5987
      %v5989 = vshrl.u32 %v5866, 16
      %v5991 = vor.u32 %v5989, %v5987
      %v5993 = vshll.u32 %v5867, 16
      %v5995 = vrot.slane %v5993, 1
      %v5996 = vsel %vm3814, %v5991, %v5995
      %v5997 = vshrl.u32 %v5867, 16
      %v5999 = vor.u32 %v5997, %v5995
      %v6001 = vshll.u32 %v5868, 16
      %v6003 = vrot.slane %v6001, 1
      %v6004 = vsel %vm3814, %v5999, %v6003
      %v6005 = vshrl.u32 %v5868, 16
      %v6007 = vor.u32 %v6005, %v6003
      %v6009 = vshll.u32 %v5869, 16
      %v6011 = vrot.slane %v6009, 1
      %v6012 = vsel %vm3814, %v6007, %v6011
      %v6013 = vshrl.u32 %v5869, 16
      %v6015 = vor.u32 %v6013, %v6011
      %v6017 = vshll.u32 %v5870, 16
      %v6019 = vrot.slane %v6017, 1
      %v6020 = vsel %vm3814, %v6015, %v6019
      %v6021 = vshrl.u32 %v5870, 16
      %v6023 = vor.u32 %v6021, %v6019
      %v6025 = vshll.u32 %v5871, 16
      %v6027 = vrot.slane %v6025, 1
      %v6028 = vsel %vm3814, %v6023, %v6027
      %v6029 = vshrl.u32 %v5871, 16
      %v6031 = vor.u32 %v6029, %v6027
      %v6033 = vshll.u32 %v5872, 16
      %v6035 = vrot.slane %v6033, 1
      %v6036 = vsel %vm3814, %v6031, %v6035
      %v6037 = vshrl.u32 %v5872, 16
      %v6039 = vor.u32 %v6037, %v6035
      %v6041 = vshll.u32 %v5873, 16
      %v6043 = vrot.slane %v6041, 1
      %v6044 = vsel %vm3814, %v6039, %v6043
      %v6045 = vshrl.u32 %v5873, 16
      %v6047 = vor.u32 %v6045, %v6043
      %v6049 = vshll.u32 %v5874, 16
      %v6051 = vrot.slane %v6049, 1
      %v6052 = vsel %vm3814, %v6047, %v6051
      %v6053 = vshrl.u32 %v5874, 16
      %v6055 = vor.u32 %v6053, %v6051
      %v6057 = vshll.u32 %v5875, 16
      %v6059 = vrot.slane %v6057, 1
      %v6060 = vsel %vm3814, %v6055, %v6059
      %v6061 = vshrl.u32 %v5875, 16
      %v6063 = vor.u32 %v6061, %v6059
      %v6065 = vshll.u32 %v5876, 16
      %v6067 = vrot.slane %v6065, 1
      %v6068 = vsel %vm3814, %v6063, %v6067
      %v6069 = vshrl.u32 %v5876, 16
      %v6071 = vor.u32 %v6069, %v6067
      %v6073 = vshll.u32 %v5877, 16
      %v6075 = vrot.slane %v6073, 1
      %v6076 = vsel %vm3814, %v6071, %v6075
      %v6077 = vshrl.u32 %v5877, 16
      %v6079 = vor.u32 %v6077, %v6075
      %v6081 = vshll.u32 %v5878, 16
      %v6083 = vrot.slane %v6081, 1
      %v6084 = vsel %vm3814, %v6079, %v6083
      %v6085 = vshrl.u32 %v5878, 16
      %v6087 = vor.u32 %v6085, %v6083
      %v6089 = vshll.u32 %v5879, 16
      %v6091 = vrot.slane %v6089, 1
      %v6092 = vsel %vm3814, %v6087, %v6091
      %v6093 = vshrl.u32 %v5879, 16
      %v6095 = vor.u32 %v6093, %v6091
      %v6097 = vshll.u32 %v5880, 16
      %v6099 = vrot.slane %v6097, 1
      %v6100 = vsel %vm3814, %v6095, %v6099
      %v6144 = vunpack.c.l.b16 %v5727
      %v6145 = vunpack.c.l.b16 %v5728
      %v6146 = vunpack.c.l.b16 %v5729
      %v6147 = vunpack.c.l.b16 %v5730
      %v6148 = vunpack.c.l.b16 %v5731
      %v6149 = vunpack.c.l.b16 %v5732
      %v6150 = vunpack.c.l.b16 %v5733
      %v6151 = vunpack.c.l.b16 %v5734
      %v6152 = vunpack.c.l.b16 %v5735
      %v6153 = vunpack.c.l.b16 %v5736
      %v6154 = vunpack.c.l.b16 %v5737
      %v6155 = vunpack.c.l.b16 %v5738
      %v6156 = vunpack.c.l.b16 %v5739
      %v6157 = vunpack.c.l.b16 %v5740
      %v6158 = vunpack.c.l.b16 %v5741
      %v6159 = vunpack.c.l.b16 %v5742
      %v6160 = vpack.c.b16 %v6145, %v6144
      %v6161 = vpack.c.b16 %v6147, %v6146
      %v6162 = vpack.c.b16 %v6149, %v6148
      %v6163 = vpack.c.b16 %v6151, %v6150
      %v6164 = vpack.c.b16 %v6153, %v6152
      %v6165 = vpack.c.b16 %v6155, %v6154
      %v6166 = vpack.c.b16 %v6157, %v6156
      %v6167 = vpack.c.b16 %v6159, %v6158
      %6176 = vmatprep.subr.bf16.mxu0 0
      %6177 = vmatpush1.bf16.msra.mxu0 %v6167
      %6178 = vmatprep.subr.bf16.mxu0 0
      %6179 = vmatpush1.bf16.msra.mxu0 %v6166
      %6180 = vmatprep.subr.bf16.mxu0 0
      %6181 = vmatpush1.bf16.msra.mxu0 %v6165
      %6182 = vmatprep.subr.bf16.mxu0 0
      %6183 = vmatpush1.bf16.msra.mxu0 %v6164
      %6184 = vmatprep.subr.bf16.mxu0 0
      %6185 = vmatpush1.bf16.msra.mxu0 %v6163
      %6186 = vmatprep.subr.bf16.mxu0 0
      %6187 = vmatpush1.bf16.msra.mxu0 %v6162
      %6188 = vmatprep.subr.bf16.mxu0 0
      %6189 = vmatpush1.bf16.msra.mxu0 %v6161
      %6190 = vmatprep.subr.bf16.mxu0 0
      %6191 = vmatpush1.bf16.msra.mxu0 %v6160
      %6192 = vmatprep.subr.bf16.mxu0 0
      %6193 = vmatpush2.bf16.msra.mxu0 0
      %6194 = vmatprep.subr.bf16.mxu0 0
      %6195 = vmatpush2.bf16.msra.mxu0 0
      %6196 = vmatprep.subr.bf16.mxu0 0
      %6197 = vmatpush2.bf16.msra.mxu0 0
      %6198 = vmatprep.subr.bf16.mxu0 0
      %6199 = vmatpush2.bf16.msra.mxu0 0
      %6200 = vmatprep.subr.bf16.mxu0 0
      %6201 = vmatpush2.bf16.msra.mxu0 0
      %6202 = vmatprep.subr.bf16.mxu0 0
      %6203 = vmatpush2.bf16.msra.mxu0 0
      %6204 = vmatprep.subr.bf16.mxu0 0
      %6205 = vmatpush2.bf16.msra.mxu0 0
      %6206 = vmatprep.subr.bf16.mxu0 0
      %6207 = vmatpush2.bf16.msra.mxu0 0
      %6208 = vmatprep.mubr.bf16.mxu0 0
      %6209 = vmatmul.mubr.bf16.gmra.mxu0 %v5892
      %v6210 = vpop.f32.mrf.mxu0
      %v6211 = vadd.f32 0.0, %v6210
      %v6212 = vpop.f32.mrf.mxu0
      %v6213 = vpop.f32.mrf.mxu0
      %v6214 = vadd.f32 0.0, %v6213
      %v6215 = vpop.f32.mrf.mxu0
      %6216 = vmatprep.mubr.bf16.mxu0 0
      %6217 = vmatmul.mubr.bf16.gmra.mxu0 %v5900
      %v6218 = vpop.f32.mrf.mxu0
      %v6219 = vadd.f32 0.0, %v6218
      %v6220 = vpop.f32.mrf.mxu0
      %v6221 = vpop.f32.mrf.mxu0
      %v6222 = vadd.f32 0.0, %v6221
      %v6223 = vpop.f32.mrf.mxu0
      %6224 = vmatprep.mubr.bf16.mxu0 0
      %6225 = vmatmul.mubr.bf16.gmra.mxu0 %v5908
      %v6226 = vpop.f32.mrf.mxu0
      %v6227 = vadd.f32 0.0, %v6226
      %v6228 = vpop.f32.mrf.mxu0
      %v6229 = vpop.f32.mrf.mxu0
      %v6230 = vadd.f32 0.0, %v6229
      %v6231 = vpop.f32.mrf.mxu0
      %6232 = vmatprep.mubr.bf16.mxu0 0
      %6233 = vmatmul.mubr.bf16.gmra.mxu0 %v5916
      %v6234 = vpop.f32.mrf.mxu0
      %v6235 = vadd.f32 0.0, %v6234
      %v6236 = vpop.f32.mrf.mxu0
      %v6237 = vpop.f32.mrf.mxu0
      %v6238 = vadd.f32 0.0, %v6237
      %v6239 = vpop.f32.mrf.mxu0
      %6240 = vmatprep.mubr.bf16.mxu0 0
      %6241 = vmatmul.mubr.bf16.gmra.mxu0 %v5924
      %v6242 = vpop.f32.mrf.mxu0
      %v6243 = vadd.f32 0.0, %v6242
      %v6244 = vpop.f32.mrf.mxu0
      %v6245 = vpop.f32.mrf.mxu0
      %v6246 = vadd.f32 0.0, %v6245
      %v6247 = vpop.f32.mrf.mxu0
      %6248 = vmatprep.mubr.bf16.mxu0 0
      %6249 = vmatmul.mubr.bf16.gmra.mxu0 %v5932
      %v6250 = vpop.f32.mrf.mxu0
      %v6251 = vadd.f32 0.0, %v6250
      %v6252 = vpop.f32.mrf.mxu0
      %v6253 = vpop.f32.mrf.mxu0
      %v6254 = vadd.f32 0.0, %v6253
      %v6255 = vpop.f32.mrf.mxu0
      %6256 = vmatprep.mubr.bf16.mxu0 0
      %6257 = vmatmul.mubr.bf16.gmra.mxu0 %v5940
      %v6258 = vpop.f32.mrf.mxu0
      %v6259 = vadd.f32 0.0, %v6258
      %v6260 = vpop.f32.mrf.mxu0
      %v6261 = vpop.f32.mrf.mxu0
      %v6262 = vadd.f32 0.0, %v6261
      %v6263 = vpop.f32.mrf.mxu0
      %6264 = vmatprep.mubr.bf16.mxu0 0
      %6265 = vmatmul.mubr.bf16.gmra.mxu0 %v5948
      %v6266 = vpop.f32.mrf.mxu0
      %v6267 = vadd.f32 0.0, %v6266
      %v6268 = vpop.f32.mrf.mxu0
      %v6269 = vpop.f32.mrf.mxu0
      %v6270 = vadd.f32 0.0, %v6269
      %v6271 = vpop.f32.mrf.mxu0
      %6272 = vmatprep.mubr.bf16.mxu0 0
      %6273 = vmatmul.mubr.bf16.gmra.mxu0 %v5956
      %v6274 = vpop.f32.mrf.mxu0
      %v6275 = vadd.f32 0.0, %v6274
      %v6276 = vpop.f32.mrf.mxu0
      %v6277 = vpop.f32.mrf.mxu0
      %v6278 = vadd.f32 0.0, %v6277
      %v6279 = vpop.f32.mrf.mxu0
      %6280 = vmatprep.mubr.bf16.mxu0 0
      %6281 = vmatmul.mubr.bf16.gmra.mxu0 %v5964
      %v6282 = vpop.f32.mrf.mxu0
      %v6283 = vadd.f32 0.0, %v6282
      %v6284 = vpop.f32.mrf.mxu0
      %v6285 = vpop.f32.mrf.mxu0
      %v6286 = vadd.f32 0.0, %v6285
      %v6287 = vpop.f32.mrf.mxu0
      %6288 = vmatprep.mubr.bf16.mxu0 0
      %6289 = vmatmul.mubr.bf16.gmra.mxu0 %v5972
      %v6290 = vpop.f32.mrf.mxu0
      %v6291 = vadd.f32 0.0, %v6290
      %v6292 = vpop.f32.mrf.mxu0
      %v6293 = vpop.f32.mrf.mxu0
      %v6294 = vadd.f32 0.0, %v6293
      %v6295 = vpop.f32.mrf.mxu0
      %6296 = vmatprep.mubr.bf16.mxu0 0
      %6297 = vmatmul.mubr.bf16.gmra.mxu0 %v5980
      %v6298 = vpop.f32.mrf.mxu0
      %v6299 = vadd.f32 0.0, %v6298
      %v6300 = vpop.f32.mrf.mxu0
      %v6301 = vpop.f32.mrf.mxu0
      %v6302 = vadd.f32 0.0, %v6301
      %v6303 = vpop.f32.mrf.mxu0
      %6304 = vmatprep.mubr.bf16.mxu0 0
      %6305 = vmatmul.mubr.bf16.gmra.mxu0 %v5988
      %v6306 = vpop.f32.mrf.mxu0
      %v6307 = vadd.f32 0.0, %v6306
      %v6308 = vpop.f32.mrf.mxu0
      %v6309 = vpop.f32.mrf.mxu0
      %v6310 = vadd.f32 0.0, %v6309
      %v6311 = vpop.f32.mrf.mxu0
      %6312 = vmatprep.mubr.bf16.mxu0 0
      %6313 = vmatmul.mubr.bf16.gmra.mxu0 %v5996
      %v6314 = vpop.f32.mrf.mxu0
      %v6315 = vadd.f32 0.0, %v6314
      %v6316 = vpop.f32.mrf.mxu0
      %v6317 = vpop.f32.mrf.mxu0
      %v6318 = vadd.f32 0.0, %v6317
      %v6319 = vpop.f32.mrf.mxu0
      %6320 = vmatprep.mubr.bf16.mxu0 0
      %6321 = vmatmul.mubr.bf16.gmra.mxu0 %v6004
      %v6322 = vpop.f32.mrf.mxu0
      %v6323 = vadd.f32 0.0, %v6322
      %v6324 = vpop.f32.mrf.mxu0
      %v6325 = vpop.f32.mrf.mxu0
      %v6326 = vadd.f32 0.0, %v6325
      %v6327 = vpop.f32.mrf.mxu0
      %6328 = vmatprep.mubr.bf16.mxu0 0
      %6329 = vmatmul.mubr.bf16.gmra.mxu0 %v6012
      %v6330 = vpop.f32.mrf.mxu0
      %v6331 = vadd.f32 0.0, %v6330
      %v6332 = vpop.f32.mrf.mxu0
      %v6333 = vpop.f32.mrf.mxu0
      %v6334 = vadd.f32 0.0, %v6333
      %v6335 = vpop.f32.mrf.mxu0
      %6336 = vmatprep.mubr.bf16.mxu0 0
      %6337 = vmatmul.mubr.bf16.gmra.mxu0 %v6020
      %v6338 = vpop.f32.mrf.mxu0
      %v6339 = vadd.f32 0.0, %v6338
      %v6340 = vpop.f32.mrf.mxu0
      %v6341 = vpop.f32.mrf.mxu0
      %v6342 = vadd.f32 0.0, %v6341
      %v6343 = vpop.f32.mrf.mxu0
      %6344 = vmatprep.mubr.bf16.mxu0 0
      %6345 = vmatmul.mubr.bf16.gmra.mxu0 %v6028
      %v6346 = vpop.f32.mrf.mxu0
      %v6347 = vadd.f32 0.0, %v6346
      %v6348 = vpop.f32.mrf.mxu0
      %v6349 = vpop.f32.mrf.mxu0
      %v6350 = vadd.f32 0.0, %v6349
      %v6351 = vpop.f32.mrf.mxu0
      %6352 = vmatprep.mubr.bf16.mxu0 0
      %6353 = vmatmul.mubr.bf16.gmra.mxu0 %v6036
      %v6354 = vpop.f32.mrf.mxu0
      %v6355 = vadd.f32 0.0, %v6354
      %v6356 = vpop.f32.mrf.mxu0
      %v6357 = vpop.f32.mrf.mxu0
      %v6358 = vadd.f32 0.0, %v6357
      %v6359 = vpop.f32.mrf.mxu0
      %6360 = vmatprep.mubr.bf16.mxu0 0
      %6361 = vmatmul.mubr.bf16.gmra.mxu0 %v6044
      %v6362 = vpop.f32.mrf.mxu0
      %v6363 = vadd.f32 0.0, %v6362
      %v6364 = vpop.f32.mrf.mxu0
      %v6365 = vpop.f32.mrf.mxu0
      %v6366 = vadd.f32 0.0, %v6365
      %v6367 = vpop.f32.mrf.mxu0
      %6368 = vmatprep.mubr.bf16.mxu0 0
      %6369 = vmatmul.mubr.bf16.gmra.mxu0 %v6052
      %v6370 = vpop.f32.mrf.mxu0
      %v6371 = vadd.f32 0.0, %v6370
      %v6372 = vpop.f32.mrf.mxu0
      %v6373 = vpop.f32.mrf.mxu0
      %v6374 = vadd.f32 0.0, %v6373
      %v6375 = vpop.f32.mrf.mxu0
      %6376 = vmatprep.mubr.bf16.mxu0 0
      %6377 = vmatmul.mubr.bf16.gmra.mxu0 %v6060
      %v6378 = vpop.f32.mrf.mxu0
      %v6379 = vadd.f32 0.0, %v6378
      %v6380 = vpop.f32.mrf.mxu0
      %v6381 = vpop.f32.mrf.mxu0
      %v6382 = vadd.f32 0.0, %v6381
      %v6383 = vpop.f32.mrf.mxu0
      %6384 = vmatprep.mubr.bf16.mxu0 0
      %6385 = vmatmul.mubr.bf16.gmra.mxu0 %v6068
      %v6386 = vpop.f32.mrf.mxu0
      %v6387 = vadd.f32 0.0, %v6386
      %v6388 = vpop.f32.mrf.mxu0
      %v6389 = vpop.f32.mrf.mxu0
      %v6390 = vadd.f32 0.0, %v6389
      %v6391 = vpop.f32.mrf.mxu0
      %6392 = vmatprep.mubr.bf16.mxu0 0
      %6393 = vmatmul.mubr.bf16.gmra.mxu0 %v6076
      %v6394 = vpop.f32.mrf.mxu0
      %v6395 = vadd.f32 0.0, %v6394
      %v6396 = vpop.f32.mrf.mxu0
      %v6397 = vpop.f32.mrf.mxu0
      %v6398 = vadd.f32 0.0, %v6397
      %v6399 = vpop.f32.mrf.mxu0
      %6400 = vmatprep.mubr.bf16.mxu0 0
      %6401 = vmatmul.mubr.bf16.gmra.mxu0 %v6084
      %v6402 = vpop.f32.mrf.mxu0
      %v6403 = vadd.f32 0.0, %v6402
      %v6404 = vpop.f32.mrf.mxu0
      %v6405 = vpop.f32.mrf.mxu0
      %v6406 = vadd.f32 0.0, %v6405
      %v6407 = vpop.f32.mrf.mxu0
      %6408 = vmatprep.mubr.bf16.mxu0 0
      %6409 = vmatmul.mubr.bf16.gmra.mxu0 %v6092
      %v6410 = vpop.f32.mrf.mxu0
      %v6411 = vadd.f32 0.0, %v6410
      %v6412 = vpop.f32.mrf.mxu0
      %v6413 = vpop.f32.mrf.mxu0
      %v6414 = vadd.f32 0.0, %v6413
      %v6415 = vpop.f32.mrf.mxu0
      %6416 = vmatprep.mubr.bf16.mxu0 0
      %6417 = vmatmul.mubr.bf16.gmra.mxu0 %v6100
      %v6418 = vpop.f32.mrf.mxu0
      %v6419 = vadd.f32 0.0, %v6418
      %v6420 = vpop.f32.mrf.mxu0
      %v6421 = vpop.f32.mrf.mxu0
      %v6422 = vadd.f32 0.0, %v6421
      %v6423 = vpop.f32.mrf.mxu0
      %6424 = vdwg.mxu0
      %v6425 = vadd.f32 %v5618, %v6211
      %v6426 = vadd.f32 %v5619, %v6214
      %v6427 = vadd.f32 %v5620, %v6219
      %v6428 = vadd.f32 %v5621, %v6222
      %v6429 = vadd.f32 %v5622, %v6227
      %v6430 = vadd.f32 %v5623, %v6230
      %v6431 = vadd.f32 %v5624, %v6235
      %v6432 = vadd.f32 %v5625, %v6238
      %v6433 = vadd.f32 %v5626, %v6243
      %v6434 = vadd.f32 %v5627, %v6246
      %v6435 = vadd.f32 %v5628, %v6251
      %v6436 = vadd.f32 %v5629, %v6254
      %v6437 = vadd.f32 %v5630, %v6259
      %v6438 = vadd.f32 %v5631, %v6262
      %v6439 = vadd.f32 %v5632, %v6267
      %v6440 = vadd.f32 %v5633, %v6270
      %v6441 = vadd.f32 %v5634, %v6275
      %v6442 = vadd.f32 %v5635, %v6278
      %v6443 = vadd.f32 %v5636, %v6283
      %v6444 = vadd.f32 %v5637, %v6286
      %v6445 = vadd.f32 %v5638, %v6291
      %v6446 = vadd.f32 %v5639, %v6294
      %v6447 = vadd.f32 %v5640, %v6299
      %v6448 = vadd.f32 %v5641, %v6302
      %v6449 = vadd.f32 %v5642, %v6307
      %v6450 = vadd.f32 %v5643, %v6310
      %v6451 = vadd.f32 %v5644, %v6315
      %v6452 = vadd.f32 %v5645, %v6318
      %v6453 = vadd.f32 %v5646, %v6323
      %v6454 = vadd.f32 %v5647, %v6326
      %v6455 = vadd.f32 %v5648, %v6331
      %v6456 = vadd.f32 %v5649, %v6334
      %v6457 = vadd.f32 %v5650, %v6339
      %v6458 = vadd.f32 %v5651, %v6342
      %v6459 = vadd.f32 %v5652, %v6347
      %v6460 = vadd.f32 %v5653, %v6350
      %v6461 = vadd.f32 %v5654, %v6355
      %v6462 = vadd.f32 %v5655, %v6358
      %v6463 = vadd.f32 %v5656, %v6363
      %v6464 = vadd.f32 %v5657, %v6366
      %v6465 = vadd.f32 %v5658, %v6371
      %v6466 = vadd.f32 %v5659, %v6374
      %v6467 = vadd.f32 %v5660, %v6379
      %v6468 = vadd.f32 %v5661, %v6382
      %v6469 = vadd.f32 %v5662, %v6387
      %v6470 = vadd.f32 %v5663, %v6390
      %v6471 = vadd.f32 %v5664, %v6395
      %v6472 = vadd.f32 %v5665, %v6398
      %v6473 = vadd.f32 %v5666, %v6403
      %v6474 = vadd.f32 %v5667, %v6406
      %v6475 = vadd.f32 %v5668, %v6411
      %v6476 = vadd.f32 %v5669, %v6414
      %v6477 = vadd.f32 %v5670, %v6419
      %v6478 = vadd.f32 %v5671, %v6422
      %v6479 = vld [vmem:[#allocation2 + $0x18] sm:$0x8]
      %v6480 = vld [vmem:[#allocation2 + $0x1c] sm:$0xf]
      %v6481 = vld [vmem:[#allocation2 + $0x20] sm:$0xf]
      %v6482 = vld [vmem:[#allocation2 + $0x24] sm:$0xf]
      %v6483 = vld [vmem:[#allocation2 + $0x28] sm:$0xf]
      %v6484 = vld [vmem:[#allocation2 + $0x2c] sm:$0xf]
      %v6485 = vld [vmem:[#allocation2 + $0x30] sm:$0xf]
      %v6486 = vld [vmem:[#allocation2 + $0x34] sm:$0xf]
      %v6487 = vld [vmem:[#allocation2 + $0x38] sm:$0xf]
      %v6488 = vld [vmem:[#allocation2 + $0x3c] sm:$0xf]
      %v6489 = vld [vmem:[#allocation2 + $0x40] sm:$0xf]
      %v6490 = vld [vmem:[#allocation2 + $0x44] sm:$0xf]
      %v6491 = vld [vmem:[#allocation2 + $0x48] sm:$0xf]
      %v6492 = vld [vmem:[#allocation2 + $0x4c] sm:$0xf]
      %v6493 = vld [vmem:[#allocation2 + $0x50] sm:$0xf]
      %v6494 = vld [vmem:[#allocation2 + $0x54] sm:$0xf]
      %v6495 = vld [vmem:[#allocation2 + $0x58] sm:$0xf]
      %v6496 = vld [vmem:[#allocation2 + $0x5c] sm:$0xf]
      %v6497 = vld [vmem:[#allocation2 + $0x60] sm:$0xf]
      %v6498 = vld [vmem:[#allocation2 + $0x64] sm:$0xf]
      %v6499 = vld [vmem:[#allocation2 + $0x68] sm:$0xf]
      %v6500 = vld [vmem:[#allocation2 + $0x6c] sm:$0xf]
      %v6501 = vld [vmem:[#allocation2 + $0x70] sm:$0xf]
      %v6502 = vld [vmem:[#allocation2 + $0x74] sm:$0xf]
      %v6503 = vld [vmem:[#allocation2 + $0x78] sm:$0xf]
      %v6504 = vld [vmem:[#allocation2 + $0x7c] sm:$0xf]
      %v6505 = vld [vmem:[#allocation2 + $0x80] sm:$0xf]
      %v6506 = vld [vmem:[#allocation2 + $0x84] sm:$0xf]
      %v6507 = vld [vmem:[#allocation2 + $0x88] sm:$0xf]
      %v6508 = vld [vmem:[#allocation2 + $0x8c] sm:$0xf]
      %v6509 = vld [vmem:[#allocation2 + $0x90] sm:$0xf]
      %v6510 = vld [vmem:[#allocation2 + $0x94] sm:$0xf]
      %v6511 = vld [vmem:[#allocation2 + $0x98] sm:$0xf]
      %v6512 = vld [vmem:[#allocation2 + $0x9c] sm:$0xf]
      %v6513 = vld [vmem:[#allocation2 + $0xa0] sm:$0xf]
      %v6514 = vld [vmem:[#allocation2 + $0xa4] sm:$0xf]
      %v6515 = vld [vmem:[#allocation2 + $0xa8] sm:$0xf]
      %v6516 = vld [vmem:[#allocation2 + $0xac] sm:$0xf]
      %v6517 = vld [vmem:[#allocation2 + $0xb0] sm:$0xf]
      %v6518 = vld [vmem:[#allocation2 + $0xb4] sm:$0xf]
      %v6519 = vld [vmem:[#allocation2 + $0xb8] sm:$0xf]
      %v6520 = vld [vmem:[#allocation2 + $0xbc] sm:$0xf]
      %v6521 = vld [vmem:[#allocation2 + $0xc0] sm:$0xf]
      %v6522 = vld [vmem:[#allocation2 + $0xc4] sm:$0xf]
      %v6523 = vld [vmem:[#allocation2 + $0xc8] sm:$0xf]
      %v6524 = vld [vmem:[#allocation2 + $0xcc] sm:$0xf]
      %v6525 = vld [vmem:[#allocation2 + $0xd0] sm:$0xf]
      %v6526 = vld [vmem:[#allocation2 + $0xd4] sm:$0xf]
      %v6527 = vld [vmem:[#allocation2 + $0xd8] sm:$0xf]
      %v6528 = vld [vmem:[#allocation2 + $0xdc] sm:$0xf]
      %v6529 = vld [vmem:[#allocation2 + $0xe0] sm:$0xf]
      %v6530 = vld [vmem:[#allocation2 + $0xe4] sm:$0xf]
      %v6531 = vld [vmem:[#allocation2 + $0xe8] sm:$0xf]
      %v6532 = vld [vmem:[#allocation2 + $0xec] sm:$0xf]
      %v6533 = vld [vmem:[#allocation2 + $0xf0] sm:$0xf]
      %v6534 = vld [vmem:[%s2 + $0x180] sm:$0xf]
      %v6535 = vld [vmem:[%s2 + $0x184] sm:$0xf]
      %v6536 = vld [vmem:[%s2 + $0x188] sm:$0xf]
      %v6537 = vld [vmem:[%s2 + $0x18c] sm:$0xf]
      %v6538 = vld [vmem:[%s2 + $0x190] sm:$0xf]
      %v6539 = vld [vmem:[%s2 + $0x194] sm:$0xf]
      %v6540 = vld [vmem:[%s2 + $0x198] sm:$0xf]
      %v6541 = vld [vmem:[%s2 + $0x19c] sm:$0xf]
      %v6542 = vld [vmem:[%s2 + $0x1a0] sm:$0xf]
      %v6543 = vld [vmem:[%s2 + $0x1a4] sm:$0xf]
      %v6544 = vld [vmem:[%s2 + $0x1a8] sm:$0xf]
      %v6545 = vld [vmem:[%s2 + $0x1ac] sm:$0xf]
      %v6546 = vld [vmem:[%s2 + $0x1b0] sm:$0xf]
      %v6547 = vld [vmem:[%s2 + $0x1b4] sm:$0xf]
      %v6548 = vld [vmem:[%s2 + $0x1b8] sm:$0xf]
      %v6549 = vld [vmem:[%s2 + $0x1bc] sm:$0xf]
      %v6605 = vunpack.c.l.b16 %v6479
      %v6606 = vunpack.c.l.b16 %v6480
      %v6607 = vunpack.c.l.b16 %v6481
      %v6608 = vunpack.c.l.b16 %v6482
      %v6609 = vunpack.c.l.b16 %v6483
      %v6610 = vunpack.c.l.b16 %v6484
      %v6611 = vunpack.c.l.b16 %v6485
      %v6612 = vunpack.c.l.b16 %v6486
      %v6613 = vunpack.c.l.b16 %v6487
      %v6614 = vunpack.c.l.b16 %v6488
      %v6615 = vunpack.c.l.b16 %v6489
      %v6616 = vunpack.c.l.b16 %v6490
      %v6617 = vunpack.c.l.b16 %v6491
      %v6618 = vunpack.c.l.b16 %v6492
      %v6619 = vunpack.c.l.b16 %v6493
      %v6620 = vunpack.c.l.b16 %v6494
      %v6621 = vunpack.c.l.b16 %v6495
      %v6622 = vunpack.c.l.b16 %v6496
      %v6623 = vunpack.c.l.b16 %v6497
      %v6624 = vunpack.c.l.b16 %v6498
      %v6625 = vunpack.c.l.b16 %v6499
      %v6626 = vunpack.c.l.b16 %v6500
      %v6627 = vunpack.c.l.b16 %v6501
      %v6628 = vunpack.c.l.b16 %v6502
      %v6629 = vunpack.c.l.b16 %v6503
      %v6630 = vunpack.c.l.b16 %v6504
      %v6631 = vunpack.c.l.b16 %v6505
      %v6632 = vunpack.c.l.b16 %v6506
      %v6633 = vunpack.c.l.b16 %v6507
      %v6634 = vunpack.c.l.b16 %v6508
      %v6635 = vunpack.c.l.b16 %v6509
      %v6636 = vunpack.c.l.b16 %v6510
      %v6637 = vunpack.c.l.b16 %v6511
      %v6638 = vunpack.c.l.b16 %v6512
      %v6639 = vunpack.c.l.b16 %v6513
      %v6640 = vunpack.c.l.b16 %v6514
      %v6641 = vunpack.c.l.b16 %v6515
      %v6642 = vunpack.c.l.b16 %v6516
      %v6643 = vunpack.c.l.b16 %v6517
      %v6644 = vunpack.c.l.b16 %v6518
      %v6645 = vunpack.c.l.b16 %v6519
      %v6646 = vunpack.c.l.b16 %v6520
      %v6647 = vunpack.c.l.b16 %v6521
      %v6648 = vunpack.c.l.b16 %v6522
      %v6649 = vunpack.c.l.b16 %v6523
      %v6650 = vunpack.c.l.b16 %v6524
      %v6651 = vunpack.c.l.b16 %v6525
      %v6652 = vunpack.c.l.b16 %v6526
      %v6653 = vunpack.c.l.b16 %v6527
      %v6654 = vunpack.c.l.b16 %v6528
      %v6655 = vunpack.c.l.b16 %v6529
      %v6656 = vunpack.c.l.b16 %v6530
      %v6657 = vunpack.c.l.b16 %v6531
      %v6658 = vunpack.c.l.b16 %v6532
      %v6659 = vunpack.c.l.b16 %v6533
      %v6660 = vpack.c.b16 %v6606, %v6605
      %v6661 = vpack.c.b16 %v6608, %v6607
      %v6662 = vpack.c.b16 %v6610, %v6609
      %v6663 = vpack.c.b16 %v6612, %v6611
      %v6664 = vpack.c.b16 %v6614, %v6613
      %v6665 = vpack.c.b16 %v6616, %v6615
      %v6666 = vpack.c.b16 %v6618, %v6617
      %v6667 = vpack.c.b16 %v6620, %v6619
      %v6668 = vpack.c.b16 %v6622, %v6621
      %v6669 = vpack.c.b16 %v6624, %v6623
      %v6670 = vpack.c.b16 %v6626, %v6625
      %v6671 = vpack.c.b16 %v6628, %v6627
      %v6672 = vpack.c.b16 %v6630, %v6629
      %v6673 = vpack.c.b16 %v6632, %v6631
      %v6674 = vpack.c.b16 %v6634, %v6633
      %v6675 = vpack.c.b16 %v6636, %v6635
      %v6676 = vpack.c.b16 %v6638, %v6637
      %v6677 = vpack.c.b16 %v6640, %v6639
      %v6678 = vpack.c.b16 %v6642, %v6641
      %v6679 = vpack.c.b16 %v6644, %v6643
      %v6680 = vpack.c.b16 %v6646, %v6645
      %v6681 = vpack.c.b16 %v6648, %v6647
      %v6682 = vpack.c.b16 %v6650, %v6649
      %v6683 = vpack.c.b16 %v6652, %v6651
      %v6684 = vpack.c.b16 %v6654, %v6653
      %v6685 = vpack.c.b16 %v6656, %v6655
      %v6686 = vpack.c.b16 %v6658, %v6657
      %v6687 = vpack.c.b16 %v6659, %v6659
      %v6689 = vshrl.u32 %v6660, 16
      %v6691 = vrot.slane %v6689, 3
      %v6692 = vshll.u32 %v6660, 16
      %v6694 = vrot.slane %v6692, 4
      %v6695 = vor.u32 %v6691, %v6694
      %v6697 = vshrl.u32 %v6661, 16
      %v6699 = vrot.slane %v6697, 3
      %v6700 = vshll.u32 %v6661, 16
      %v6702 = vrot.slane %v6700, 4
      %v6703 = vor.u32 %v6699, %v6702
      %v6704 = vsel %vm3029, %v6695, %v6703
      %v6706 = vshrl.u32 %v6662, 16
      %v6708 = vrot.slane %v6706, 3
      %v6709 = vshll.u32 %v6662, 16
      %v6711 = vrot.slane %v6709, 4
      %v6712 = vor.u32 %v6708, %v6711
      %v6713 = vsel %vm3029, %v6703, %v6712
      %v6715 = vshrl.u32 %v6663, 16
      %v6717 = vrot.slane %v6715, 3
      %v6718 = vshll.u32 %v6663, 16
      %v6720 = vrot.slane %v6718, 4
      %v6721 = vor.u32 %v6717, %v6720
      %v6722 = vsel %vm3029, %v6712, %v6721
      %v6724 = vshrl.u32 %v6664, 16
      %v6726 = vrot.slane %v6724, 3
      %v6727 = vshll.u32 %v6664, 16
      %v6729 = vrot.slane %v6727, 4
      %v6730 = vor.u32 %v6726, %v6729
      %v6731 = vsel %vm3029, %v6721, %v6730
      %v6733 = vshrl.u32 %v6665, 16
      %v6735 = vrot.slane %v6733, 3
      %v6736 = vshll.u32 %v6665, 16
      %v6738 = vrot.slane %v6736, 4
      %v6739 = vor.u32 %v6735, %v6738
      %v6740 = vsel %vm3029, %v6730, %v6739
      %v6742 = vshrl.u32 %v6666, 16
      %v6744 = vrot.slane %v6742, 3
      %v6745 = vshll.u32 %v6666, 16
      %v6747 = vrot.slane %v6745, 4
      %v6748 = vor.u32 %v6744, %v6747
      %v6749 = vsel %vm3029, %v6739, %v6748
      %v6751 = vshrl.u32 %v6667, 16
      %v6753 = vrot.slane %v6751, 3
      %v6754 = vshll.u32 %v6667, 16
      %v6756 = vrot.slane %v6754, 4
      %v6757 = vor.u32 %v6753, %v6756
      %v6758 = vsel %vm3029, %v6748, %v6757
      %v6760 = vshrl.u32 %v6668, 16
      %v6762 = vrot.slane %v6760, 3
      %v6763 = vshll.u32 %v6668, 16
      %v6765 = vrot.slane %v6763, 4
      %v6766 = vor.u32 %v6762, %v6765
      %v6767 = vsel %vm3029, %v6757, %v6766
      %v6769 = vshrl.u32 %v6669, 16
      %v6771 = vrot.slane %v6769, 3
      %v6772 = vshll.u32 %v6669, 16
      %v6774 = vrot.slane %v6772, 4
      %v6775 = vor.u32 %v6771, %v6774
      %v6776 = vsel %vm3029, %v6766, %v6775
      %v6778 = vshrl.u32 %v6670, 16
      %v6780 = vrot.slane %v6778, 3
      %v6781 = vshll.u32 %v6670, 16
      %v6783 = vrot.slane %v6781, 4
      %v6784 = vor.u32 %v6780, %v6783
      %v6785 = vsel %vm3029, %v6775, %v6784
      %v6787 = vshrl.u32 %v6671, 16
      %v6789 = vrot.slane %v6787, 3
      %v6790 = vshll.u32 %v6671, 16
      %v6792 = vrot.slane %v6790, 4
      %v6793 = vor.u32 %v6789, %v6792
      %v6794 = vsel %vm3029, %v6784, %v6793
      %v6796 = vshrl.u32 %v6672, 16
      %v6798 = vrot.slane %v6796, 3
      %v6799 = vshll.u32 %v6672, 16
      %v6801 = vrot.slane %v6799, 4
      %v6802 = vor.u32 %v6798, %v6801
      %v6803 = vsel %vm3029, %v6793, %v6802
      %v6805 = vshrl.u32 %v6673, 16
      %v6807 = vrot.slane %v6805, 3
      %v6808 = vshll.u32 %v6673, 16
      %v6810 = vrot.slane %v6808, 4
      %v6811 = vor.u32 %v6807, %v6810
      %v6812 = vsel %vm3029, %v6802, %v6811
      %v6814 = vshrl.u32 %v6674, 16
      %v6816 = vrot.slane %v6814, 3
      %v6817 = vshll.u32 %v6674, 16
      %v6819 = vrot.slane %v6817, 4
      %v6820 = vor.u32 %v6816, %v6819
      %v6821 = vsel %vm3029, %v6811, %v6820
      %v6823 = vshrl.u32 %v6675, 16
      %v6825 = vrot.slane %v6823, 3
      %v6826 = vshll.u32 %v6675, 16
      %v6828 = vrot.slane %v6826, 4
      %v6829 = vor.u32 %v6825, %v6828
      %v6830 = vsel %vm3029, %v6820, %v6829
      %v6832 = vshrl.u32 %v6676, 16
      %v6834 = vrot.slane %v6832, 3
      %v6835 = vshll.u32 %v6676, 16
      %v6837 = vrot.slane %v6835, 4
      %v6838 = vor.u32 %v6834, %v6837
      %v6839 = vsel %vm3029, %v6829, %v6838
      %v6841 = vshrl.u32 %v6677, 16
      %v6843 = vrot.slane %v6841, 3
      %v6844 = vshll.u32 %v6677, 16
      %v6846 = vrot.slane %v6844, 4
      %v6847 = vor.u32 %v6843, %v6846
      %v6848 = vsel %vm3029, %v6838, %v6847
      %v6850 = vshrl.u32 %v6678, 16
      %v6852 = vrot.slane %v6850, 3
      %v6853 = vshll.u32 %v6678, 16
      %v6855 = vrot.slane %v6853, 4
      %v6856 = vor.u32 %v6852, %v6855
      %v6857 = vsel %vm3029, %v6847, %v6856
      %v6859 = vshrl.u32 %v6679, 16
      %v6861 = vrot.slane %v6859, 3
      %v6862 = vshll.u32 %v6679, 16
      %v6864 = vrot.slane %v6862, 4
      %v6865 = vor.u32 %v6861, %v6864
      %v6866 = vsel %vm3029, %v6856, %v6865
      %v6868 = vshrl.u32 %v6680, 16
      %v6870 = vrot.slane %v6868, 3
      %v6871 = vshll.u32 %v6680, 16
      %v6873 = vrot.slane %v6871, 4
      %v6874 = vor.u32 %v6870, %v6873
      %v6875 = vsel %vm3029, %v6865, %v6874
      %v6877 = vshrl.u32 %v6681, 16
      %v6879 = vrot.slane %v6877, 3
      %v6880 = vshll.u32 %v6681, 16
      %v6882 = vrot.slane %v6880, 4
      %v6883 = vor.u32 %v6879, %v6882
      %v6884 = vsel %vm3029, %v6874, %v6883
      %v6886 = vshrl.u32 %v6682, 16
      %v6888 = vrot.slane %v6886, 3
      %v6889 = vshll.u32 %v6682, 16
      %v6891 = vrot.slane %v6889, 4
      %v6892 = vor.u32 %v6888, %v6891
      %v6893 = vsel %vm3029, %v6883, %v6892
      %v6895 = vshrl.u32 %v6683, 16
      %v6897 = vrot.slane %v6895, 3
      %v6898 = vshll.u32 %v6683, 16
      %v6900 = vrot.slane %v6898, 4
      %v6901 = vor.u32 %v6897, %v6900
      %v6902 = vsel %vm3029, %v6892, %v6901
      %v6904 = vshrl.u32 %v6684, 16
      %v6906 = vrot.slane %v6904, 3
      %v6907 = vshll.u32 %v6684, 16
      %v6909 = vrot.slane %v6907, 4
      %v6910 = vor.u32 %v6906, %v6909
      %v6911 = vsel %vm3029, %v6901, %v6910
      %v6913 = vshrl.u32 %v6685, 16
      %v6915 = vrot.slane %v6913, 3
      %v6916 = vshll.u32 %v6685, 16
      %v6918 = vrot.slane %v6916, 4
      %v6919 = vor.u32 %v6915, %v6918
      %v6920 = vsel %vm3029, %v6910, %v6919
      %v6922 = vshrl.u32 %v6686, 16
      %v6924 = vrot.slane %v6922, 3
      %v6925 = vshll.u32 %v6686, 16
      %v6927 = vrot.slane %v6925, 4
      %v6928 = vor.u32 %v6924, %v6927
      %v6929 = vsel %vm3029, %v6919, %v6928
      %v6931 = vshrl.u32 %v6687, 16
      %v6933 = vrot.slane %v6931, 3
      %v6934 = vshll.u32 %v6687, 16
      %v6936 = vrot.slane %v6934, 4
      %v6937 = vor.u32 %v6933, %v6936
      %v6938 = vsel %vm3029, %v6928, %v6937
      %v6982 = vunpack.c.l.b16 %v6534
      %v6983 = vunpack.c.l.b16 %v6535
      %v6984 = vunpack.c.l.b16 %v6536
      %v6985 = vunpack.c.l.b16 %v6537
      %v6986 = vunpack.c.l.b16 %v6538
      %v6987 = vunpack.c.l.b16 %v6539
      %v6988 = vunpack.c.l.b16 %v6540
      %v6989 = vunpack.c.l.b16 %v6541
      %v6990 = vunpack.c.l.b16 %v6542
      %v6991 = vunpack.c.l.b16 %v6543
      %v6992 = vunpack.c.l.b16 %v6544
      %v6993 = vunpack.c.l.b16 %v6545
      %v6994 = vunpack.c.l.b16 %v6546
      %v6995 = vunpack.c.l.b16 %v6547
      %v6996 = vunpack.c.l.b16 %v6548
      %v6997 = vunpack.c.l.b16 %v6549
      %v6998 = vpack.c.b16 %v6983, %v6982
      %v6999 = vpack.c.b16 %v6985, %v6984
      %v7000 = vpack.c.b16 %v6987, %v6986
      %v7001 = vpack.c.b16 %v6989, %v6988
      %v7002 = vpack.c.b16 %v6991, %v6990
      %v7003 = vpack.c.b16 %v6993, %v6992
      %v7004 = vpack.c.b16 %v6995, %v6994
      %v7005 = vpack.c.b16 %v6997, %v6996
      %7014 = vmatprep.subr.bf16.mxu0 0
      %7015 = vmatpush1.bf16.msra.mxu0 %v7005
      %7016 = vmatprep.subr.bf16.mxu0 0
      %7017 = vmatpush1.bf16.msra.mxu0 %v7004
      %7018 = vmatprep.subr.bf16.mxu0 0
      %7019 = vmatpush1.bf16.msra.mxu0 %v7003
      %7020 = vmatprep.subr.bf16.mxu0 0
      %7021 = vmatpush1.bf16.msra.mxu0 %v7002
      %7022 = vmatprep.subr.bf16.mxu0 0
      %7023 = vmatpush1.bf16.msra.mxu0 %v7001
      %7024 = vmatprep.subr.bf16.mxu0 0
      %7025 = vmatpush1.bf16.msra.mxu0 %v7000
      %7026 = vmatprep.subr.bf16.mxu0 0
      %7027 = vmatpush1.bf16.msra.mxu0 %v6999
      %7028 = vmatprep.subr.bf16.mxu0 0
      %7029 = vmatpush1.bf16.msra.mxu0 %v6998
      %7030 = vmatprep.subr.bf16.mxu0 0
      %7031 = vmatpush2.bf16.msra.mxu0 0
      %7032 = vmatprep.subr.bf16.mxu0 0
      %7033 = vmatpush2.bf16.msra.mxu0 0
      %7034 = vmatprep.subr.bf16.mxu0 0
      %7035 = vmatpush2.bf16.msra.mxu0 0
      %7036 = vmatprep.subr.bf16.mxu0 0
      %7037 = vmatpush2.bf16.msra.mxu0 0
      %7038 = vmatprep.subr.bf16.mxu0 0
      %7039 = vmatpush2.bf16.msra.mxu0 0
      %7040 = vmatprep.subr.bf16.mxu0 0
      %7041 = vmatpush2.bf16.msra.mxu0 0
      %7042 = vmatprep.subr.bf16.mxu0 0
      %7043 = vmatpush2.bf16.msra.mxu0 0
      %7044 = vmatprep.subr.bf16.mxu0 0
      %7045 = vmatpush2.bf16.msra.mxu0 0
      %7046 = vmatprep.mubr.bf16.mxu0 0
      %7047 = vmatmul.mubr.bf16.gmra.mxu0 %v6704
      %v7048 = vpop.f32.mrf.mxu0
      %v7049 = vadd.f32 0.0, %v7048
      %v7050 = vpop.f32.mrf.mxu0
      %v7051 = vpop.f32.mrf.mxu0
      %v7052 = vadd.f32 0.0, %v7051
      %v7053 = vpop.f32.mrf.mxu0
      %7054 = vmatprep.mubr.bf16.mxu0 0
      %7055 = vmatmul.mubr.bf16.gmra.mxu0 %v6713
      %v7056 = vpop.f32.mrf.mxu0
      %v7057 = vadd.f32 0.0, %v7056
      %v7058 = vpop.f32.mrf.mxu0
      %v7059 = vpop.f32.mrf.mxu0
      %v7060 = vadd.f32 0.0, %v7059
      %v7061 = vpop.f32.mrf.mxu0
      %7062 = vmatprep.mubr.bf16.mxu0 0
      %7063 = vmatmul.mubr.bf16.gmra.mxu0 %v6722
      %v7064 = vpop.f32.mrf.mxu0
      %v7065 = vadd.f32 0.0, %v7064
      %v7066 = vpop.f32.mrf.mxu0
      %v7067 = vpop.f32.mrf.mxu0
      %v7068 = vadd.f32 0.0, %v7067
      %v7069 = vpop.f32.mrf.mxu0
      %7070 = vmatprep.mubr.bf16.mxu0 0
      %7071 = vmatmul.mubr.bf16.gmra.mxu0 %v6731
      %v7072 = vpop.f32.mrf.mxu0
      %v7073 = vadd.f32 0.0, %v7072
      %v7074 = vpop.f32.mrf.mxu0
      %v7075 = vpop.f32.mrf.mxu0
      %v7076 = vadd.f32 0.0, %v7075
      %v7077 = vpop.f32.mrf.mxu0
      %7078 = vmatprep.mubr.bf16.mxu0 0
      %7079 = vmatmul.mubr.bf16.gmra.mxu0 %v6740
      %v7080 = vpop.f32.mrf.mxu0
      %v7081 = vadd.f32 0.0, %v7080
      %v7082 = vpop.f32.mrf.mxu0
      %v7083 = vpop.f32.mrf.mxu0
      %v7084 = vadd.f32 0.0, %v7083
      %v7085 = vpop.f32.mrf.mxu0
      %7086 = vmatprep.mubr.bf16.mxu0 0
      %7087 = vmatmul.mubr.bf16.gmra.mxu0 %v6749
      %v7088 = vpop.f32.mrf.mxu0
      %v7089 = vadd.f32 0.0, %v7088
      %v7090 = vpop.f32.mrf.mxu0
      %v7091 = vpop.f32.mrf.mxu0
      %v7092 = vadd.f32 0.0, %v7091
      %v7093 = vpop.f32.mrf.mxu0
      %7094 = vmatprep.mubr.bf16.mxu0 0
      %7095 = vmatmul.mubr.bf16.gmra.mxu0 %v6758
      %v7096 = vpop.f32.mrf.mxu0
      %v7097 = vadd.f32 0.0, %v7096
      %v7098 = vpop.f32.mrf.mxu0
      %v7099 = vpop.f32.mrf.mxu0
      %v7100 = vadd.f32 0.0, %v7099
      %v7101 = vpop.f32.mrf.mxu0
      %7102 = vmatprep.mubr.bf16.mxu0 0
      %7103 = vmatmul.mubr.bf16.gmra.mxu0 %v6767
      %v7104 = vpop.f32.mrf.mxu0
      %v7105 = vadd.f32 0.0, %v7104
      %v7106 = vpop.f32.mrf.mxu0
      %v7107 = vpop.f32.mrf.mxu0
      %v7108 = vadd.f32 0.0, %v7107
      %v7109 = vpop.f32.mrf.mxu0
      %7110 = vmatprep.mubr.bf16.mxu0 0
      %7111 = vmatmul.mubr.bf16.gmra.mxu0 %v6776
      %v7112 = vpop.f32.mrf.mxu0
      %v7113 = vadd.f32 0.0, %v7112
      %v7114 = vpop.f32.mrf.mxu0
      %v7115 = vpop.f32.mrf.mxu0
      %v7116 = vadd.f32 0.0, %v7115
      %v7117 = vpop.f32.mrf.mxu0
      %7118 = vmatprep.mubr.bf16.mxu0 0
      %7119 = vmatmul.mubr.bf16.gmra.mxu0 %v6785
      %v7120 = vpop.f32.mrf.mxu0
      %v7121 = vadd.f32 0.0, %v7120
      %v7122 = vpop.f32.mrf.mxu0
      %v7123 = vpop.f32.mrf.mxu0
      %v7124 = vadd.f32 0.0, %v7123
      %v7125 = vpop.f32.mrf.mxu0
      %7126 = vmatprep.mubr.bf16.mxu0 0
      %7127 = vmatmul.mubr.bf16.gmra.mxu0 %v6794
      %v7128 = vpop.f32.mrf.mxu0
      %v7129 = vadd.f32 0.0, %v7128
      %v7130 = vpop.f32.mrf.mxu0
      %v7131 = vpop.f32.mrf.mxu0
      %v7132 = vadd.f32 0.0, %v7131
      %v7133 = vpop.f32.mrf.mxu0
      %7134 = vmatprep.mubr.bf16.mxu0 0
      %7135 = vmatmul.mubr.bf16.gmra.mxu0 %v6803
      %v7136 = vpop.f32.mrf.mxu0
      %v7137 = vadd.f32 0.0, %v7136
      %v7138 = vpop.f32.mrf.mxu0
      %v7139 = vpop.f32.mrf.mxu0
      %v7140 = vadd.f32 0.0, %v7139
      %v7141 = vpop.f32.mrf.mxu0
      %7142 = vmatprep.mubr.bf16.mxu0 0
      %7143 = vmatmul.mubr.bf16.gmra.mxu0 %v6812
      %v7144 = vpop.f32.mrf.mxu0
      %v7145 = vadd.f32 0.0, %v7144
      %v7146 = vpop.f32.mrf.mxu0
      %v7147 = vpop.f32.mrf.mxu0
      %v7148 = vadd.f32 0.0, %v7147
      %v7149 = vpop.f32.mrf.mxu0
      %7150 = vmatprep.mubr.bf16.mxu0 0
      %7151 = vmatmul.mubr.bf16.gmra.mxu0 %v6821
      %v7152 = vpop.f32.mrf.mxu0
      %v7153 = vadd.f32 0.0, %v7152
      %v7154 = vpop.f32.mrf.mxu0
      %v7155 = vpop.f32.mrf.mxu0
      %v7156 = vadd.f32 0.0, %v7155
      %v7157 = vpop.f32.mrf.mxu0
      %7158 = vmatprep.mubr.bf16.mxu0 0
      %7159 = vmatmul.mubr.bf16.gmra.mxu0 %v6830
      %v7160 = vpop.f32.mrf.mxu0
      %v7161 = vadd.f32 0.0, %v7160
      %v7162 = vpop.f32.mrf.mxu0
      %v7163 = vpop.f32.mrf.mxu0
      %v7164 = vadd.f32 0.0, %v7163
      %v7165 = vpop.f32.mrf.mxu0
      %7166 = vmatprep.mubr.bf16.mxu0 0
      %7167 = vmatmul.mubr.bf16.gmra.mxu0 %v6839
      %v7168 = vpop.f32.mrf.mxu0
      %v7169 = vadd.f32 0.0, %v7168
      %v7170 = vpop.f32.mrf.mxu0
      %v7171 = vpop.f32.mrf.mxu0
      %v7172 = vadd.f32 0.0, %v7171
      %v7173 = vpop.f32.mrf.mxu0
      %7174 = vmatprep.mubr.bf16.mxu0 0
      %7175 = vmatmul.mubr.bf16.gmra.mxu0 %v6848
      %v7176 = vpop.f32.mrf.mxu0
      %v7177 = vadd.f32 0.0, %v7176
      %v7178 = vpop.f32.mrf.mxu0
      %v7179 = vpop.f32.mrf.mxu0
      %v7180 = vadd.f32 0.0, %v7179
      %v7181 = vpop.f32.mrf.mxu0
      %7182 = vmatprep.mubr.bf16.mxu0 0
      %7183 = vmatmul.mubr.bf16.gmra.mxu0 %v6857
      %v7184 = vpop.f32.mrf.mxu0
      %v7185 = vadd.f32 0.0, %v7184
      %v7186 = vpop.f32.mrf.mxu0
      %v7187 = vpop.f32.mrf.mxu0
      %v7188 = vadd.f32 0.0, %v7187
      %v7189 = vpop.f32.mrf.mxu0
      %7190 = vmatprep.mubr.bf16.mxu0 0
      %7191 = vmatmul.mubr.bf16.gmra.mxu0 %v6866
      %v7192 = vpop.f32.mrf.mxu0
      %v7193 = vadd.f32 0.0, %v7192
      %v7194 = vpop.f32.mrf.mxu0
      %v7195 = vpop.f32.mrf.mxu0
      %v7196 = vadd.f32 0.0, %v7195
      %v7197 = vpop.f32.mrf.mxu0
      %7198 = vmatprep.mubr.bf16.mxu0 0
      %7199 = vmatmul.mubr.bf16.gmra.mxu0 %v6875
      %v7200 = vpop.f32.mrf.mxu0
      %v7201 = vadd.f32 0.0, %v7200
      %v7202 = vpop.f32.mrf.mxu0
      %v7203 = vpop.f32.mrf.mxu0
      %v7204 = vadd.f32 0.0, %v7203
      %v7205 = vpop.f32.mrf.mxu0
      %7206 = vmatprep.mubr.bf16.mxu0 0
      %7207 = vmatmul.mubr.bf16.gmra.mxu0 %v6884
      %v7208 = vpop.f32.mrf.mxu0
      %v7209 = vadd.f32 0.0, %v7208
      %v7210 = vpop.f32.mrf.mxu0
      %v7211 = vpop.f32.mrf.mxu0
      %v7212 = vadd.f32 0.0, %v7211
      %v7213 = vpop.f32.mrf.mxu0
      %7214 = vmatprep.mubr.bf16.mxu0 0
      %7215 = vmatmul.mubr.bf16.gmra.mxu0 %v6893
      %v7216 = vpop.f32.mrf.mxu0
      %v7217 = vadd.f32 0.0, %v7216
      %v7218 = vpop.f32.mrf.mxu0
      %v7219 = vpop.f32.mrf.mxu0
      %v7220 = vadd.f32 0.0, %v7219
      %v7221 = vpop.f32.mrf.mxu0
      %7222 = vmatprep.mubr.bf16.mxu0 0
      %7223 = vmatmul.mubr.bf16.gmra.mxu0 %v6902
      %v7224 = vpop.f32.mrf.mxu0
      %v7225 = vadd.f32 0.0, %v7224
      %v7226 = vpop.f32.mrf.mxu0
      %v7227 = vpop.f32.mrf.mxu0
      %v7228 = vadd.f32 0.0, %v7227
      %v7229 = vpop.f32.mrf.mxu0
      %7230 = vmatprep.mubr.bf16.mxu0 0
      %7231 = vmatmul.mubr.bf16.gmra.mxu0 %v6911
      %v7232 = vpop.f32.mrf.mxu0
      %v7233 = vadd.f32 0.0, %v7232
      %v7234 = vpop.f32.mrf.mxu0
      %v7235 = vpop.f32.mrf.mxu0
      %v7236 = vadd.f32 0.0, %v7235
      %v7237 = vpop.f32.mrf.mxu0
      %7238 = vmatprep.mubr.bf16.mxu0 0
      %7239 = vmatmul.mubr.bf16.gmra.mxu0 %v6920
      %v7240 = vpop.f32.mrf.mxu0
      %v7241 = vadd.f32 0.0, %v7240
      %v7242 = vpop.f32.mrf.mxu0
      %v7243 = vpop.f32.mrf.mxu0
      %v7244 = vadd.f32 0.0, %v7243
      %v7245 = vpop.f32.mrf.mxu0
      %7246 = vmatprep.mubr.bf16.mxu0 0
      %7247 = vmatmul.mubr.bf16.gmra.mxu0 %v6929
      %v7248 = vpop.f32.mrf.mxu0
      %v7249 = vadd.f32 0.0, %v7248
      %v7250 = vpop.f32.mrf.mxu0
      %v7251 = vpop.f32.mrf.mxu0
      %v7252 = vadd.f32 0.0, %v7251
      %v7253 = vpop.f32.mrf.mxu0
      %7254 = vmatprep.mubr.bf16.mxu0 0
      %7255 = vmatmul.mubr.bf16.gmra.mxu0 %v6938
      %v7256 = vpop.f32.mrf.mxu0
      %v7257 = vadd.f32 0.0, %v7256
      %v7258 = vpop.f32.mrf.mxu0
      %v7259 = vpop.f32.mrf.mxu0
      %v7260 = vadd.f32 0.0, %v7259
      %v7261 = vpop.f32.mrf.mxu0
      %7262 = vdwg.mxu0
      %v7263 = vadd.f32 %v6425, %v7049
      %v7264 = vadd.f32 %v6426, %v7052
      %v7265 = vadd.f32 %v6427, %v7057
      %v7266 = vadd.f32 %v6428, %v7060
      %v7267 = vadd.f32 %v6429, %v7065
      %v7268 = vadd.f32 %v6430, %v7068
      %v7269 = vadd.f32 %v6431, %v7073
      %v7270 = vadd.f32 %v6432, %v7076
      %v7271 = vadd.f32 %v6433, %v7081
      %v7272 = vadd.f32 %v6434, %v7084
      %v7273 = vadd.f32 %v6435, %v7089
      %v7274 = vadd.f32 %v6436, %v7092
      %v7275 = vadd.f32 %v6437, %v7097
      %v7276 = vadd.f32 %v6438, %v7100
      %v7277 = vadd.f32 %v6439, %v7105
      %v7278 = vadd.f32 %v6440, %v7108
      %v7279 = vadd.f32 %v6441, %v7113
      %v7280 = vadd.f32 %v6442, %v7116
      %v7281 = vadd.f32 %v6443, %v7121
      %v7282 = vadd.f32 %v6444, %v7124
      %v7283 = vadd.f32 %v6445, %v7129
      %v7284 = vadd.f32 %v6446, %v7132
      %v7285 = vadd.f32 %v6447, %v7137
      %v7286 = vadd.f32 %v6448, %v7140
      %v7287 = vadd.f32 %v6449, %v7145
      %v7288 = vadd.f32 %v6450, %v7148
      %v7289 = vadd.f32 %v6451, %v7153
      %v7290 = vadd.f32 %v6452, %v7156
      %v7291 = vadd.f32 %v6453, %v7161
      %v7292 = vadd.f32 %v6454, %v7164
      %v7293 = vadd.f32 %v6455, %v7169
      %v7294 = vadd.f32 %v6456, %v7172
      %v7295 = vadd.f32 %v6457, %v7177
      %v7296 = vadd.f32 %v6458, %v7180
      %v7297 = vadd.f32 %v6459, %v7185
      %v7298 = vadd.f32 %v6460, %v7188
      %v7299 = vadd.f32 %v6461, %v7193
      %v7300 = vadd.f32 %v6462, %v7196
      %v7301 = vadd.f32 %v6463, %v7201
      %v7302 = vadd.f32 %v6464, %v7204
      %v7303 = vadd.f32 %v6465, %v7209
      %v7304 = vadd.f32 %v6466, %v7212
      %v7305 = vadd.f32 %v6467, %v7217
      %v7306 = vadd.f32 %v6468, %v7220
      %v7307 = vadd.f32 %v6469, %v7225
      %v7308 = vadd.f32 %v6470, %v7228
      %v7309 = vadd.f32 %v6471, %v7233
      %v7310 = vadd.f32 %v6472, %v7236
      %v7311 = vadd.f32 %v6473, %v7241
      %v7312 = vadd.f32 %v6474, %v7244
      %v7313 = vadd.f32 %v6475, %v7249
      %v7314 = vadd.f32 %v6476, %v7252
      %v7315 = vadd.f32 %v6477, %v7257
      %v7316 = vadd.f32 %v6478, %v7260
      %v7317 = vld [vmem:[%s2 + $0x1c0] sm:$0xf]
      %v7318 = vld [vmem:[%s2 + $0x1c4] sm:$0xf]
      %v7319 = vld [vmem:[%s2 + $0x1c8] sm:$0xf]
      %v7320 = vld [vmem:[%s2 + $0x1cc] sm:$0xf]
      %v7321 = vld [vmem:[%s2 + $0x1d0] sm:$0xf]
      %v7322 = vld [vmem:[%s2 + $0x1d4] sm:$0xf]
      %v7323 = vld [vmem:[%s2 + $0x1d8] sm:$0xf]
      %v7324 = vld [vmem:[%s2 + $0x1dc] sm:$0xf]
      %v7325 = vld [vmem:[%s2 + $0x1e0] sm:$0xf]
      %v7326 = vld [vmem:[%s2 + $0x1e4] sm:$0xf]
      %v7327 = vld [vmem:[%s2 + $0x1e8] sm:$0xf]
      %v7328 = vld [vmem:[%s2 + $0x1ec] sm:$0xf]
      %v7329 = vld [vmem:[%s2 + $0x1f0] sm:$0xf]
      %v7330 = vld [vmem:[%s2 + $0x1f4] sm:$0xf]
      %v7331 = vld [vmem:[%s2 + $0x1f8] sm:$0xf]
      %v7332 = vld [vmem:[%s2 + $0x1fc] sm:$0xf]
      %v7333 = vpack.c.b16 %v6607, %v6606
      %v7334 = vpack.c.b16 %v6609, %v6608
      %v7335 = vpack.c.b16 %v6611, %v6610
      %v7336 = vpack.c.b16 %v6613, %v6612
      %v7337 = vpack.c.b16 %v6615, %v6614
      %v7338 = vpack.c.b16 %v6617, %v6616
      %v7339 = vpack.c.b16 %v6619, %v6618
      %v7340 = vpack.c.b16 %v6621, %v6620
      %v7341 = vpack.c.b16 %v6623, %v6622
      %v7342 = vpack.c.b16 %v6625, %v6624
      %v7343 = vpack.c.b16 %v6627, %v6626
      %v7344 = vpack.c.b16 %v6629, %v6628
      %v7345 = vpack.c.b16 %v6631, %v6630
      %v7346 = vpack.c.b16 %v6633, %v6632
      %v7347 = vpack.c.b16 %v6635, %v6634
      %v7348 = vpack.c.b16 %v6637, %v6636
      %v7349 = vpack.c.b16 %v6639, %v6638
      %v7350 = vpack.c.b16 %v6641, %v6640
      %v7351 = vpack.c.b16 %v6643, %v6642
      %v7352 = vpack.c.b16 %v6645, %v6644
      %v7353 = vpack.c.b16 %v6647, %v6646
      %v7354 = vpack.c.b16 %v6649, %v6648
      %v7355 = vpack.c.b16 %v6651, %v6650
      %v7356 = vpack.c.b16 %v6653, %v6652
      %v7357 = vpack.c.b16 %v6655, %v6654
      %v7358 = vpack.c.b16 %v6657, %v6656
      %v7359 = vpack.c.b16 %v6659, %v6658
      %v7403 = vunpack.c.l.b16 %v7317
      %v7404 = vunpack.c.l.b16 %v7318
      %v7405 = vunpack.c.l.b16 %v7319
      %v7406 = vunpack.c.l.b16 %v7320
      %v7407 = vunpack.c.l.b16 %v7321
      %v7408 = vunpack.c.l.b16 %v7322
      %v7409 = vunpack.c.l.b16 %v7323
      %v7410 = vunpack.c.l.b16 %v7324
      %v7411 = vunpack.c.l.b16 %v7325
      %v7412 = vunpack.c.l.b16 %v7326
      %v7413 = vunpack.c.l.b16 %v7327
      %v7414 = vunpack.c.l.b16 %v7328
      %v7415 = vunpack.c.l.b16 %v7329
      %v7416 = vunpack.c.l.b16 %v7330
      %v7417 = vunpack.c.l.b16 %v7331
      %v7418 = vunpack.c.l.b16 %v7332
      %v7419 = vpack.c.b16 %v7404, %v7403
      %v7420 = vpack.c.b16 %v7406, %v7405
      %v7421 = vpack.c.b16 %v7408, %v7407
      %v7422 = vpack.c.b16 %v7410, %v7409
      %v7423 = vpack.c.b16 %v7412, %v7411
      %v7424 = vpack.c.b16 %v7414, %v7413
      %v7425 = vpack.c.b16 %v7416, %v7415
      %v7426 = vpack.c.b16 %v7418, %v7417
      %7435 = vmatprep.subr.bf16.mxu0 0
      %7436 = vmatpush1.bf16.msra.mxu0 %v7426
      %7437 = vmatprep.subr.bf16.mxu0 0
      %7438 = vmatpush1.bf16.msra.mxu0 %v7425
      %7439 = vmatprep.subr.bf16.mxu0 0
      %7440 = vmatpush1.bf16.msra.mxu0 %v7424
      %7441 = vmatprep.subr.bf16.mxu0 0
      %7442 = vmatpush1.bf16.msra.mxu0 %v7423
      %7443 = vmatprep.subr.bf16.mxu0 0
      %7444 = vmatpush1.bf16.msra.mxu0 %v7422
      %7445 = vmatprep.subr.bf16.mxu0 0
      %7446 = vmatpush1.bf16.msra.mxu0 %v7421
      %7447 = vmatprep.subr.bf16.mxu0 0
      %7448 = vmatpush1.bf16.msra.mxu0 %v7420
      %7449 = vmatprep.subr.bf16.mxu0 0
      %7450 = vmatpush1.bf16.msra.mxu0 %v7419
      %7451 = vmatprep.subr.bf16.mxu0 0
      %7452 = vmatpush2.bf16.msra.mxu0 0
      %7453 = vmatprep.subr.bf16.mxu0 0
      %7454 = vmatpush2.bf16.msra.mxu0 0
      %7455 = vmatprep.subr.bf16.mxu0 0
      %7456 = vmatpush2.bf16.msra.mxu0 0
      %7457 = vmatprep.subr.bf16.mxu0 0
      %7458 = vmatpush2.bf16.msra.mxu0 0
      %7459 = vmatprep.subr.bf16.mxu0 0
      %7460 = vmatpush2.bf16.msra.mxu0 0
      %7461 = vmatprep.subr.bf16.mxu0 0
      %7462 = vmatpush2.bf16.msra.mxu0 0
      %7463 = vmatprep.subr.bf16.mxu0 0
      %7464 = vmatpush2.bf16.msra.mxu0 0
      %7465 = vmatprep.subr.bf16.mxu0 0
      %7466 = vmatpush2.bf16.msra.mxu0 0
      %7467 = vmatprep.mubr.bf16.mxu0 0
      %7468 = vmatmul.mubr.bf16.gmra.mxu0 %v7333
      %v7469 = vpop.f32.mrf.mxu0
      %v7470 = vadd.f32 0.0, %v7469
      %v7471 = vpop.f32.mrf.mxu0
      %v7472 = vpop.f32.mrf.mxu0
      %v7473 = vadd.f32 0.0, %v7472
      %v7474 = vpop.f32.mrf.mxu0
      %7475 = vmatprep.mubr.bf16.mxu0 0
      %7476 = vmatmul.mubr.bf16.gmra.mxu0 %v7334
      %v7477 = vpop.f32.mrf.mxu0
      %v7478 = vadd.f32 0.0, %v7477
      %v7479 = vpop.f32.mrf.mxu0
      %v7480 = vpop.f32.mrf.mxu0
      %v7481 = vadd.f32 0.0, %v7480
      %v7482 = vpop.f32.mrf.mxu0
      %7483 = vmatprep.mubr.bf16.mxu0 0
      %7484 = vmatmul.mubr.bf16.gmra.mxu0 %v7335
      %v7485 = vpop.f32.mrf.mxu0
      %v7486 = vadd.f32 0.0, %v7485
      %v7487 = vpop.f32.mrf.mxu0
      %v7488 = vpop.f32.mrf.mxu0
      %v7489 = vadd.f32 0.0, %v7488
      %v7490 = vpop.f32.mrf.mxu0
      %7491 = vmatprep.mubr.bf16.mxu0 0
      %7492 = vmatmul.mubr.bf16.gmra.mxu0 %v7336
      %v7493 = vpop.f32.mrf.mxu0
      %v7494 = vadd.f32 0.0, %v7493
      %v7495 = vpop.f32.mrf.mxu0
      %v7496 = vpop.f32.mrf.mxu0
      %v7497 = vadd.f32 0.0, %v7496
      %v7498 = vpop.f32.mrf.mxu0
      %7499 = vmatprep.mubr.bf16.mxu0 0
      %7500 = vmatmul.mubr.bf16.gmra.mxu0 %v7337
      %v7501 = vpop.f32.mrf.mxu0
      %v7502 = vadd.f32 0.0, %v7501
      %v7503 = vpop.f32.mrf.mxu0
      %v7504 = vpop.f32.mrf.mxu0
      %v7505 = vadd.f32 0.0, %v7504
      %v7506 = vpop.f32.mrf.mxu0
      %7507 = vmatprep.mubr.bf16.mxu0 0
      %7508 = vmatmul.mubr.bf16.gmra.mxu0 %v7338
      %v7509 = vpop.f32.mrf.mxu0
      %v7510 = vadd.f32 0.0, %v7509
      %v7511 = vpop.f32.mrf.mxu0
      %v7512 = vpop.f32.mrf.mxu0
      %v7513 = vadd.f32 0.0, %v7512
      %v7514 = vpop.f32.mrf.mxu0
      %7515 = vmatprep.mubr.bf16.mxu0 0
      %7516 = vmatmul.mubr.bf16.gmra.mxu0 %v7339
      %v7517 = vpop.f32.mrf.mxu0
      %v7518 = vadd.f32 0.0, %v7517
      %v7519 = vpop.f32.mrf.mxu0
      %v7520 = vpop.f32.mrf.mxu0
      %v7521 = vadd.f32 0.0, %v7520
      %v7522 = vpop.f32.mrf.mxu0
      %7523 = vmatprep.mubr.bf16.mxu0 0
      %7524 = vmatmul.mubr.bf16.gmra.mxu0 %v7340
      %v7525 = vpop.f32.mrf.mxu0
      %v7526 = vadd.f32 0.0, %v7525
      %v7527 = vpop.f32.mrf.mxu0
      %v7528 = vpop.f32.mrf.mxu0
      %v7529 = vadd.f32 0.0, %v7528
      %v7530 = vpop.f32.mrf.mxu0
      %7531 = vmatprep.mubr.bf16.mxu0 0
      %7532 = vmatmul.mubr.bf16.gmra.mxu0 %v7341
      %v7533 = vpop.f32.mrf.mxu0
      %v7534 = vadd.f32 0.0, %v7533
      %v7535 = vpop.f32.mrf.mxu0
      %v7536 = vpop.f32.mrf.mxu0
      %v7537 = vadd.f32 0.0, %v7536
      %v7538 = vpop.f32.mrf.mxu0
      %7539 = vmatprep.mubr.bf16.mxu0 0
      %7540 = vmatmul.mubr.bf16.gmra.mxu0 %v7342
      %v7541 = vpop.f32.mrf.mxu0
      %v7542 = vadd.f32 0.0, %v7541
      %v7543 = vpop.f32.mrf.mxu0
      %v7544 = vpop.f32.mrf.mxu0
      %v7545 = vadd.f32 0.0, %v7544
      %v7546 = vpop.f32.mrf.mxu0
      %7547 = vmatprep.mubr.bf16.mxu0 0
      %7548 = vmatmul.mubr.bf16.gmra.mxu0 %v7343
      %v7549 = vpop.f32.mrf.mxu0
      %v7550 = vadd.f32 0.0, %v7549
      %v7551 = vpop.f32.mrf.mxu0
      %v7552 = vpop.f32.mrf.mxu0
      %v7553 = vadd.f32 0.0, %v7552
      %v7554 = vpop.f32.mrf.mxu0
      %7555 = vmatprep.mubr.bf16.mxu0 0
      %7556 = vmatmul.mubr.bf16.gmra.mxu0 %v7344
      %v7557 = vpop.f32.mrf.mxu0
      %v7558 = vadd.f32 0.0, %v7557
      %v7559 = vpop.f32.mrf.mxu0
      %v7560 = vpop.f32.mrf.mxu0
      %v7561 = vadd.f32 0.0, %v7560
      %v7562 = vpop.f32.mrf.mxu0
      %7563 = vmatprep.mubr.bf16.mxu0 0
      %7564 = vmatmul.mubr.bf16.gmra.mxu0 %v7345
      %v7565 = vpop.f32.mrf.mxu0
      %v7566 = vadd.f32 0.0, %v7565
      %v7567 = vpop.f32.mrf.mxu0
      %v7568 = vpop.f32.mrf.mxu0
      %v7569 = vadd.f32 0.0, %v7568
      %v7570 = vpop.f32.mrf.mxu0
      %7571 = vmatprep.mubr.bf16.mxu0 0
      %7572 = vmatmul.mubr.bf16.gmra.mxu0 %v7346
      %v7573 = vpop.f32.mrf.mxu0
      %v7574 = vadd.f32 0.0, %v7573
      %v7575 = vpop.f32.mrf.mxu0
      %v7576 = vpop.f32.mrf.mxu0
      %v7577 = vadd.f32 0.0, %v7576
      %v7578 = vpop.f32.mrf.mxu0
      %7579 = vmatprep.mubr.bf16.mxu0 0
      %7580 = vmatmul.mubr.bf16.gmra.mxu0 %v7347
      %v7581 = vpop.f32.mrf.mxu0
      %v7582 = vadd.f32 0.0, %v7581
      %v7583 = vpop.f32.mrf.mxu0
      %v7584 = vpop.f32.mrf.mxu0
      %v7585 = vadd.f32 0.0, %v7584
      %v7586 = vpop.f32.mrf.mxu0
      %7587 = vmatprep.mubr.bf16.mxu0 0
      %7588 = vmatmul.mubr.bf16.gmra.mxu0 %v7348
      %v7589 = vpop.f32.mrf.mxu0
      %v7590 = vadd.f32 0.0, %v7589
      %v7591 = vpop.f32.mrf.mxu0
      %v7592 = vpop.f32.mrf.mxu0
      %v7593 = vadd.f32 0.0, %v7592
      %v7594 = vpop.f32.mrf.mxu0
      %7595 = vmatprep.mubr.bf16.mxu0 0
      %7596 = vmatmul.mubr.bf16.gmra.mxu0 %v7349
      %v7597 = vpop.f32.mrf.mxu0
      %v7598 = vadd.f32 0.0, %v7597
      %v7599 = vpop.f32.mrf.mxu0
      %v7600 = vpop.f32.mrf.mxu0
      %v7601 = vadd.f32 0.0, %v7600
      %v7602 = vpop.f32.mrf.mxu0
      %7603 = vmatprep.mubr.bf16.mxu0 0
      %7604 = vmatmul.mubr.bf16.gmra.mxu0 %v7350
      %v7605 = vpop.f32.mrf.mxu0
      %v7606 = vadd.f32 0.0, %v7605
      %v7607 = vpop.f32.mrf.mxu0
      %v7608 = vpop.f32.mrf.mxu0
      %v7609 = vadd.f32 0.0, %v7608
      %v7610 = vpop.f32.mrf.mxu0
      %7611 = vmatprep.mubr.bf16.mxu0 0
      %7612 = vmatmul.mubr.bf16.gmra.mxu0 %v7351
      %v7613 = vpop.f32.mrf.mxu0
      %v7614 = vadd.f32 0.0, %v7613
      %v7615 = vpop.f32.mrf.mxu0
      %v7616 = vpop.f32.mrf.mxu0
      %v7617 = vadd.f32 0.0, %v7616
      %v7618 = vpop.f32.mrf.mxu0
      %7619 = vmatprep.mubr.bf16.mxu0 0
      %7620 = vmatmul.mubr.bf16.gmra.mxu0 %v7352
      %v7621 = vpop.f32.mrf.mxu0
      %v7622 = vadd.f32 0.0, %v7621
      %v7623 = vpop.f32.mrf.mxu0
      %v7624 = vpop.f32.mrf.mxu0
      %v7625 = vadd.f32 0.0, %v7624
      %v7626 = vpop.f32.mrf.mxu0
      %7627 = vmatprep.mubr.bf16.mxu0 0
      %7628 = vmatmul.mubr.bf16.gmra.mxu0 %v7353
      %v7629 = vpop.f32.mrf.mxu0
      %v7630 = vadd.f32 0.0, %v7629
      %v7631 = vpop.f32.mrf.mxu0
      %v7632 = vpop.f32.mrf.mxu0
      %v7633 = vadd.f32 0.0, %v7632
      %v7634 = vpop.f32.mrf.mxu0
      %7635 = vmatprep.mubr.bf16.mxu0 0
      %7636 = vmatmul.mubr.bf16.gmra.mxu0 %v7354
      %v7637 = vpop.f32.mrf.mxu0
      %v7638 = vadd.f32 0.0, %v7637
      %v7639 = vpop.f32.mrf.mxu0
      %v7640 = vpop.f32.mrf.mxu0
      %v7641 = vadd.f32 0.0, %v7640
      %v7642 = vpop.f32.mrf.mxu0
      %7643 = vmatprep.mubr.bf16.mxu0 0
      %7644 = vmatmul.mubr.bf16.gmra.mxu0 %v7355
      %v7645 = vpop.f32.mrf.mxu0
      %v7646 = vadd.f32 0.0, %v7645
      %v7647 = vpop.f32.mrf.mxu0
      %v7648 = vpop.f32.mrf.mxu0
      %v7649 = vadd.f32 0.0, %v7648
      %v7650 = vpop.f32.mrf.mxu0
      %7651 = vmatprep.mubr.bf16.mxu0 0
      %7652 = vmatmul.mubr.bf16.gmra.mxu0 %v7356
      %v7653 = vpop.f32.mrf.mxu0
      %v7654 = vadd.f32 0.0, %v7653
      %v7655 = vpop.f32.mrf.mxu0
      %v7656 = vpop.f32.mrf.mxu0
      %v7657 = vadd.f32 0.0, %v7656
      %v7658 = vpop.f32.mrf.mxu0
      %7659 = vmatprep.mubr.bf16.mxu0 0
      %7660 = vmatmul.mubr.bf16.gmra.mxu0 %v7357
      %v7661 = vpop.f32.mrf.mxu0
      %v7662 = vadd.f32 0.0, %v7661
      %v7663 = vpop.f32.mrf.mxu0
      %v7664 = vpop.f32.mrf.mxu0
      %v7665 = vadd.f32 0.0, %v7664
      %v7666 = vpop.f32.mrf.mxu0
      %7667 = vmatprep.mubr.bf16.mxu0 0
      %7668 = vmatmul.mubr.bf16.gmra.mxu0 %v7358
      %v7669 = vpop.f32.mrf.mxu0
      %v7670 = vadd.f32 0.0, %v7669
      %v7671 = vpop.f32.mrf.mxu0
      %v7672 = vpop.f32.mrf.mxu0
      %v7673 = vadd.f32 0.0, %v7672
      %v7674 = vpop.f32.mrf.mxu0
      %7675 = vmatprep.mubr.bf16.mxu0 0
      %7676 = vmatmul.mubr.bf16.gmra.mxu0 %v7359
      %v7677 = vpop.f32.mrf.mxu0
      %v7678 = vadd.f32 0.0, %v7677
      %v7679 = vpop.f32.mrf.mxu0
      %v7680 = vpop.f32.mrf.mxu0
      %v7681 = vadd.f32 0.0, %v7680
      %v7682 = vpop.f32.mrf.mxu0
      %7683 = vdwg.mxu0
      %v7684 = vadd.f32 %v7263, %v7470
      %v7685 = vadd.f32 %v7264, %v7473
      %v7686 = vadd.f32 %v7265, %v7478
      %v7687 = vadd.f32 %v7266, %v7481
      %v7688 = vadd.f32 %v7267, %v7486
      %v7689 = vadd.f32 %v7268, %v7489
      %v7690 = vadd.f32 %v7269, %v7494
      %v7691 = vadd.f32 %v7270, %v7497
      %v7692 = vadd.f32 %v7271, %v7502
      %v7693 = vadd.f32 %v7272, %v7505
      %v7694 = vadd.f32 %v7273, %v7510
      %v7695 = vadd.f32 %v7274, %v7513
      %v7696 = vadd.f32 %v7275, %v7518
      %v7697 = vadd.f32 %v7276, %v7521
      %v7698 = vadd.f32 %v7277, %v7526
      %v7699 = vadd.f32 %v7278, %v7529
      %v7700 = vadd.f32 %v7279, %v7534
      %v7701 = vadd.f32 %v7280, %v7537
      %v7702 = vadd.f32 %v7281, %v7542
      %v7703 = vadd.f32 %v7282, %v7545
      %v7704 = vadd.f32 %v7283, %v7550
      %v7705 = vadd.f32 %v7284, %v7553
      %v7706 = vadd.f32 %v7285, %v7558
      %v7707 = vadd.f32 %v7286, %v7561
      %v7708 = vadd.f32 %v7287, %v7566
      %v7709 = vadd.f32 %v7288, %v7569
      %v7710 = vadd.f32 %v7289, %v7574
      %v7711 = vadd.f32 %v7290, %v7577
      %v7712 = vadd.f32 %v7291, %v7582
      %v7713 = vadd.f32 %v7292, %v7585
      %v7714 = vadd.f32 %v7293, %v7590
      %v7715 = vadd.f32 %v7294, %v7593
      %v7716 = vadd.f32 %v7295, %v7598
      %v7717 = vadd.f32 %v7296, %v7601
      %v7718 = vadd.f32 %v7297, %v7606
      %v7719 = vadd.f32 %v7298, %v7609
      %v7720 = vadd.f32 %v7299, %v7614
      %v7721 = vadd.f32 %v7300, %v7617
      %v7722 = vadd.f32 %v7301, %v7622
      %v7723 = vadd.f32 %v7302, %v7625
      %v7724 = vadd.f32 %v7303, %v7630
      %v7725 = vadd.f32 %v7304, %v7633
      %v7726 = vadd.f32 %v7305, %v7638
      %v7727 = vadd.f32 %v7306, %v7641
      %v7728 = vadd.f32 %v7307, %v7646
      %v7729 = vadd.f32 %v7308, %v7649
      %v7730 = vadd.f32 %v7309, %v7654
      %v7731 = vadd.f32 %v7310, %v7657
      %v7732 = vadd.f32 %v7311, %v7662
      %v7733 = vadd.f32 %v7312, %v7665
      %v7734 = vadd.f32 %v7313, %v7670
      %v7735 = vadd.f32 %v7314, %v7673
      %v7736 = vadd.f32 %v7315, %v7678
      %v7737 = vadd.f32 %v7316, %v7681
      %v7738 = vld [vmem:[#allocation2 + $0x1c] sm:$0xf]
      %v7739 = vld [vmem:[#allocation2 + $0x20] sm:$0xf]
      %v7740 = vld [vmem:[#allocation2 + $0x24] sm:$0xf]
      %v7741 = vld [vmem:[#allocation2 + $0x28] sm:$0xf]
      %v7742 = vld [vmem:[#allocation2 + $0x2c] sm:$0xf]
      %v7743 = vld [vmem:[#allocation2 + $0x30] sm:$0xf]
      %v7744 = vld [vmem:[#allocation2 + $0x34] sm:$0xf]
      %v7745 = vld [vmem:[#allocation2 + $0x38] sm:$0xf]
      %v7746 = vld [vmem:[#allocation2 + $0x3c] sm:$0xf]
      %v7747 = vld [vmem:[#allocation2 + $0x40] sm:$0xf]
      %v7748 = vld [vmem:[#allocation2 + $0x44] sm:$0xf]
      %v7749 = vld [vmem:[#allocation2 + $0x48] sm:$0xf]
      %v7750 = vld [vmem:[#allocation2 + $0x4c] sm:$0xf]
      %v7751 = vld [vmem:[#allocation2 + $0x50] sm:$0xf]
      %v7752 = vld [vmem:[#allocation2 + $0x54] sm:$0xf]
      %v7753 = vld [vmem:[#allocation2 + $0x58] sm:$0xf]
      %v7754 = vld [vmem:[#allocation2 + $0x5c] sm:$0xf]
      %v7755 = vld [vmem:[#allocation2 + $0x60] sm:$0xf]
      %v7756 = vld [vmem:[#allocation2 + $0x64] sm:$0xf]
      %v7757 = vld [vmem:[#allocation2 + $0x68] sm:$0xf]
      %v7758 = vld [vmem:[#allocation2 + $0x6c] sm:$0xf]
      %v7759 = vld [vmem:[#allocation2 + $0x70] sm:$0xf]
      %v7760 = vld [vmem:[#allocation2 + $0x74] sm:$0xf]
      %v7761 = vld [vmem:[#allocation2 + $0x78] sm:$0xf]
      %v7762 = vld [vmem:[#allocation2 + $0x7c] sm:$0xf]
      %v7763 = vld [vmem:[#allocation2 + $0x80] sm:$0xf]
      %v7764 = vld [vmem:[#allocation2 + $0x84] sm:$0xf]
      %v7765 = vld [vmem:[#allocation2 + $0x88] sm:$0xf]
      %v7766 = vld [vmem:[#allocation2 + $0x8c] sm:$0xf]
      %v7767 = vld [vmem:[#allocation2 + $0x90] sm:$0xf]
      %v7768 = vld [vmem:[#allocation2 + $0x94] sm:$0xf]
      %v7769 = vld [vmem:[#allocation2 + $0x98] sm:$0xf]
      %v7770 = vld [vmem:[#allocation2 + $0x9c] sm:$0xf]
      %v7771 = vld [vmem:[#allocation2 + $0xa0] sm:$0xf]
      %v7772 = vld [vmem:[#allocation2 + $0xa4] sm:$0xf]
      %v7773 = vld [vmem:[#allocation2 + $0xa8] sm:$0xf]
      %v7774 = vld [vmem:[#allocation2 + $0xac] sm:$0xf]
      %v7775 = vld [vmem:[#allocation2 + $0xb0] sm:$0xf]
      %v7776 = vld [vmem:[#allocation2 + $0xb4] sm:$0xf]
      %v7777 = vld [vmem:[#allocation2 + $0xb8] sm:$0xf]
      %v7778 = vld [vmem:[#allocation2 + $0xbc] sm:$0xf]
      %v7779 = vld [vmem:[#allocation2 + $0xc0] sm:$0xf]
      %v7780 = vld [vmem:[#allocation2 + $0xc4] sm:$0xf]
      %v7781 = vld [vmem:[#allocation2 + $0xc8] sm:$0xf]
      %v7782 = vld [vmem:[#allocation2 + $0xcc] sm:$0xf]
      %v7783 = vld [vmem:[#allocation2 + $0xd0] sm:$0xf]
      %v7784 = vld [vmem:[#allocation2 + $0xd4] sm:$0xf]
      %v7785 = vld [vmem:[#allocation2 + $0xd8] sm:$0xf]
      %v7786 = vld [vmem:[#allocation2 + $0xdc] sm:$0xf]
      %v7787 = vld [vmem:[#allocation2 + $0xe0] sm:$0xf]
      %v7788 = vld [vmem:[#allocation2 + $0xe4] sm:$0xf]
      %v7789 = vld [vmem:[#allocation2 + $0xe8] sm:$0xf]
      %v7790 = vld [vmem:[#allocation2 + $0xec] sm:$0xf]
      %v7791 = vld [vmem:[#allocation2 + $0xf0] sm:$0xf]
      %v7792 = vld [vmem:[#allocation2 + $0xf4] sm:$0x1]
      %v7793 = vld [vmem:[%s2 + $0x200] sm:$0xf]
      %v7794 = vld [vmem:[%s2 + $0x204] sm:$0xf]
      %v7795 = vld [vmem:[%s2 + $0x208] sm:$0xf]
      %v7796 = vld [vmem:[%s2 + $0x20c] sm:$0xf]
      %v7797 = vld [vmem:[%s2 + $0x210] sm:$0xf]
      %v7798 = vld [vmem:[%s2 + $0x214] sm:$0xf]
      %v7799 = vld [vmem:[%s2 + $0x218] sm:$0xf]
      %v7800 = vld [vmem:[%s2 + $0x21c] sm:$0xf]
      %v7801 = vld [vmem:[%s2 + $0x220] sm:$0xf]
      %v7802 = vld [vmem:[%s2 + $0x224] sm:$0xf]
      %v7803 = vld [vmem:[%s2 + $0x228] sm:$0xf]
      %v7804 = vld [vmem:[%s2 + $0x22c] sm:$0xf]
      %v7805 = vld [vmem:[%s2 + $0x230] sm:$0xf]
      %v7806 = vld [vmem:[%s2 + $0x234] sm:$0xf]
      %v7807 = vld [vmem:[%s2 + $0x238] sm:$0xf]
      %v7808 = vld [vmem:[%s2 + $0x23c] sm:$0xf]
      %v7864 = vunpack.c.l.b16 %v7738
      %v7865 = vunpack.c.l.b16 %v7739
      %v7866 = vunpack.c.l.b16 %v7740
      %v7867 = vunpack.c.l.b16 %v7741
      %v7868 = vunpack.c.l.b16 %v7742
      %v7869 = vunpack.c.l.b16 %v7743
      %v7870 = vunpack.c.l.b16 %v7744
      %v7871 = vunpack.c.l.b16 %v7745
      %v7872 = vunpack.c.l.b16 %v7746
      %v7873 = vunpack.c.l.b16 %v7747
      %v7874 = vunpack.c.l.b16 %v7748
      %v7875 = vunpack.c.l.b16 %v7749
      %v7876 = vunpack.c.l.b16 %v7750
      %v7877 = vunpack.c.l.b16 %v7751
      %v7878 = vunpack.c.l.b16 %v7752
      %v7879 = vunpack.c.l.b16 %v7753
      %v7880 = vunpack.c.l.b16 %v7754
      %v7881 = vunpack.c.l.b16 %v7755
      %v7882 = vunpack.c.l.b16 %v7756
      %v7883 = vunpack.c.l.b16 %v7757
      %v7884 = vunpack.c.l.b16 %v7758
      %v7885 = vunpack.c.l.b16 %v7759
      %v7886 = vunpack.c.l.b16 %v7760
      %v7887 = vunpack.c.l.b16 %v7761
      %v7888 = vunpack.c.l.b16 %v7762
      %v7889 = vunpack.c.l.b16 %v7763
      %v7890 = vunpack.c.l.b16 %v7764
      %v7891 = vunpack.c.l.b16 %v7765
      %v7892 = vunpack.c.l.b16 %v7766
      %v7893 = vunpack.c.l.b16 %v7767
      %v7894 = vunpack.c.l.b16 %v7768
      %v7895 = vunpack.c.l.b16 %v7769
      %v7896 = vunpack.c.l.b16 %v7770
      %v7897 = vunpack.c.l.b16 %v7771
      %v7898 = vunpack.c.l.b16 %v7772
      %v7899 = vunpack.c.l.b16 %v7773
      %v7900 = vunpack.c.l.b16 %v7774
      %v7901 = vunpack.c.l.b16 %v7775
      %v7902 = vunpack.c.l.b16 %v7776
      %v7903 = vunpack.c.l.b16 %v7777
      %v7904 = vunpack.c.l.b16 %v7778
      %v7905 = vunpack.c.l.b16 %v7779
      %v7906 = vunpack.c.l.b16 %v7780
      %v7907 = vunpack.c.l.b16 %v7781
      %v7908 = vunpack.c.l.b16 %v7782
      %v7909 = vunpack.c.l.b16 %v7783
      %v7910 = vunpack.c.l.b16 %v7784
      %v7911 = vunpack.c.l.b16 %v7785
      %v7912 = vunpack.c.l.b16 %v7786
      %v7913 = vunpack.c.l.b16 %v7787
      %v7914 = vunpack.c.l.b16 %v7788
      %v7915 = vunpack.c.l.b16 %v7789
      %v7916 = vunpack.c.l.b16 %v7790
      %v7917 = vunpack.c.l.b16 %v7791
      %v7918 = vunpack.c.l.b16 %v7792
      %v7919 = vpack.c.b16 %v7865, %v7864
      %v7920 = vpack.c.b16 %v7867, %v7866
      %v7921 = vpack.c.b16 %v7869, %v7868
      %v7922 = vpack.c.b16 %v7871, %v7870
      %v7923 = vpack.c.b16 %v7873, %v7872
      %v7924 = vpack.c.b16 %v7875, %v7874
      %v7925 = vpack.c.b16 %v7877, %v7876
      %v7926 = vpack.c.b16 %v7879, %v7878
      %v7927 = vpack.c.b16 %v7881, %v7880
      %v7928 = vpack.c.b16 %v7883, %v7882
      %v7929 = vpack.c.b16 %v7885, %v7884
      %v7930 = vpack.c.b16 %v7887, %v7886
      %v7931 = vpack.c.b16 %v7889, %v7888
      %v7932 = vpack.c.b16 %v7891, %v7890
      %v7933 = vpack.c.b16 %v7893, %v7892
      %v7934 = vpack.c.b16 %v7895, %v7894
      %v7935 = vpack.c.b16 %v7897, %v7896
      %v7936 = vpack.c.b16 %v7899, %v7898
      %v7937 = vpack.c.b16 %v7901, %v7900
      %v7938 = vpack.c.b16 %v7903, %v7902
      %v7939 = vpack.c.b16 %v7905, %v7904
      %v7940 = vpack.c.b16 %v7907, %v7906
      %v7941 = vpack.c.b16 %v7909, %v7908
      %v7942 = vpack.c.b16 %v7911, %v7910
      %v7943 = vpack.c.b16 %v7913, %v7912
      %v7944 = vpack.c.b16 %v7915, %v7914
      %v7945 = vpack.c.b16 %v7917, %v7916
      %v7946 = vpack.c.b16 %v7918, %v7918
      %v7948 = vshrl.u32 %v7919, 16
      %v7950 = vshll.u32 %v7919, 16
      %v7952 = vrot.slane %v7950, 1
      %v7953 = vor.u32 %v7948, %v7952
      %v7955 = vshll.u32 %v7920, 16
      %v7957 = vrot.slane %v7955, 1
      %v7958 = vsel %vm3814, %v7953, %v7957
      %v7959 = vshrl.u32 %v7920, 16
      %v7961 = vor.u32 %v7959, %v7957
      %v7963 = vshll.u32 %v7921, 16
      %v7965 = vrot.slane %v7963, 1
      %v7966 = vsel %vm3814, %v7961, %v7965
      %v7967 = vshrl.u32 %v7921, 16
      %v7969 = vor.u32 %v7967, %v7965
      %v7971 = vshll.u32 %v7922, 16
      %v7973 = vrot.slane %v7971, 1
      %v7974 = vsel %vm3814, %v7969, %v7973
      %v7975 = vshrl.u32 %v7922, 16
      %v7977 = vor.u32 %v7975, %v7973
      %v7979 = vshll.u32 %v7923, 16
      %v7981 = vrot.slane %v7979, 1
      %v7982 = vsel %vm3814, %v7977, %v7981
      %v7983 = vshrl.u32 %v7923, 16
      %v7985 = vor.u32 %v7983, %v7981
      %v7987 = vshll.u32 %v7924, 16
      %v7989 = vrot.slane %v7987, 1
      %v7990 = vsel %vm3814, %v7985, %v7989
      %v7991 = vshrl.u32 %v7924, 16
      %v7993 = vor.u32 %v7991, %v7989
      %v7995 = vshll.u32 %v7925, 16
      %v7997 = vrot.slane %v7995, 1
      %v7998 = vsel %vm3814, %v7993, %v7997
      %v7999 = vshrl.u32 %v7925, 16
      %v8001 = vor.u32 %v7999, %v7997
      %v8003 = vshll.u32 %v7926, 16
      %v8005 = vrot.slane %v8003, 1
      %v8006 = vsel %vm3814, %v8001, %v8005
      %v8007 = vshrl.u32 %v7926, 16
      %v8009 = vor.u32 %v8007, %v8005
      %v8011 = vshll.u32 %v7927, 16
      %v8013 = vrot.slane %v8011, 1
      %v8014 = vsel %vm3814, %v8009, %v8013
      %v8015 = vshrl.u32 %v7927, 16
      %v8017 = vor.u32 %v8015, %v8013
      %v8019 = vshll.u32 %v7928, 16
      %v8021 = vrot.slane %v8019, 1
      %v8022 = vsel %vm3814, %v8017, %v8021
      %v8023 = vshrl.u32 %v7928, 16
      %v8025 = vor.u32 %v8023, %v8021
      %v8027 = vshll.u32 %v7929, 16
      %v8029 = vrot.slane %v8027, 1
      %v8030 = vsel %vm3814, %v8025, %v8029
      %v8031 = vshrl.u32 %v7929, 16
      %v8033 = vor.u32 %v8031, %v8029
      %v8035 = vshll.u32 %v7930, 16
      %v8037 = vrot.slane %v8035, 1
      %v8038 = vsel %vm3814, %v8033, %v8037
      %v8039 = vshrl.u32 %v7930, 16
      %v8041 = vor.u32 %v8039, %v8037
      %v8043 = vshll.u32 %v7931, 16
      %v8045 = vrot.slane %v8043, 1
      %v8046 = vsel %vm3814, %v8041, %v8045
      %v8047 = vshrl.u32 %v7931, 16
      %v8049 = vor.u32 %v8047, %v8045
      %v8051 = vshll.u32 %v7932, 16
      %v8053 = vrot.slane %v8051, 1
      %v8054 = vsel %vm3814, %v8049, %v8053
      %v8055 = vshrl.u32 %v7932, 16
      %v8057 = vor.u32 %v8055, %v8053
      %v8059 = vshll.u32 %v7933, 16
      %v8061 = vrot.slane %v8059, 1
      %v8062 = vsel %vm3814, %v8057, %v8061
      %v8063 = vshrl.u32 %v7933, 16
      %v8065 = vor.u32 %v8063, %v8061
      %v8067 = vshll.u32 %v7934, 16
      %v8069 = vrot.slane %v8067, 1
      %v8070 = vsel %vm3814, %v8065, %v8069
      %v8071 = vshrl.u32 %v7934, 16
      %v8073 = vor.u32 %v8071, %v8069
      %v8075 = vshll.u32 %v7935, 16
      %v8077 = vrot.slane %v8075, 1
      %v8078 = vsel %vm3814, %v8073, %v8077
      %v8079 = vshrl.u32 %v7935, 16
      %v8081 = vor.u32 %v8079, %v8077
      %v8083 = vshll.u32 %v7936, 16
      %v8085 = vrot.slane %v8083, 1
      %v8086 = vsel %vm3814, %v8081, %v8085
      %v8087 = vshrl.u32 %v7936, 16
      %v8089 = vor.u32 %v8087, %v8085
      %v8091 = vshll.u32 %v7937, 16
      %v8093 = vrot.slane %v8091, 1
      %v8094 = vsel %vm3814, %v8089, %v8093
      %v8095 = vshrl.u32 %v7937, 16
      %v8097 = vor.u32 %v8095, %v8093
      %v8099 = vshll.u32 %v7938, 16
      %v8101 = vrot.slane %v8099, 1
      %v8102 = vsel %vm3814, %v8097, %v8101
      %v8103 = vshrl.u32 %v7938, 16
      %v8105 = vor.u32 %v8103, %v8101
      %v8107 = vshll.u32 %v7939, 16
      %v8109 = vrot.slane %v8107, 1
      %v8110 = vsel %vm3814, %v8105, %v8109
      %v8111 = vshrl.u32 %v7939, 16
      %v8113 = vor.u32 %v8111, %v8109
      %v8115 = vshll.u32 %v7940, 16
      %v8117 = vrot.slane %v8115, 1
      %v8118 = vsel %vm3814, %v8113, %v8117
      %v8119 = vshrl.u32 %v7940, 16
      %v8121 = vor.u32 %v8119, %v8117
      %v8123 = vshll.u32 %v7941, 16
      %v8125 = vrot.slane %v8123, 1
      %v8126 = vsel %vm3814, %v8121, %v8125
      %v8127 = vshrl.u32 %v7941, 16
      %v8129 = vor.u32 %v8127, %v8125
      %v8131 = vshll.u32 %v7942, 16
      %v8133 = vrot.slane %v8131, 1
      %v8134 = vsel %vm3814, %v8129, %v8133
      %v8135 = vshrl.u32 %v7942, 16
      %v8137 = vor.u32 %v8135, %v8133
      %v8139 = vshll.u32 %v7943, 16
      %v8141 = vrot.slane %v8139, 1
      %v8142 = vsel %vm3814, %v8137, %v8141
      %v8143 = vshrl.u32 %v7943, 16
      %v8145 = vor.u32 %v8143, %v8141
      %v8147 = vshll.u32 %v7944, 16
      %v8149 = vrot.slane %v8147, 1
      %v8150 = vsel %vm3814, %v8145, %v8149
      %v8151 = vshrl.u32 %v7944, 16
      %v8153 = vor.u32 %v8151, %v8149
      %v8155 = vshll.u32 %v7945, 16
      %v8157 = vrot.slane %v8155, 1
      %v8158 = vsel %vm3814, %v8153, %v8157
      %v8159 = vshrl.u32 %v7945, 16
      %v8161 = vor.u32 %v8159, %v8157
      %v8163 = vshll.u32 %v7946, 16
      %v8165 = vrot.slane %v8163, 1
      %v8166 = vsel %vm3814, %v8161, %v8165
      %v8210 = vunpack.c.l.b16 %v7793
      %v8211 = vunpack.c.l.b16 %v7794
      %v8212 = vunpack.c.l.b16 %v7795
      %v8213 = vunpack.c.l.b16 %v7796
      %v8214 = vunpack.c.l.b16 %v7797
      %v8215 = vunpack.c.l.b16 %v7798
      %v8216 = vunpack.c.l.b16 %v7799
      %v8217 = vunpack.c.l.b16 %v7800
      %v8218 = vunpack.c.l.b16 %v7801
      %v8219 = vunpack.c.l.b16 %v7802
      %v8220 = vunpack.c.l.b16 %v7803
      %v8221 = vunpack.c.l.b16 %v7804
      %v8222 = vunpack.c.l.b16 %v7805
      %v8223 = vunpack.c.l.b16 %v7806
      %v8224 = vunpack.c.l.b16 %v7807
      %v8225 = vunpack.c.l.b16 %v7808
      %v8226 = vpack.c.b16 %v8211, %v8210
      %v8227 = vpack.c.b16 %v8213, %v8212
      %v8228 = vpack.c.b16 %v8215, %v8214
      %v8229 = vpack.c.b16 %v8217, %v8216
      %v8230 = vpack.c.b16 %v8219, %v8218
      %v8231 = vpack.c.b16 %v8221, %v8220
      %v8232 = vpack.c.b16 %v8223, %v8222
      %v8233 = vpack.c.b16 %v8225, %v8224
      %8242 = vmatprep.subr.bf16.mxu0 0
      %8243 = vmatpush1.bf16.msra.mxu0 %v8233
      %8244 = vmatprep.subr.bf16.mxu0 0
      %8245 = vmatpush1.bf16.msra.mxu0 %v8232
      %8246 = vmatprep.subr.bf16.mxu0 0
      %8247 = vmatpush1.bf16.msra.mxu0 %v8231
      %8248 = vmatprep.subr.bf16.mxu0 0
      %8249 = vmatpush1.bf16.msra.mxu0 %v8230
      %8250 = vmatprep.subr.bf16.mxu0 0
      %8251 = vmatpush1.bf16.msra.mxu0 %v8229
      %8252 = vmatprep.subr.bf16.mxu0 0
      %8253 = vmatpush1.bf16.msra.mxu0 %v8228
      %8254 = vmatprep.subr.bf16.mxu0 0
      %8255 = vmatpush1.bf16.msra.mxu0 %v8227
      %8256 = vmatprep.subr.bf16.mxu0 0
      %8257 = vmatpush1.bf16.msra.mxu0 %v8226
      %8258 = vmatprep.subr.bf16.mxu0 0
      %8259 = vmatpush2.bf16.msra.mxu0 0
      %8260 = vmatprep.subr.bf16.mxu0 0
      %8261 = vmatpush2.bf16.msra.mxu0 0
      %8262 = vmatprep.subr.bf16.mxu0 0
      %8263 = vmatpush2.bf16.msra.mxu0 0
      %8264 = vmatprep.subr.bf16.mxu0 0
      %8265 = vmatpush2.bf16.msra.mxu0 0
      %8266 = vmatprep.subr.bf16.mxu0 0
      %8267 = vmatpush2.bf16.msra.mxu0 0
      %8268 = vmatprep.subr.bf16.mxu0 0
      %8269 = vmatpush2.bf16.msra.mxu0 0
      %8270 = vmatprep.subr.bf16.mxu0 0
      %8271 = vmatpush2.bf16.msra.mxu0 0
      %8272 = vmatprep.subr.bf16.mxu0 0
      %8273 = vmatpush2.bf16.msra.mxu0 0
      %8274 = vmatprep.mubr.bf16.mxu0 0
      %8275 = vmatmul.mubr.bf16.gmra.mxu0 %v7958
      %v8276 = vpop.f32.mrf.mxu0
      %v8277 = vadd.f32 0.0, %v8276
      %v8278 = vpop.f32.mrf.mxu0
      %v8279 = vpop.f32.mrf.mxu0
      %v8280 = vadd.f32 0.0, %v8279
      %v8281 = vpop.f32.mrf.mxu0
      %8282 = vmatprep.mubr.bf16.mxu0 0
      %8283 = vmatmul.mubr.bf16.gmra.mxu0 %v7966
      %v8284 = vpop.f32.mrf.mxu0
      %v8285 = vadd.f32 0.0, %v8284
      %v8286 = vpop.f32.mrf.mxu0
      %v8287 = vpop.f32.mrf.mxu0
      %v8288 = vadd.f32 0.0, %v8287
      %v8289 = vpop.f32.mrf.mxu0
      %8290 = vmatprep.mubr.bf16.mxu0 0
      %8291 = vmatmul.mubr.bf16.gmra.mxu0 %v7974
      %v8292 = vpop.f32.mrf.mxu0
      %v8293 = vadd.f32 0.0, %v8292
      %v8294 = vpop.f32.mrf.mxu0
      %v8295 = vpop.f32.mrf.mxu0
      %v8296 = vadd.f32 0.0, %v8295
      %v8297 = vpop.f32.mrf.mxu0
      %8298 = vmatprep.mubr.bf16.mxu0 0
      %8299 = vmatmul.mubr.bf16.gmra.mxu0 %v7982
      %v8300 = vpop.f32.mrf.mxu0
      %v8301 = vadd.f32 0.0, %v8300
      %v8302 = vpop.f32.mrf.mxu0
      %v8303 = vpop.f32.mrf.mxu0
      %v8304 = vadd.f32 0.0, %v8303
      %v8305 = vpop.f32.mrf.mxu0
      %8306 = vmatprep.mubr.bf16.mxu0 0
      %8307 = vmatmul.mubr.bf16.gmra.mxu0 %v7990
      %v8308 = vpop.f32.mrf.mxu0
      %v8309 = vadd.f32 0.0, %v8308
      %v8310 = vpop.f32.mrf.mxu0
      %v8311 = vpop.f32.mrf.mxu0
      %v8312 = vadd.f32 0.0, %v8311
      %v8313 = vpop.f32.mrf.mxu0
      %8314 = vmatprep.mubr.bf16.mxu0 0
      %8315 = vmatmul.mubr.bf16.gmra.mxu0 %v7998
      %v8316 = vpop.f32.mrf.mxu0
      %v8317 = vadd.f32 0.0, %v8316
      %v8318 = vpop.f32.mrf.mxu0
      %v8319 = vpop.f32.mrf.mxu0
      %v8320 = vadd.f32 0.0, %v8319
      %v8321 = vpop.f32.mrf.mxu0
      %8322 = vmatprep.mubr.bf16.mxu0 0
      %8323 = vmatmul.mubr.bf16.gmra.mxu0 %v8006
      %v8324 = vpop.f32.mrf.mxu0
      %v8325 = vadd.f32 0.0, %v8324
      %v8326 = vpop.f32.mrf.mxu0
      %v8327 = vpop.f32.mrf.mxu0
      %v8328 = vadd.f32 0.0, %v8327
      %v8329 = vpop.f32.mrf.mxu0
      %8330 = vmatprep.mubr.bf16.mxu0 0
      %8331 = vmatmul.mubr.bf16.gmra.mxu0 %v8014
      %v8332 = vpop.f32.mrf.mxu0
      %v8333 = vadd.f32 0.0, %v8332
      %v8334 = vpop.f32.mrf.mxu0
      %v8335 = vpop.f32.mrf.mxu0
      %v8336 = vadd.f32 0.0, %v8335
      %v8337 = vpop.f32.mrf.mxu0
      %8338 = vmatprep.mubr.bf16.mxu0 0
      %8339 = vmatmul.mubr.bf16.gmra.mxu0 %v8022
      %v8340 = vpop.f32.mrf.mxu0
      %v8341 = vadd.f32 0.0, %v8340
      %v8342 = vpop.f32.mrf.mxu0
      %v8343 = vpop.f32.mrf.mxu0
      %v8344 = vadd.f32 0.0, %v8343
      %v8345 = vpop.f32.mrf.mxu0
      %8346 = vmatprep.mubr.bf16.mxu0 0
      %8347 = vmatmul.mubr.bf16.gmra.mxu0 %v8030
      %v8348 = vpop.f32.mrf.mxu0
      %v8349 = vadd.f32 0.0, %v8348
      %v8350 = vpop.f32.mrf.mxu0
      %v8351 = vpop.f32.mrf.mxu0
      %v8352 = vadd.f32 0.0, %v8351
      %v8353 = vpop.f32.mrf.mxu0
      %8354 = vmatprep.mubr.bf16.mxu0 0
      %8355 = vmatmul.mubr.bf16.gmra.mxu0 %v8038
      %v8356 = vpop.f32.mrf.mxu0
      %v8357 = vadd.f32 0.0, %v8356
      %v8358 = vpop.f32.mrf.mxu0
      %v8359 = vpop.f32.mrf.mxu0
      %v8360 = vadd.f32 0.0, %v8359
      %v8361 = vpop.f32.mrf.mxu0
      %8362 = vmatprep.mubr.bf16.mxu0 0
      %8363 = vmatmul.mubr.bf16.gmra.mxu0 %v8046
      %v8364 = vpop.f32.mrf.mxu0
      %v8365 = vadd.f32 0.0, %v8364
      %v8366 = vpop.f32.mrf.mxu0
      %v8367 = vpop.f32.mrf.mxu0
      %v8368 = vadd.f32 0.0, %v8367
      %v8369 = vpop.f32.mrf.mxu0
      %8370 = vmatprep.mubr.bf16.mxu0 0
      %8371 = vmatmul.mubr.bf16.gmra.mxu0 %v8054
      %v8372 = vpop.f32.mrf.mxu0
      %v8373 = vadd.f32 0.0, %v8372
      %v8374 = vpop.f32.mrf.mxu0
      %v8375 = vpop.f32.mrf.mxu0
      %v8376 = vadd.f32 0.0, %v8375
      %v8377 = vpop.f32.mrf.mxu0
      %8378 = vmatprep.mubr.bf16.mxu0 0
      %8379 = vmatmul.mubr.bf16.gmra.mxu0 %v8062
      %v8380 = vpop.f32.mrf.mxu0
      %v8381 = vadd.f32 0.0, %v8380
      %v8382 = vpop.f32.mrf.mxu0
      %v8383 = vpop.f32.mrf.mxu0
      %v8384 = vadd.f32 0.0, %v8383
      %v8385 = vpop.f32.mrf.mxu0
      %8386 = vmatprep.mubr.bf16.mxu0 0
      %8387 = vmatmul.mubr.bf16.gmra.mxu0 %v8070
      %v8388 = vpop.f32.mrf.mxu0
      %v8389 = vadd.f32 0.0, %v8388
      %v8390 = vpop.f32.mrf.mxu0
      %v8391 = vpop.f32.mrf.mxu0
      %v8392 = vadd.f32 0.0, %v8391
      %v8393 = vpop.f32.mrf.mxu0
      %8394 = vmatprep.mubr.bf16.mxu0 0
      %8395 = vmatmul.mubr.bf16.gmra.mxu0 %v8078
      %v8396 = vpop.f32.mrf.mxu0
      %v8397 = vadd.f32 0.0, %v8396
      %v8398 = vpop.f32.mrf.mxu0
      %v8399 = vpop.f32.mrf.mxu0
      %v8400 = vadd.f32 0.0, %v8399
      %v8401 = vpop.f32.mrf.mxu0
      %8402 = vmatprep.mubr.bf16.mxu0 0
      %8403 = vmatmul.mubr.bf16.gmra.mxu0 %v8086
      %v8404 = vpop.f32.mrf.mxu0
      %v8405 = vadd.f32 0.0, %v8404
      %v8406 = vpop.f32.mrf.mxu0
      %v8407 = vpop.f32.mrf.mxu0
      %v8408 = vadd.f32 0.0, %v8407
      %v8409 = vpop.f32.mrf.mxu0
      %8410 = vmatprep.mubr.bf16.mxu0 0
      %8411 = vmatmul.mubr.bf16.gmra.mxu0 %v8094
      %v8412 = vpop.f32.mrf.mxu0
      %v8413 = vadd.f32 0.0, %v8412
      %v8414 = vpop.f32.mrf.mxu0
      %v8415 = vpop.f32.mrf.mxu0
      %v8416 = vadd.f32 0.0, %v8415
      %v8417 = vpop.f32.mrf.mxu0
      %8418 = vmatprep.mubr.bf16.mxu0 0
      %8419 = vmatmul.mubr.bf16.gmra.mxu0 %v8102
      %v8420 = vpop.f32.mrf.mxu0
      %v8421 = vadd.f32 0.0, %v8420
      %v8422 = vpop.f32.mrf.mxu0
      %v8423 = vpop.f32.mrf.mxu0
      %v8424 = vadd.f32 0.0, %v8423
      %v8425 = vpop.f32.mrf.mxu0
      %8426 = vmatprep.mubr.bf16.mxu0 0
      %8427 = vmatmul.mubr.bf16.gmra.mxu0 %v8110
      %v8428 = vpop.f32.mrf.mxu0
      %v8429 = vadd.f32 0.0, %v8428
      %v8430 = vpop.f32.mrf.mxu0
      %v8431 = vpop.f32.mrf.mxu0
      %v8432 = vadd.f32 0.0, %v8431
      %v8433 = vpop.f32.mrf.mxu0
      %8434 = vmatprep.mubr.bf16.mxu0 0
      %8435 = vmatmul.mubr.bf16.gmra.mxu0 %v8118
      %v8436 = vpop.f32.mrf.mxu0
      %v8437 = vadd.f32 0.0, %v8436
      %v8438 = vpop.f32.mrf.mxu0
      %v8439 = vpop.f32.mrf.mxu0
      %v8440 = vadd.f32 0.0, %v8439
      %v8441 = vpop.f32.mrf.mxu0
      %8442 = vmatprep.mubr.bf16.mxu0 0
      %8443 = vmatmul.mubr.bf16.gmra.mxu0 %v8126
      %v8444 = vpop.f32.mrf.mxu0
      %v8445 = vadd.f32 0.0, %v8444
      %v8446 = vpop.f32.mrf.mxu0
      %v8447 = vpop.f32.mrf.mxu0
      %v8448 = vadd.f32 0.0, %v8447
      %v8449 = vpop.f32.mrf.mxu0
      %8450 = vmatprep.mubr.bf16.mxu0 0
      %8451 = vmatmul.mubr.bf16.gmra.mxu0 %v8134
      %v8452 = vpop.f32.mrf.mxu0
      %v8453 = vadd.f32 0.0, %v8452
      %v8454 = vpop.f32.mrf.mxu0
      %v8455 = vpop.f32.mrf.mxu0
      %v8456 = vadd.f32 0.0, %v8455
      %v8457 = vpop.f32.mrf.mxu0
      %8458 = vmatprep.mubr.bf16.mxu0 0
      %8459 = vmatmul.mubr.bf16.gmra.mxu0 %v8142
      %v8460 = vpop.f32.mrf.mxu0
      %v8461 = vadd.f32 0.0, %v8460
      %v8462 = vpop.f32.mrf.mxu0
      %v8463 = vpop.f32.mrf.mxu0
      %v8464 = vadd.f32 0.0, %v8463
      %v8465 = vpop.f32.mrf.mxu0
      %8466 = vmatprep.mubr.bf16.mxu0 0
      %8467 = vmatmul.mubr.bf16.gmra.mxu0 %v8150
      %v8468 = vpop.f32.mrf.mxu0
      %v8469 = vadd.f32 0.0, %v8468
      %v8470 = vpop.f32.mrf.mxu0
      %v8471 = vpop.f32.mrf.mxu0
      %v8472 = vadd.f32 0.0, %v8471
      %v8473 = vpop.f32.mrf.mxu0
      %8474 = vmatprep.mubr.bf16.mxu0 0
      %8475 = vmatmul.mubr.bf16.gmra.mxu0 %v8158
      %v8476 = vpop.f32.mrf.mxu0
      %v8477 = vadd.f32 0.0, %v8476
      %v8478 = vpop.f32.mrf.mxu0
      %v8479 = vpop.f32.mrf.mxu0
      %v8480 = vadd.f32 0.0, %v8479
      %v8481 = vpop.f32.mrf.mxu0
      %8482 = vmatprep.mubr.bf16.mxu0 0
      %8483 = vmatmul.mubr.bf16.gmra.mxu0 %v8166
      %v8484 = vpop.f32.mrf.mxu0
      %v8485 = vadd.f32 0.0, %v8484
      %v8486 = vpop.f32.mrf.mxu0
      %v8487 = vpop.f32.mrf.mxu0
      %v8488 = vadd.f32 0.0, %v8487
      %v8489 = vpop.f32.mrf.mxu0
      %8490 = vdwg.mxu0
      %v8491 = vadd.f32 %v7684, %v8277
      %v8492 = vadd.f32 %v7685, %v8280
      %v8493 = vadd.f32 %v7686, %v8285
      %v8494 = vadd.f32 %v7687, %v8288
      %v8495 = vadd.f32 %v7688, %v8293
      %v8496 = vadd.f32 %v7689, %v8296
      %v8497 = vadd.f32 %v7690, %v8301
      %v8498 = vadd.f32 %v7691, %v8304
      %v8499 = vadd.f32 %v7692, %v8309
      %v8500 = vadd.f32 %v7693, %v8312
      %v8501 = vadd.f32 %v7694, %v8317
      %v8502 = vadd.f32 %v7695, %v8320
      %v8503 = vadd.f32 %v7696, %v8325
      %v8504 = vadd.f32 %v7697, %v8328
      %v8505 = vadd.f32 %v7698, %v8333
      %v8506 = vadd.f32 %v7699, %v8336
      %v8507 = vadd.f32 %v7700, %v8341
      %v8508 = vadd.f32 %v7701, %v8344
      %v8509 = vadd.f32 %v7702, %v8349
      %v8510 = vadd.f32 %v7703, %v8352
      %v8511 = vadd.f32 %v7704, %v8357
      %v8512 = vadd.f32 %v7705, %v8360
      %v8513 = vadd.f32 %v7706, %v8365
      %v8514 = vadd.f32 %v7707, %v8368
      %v8515 = vadd.f32 %v7708, %v8373
      %v8516 = vadd.f32 %v7709, %v8376
      %v8517 = vadd.f32 %v7710, %v8381
      %v8518 = vadd.f32 %v7711, %v8384
      %v8519 = vadd.f32 %v7712, %v8389
      %v8520 = vadd.f32 %v7713, %v8392
      %v8521 = vadd.f32 %v7714, %v8397
      %v8522 = vadd.f32 %v7715, %v8400
      %v8523 = vadd.f32 %v7716, %v8405
      %v8524 = vadd.f32 %v7717, %v8408
      %v8525 = vadd.f32 %v7718, %v8413
      %v8526 = vadd.f32 %v7719, %v8416
      %v8527 = vadd.f32 %v7720, %v8421
      %v8528 = vadd.f32 %v7721, %v8424
      %v8529 = vadd.f32 %v7722, %v8429
      %v8530 = vadd.f32 %v7723, %v8432
      %v8531 = vadd.f32 %v7724, %v8437
      %v8532 = vadd.f32 %v7725, %v8440
      %v8533 = vadd.f32 %v7726, %v8445
      %v8534 = vadd.f32 %v7727, %v8448
      %v8535 = vadd.f32 %v7728, %v8453
      %v8536 = vadd.f32 %v7729, %v8456
      %v8537 = vadd.f32 %v7730, %v8461
      %v8538 = vadd.f32 %v7731, %v8464
      %v8539 = vadd.f32 %v7732, %v8469
      %v8540 = vadd.f32 %v7733, %v8472
      %v8541 = vadd.f32 %v7734, %v8477
      %v8542 = vadd.f32 %v7735, %v8480
      %v8543 = vadd.f32 %v7736, %v8485
      %v8544 = vadd.f32 %v7737, %v8488
      %v8545 = vld [vmem:[%s4] sm:$0x7]
      %v8546 = vlaneseq
      %v8547 = vshrl.u32 %v8546, 7
      %v8548 = vsub.s32 0, %v8547
      %v8549 = vrot.slane %v8545, %v8548
      %v8550 = vadd.f32 %v8491, %v8549
      %v8551 = vadd.f32 %v8492, %v8549
      %v8552 = vadd.f32 %v8493, %v8549
      %v8553 = vadd.f32 %v8494, %v8549
      %v8554 = vadd.f32 %v8495, %v8549
      %v8555 = vadd.f32 %v8496, %v8549
      %v8556 = vadd.f32 %v8497, %v8549
      %v8557 = vadd.f32 %v8498, %v8549
      %v8558 = vadd.f32 %v8499, %v8549
      %v8559 = vadd.f32 %v8500, %v8549
      %v8560 = vadd.f32 %v8501, %v8549
      %v8561 = vadd.f32 %v8502, %v8549
      %v8562 = vadd.f32 %v8503, %v8549
      %v8563 = vadd.f32 %v8504, %v8549
      %v8564 = vadd.f32 %v8505, %v8549
      %v8565 = vadd.f32 %v8506, %v8549
      %v8566 = vadd.f32 %v8507, %v8549
      %v8567 = vadd.f32 %v8508, %v8549
      %v8568 = vadd.f32 %v8509, %v8549
      %v8569 = vadd.f32 %v8510, %v8549
      %v8570 = vadd.f32 %v8511, %v8549
      %v8571 = vadd.f32 %v8512, %v8549
      %v8572 = vadd.f32 %v8513, %v8549
      %v8573 = vadd.f32 %v8514, %v8549
      %v8574 = vadd.f32 %v8515, %v8549
      %v8575 = vadd.f32 %v8516, %v8549
      %v8576 = vadd.f32 %v8517, %v8549
      %v8577 = vadd.f32 %v8518, %v8549
      %v8578 = vadd.f32 %v8519, %v8549
      %v8579 = vadd.f32 %v8520, %v8549
      %v8580 = vadd.f32 %v8521, %v8549
      %v8581 = vadd.f32 %v8522, %v8549
      %v8582 = vadd.f32 %v8523, %v8549
      %v8583 = vadd.f32 %v8524, %v8549
      %v8584 = vadd.f32 %v8525, %v8549
      %v8585 = vadd.f32 %v8526, %v8549
      %v8586 = vadd.f32 %v8527, %v8549
      %v8587 = vadd.f32 %v8528, %v8549
      %v8588 = vadd.f32 %v8529, %v8549
      %v8589 = vadd.f32 %v8530, %v8549
      %v8590 = vadd.f32 %v8531, %v8549
      %v8591 = vadd.f32 %v8532, %v8549
      %v8592 = vadd.f32 %v8533, %v8549
      %v8593 = vadd.f32 %v8534, %v8549
      %v8594 = vadd.f32 %v8535, %v8549
      %v8595 = vadd.f32 %v8536, %v8549
      %v8596 = vadd.f32 %v8537, %v8549
      %v8597 = vadd.f32 %v8538, %v8549
      %v8598 = vadd.f32 %v8539, %v8549
      %v8599 = vadd.f32 %v8540, %v8549
      %v8600 = vadd.f32 %v8541, %v8549
      %v8601 = vadd.f32 %v8542, %v8549
      %v8602 = vadd.f32 %v8543, %v8549
      %v8603 = vadd.f32 %v8544, %v8549
      %v8604 = vmul.f32 %v8550, %v887
      %v8605 = vmul.f32 %v8551, %v892
      %v8606 = vmul.f32 %v8552, %v897
      %v8607 = vmul.f32 %v8553, %v902
      %v8608 = vmul.f32 %v8554, %v907
      %v8609 = vmul.f32 %v8555, %v912
      %v8610 = vmul.f32 %v8556, %v917
      %v8611 = vmul.f32 %v8557, %v922
      %v8612 = vmul.f32 %v8558, %v927
      %v8613 = vmul.f32 %v8559, %v932
      %v8614 = vmul.f32 %v8560, %v937
      %v8615 = vmul.f32 %v8561, %v942
      %v8616 = vmul.f32 %v8562, %v947
      %v8617 = vmul.f32 %v8563, %v952
      %v8618 = vmul.f32 %v8564, %v957
      %v8619 = vmul.f32 %v8565, %v962
      %v8620 = vmul.f32 %v8566, %v967
      %v8621 = vmul.f32 %v8567, %v972
      %v8622 = vmul.f32 %v8568, %v977
      %v8623 = vmul.f32 %v8569, %v982
      %v8624 = vmul.f32 %v8570, %v987
      %v8625 = vmul.f32 %v8571, %v992
      %v8626 = vmul.f32 %v8572, %v997
      %v8627 = vmul.f32 %v8573, %v1002
      %v8628 = vmul.f32 %v8574, %v1007
      %v8629 = vmul.f32 %v8575, %v1012
      %v8630 = vmul.f32 %v8576, %v1017
      %v8631 = vmul.f32 %v8577, %v1022
      %v8632 = vmul.f32 %v8578, %v1027
      %v8633 = vmul.f32 %v8579, %v1032
      %v8634 = vmul.f32 %v8580, %v1037
      %v8635 = vmul.f32 %v8581, %v1042
      %v8636 = vmul.f32 %v8582, %v1047
      %v8637 = vmul.f32 %v8583, %v1052
      %v8638 = vmul.f32 %v8584, %v1057
      %v8639 = vmul.f32 %v8585, %v1062
      %v8640 = vmul.f32 %v8586, %v1067
      %v8641 = vmul.f32 %v8587, %v1072
      %v8642 = vmul.f32 %v8588, %v1077
      %v8643 = vmul.f32 %v8589, %v1082
      %v8644 = vmul.f32 %v8590, %v1087
      %v8645 = vmul.f32 %v8591, %v1092
      %v8646 = vmul.f32 %v8592, %v1097
      %v8647 = vmul.f32 %v8593, %v1102
      %v8648 = vmul.f32 %v8594, %v1107
      %v8649 = vmul.f32 %v8595, %v1112
      %v8650 = vmul.f32 %v8596, %v1117
      %v8651 = vmul.f32 %v8597, %v1122
      %v8652 = vmul.f32 %v8598, %v1127
      %v8653 = vmul.f32 %v8599, %v1132
      %v8654 = vmul.f32 %v8600, %v1137
      %v8655 = vmul.f32 %v8601, %v1142
      %v8656 = vmul.f32 %v8602, %v1147
      %v8657 = vmul.f32 %v8603, %v1152
      %v8658 = vadd.f32 %v8604, %v8605
      %v8659 = vadd.f32 %v8658, %v8606
      %v8660 = vadd.f32 %v8659, %v8607
      %v8661 = vadd.f32 %v8660, %v8608
      %v8662 = vadd.f32 %v8661, %v8609
      %v8663 = vadd.f32 %v8662, %v8610
      %v8664 = vadd.f32 %v8663, %v8611
      %v8665 = vadd.f32 %v8664, %v8612
      %v8666 = vadd.f32 %v8665, %v8613
      %v8667 = vadd.f32 %v8666, %v8614
      %v8668 = vadd.f32 %v8667, %v8615
      %v8669 = vadd.f32 %v8668, %v8616
      %v8670 = vadd.f32 %v8669, %v8617
      %v8671 = vadd.f32 %v8670, %v8618
      %v8672 = vadd.f32 %v8671, %v8619
      %v8673 = vadd.f32 %v8672, %v8620
      %v8674 = vadd.f32 %v8673, %v8621
      %v8675 = vadd.f32 %v8674, %v8622
      %v8676 = vadd.f32 %v8675, %v8623
      %v8677 = vadd.f32 %v8676, %v8624
      %v8678 = vadd.f32 %v8677, %v8625
      %v8679 = vadd.f32 %v8678, %v8626
      %v8680 = vadd.f32 %v8679, %v8627
      %v8681 = vadd.f32 %v8680, %v8628
      %v8682 = vadd.f32 %v8681, %v8629
      %v8683 = vadd.f32 %v8682, %v8630
      %v8684 = vadd.f32 %v8683, %v8631
      %v8685 = vadd.f32 %v8684, %v8632
      %v8686 = vadd.f32 %v8685, %v8633
      %v8687 = vadd.f32 %v8686, %v8634
      %v8688 = vadd.f32 %v8687, %v8635
      %v8689 = vadd.f32 %v8688, %v8636
      %v8690 = vadd.f32 %v8689, %v8637
      %v8691 = vadd.f32 %v8690, %v8638
      %v8692 = vadd.f32 %v8691, %v8639
      %v8693 = vadd.f32 %v8692, %v8640
      %v8694 = vadd.f32 %v8693, %v8641
      %v8695 = vadd.f32 %v8694, %v8642
      %v8696 = vadd.f32 %v8695, %v8643
      %v8697 = vadd.f32 %v8696, %v8644
      %v8698 = vadd.f32 %v8697, %v8645
      %v8699 = vadd.f32 %v8698, %v8646
      %v8700 = vadd.f32 %v8699, %v8647
      %v8701 = vadd.f32 %v8700, %v8648
      %v8702 = vadd.f32 %v8701, %v8649
      %v8703 = vadd.f32 %v8702, %v8650
      %v8704 = vadd.f32 %v8703, %v8651
      %v8705 = vadd.f32 %v8704, %v8652
      %v8706 = vadd.f32 %v8705, %v8653
      %v8707 = vadd.f32 %v8706, %v8654
      %v8708 = vadd.f32 %v8707, %v8655
      %v8709 = vadd.f32 %v8708, %v8656
      %v8710 = vadd.f32 %v8709, %v8657
      %v8711 = vrot.slane %v8710, 4
      %v8712 = vadd.f32 %v8710, %v8711
      %v8713 = vrot.slane %v8712, 2
      %v8714 = vadd.f32 %v8712, %v8713
      %v8715 = vrot.slane %v8714, 1
      %v8716 = vadd.f32 %v8714, %v8715
      %v8717 = vmul.f32 %v8604, %v8550
      %v8718 = vmul.f32 %v8605, %v8551
      %v8719 = vmul.f32 %v8606, %v8552
      %v8720 = vmul.f32 %v8607, %v8553
      %v8721 = vmul.f32 %v8608, %v8554
      %v8722 = vmul.f32 %v8609, %v8555
      %v8723 = vmul.f32 %v8610, %v8556
      %v8724 = vmul.f32 %v8611, %v8557
      %v8725 = vmul.f32 %v8612, %v8558
      %v8726 = vmul.f32 %v8613, %v8559
      %v8727 = vmul.f32 %v8614, %v8560
      %v8728 = vmul.f32 %v8615, %v8561
      %v8729 = vmul.f32 %v8616, %v8562
      %v8730 = vmul.f32 %v8617, %v8563
      %v8731 = vmul.f32 %v8618, %v8564
      %v8732 = vmul.f32 %v8619, %v8565
      %v8733 = vmul.f32 %v8620, %v8566
      %v8734 = vmul.f32 %v8621, %v8567
      %v8735 = vmul.f32 %v8622, %v8568
      %v8736 = vmul.f32 %v8623, %v8569
      %v8737 = vmul.f32 %v8624, %v8570
      %v8738 = vmul.f32 %v8625, %v8571
      %v8739 = vmul.f32 %v8626, %v8572
      %v8740 = vmul.f32 %v8627, %v8573
      %v8741 = vmul.f32 %v8628, %v8574
      %v8742 = vmul.f32 %v8629, %v8575
      %v8743 = vmul.f32 %v8630, %v8576
      %v8744 = vmul.f32 %v8631, %v8577
      %v8745 = vmul.f32 %v8632, %v8578
      %v8746 = vmul.f32 %v8633, %v8579
      %v8747 = vmul.f32 %v8634, %v8580
      %v8748 = vmul.f32 %v8635, %v8581
      %v8749 = vmul.f32 %v8636, %v8582
      %v8750 = vmul.f32 %v8637, %v8583
      %v8751 = vmul.f32 %v8638, %v8584
      %v8752 = vmul.f32 %v8639, %v8585
      %v8753 = vmul.f32 %v8640, %v8586
      %v8754 = vmul.f32 %v8641, %v8587
      %v8755 = vmul.f32 %v8642, %v8588
      %v8756 = vmul.f32 %v8643, %v8589
      %v8757 = vmul.f32 %v8644, %v8590
      %v8758 = vmul.f32 %v8645, %v8591
      %v8759 = vmul.f32 %v8646, %v8592
      %v8760 = vmul.f32 %v8647, %v8593
      %v8761 = vmul.f32 %v8648, %v8594
      %v8762 = vmul.f32 %v8649, %v8595
      %v8763 = vmul.f32 %v8650, %v8596
      %v8764 = vmul.f32 %v8651, %v8597
      %v8765 = vmul.f32 %v8652, %v8598
      %v8766 = vmul.f32 %v8653, %v8599
      %v8767 = vmul.f32 %v8654, %v8600
      %v8768 = vmul.f32 %v8655, %v8601
      %v8769 = vmul.f32 %v8656, %v8602
      %v8770 = vmul.f32 %v8657, %v8603
      %v8771 = vadd.f32 %v8717, %v8718
      %v8772 = vadd.f32 %v8771, %v8719
      %v8773 = vadd.f32 %v8772, %v8720
      %v8774 = vadd.f32 %v8773, %v8721
      %v8775 = vadd.f32 %v8774, %v8722
      %v8776 = vadd.f32 %v8775, %v8723
      %v8777 = vadd.f32 %v8776, %v8724
      %v8778 = vadd.f32 %v8777, %v8725
      %v8779 = vadd.f32 %v8778, %v8726
      %v8780 = vadd.f32 %v8779, %v8727
      %v8781 = vadd.f32 %v8780, %v8728
      %v8782 = vadd.f32 %v8781, %v8729
      %v8783 = vadd.f32 %v8782, %v8730
      %v8784 = vadd.f32 %v8783, %v8731
      %v8785 = vadd.f32 %v8784, %v8732
      %v8786 = vadd.f32 %v8785, %v8733
      %v8787 = vadd.f32 %v8786, %v8734
      %v8788 = vadd.f32 %v8787, %v8735
      %v8789 = vadd.f32 %v8788, %v8736
      %v8790 = vadd.f32 %v8789, %v8737
      %v8791 = vadd.f32 %v8790, %v8738
      %v8792 = vadd.f32 %v8791, %v8739
      %v8793 = vadd.f32 %v8792, %v8740
      %v8794 = vadd.f32 %v8793, %v8741
      %v8795 = vadd.f32 %v8794, %v8742
      %v8796 = vadd.f32 %v8795, %v8743
      %v8797 = vadd.f32 %v8796, %v8744
      %v8798 = vadd.f32 %v8797, %v8745
      %v8799 = vadd.f32 %v8798, %v8746
      %v8800 = vadd.f32 %v8799, %v8747
      %v8801 = vadd.f32 %v8800, %v8748
      %v8802 = vadd.f32 %v8801, %v8749
      %v8803 = vadd.f32 %v8802, %v8750
      %v8804 = vadd.f32 %v8803, %v8751
      %v8805 = vadd.f32 %v8804, %v8752
      %v8806 = vadd.f32 %v8805, %v8753
      %v8807 = vadd.f32 %v8806, %v8754
      %v8808 = vadd.f32 %v8807, %v8755
      %v8809 = vadd.f32 %v8808, %v8756
      %v8810 = vadd.f32 %v8809, %v8757
      %v8811 = vadd.f32 %v8810, %v8758
      %v8812 = vadd.f32 %v8811, %v8759
      %v8813 = vadd.f32 %v8812, %v8760
      %v8814 = vadd.f32 %v8813, %v8761
      %v8815 = vadd.f32 %v8814, %v8762
      %v8816 = vadd.f32 %v8815, %v8763
      %v8817 = vadd.f32 %v8816, %v8764
      %v8818 = vadd.f32 %v8817, %v8765
      %v8819 = vadd.f32 %v8818, %v8766
      %v8820 = vadd.f32 %v8819, %v8767
      %v8821 = vadd.f32 %v8820, %v8768
      %v8822 = vadd.f32 %v8821, %v8769
      %v8823 = vadd.f32 %v8822, %v8770
      %v8824 = vrot.slane %v8823, 4
      %v8825 = vadd.f32 %v8823, %v8824
      %v8826 = vrot.slane %v8825, 2
      %v8827 = vadd.f32 %v8825, %v8826
      %v8828 = vrot.slane %v8827, 1
      %v8829 = vadd.f32 %v8827, %v8828
      %v8830 = vsel %vm1380, %v8716, %v8829
      %8831 = vmatprep.subr.mxu0 0.0
      %8832 = vmatpush1.msra.mxu0 %v403
      %8833 = vmatprep.subr.mxu0 0.0
      %8834 = vmatpush1.msra.mxu0 %v402
      %8835 = vmatprep.subr.mxu0 0.0
      %8836 = vmatpush1.msra.mxu0 %v401
      %8837 = vmatprep.subr.mxu0 0.0
      %8838 = vmatpush1.msra.mxu0 %v400
      %8839 = vmatprep.subr.mxu0 0.0
      %8840 = vmatpush1.msra.mxu0 %v399
      %8841 = vmatprep.subr.mxu0 0.0
      %8842 = vmatpush1.msra.mxu0 %v398
      %8843 = vmatprep.subr.mxu0 0.0
      %8844 = vmatpush1.msra.mxu0 %v397
      %8845 = vmatprep.subr.mxu0 0.0
      %8846 = vmatpush1.msra.mxu0 %v396
      %8847 = vmatprep.subr.mxu0 0.0
      %8848 = vmatpush1.msra.mxu0 %v395
      %8849 = vmatprep.subr.mxu0 0.0
      %8850 = vmatpush1.msra.mxu0 %v394
      %8851 = vmatprep.subr.mxu0 0.0
      %8852 = vmatpush1.msra.mxu0 %v393
      %8853 = vmatprep.subr.mxu0 0.0
      %8854 = vmatpush1.msra.mxu0 %v392
      %8855 = vmatprep.subr.mxu0 0.0
      %8856 = vmatpush1.msra.mxu0 %v391
      %8857 = vmatprep.subr.mxu0 0.0
      %8858 = vmatpush1.msra.mxu0 %v390
      %8859 = vmatprep.subr.mxu0 0.0
      %8860 = vmatpush1.msra.mxu0 %v389
      %8861 = vmatprep.subr.mxu0 0.0
      %8862 = vmatpush1.msra.mxu0 %v388
      %8863 = vmatprep.subr.mxu0 0.0
      %8864 = vmatpush2.msra.mxu0 0.0
      %8865 = vmatprep.subr.mxu0 0.0
      %8866 = vmatpush2.msra.mxu0 0.0
      %8867 = vmatprep.subr.mxu0 0.0
      %8868 = vmatpush2.msra.mxu0 0.0
      %8869 = vmatprep.subr.mxu0 0.0
      %8870 = vmatpush2.msra.mxu0 0.0
      %8871 = vmatprep.subr.mxu0 0.0
      %8872 = vmatpush2.msra.mxu0 0.0
      %8873 = vmatprep.subr.mxu0 0.0
      %8874 = vmatpush2.msra.mxu0 0.0
      %8875 = vmatprep.subr.mxu0 0.0
      %8876 = vmatpush2.msra.mxu0 0.0
      %8877 = vmatprep.subr.mxu0 0.0
      %8878 = vmatpush2.msra.mxu0 0.0
      %8879 = vmatprep.subr.mxu0 0.0
      %8880 = vmatpush2.msra.mxu0 0.0
      %8881 = vmatprep.subr.mxu0 0.0
      %8882 = vmatpush2.msra.mxu0 0.0
      %8883 = vmatprep.subr.mxu0 0.0
      %8884 = vmatpush2.msra.mxu0 0.0
      %8885 = vmatprep.subr.mxu0 0.0
      %8886 = vmatpush2.msra.mxu0 0.0
      %8887 = vmatprep.subr.mxu0 0.0
      %8888 = vmatpush2.msra.mxu0 0.0
      %8889 = vmatprep.subr.mxu0 0.0
      %8890 = vmatpush2.msra.mxu0 0.0
      %8891 = vmatprep.subr.mxu0 0.0
      %8892 = vmatpush2.msra.mxu0 0.0
      %8893 = vmatprep.subr.mxu0 0.0
      %8894 = vmatpush2.msra.mxu0 0.0
      %8895 = vmatprep.mubr.f32.mxu0 0.0
      %8896 = vmatmul.mubr.f32.gmra.mxu0 %v8830
      %v8897 = vpop.f32.mrf.mxu0
      %v8898 = vadd.f32 0.0, %v8897
      %v8899 = vpop.f32.mrf.mxu0
      %8900 = vdwg.mxu0
      %v8901 = vmul.f32 %v8898, 0.001953125
      %v8902 = vmul.f32 %v8901, %v8901
      %v8904 = vrot.slane %v8902, 7
      %v8906 = vsub.f32 %v8901, %v8904
      %v8907 = vadd.f32 %v8906, 1e-05
      %v8908 = vrsqrt.pop %v8907
      %v8909 = vlaneseq
      %v8910 = vshrl.u32 %v8909, 7
      %v8911 = vsub.s32 0, %v8910
      %v8912 = vrot.slane %v8901, %v8911
      %v8913 = vsub.f32 %v8550, %v8912
      %v8914 = vsub.f32 %v8551, %v8912
      %v8915 = vsub.f32 %v8552, %v8912
      %v8916 = vsub.f32 %v8553, %v8912
      %v8917 = vsub.f32 %v8554, %v8912
      %v8918 = vsub.f32 %v8555, %v8912
      %v8919 = vsub.f32 %v8556, %v8912
      %v8920 = vsub.f32 %v8557, %v8912
      %v8921 = vsub.f32 %v8558, %v8912
      %v8922 = vsub.f32 %v8559, %v8912
      %v8923 = vsub.f32 %v8560, %v8912
      %v8924 = vsub.f32 %v8561, %v8912
      %v8925 = vsub.f32 %v8562, %v8912
      %v8926 = vsub.f32 %v8563, %v8912
      %v8927 = vsub.f32 %v8564, %v8912
      %v8928 = vsub.f32 %v8565, %v8912
      %v8929 = vsub.f32 %v8566, %v8912
      %v8930 = vsub.f32 %v8567, %v8912
      %v8931 = vsub.f32 %v8568, %v8912
      %v8932 = vsub.f32 %v8569, %v8912
      %v8933 = vsub.f32 %v8570, %v8912
      %v8934 = vsub.f32 %v8571, %v8912
      %v8935 = vsub.f32 %v8572, %v8912
      %v8936 = vsub.f32 %v8573, %v8912
      %v8937 = vsub.f32 %v8574, %v8912
      %v8938 = vsub.f32 %v8575, %v8912
      %v8939 = vsub.f32 %v8576, %v8912
      %v8940 = vsub.f32 %v8577, %v8912
      %v8941 = vsub.f32 %v8578, %v8912
      %v8942 = vsub.f32 %v8579, %v8912
      %v8943 = vsub.f32 %v8580, %v8912
      %v8944 = vsub.f32 %v8581, %v8912
      %v8945 = vsub.f32 %v8582, %v8912
      %v8946 = vsub.f32 %v8583, %v8912
      %v8947 = vsub.f32 %v8584, %v8912
      %v8948 = vsub.f32 %v8585, %v8912
      %v8949 = vsub.f32 %v8586, %v8912
      %v8950 = vsub.f32 %v8587, %v8912
      %v8951 = vsub.f32 %v8588, %v8912
      %v8952 = vsub.f32 %v8589, %v8912
      %v8953 = vsub.f32 %v8590, %v8912
      %v8954 = vsub.f32 %v8591, %v8912
      %v8955 = vsub.f32 %v8592, %v8912
      %v8956 = vsub.f32 %v8593, %v8912
      %v8957 = vsub.f32 %v8594, %v8912
      %v8958 = vsub.f32 %v8595, %v8912
      %v8959 = vsub.f32 %v8596, %v8912
      %v8960 = vsub.f32 %v8597, %v8912
      %v8961 = vsub.f32 %v8598, %v8912
      %v8962 = vsub.f32 %v8599, %v8912
      %v8963 = vsub.f32 %v8600, %v8912
      %v8964 = vmul.f32 %v8908, %v8545
      %v8965 = vlaneseq
      %v8966 = vshrl.u32 %v8965, 7
      %v8967 = vsub.s32 1, %v8966
      %v8968 = vrot.slane %v8964, %v8967
      %v8969 = vmul.f32 %v8913, %v8968
      %v8970 = vmul.f32 %v8914, %v8968
      %v8971 = vmul.f32 %v8915, %v8968
      %v8972 = vmul.f32 %v8916, %v8968
      %v8973 = vmul.f32 %v8917, %v8968
      %v8974 = vmul.f32 %v8918, %v8968
      %v8975 = vmul.f32 %v8919, %v8968
      %v8976 = vmul.f32 %v8920, %v8968
      %v8977 = vmul.f32 %v8921, %v8968
      %v8978 = vmul.f32 %v8922, %v8968
      %v8979 = vmul.f32 %v8923, %v8968
      %v8980 = vmul.f32 %v8924, %v8968
      %v8981 = vmul.f32 %v8925, %v8968
      %v8982 = vmul.f32 %v8926, %v8968
      %v8983 = vmul.f32 %v8927, %v8968
      %v8984 = vmul.f32 %v8928, %v8968
      %v8985 = vmul.f32 %v8929, %v8968
      %v8986 = vmul.f32 %v8930, %v8968
      %v8987 = vmul.f32 %v8931, %v8968
      %v8988 = vmul.f32 %v8932, %v8968
      %v8989 = vmul.f32 %v8933, %v8968
      %v8990 = vmul.f32 %v8934, %v8968
      %v8991 = vmul.f32 %v8935, %v8968
      %v8992 = vmul.f32 %v8936, %v8968
      %v8993 = vmul.f32 %v8937, %v8968
      %v8994 = vmul.f32 %v8938, %v8968
      %v8995 = vmul.f32 %v8939, %v8968
      %v8996 = vmul.f32 %v8940, %v8968
      %v8997 = vmul.f32 %v8941, %v8968
      %v8998 = vmul.f32 %v8942, %v8968
      %v8999 = vmul.f32 %v8943, %v8968
      %v9000 = vmul.f32 %v8944, %v8968
      %v9001 = vmul.f32 %v8945, %v8968
      %v9002 = vmul.f32 %v8946, %v8968
      %v9003 = vmul.f32 %v8947, %v8968
      %v9004 = vmul.f32 %v8948, %v8968
      %v9005 = vmul.f32 %v8949, %v8968
      %v9006 = vmul.f32 %v8950, %v8968
      %v9007 = vmul.f32 %v8951, %v8968
      %v9008 = vmul.f32 %v8952, %v8968
      %v9009 = vmul.f32 %v8953, %v8968
      %v9010 = vmul.f32 %v8954, %v8968
      %v9011 = vmul.f32 %v8955, %v8968
      %v9012 = vmul.f32 %v8956, %v8968
      %v9013 = vmul.f32 %v8957, %v8968
      %v9014 = vmul.f32 %v8958, %v8968
      %v9015 = vmul.f32 %v8959, %v8968
      %v9016 = vmul.f32 %v8960, %v8968
      %v9017 = vmul.f32 %v8961, %v8968
      %v9018 = vmul.f32 %v8962, %v8968
      %v9019 = vmul.f32 %v8963, %v8968
      %v9020 = vlaneseq
      %v9021 = vshrl.u32 %v9020, 7
      %v9022 = vsub.s32 2, %v9021
      %v9023 = vrot.slane %v8545, %v9022
      %v9024 = vadd.f32 %v8969, %v9023
      %v9025 = vadd.f32 %v8970, %v9023
      %v9026 = vadd.f32 %v8971, %v9023
      %v9027 = vadd.f32 %v8972, %v9023
      %v9028 = vadd.f32 %v8973, %v9023
      %v9029 = vadd.f32 %v8974, %v9023
      %v9030 = vadd.f32 %v8975, %v9023
      %v9031 = vadd.f32 %v8976, %v9023
      %v9032 = vadd.f32 %v8977, %v9023
      %v9033 = vadd.f32 %v8978, %v9023
      %v9034 = vadd.f32 %v8979, %v9023
      %v9035 = vadd.f32 %v8980, %v9023
      %v9036 = vadd.f32 %v8981, %v9023
      %v9037 = vadd.f32 %v8982, %v9023
      %v9038 = vadd.f32 %v8983, %v9023
      %v9039 = vadd.f32 %v8984, %v9023
      %v9040 = vadd.f32 %v8985, %v9023
      %v9041 = vadd.f32 %v8986, %v9023
      %v9042 = vadd.f32 %v8987, %v9023
      %v9043 = vadd.f32 %v8988, %v9023
      %v9044 = vadd.f32 %v8989, %v9023
      %v9045 = vadd.f32 %v8990, %v9023
      %v9046 = vadd.f32 %v8991, %v9023
      %v9047 = vadd.f32 %v8992, %v9023
      %v9048 = vadd.f32 %v8993, %v9023
      %v9049 = vadd.f32 %v8994, %v9023
      %v9050 = vadd.f32 %v8995, %v9023
      %v9051 = vadd.f32 %v8996, %v9023
      %v9052 = vadd.f32 %v8997, %v9023
      %v9053 = vadd.f32 %v8998, %v9023
      %v9054 = vadd.f32 %v8999, %v9023
      %v9055 = vadd.f32 %v9000, %v9023
      %v9056 = vadd.f32 %v9001, %v9023
      %v9057 = vadd.f32 %v9002, %v9023
      %v9058 = vadd.f32 %v9003, %v9023
      %v9059 = vadd.f32 %v9004, %v9023
      %v9060 = vadd.f32 %v9005, %v9023
      %v9061 = vadd.f32 %v9006, %v9023
      %v9062 = vadd.f32 %v9007, %v9023
      %v9063 = vadd.f32 %v9008, %v9023
      %v9064 = vadd.f32 %v9009, %v9023
      %v9065 = vadd.f32 %v9010, %v9023
      %v9066 = vadd.f32 %v9011, %v9023
      %v9067 = vadd.f32 %v9012, %v9023
      %v9068 = vadd.f32 %v9013, %v9023
      %v9069 = vadd.f32 %v9014, %v9023
      %v9070 = vadd.f32 %v9015, %v9023
      %v9071 = vadd.f32 %v9016, %v9023
      %v9072 = vadd.f32 %v9017, %v9023
      %v9073 = vadd.f32 %v9018, %v9023
      %v9074 = vadd.f32 %v9019, %v9023
      %v9075 = vmul.f32 %v9024, 0.5
      %v9076 = vmul.f32 %v9025, 0.5
      %v9077 = vmul.f32 %v9026, 0.5
      %v9078 = vmul.f32 %v9027, 0.5
      %v9079 = vmul.f32 %v9028, 0.5
      %v9080 = vmul.f32 %v9029, 0.5
      %v9081 = vmul.f32 %v9030, 0.5
      %v9082 = vmul.f32 %v9031, 0.5
      %v9083 = vmul.f32 %v9032, 0.5
      %v9084 = vmul.f32 %v9033, 0.5
      %v9085 = vmul.f32 %v9034, 0.5
      %v9086 = vmul.f32 %v9035, 0.5
      %v9087 = vmul.f32 %v9036, 0.5
      %v9088 = vmul.f32 %v9037, 0.5
      %v9089 = vmul.f32 %v9038, 0.5
      %v9090 = vmul.f32 %v9039, 0.5
      %v9091 = vmul.f32 %v9040, 0.5
      %v9092 = vmul.f32 %v9041, 0.5
      %v9093 = vmul.f32 %v9042, 0.5
      %v9094 = vmul.f32 %v9043, 0.5
      %v9095 = vmul.f32 %v9044, 0.5
      %v9096 = vmul.f32 %v9045, 0.5
      %v9097 = vmul.f32 %v9046, 0.5
      %v9098 = vmul.f32 %v9047, 0.5
      %v9099 = vmul.f32 %v9048, 0.5
      %v9100 = vmul.f32 %v9049, 0.5
      %v9101 = vmul.f32 %v9050, 0.5
      %v9102 = vmul.f32 %v9051, 0.5
      %v9103 = vmul.f32 %v9052, 0.5
      %v9104 = vmul.f32 %v9053, 0.5
      %v9105 = vmul.f32 %v9054, 0.5
      %v9106 = vmul.f32 %v9055, 0.5
      %v9107 = vmul.f32 %v9056, 0.5
      %v9108 = vmul.f32 %v9057, 0.5
      %v9109 = vmul.f32 %v9058, 0.5
      %v9110 = vmul.f32 %v9059, 0.5
      %v9111 = vmul.f32 %v9060, 0.5
      %v9112 = vmul.f32 %v9061, 0.5
      %v9113 = vmul.f32 %v9062, 0.5
      %v9114 = vmul.f32 %v9063, 0.5
      %v9115 = vmul.f32 %v9064, 0.5
      %v9116 = vmul.f32 %v9065, 0.5
      %v9117 = vmul.f32 %v9066, 0.5
      %v9118 = vmul.f32 %v9067, 0.5
      %v9119 = vmul.f32 %v9068, 0.5
      %v9120 = vmul.f32 %v9069, 0.5
      %v9121 = vmul.f32 %v9070, 0.5
      %v9122 = vmul.f32 %v9071, 0.5
      %v9123 = vmul.f32 %v9072, 0.5
      %v9124 = vmul.f32 %v9073, 0.5
      %v9125 = vmul.f32 %v9074, 0.5
      %v9126 = vmul.f32 %v9024, 0.044715
      %v9127 = vmul.f32 %v9025, 0.044715
      %v9128 = vmul.f32 %v9026, 0.044715
      %v9129 = vmul.f32 %v9027, 0.044715
      %v9130 = vmul.f32 %v9028, 0.044715
      %v9131 = vmul.f32 %v9029, 0.044715
      %v9132 = vmul.f32 %v9030, 0.044715
      %v9133 = vmul.f32 %v9031, 0.044715
      %v9134 = vmul.f32 %v9032, 0.044715
      %v9135 = vmul.f32 %v9033, 0.044715
      %v9136 = vmul.f32 %v9034, 0.044715
      %v9137 = vmul.f32 %v9035, 0.044715
      %v9138 = vmul.f32 %v9036, 0.044715
      %v9139 = vmul.f32 %v9037, 0.044715
      %v9140 = vmul.f32 %v9038, 0.044715
      %v9141 = vmul.f32 %v9039, 0.044715
      %v9142 = vmul.f32 %v9040, 0.044715
      %v9143 = vmul.f32 %v9041, 0.044715
      %v9144 = vmul.f32 %v9042, 0.044715
      %v9145 = vmul.f32 %v9043, 0.044715
      %v9146 = vmul.f32 %v9044, 0.044715
      %v9147 = vmul.f32 %v9045, 0.044715
      %v9148 = vmul.f32 %v9046, 0.044715
      %v9149 = vmul.f32 %v9047, 0.044715
      %v9150 = vmul.f32 %v9048, 0.044715
      %v9151 = vmul.f32 %v9049, 0.044715
      %v9152 = vmul.f32 %v9050, 0.044715
      %v9153 = vmul.f32 %v9051, 0.044715
      %v9154 = vmul.f32 %v9052, 0.044715
      %v9155 = vmul.f32 %v9053, 0.044715
      %v9156 = vmul.f32 %v9054, 0.044715
      %v9157 = vmul.f32 %v9055, 0.044715
      %v9158 = vmul.f32 %v9056, 0.044715
      %v9159 = vmul.f32 %v9057, 0.044715
      %v9160 = vmul.f32 %v9058, 0.044715
      %v9161 = vmul.f32 %v9059, 0.044715
      %v9162 = vmul.f32 %v9060, 0.044715
      %v9163 = vmul.f32 %v9061, 0.044715
      %v9164 = vmul.f32 %v9062, 0.044715
      %v9165 = vmul.f32 %v9063, 0.044715
      %v9166 = vmul.f32 %v9064, 0.044715
      %v9167 = vmul.f32 %v9065, 0.044715
      %v9168 = vmul.f32 %v9066, 0.044715
      %v9169 = vmul.f32 %v9067, 0.044715
      %v9170 = vmul.f32 %v9068, 0.044715
      %v9171 = vmul.f32 %v9069, 0.044715
      %v9172 = vmul.f32 %v9070, 0.044715
      %v9173 = vmul.f32 %v9071, 0.044715
      %v9174 = vmul.f32 %v9072, 0.044715
      %v9175 = vmul.f32 %v9073, 0.044715
      %v9176 = vmul.f32 %v9074, 0.044715
      %v9177 = vmul.f32 %v9126, %v9024
      %v9178 = vmul.f32 %v9127, %v9025
      %v9179 = vmul.f32 %v9128, %v9026
      %v9180 = vmul.f32 %v9129, %v9027
      %v9181 = vmul.f32 %v9130, %v9028
      %v9182 = vmul.f32 %v9131, %v9029
      %v9183 = vmul.f32 %v9132, %v9030
      %v9184 = vmul.f32 %v9133, %v9031
      %v9185 = vmul.f32 %v9134, %v9032
      %v9186 = vmul.f32 %v9135, %v9033
      %v9187 = vmul.f32 %v9136, %v9034
      %v9188 = vmul.f32 %v9137, %v9035
      %v9189 = vmul.f32 %v9138, %v9036
      %v9190 = vmul.f32 %v9139, %v9037
      %v9191 = vmul.f32 %v9140, %v9038
      %v9192 = vmul.f32 %v9141, %v9039
      %v9193 = vmul.f32 %v9142, %v9040
      %v9194 = vmul.f32 %v9143, %v9041
      %v9195 = vmul.f32 %v9144, %v9042
      %v9196 = vmul.f32 %v9145, %v9043
      %v9197 = vmul.f32 %v9146, %v9044
      %v9198 = vmul.f32 %v9147, %v9045
      %v9199 = vmul.f32 %v9148, %v9046
      %v9200 = vmul.f32 %v9149, %v9047
      %v9201 = vmul.f32 %v9150, %v9048
      %v9202 = vmul.f32 %v9151, %v9049
      %v9203 = vmul.f32 %v9152, %v9050
      %v9204 = vmul.f32 %v9153, %v9051
      %v9205 = vmul.f32 %v9154, %v9052
      %v9206 = vmul.f32 %v9155, %v9053
      %v9207 = vmul.f32 %v9156, %v9054
      %v9208 = vmul.f32 %v9157, %v9055
      %v9209 = vmul.f32 %v9158, %v9056
      %v9210 = vmul.f32 %v9159, %v9057
      %v9211 = vmul.f32 %v9160, %v9058
      %v9212 = vmul.f32 %v9161, %v9059
      %v9213 = vmul.f32 %v9162, %v9060
      %v9214 = vmul.f32 %v9163, %v9061
      %v9215 = vmul.f32 %v9164, %v9062
      %v9216 = vmul.f32 %v9165, %v9063
      %v9217 = vmul.f32 %v9166, %v9064
      %v9218 = vmul.f32 %v9167, %v9065
      %v9219 = vmul.f32 %v9168, %v9066
      %v9220 = vmul.f32 %v9169, %v9067
      %v9221 = vmul.f32 %v9170, %v9068
      %v9222 = vmul.f32 %v9171, %v9069
      %v9223 = vmul.f32 %v9172, %v9070
      %v9224 = vmul.f32 %v9173, %v9071
      %v9225 = vmul.f32 %v9174, %v9072
      %v9226 = vmul.f32 %v9175, %v9073
      %v9227 = vmul.f32 %v9176, %v9074
      %v9228 = vmul.f32 %v9177, %v9024
      %v9229 = vmul.f32 %v9178, %v9025
      %v9230 = vmul.f32 %v9179, %v9026
      %v9231 = vmul.f32 %v9180, %v9027
      %v9232 = vmul.f32 %v9181, %v9028
      %v9233 = vmul.f32 %v9182, %v9029
      %v9234 = vmul.f32 %v9183, %v9030
      %v9235 = vmul.f32 %v9184, %v9031
      %v9236 = vmul.f32 %v9185, %v9032
      %v9237 = vmul.f32 %v9186, %v9033
      %v9238 = vmul.f32 %v9187, %v9034
      %v9239 = vmul.f32 %v9188, %v9035
      %v9240 = vmul.f32 %v9189, %v9036
      %v9241 = vmul.f32 %v9190, %v9037
      %v9242 = vmul.f32 %v9191, %v9038
      %v9243 = vmul.f32 %v9192, %v9039
      %v9244 = vmul.f32 %v9193, %v9040
      %v9245 = vmul.f32 %v9194, %v9041
      %v9246 = vmul.f32 %v9195, %v9042
      %v9247 = vmul.f32 %v9196, %v9043
      %v9248 = vmul.f32 %v9197, %v9044
      %v9249 = vmul.f32 %v9198, %v9045
      %v9250 = vmul.f32 %v9199, %v9046
      %v9251 = vmul.f32 %v9200, %v9047
      %v9252 = vmul.f32 %v9201, %v9048
      %v9253 = vmul.f32 %v9202, %v9049
      %v9254 = vmul.f32 %v9203, %v9050
      %v9255 = vmul.f32 %v9204, %v9051
      %v9256 = vmul.f32 %v9205, %v9052
      %v9257 = vmul.f32 %v9206, %v9053
      %v9258 = vmul.f32 %v9207, %v9054
      %v9259 = vmul.f32 %v9208, %v9055
      %v9260 = vmul.f32 %v9209, %v9056
      %v9261 = vmul.f32 %v9210, %v9057
      %v9262 = vmul.f32 %v9211, %v9058
      %v9263 = vmul.f32 %v9212, %v9059
      %v9264 = vmul.f32 %v9213, %v9060
      %v9265 = vmul.f32 %v9214, %v9061
      %v9266 = vmul.f32 %v9215, %v9062
      %v9267 = vmul.f32 %v9216, %v9063
      %v9268 = vmul.f32 %v9217, %v9064
      %v9269 = vmul.f32 %v9218, %v9065
      %v9270 = vmul.f32 %v9219, %v9066
      %v9271 = vmul.f32 %v9220, %v9067
      %v9272 = vmul.f32 %v9221, %v9068
      %v9273 = vmul.f32 %v9222, %v9069
      %v9274 = vmul.f32 %v9223, %v9070
      %v9275 = vmul.f32 %v9224, %v9071
      %v9276 = vmul.f32 %v9225, %v9072
      %v9277 = vmul.f32 %v9226, %v9073
      %v9278 = vmul.f32 %v9227, %v9074
      %v9279 = vadd.f32 %v9024, %v9228
      %v9280 = vadd.f32 %v9025, %v9229
      %v9281 = vadd.f32 %v9026, %v9230
      %v9282 = vadd.f32 %v9027, %v9231
      %v9283 = vadd.f32 %v9028, %v9232
      %v9284 = vadd.f32 %v9029, %v9233
      %v9285 = vadd.f32 %v9030, %v9234
      %v9286 = vadd.f32 %v9031, %v9235
      %v9287 = vadd.f32 %v9032, %v9236
      %v9288 = vadd.f32 %v9033, %v9237
      %v9289 = vadd.f32 %v9034, %v9238
      %v9290 = vadd.f32 %v9035, %v9239
      %v9291 = vadd.f32 %v9036, %v9240
      %v9292 = vadd.f32 %v9037, %v9241
      %v9293 = vadd.f32 %v9038, %v9242
      %v9294 = vadd.f32 %v9039, %v9243
      %v9295 = vadd.f32 %v9040, %v9244
      %v9296 = vadd.f32 %v9041, %v9245
      %v9297 = vadd.f32 %v9042, %v9246
      %v9298 = vadd.f32 %v9043, %v9247
      %v9299 = vadd.f32 %v9044, %v9248
      %v9300 = vadd.f32 %v9045, %v9249
      %v9301 = vadd.f32 %v9046, %v9250
      %v9302 = vadd.f32 %v9047, %v9251
      %v9303 = vadd.f32 %v9048, %v9252
      %v9304 = vadd.f32 %v9049, %v9253
      %v9305 = vadd.f32 %v9050, %v9254
      %v9306 = vadd.f32 %v9051, %v9255
      %v9307 = vadd.f32 %v9052, %v9256
      %v9308 = vadd.f32 %v9053, %v9257
      %v9309 = vadd.f32 %v9054, %v9258
      %v9310 = vadd.f32 %v9055, %v9259
      %v9311 = vadd.f32 %v9056, %v9260
      %v9312 = vadd.f32 %v9057, %v9261
      %v9313 = vadd.f32 %v9058, %v9262
      %v9314 = vadd.f32 %v9059, %v9263
      %v9315 = vadd.f32 %v9060, %v9264
      %v9316 = vadd.f32 %v9061, %v9265
      %v9317 = vadd.f32 %v9062, %v9266
      %v9318 = vadd.f32 %v9063, %v9267
      %v9319 = vadd.f32 %v9064, %v9268
      %v9320 = vadd.f32 %v9065, %v9269
      %v9321 = vadd.f32 %v9066, %v9270
      %v9322 = vadd.f32 %v9067, %v9271
      %v9323 = vadd.f32 %v9068, %v9272
      %v9324 = vadd.f32 %v9069, %v9273
      %v9325 = vadd.f32 %v9070, %v9274
      %v9326 = vadd.f32 %v9071, %v9275
      %v9327 = vadd.f32 %v9072, %v9276
      %v9328 = vadd.f32 %v9073, %v9277
      %v9329 = vadd.f32 %v9074, %v9278
      %v9330 = vmul.f32 %v9279, 0.7978846
      %v9331 = vmul.f32 %v9280, 0.7978846
      %v9332 = vmul.f32 %v9281, 0.7978846
      %v9333 = vmul.f32 %v9282, 0.7978846
      %v9334 = vmul.f32 %v9283, 0.7978846
      %v9335 = vmul.f32 %v9284, 0.7978846
      %v9336 = vmul.f32 %v9285, 0.7978846
      %v9337 = vmul.f32 %v9286, 0.7978846
      %v9338 = vmul.f32 %v9287, 0.7978846
      %v9339 = vmul.f32 %v9288, 0.7978846
      %v9340 = vmul.f32 %v9289, 0.7978846
      %v9341 = vmul.f32 %v9290, 0.7978846
      %v9342 = vmul.f32 %v9291, 0.7978846
      %v9343 = vmul.f32 %v9292, 0.7978846
      %v9344 = vmul.f32 %v9293, 0.7978846
      %v9345 = vmul.f32 %v9294, 0.7978846
      %v9346 = vmul.f32 %v9295, 0.7978846
      %v9347 = vmul.f32 %v9296, 0.7978846
      %v9348 = vmul.f32 %v9297, 0.7978846
      %v9349 = vmul.f32 %v9298, 0.7978846
      %v9350 = vmul.f32 %v9299, 0.7978846
      %v9351 = vmul.f32 %v9300, 0.7978846
      %v9352 = vmul.f32 %v9301, 0.7978846
      %v9353 = vmul.f32 %v9302, 0.7978846
      %v9354 = vmul.f32 %v9303, 0.7978846
      %v9355 = vmul.f32 %v9304, 0.7978846
      %v9356 = vmul.f32 %v9305, 0.7978846
      %v9357 = vmul.f32 %v9306, 0.7978846
      %v9358 = vmul.f32 %v9307, 0.7978846
      %v9359 = vmul.f32 %v9308, 0.7978846
      %v9360 = vmul.f32 %v9309, 0.7978846
      %v9361 = vmul.f32 %v9310, 0.7978846
      %v9362 = vmul.f32 %v9311, 0.7978846
      %v9363 = vmul.f32 %v9312, 0.7978846
      %v9364 = vmul.f32 %v9313, 0.7978846
      %v9365 = vmul.f32 %v9314, 0.7978846
      %v9366 = vmul.f32 %v9315, 0.7978846
      %v9367 = vmul.f32 %v9316, 0.7978846
      %v9368 = vmul.f32 %v9317, 0.7978846
      %v9369 = vmul.f32 %v9318, 0.7978846
      %v9370 = vmul.f32 %v9319, 0.7978846
      %v9371 = vmul.f32 %v9320, 0.7978846
      %v9372 = vmul.f32 %v9321, 0.7978846
      %v9373 = vmul.f32 %v9322, 0.7978846
      %v9374 = vmul.f32 %v9323, 0.7978846
      %v9375 = vmul.f32 %v9324, 0.7978846
      %v9376 = vmul.f32 %v9325, 0.7978846
      %v9377 = vmul.f32 %v9326, 0.7978846
      %v9378 = vmul.f32 %v9327, 0.7978846
      %v9379 = vmul.f32 %v9328, 0.7978846
      %v9380 = vmul.f32 %v9329, 0.7978846
      %v9381 = vtanh.pop %v9330
      %v9382 = vtanh.pop %v9331
      %v9383 = vtanh.pop %v9332
      %v9384 = vtanh.pop %v9333
      %v9385 = vtanh.pop %v9334
      %v9386 = vtanh.pop %v9335
      %v9387 = vtanh.pop %v9336
      %v9388 = vtanh.pop %v9337
      %v9389 = vtanh.pop %v9338
      %v9390 = vtanh.pop %v9339
      %v9391 = vtanh.pop %v9340
      %v9392 = vtanh.pop %v9341
      %v9393 = vtanh.pop %v9342
      %v9394 = vtanh.pop %v9343
      %v9395 = vtanh.pop %v9344
      %v9396 = vtanh.pop %v9345
      %v9397 = vtanh.pop %v9346
      %v9398 = vtanh.pop %v9347
      %v9399 = vtanh.pop %v9348
      %v9400 = vtanh.pop %v9349
      %v9401 = vtanh.pop %v9350
      %v9402 = vtanh.pop %v9351
      %v9403 = vtanh.pop %v9352
      %v9404 = vtanh.pop %v9353
      %v9405 = vtanh.pop %v9354
      %v9406 = vtanh.pop %v9355
      %v9407 = vtanh.pop %v9356
      %v9408 = vtanh.pop %v9357
      %v9409 = vtanh.pop %v9358
      %v9410 = vtanh.pop %v9359
      %v9411 = vtanh.pop %v9360
      %v9412 = vtanh.pop %v9361
      %v9413 = vtanh.pop %v9362
      %v9414 = vtanh.pop %v9363
      %v9415 = vtanh.pop %v9364
      %v9416 = vtanh.pop %v9365
      %v9417 = vtanh.pop %v9366
      %v9418 = vtanh.pop %v9367
      %v9419 = vtanh.pop %v9368
      %v9420 = vtanh.pop %v9369
      %v9421 = vtanh.pop %v9370
      %v9422 = vtanh.pop %v9371
      %v9423 = vtanh.pop %v9372
      %v9424 = vtanh.pop %v9373
      %v9425 = vtanh.pop %v9374
      %v9426 = vtanh.pop %v9375
      %v9427 = vtanh.pop %v9376
      %v9428 = vtanh.pop %v9377
      %v9429 = vtanh.pop %v9378
      %v9430 = vtanh.pop %v9379
      %v9431 = vtanh.pop %v9380
      %v9432 = vadd.f32 %v9381, 1.0
      %v9433 = vadd.f32 %v9382, 1.0
      %v9434 = vadd.f32 %v9383, 1.0
      %v9435 = vadd.f32 %v9384, 1.0
      %v9436 = vadd.f32 %v9385, 1.0
      %v9437 = vadd.f32 %v9386, 1.0
      %v9438 = vadd.f32 %v9387, 1.0
      %v9439 = vadd.f32 %v9388, 1.0
      %v9440 = vadd.f32 %v9389, 1.0
      %v9441 = vadd.f32 %v9390, 1.0
      %v9442 = vadd.f32 %v9391, 1.0
      %v9443 = vadd.f32 %v9392, 1.0
      %v9444 = vadd.f32 %v9393, 1.0
      %v9445 = vadd.f32 %v9394, 1.0
      %v9446 = vadd.f32 %v9395, 1.0
      %v9447 = vadd.f32 %v9396, 1.0
      %v9448 = vadd.f32 %v9397, 1.0
      %v9449 = vadd.f32 %v9398, 1.0
      %v9450 = vadd.f32 %v9399, 1.0
      %v9451 = vadd.f32 %v9400, 1.0
      %v9452 = vadd.f32 %v9401, 1.0
      %v9453 = vadd.f32 %v9402, 1.0
      %v9454 = vadd.f32 %v9403, 1.0
      %v9455 = vadd.f32 %v9404, 1.0
      %v9456 = vadd.f32 %v9405, 1.0
      %v9457 = vadd.f32 %v9406, 1.0
      %v9458 = vadd.f32 %v9407, 1.0
      %v9459 = vadd.f32 %v9408, 1.0
      %v9460 = vadd.f32 %v9409, 1.0
      %v9461 = vadd.f32 %v9410, 1.0
      %v9462 = vadd.f32 %v9411, 1.0
      %v9463 = vadd.f32 %v9412, 1.0
      %v9464 = vadd.f32 %v9413, 1.0
      %v9465 = vadd.f32 %v9414, 1.0
      %v9466 = vadd.f32 %v9415, 1.0
      %v9467 = vadd.f32 %v9416, 1.0
      %v9468 = vadd.f32 %v9417, 1.0
      %v9469 = vadd.f32 %v9418, 1.0
      %v9470 = vadd.f32 %v9419, 1.0
      %v9471 = vadd.f32 %v9420, 1.0
      %v9472 = vadd.f32 %v9421, 1.0
      %v9473 = vadd.f32 %v9422, 1.0
      %v9474 = vadd.f32 %v9423, 1.0
      %v9475 = vadd.f32 %v9424, 1.0
      %v9476 = vadd.f32 %v9425, 1.0
      %v9477 = vadd.f32 %v9426, 1.0
      %v9478 = vadd.f32 %v9427, 1.0
      %v9479 = vadd.f32 %v9428, 1.0
      %v9480 = vadd.f32 %v9429, 1.0
      %v9481 = vadd.f32 %v9430, 1.0
      %v9482 = vadd.f32 %v9431, 1.0
      %v9483 = vmul.f32 %v9075, %v9432
      %v9484 = vmul.f32 %v9076, %v9433
      %v9485 = vmul.f32 %v9077, %v9434
      %v9486 = vmul.f32 %v9078, %v9435
      %v9487 = vmul.f32 %v9079, %v9436
      %v9488 = vmul.f32 %v9080, %v9437
      %v9489 = vmul.f32 %v9081, %v9438
      %v9490 = vmul.f32 %v9082, %v9439
      %v9491 = vmul.f32 %v9083, %v9440
      %v9492 = vmul.f32 %v9084, %v9441
      %v9493 = vmul.f32 %v9085, %v9442
      %v9494 = vmul.f32 %v9086, %v9443
      %v9495 = vmul.f32 %v9087, %v9444
      %v9496 = vmul.f32 %v9088, %v9445
      %v9497 = vmul.f32 %v9089, %v9446
      %v9498 = vmul.f32 %v9090, %v9447
      %v9499 = vmul.f32 %v9091, %v9448
      %v9500 = vmul.f32 %v9092, %v9449
      %v9501 = vmul.f32 %v9093, %v9450
      %v9502 = vmul.f32 %v9094, %v9451
      %v9503 = vmul.f32 %v9095, %v9452
      %v9504 = vmul.f32 %v9096, %v9453
      %v9505 = vmul.f32 %v9097, %v9454
      %v9506 = vmul.f32 %v9098, %v9455
      %v9507 = vmul.f32 %v9099, %v9456
      %v9508 = vmul.f32 %v9100, %v9457
      %v9509 = vmul.f32 %v9101, %v9458
      %v9510 = vmul.f32 %v9102, %v9459
      %v9511 = vmul.f32 %v9103, %v9460
      %v9512 = vmul.f32 %v9104, %v9461
      %v9513 = vmul.f32 %v9105, %v9462
      %v9514 = vmul.f32 %v9106, %v9463
      %v9515 = vmul.f32 %v9107, %v9464
      %v9516 = vmul.f32 %v9108, %v9465
      %v9517 = vmul.f32 %v9109, %v9466
      %v9518 = vmul.f32 %v9110, %v9467
      %v9519 = vmul.f32 %v9111, %v9468
      %v9520 = vmul.f32 %v9112, %v9469
      %v9521 = vmul.f32 %v9113, %v9470
      %v9522 = vmul.f32 %v9114, %v9471
      %v9523 = vmul.f32 %v9115, %v9472
      %v9524 = vmul.f32 %v9116, %v9473
      %v9525 = vmul.f32 %v9117, %v9474
      %v9526 = vmul.f32 %v9118, %v9475
      %v9527 = vmul.f32 %v9119, %v9476
      %v9528 = vmul.f32 %v9120, %v9477
      %v9529 = vmul.f32 %v9121, %v9478
      %v9530 = vmul.f32 %v9122, %v9479
      %v9531 = vmul.f32 %v9123, %v9480
      %v9532 = vmul.f32 %v9124, %v9481
      %v9533 = vmul.f32 %v9125, %v9482
      %vm9582 = vcmask 1046528
      %v9583 = vrot.slane %v9483, 1
      %v9584 = vrot.slane %v9484, 1
      %v9585 = vsel %vm9582, %v9583, %v9584
      %v9586 = vrot.slane %v9485, 1
      %v9587 = vsel %vm9582, %v9584, %v9586
      %v9588 = vrot.slane %v9486, 1
      %v9589 = vsel %vm9582, %v9586, %v9588
      %v9590 = vrot.slane %v9487, 1
      %v9591 = vsel %vm9582, %v9588, %v9590
      %v9592 = vrot.slane %v9488, 1
      %v9593 = vsel %vm9582, %v9590, %v9592
      %v9594 = vrot.slane %v9489, 1
      %v9595 = vsel %vm9582, %v9592, %v9594
      %v9596 = vrot.slane %v9490, 1
      %v9597 = vsel %vm9582, %v9594, %v9596
      %v9598 = vrot.slane %v9491, 1
      %v9599 = vsel %vm9582, %v9596, %v9598
      %v9600 = vrot.slane %v9492, 1
      %v9601 = vsel %vm9582, %v9598, %v9600
      %v9602 = vrot.slane %v9493, 1
      %v9603 = vsel %vm9582, %v9600, %v9602
      %v9604 = vrot.slane %v9494, 1
      %v9605 = vsel %vm9582, %v9602, %v9604
      %v9606 = vrot.slane %v9495, 1
      %v9607 = vsel %vm9582, %v9604, %v9606
      %v9608 = vrot.slane %v9496, 1
      %v9609 = vsel %vm9582, %v9606, %v9608
      %v9610 = vrot.slane %v9497, 1
      %v9611 = vsel %vm9582, %v9608, %v9610
      %v9612 = vrot.slane %v9498, 1
      %v9613 = vsel %vm9582, %v9610, %v9612
      %v9614 = vrot.slane %v9499, 1
      %v9615 = vsel %vm9582, %v9612, %v9614
      %v9616 = vrot.slane %v9500, 1
      %v9617 = vsel %vm9582, %v9614, %v9616
      %v9618 = vrot.slane %v9501, 1
      %v9619 = vsel %vm9582, %v9616, %v9618
      %v9620 = vrot.slane %v9502, 1
      %v9621 = vsel %vm9582, %v9618, %v9620
      %v9622 = vrot.slane %v9503, 1
      %v9623 = vsel %vm9582, %v9620, %v9622
      %v9624 = vrot.slane %v9504, 1
      %v9625 = vsel %vm9582, %v9622, %v9624
      %v9626 = vrot.slane %v9505, 1
      %v9627 = vsel %vm9582, %v9624, %v9626
      %v9628 = vrot.slane %v9506, 1
      %v9629 = vsel %vm9582, %v9626, %v9628
      %v9630 = vrot.slane %v9507, 1
      %v9631 = vsel %vm9582, %v9628, %v9630
      %v9632 = vrot.slane %v9508, 1
      %v9633 = vsel %vm9582, %v9630, %v9632
      %v9634 = vrot.slane %v9509, 1
      %v9635 = vsel %vm9582, %v9632, %v9634
      %v9636 = vrot.slane %v9510, 1
      %v9637 = vsel %vm9582, %v9634, %v9636
      %v9638 = vrot.slane %v9511, 1
      %v9639 = vsel %vm9582, %v9636, %v9638
      %v9640 = vrot.slane %v9512, 1
      %v9641 = vsel %vm9582, %v9638, %v9640
      %v9642 = vrot.slane %v9513, 1
      %v9643 = vsel %vm9582, %v9640, %v9642
      %v9644 = vrot.slane %v9514, 1
      %v9645 = vsel %vm9582, %v9642, %v9644
      %v9646 = vrot.slane %v9515, 1
      %v9647 = vsel %vm9582, %v9644, %v9646
      %v9648 = vrot.slane %v9516, 1
      %v9649 = vsel %vm9582, %v9646, %v9648
      %v9650 = vrot.slane %v9517, 1
      %v9651 = vsel %vm9582, %v9648, %v9650
      %v9652 = vrot.slane %v9518, 1
      %v9653 = vsel %vm9582, %v9650, %v9652
      %v9654 = vrot.slane %v9519, 1
      %v9655 = vsel %vm9582, %v9652, %v9654
      %v9656 = vrot.slane %v9520, 1
      %v9657 = vsel %vm9582, %v9654, %v9656
      %v9658 = vrot.slane %v9521, 1
      %v9659 = vsel %vm9582, %v9656, %v9658
      %v9660 = vrot.slane %v9522, 1
      %v9661 = vsel %vm9582, %v9658, %v9660
      %v9662 = vrot.slane %v9523, 1
      %v9663 = vsel %vm9582, %v9660, %v9662
      %v9664 = vrot.slane %v9524, 1
      %v9665 = vsel %vm9582, %v9662, %v9664
      %v9666 = vrot.slane %v9525, 1
      %v9667 = vsel %vm9582, %v9664, %v9666
      %v9668 = vrot.slane %v9526, 1
      %v9669 = vsel %vm9582, %v9666, %v9668
      %v9670 = vrot.slane %v9527, 1
      %v9671 = vsel %vm9582, %v9668, %v9670
      %v9672 = vrot.slane %v9528, 1
      %v9673 = vsel %vm9582, %v9670, %v9672
      %v9674 = vrot.slane %v9529, 1
      %v9675 = vsel %vm9582, %v9672, %v9674
      %v9676 = vrot.slane %v9530, 1
      %v9677 = vsel %vm9582, %v9674, %v9676
      %v9725 = vmax.f32 %v9483, %v9585
      %v9726 = vmax.f32 %v9484, %v9587
      %v9727 = vmax.f32 %v9485, %v9589
      %v9728 = vmax.f32 %v9486, %v9591
      %v9729 = vmax.f32 %v9487, %v9593
      %v9730 = vmax.f32 %v9488, %v9595
      %v9731 = vmax.f32 %v9489, %v9597
      %v9732 = vmax.f32 %v9490, %v9599
      %v9733 = vmax.f32 %v9491, %v9601
      %v9734 = vmax.f32 %v9492, %v9603
      %v9735 = vmax.f32 %v9493, %v9605
      %v9736 = vmax.f32 %v9494, %v9607
      %v9737 = vmax.f32 %v9495, %v9609
      %v9738 = vmax.f32 %v9496, %v9611
      %v9739 = vmax.f32 %v9497, %v9613
      %v9740 = vmax.f32 %v9498, %v9615
      %v9741 = vmax.f32 %v9499, %v9617
      %v9742 = vmax.f32 %v9500, %v9619
      %v9743 = vmax.f32 %v9501, %v9621
      %v9744 = vmax.f32 %v9502, %v9623
      %v9745 = vmax.f32 %v9503, %v9625
      %v9746 = vmax.f32 %v9504, %v9627
      %v9747 = vmax.f32 %v9505, %v9629
      %v9748 = vmax.f32 %v9506, %v9631
      %v9749 = vmax.f32 %v9507, %v9633
      %v9750 = vmax.f32 %v9508, %v9635
      %v9751 = vmax.f32 %v9509, %v9637
      %v9752 = vmax.f32 %v9510, %v9639
      %v9753 = vmax.f32 %v9511, %v9641
      %v9754 = vmax.f32 %v9512, %v9643
      %v9755 = vmax.f32 %v9513, %v9645
      %v9756 = vmax.f32 %v9514, %v9647
      %v9757 = vmax.f32 %v9515, %v9649
      %v9758 = vmax.f32 %v9516, %v9651
      %v9759 = vmax.f32 %v9517, %v9653
      %v9760 = vmax.f32 %v9518, %v9655
      %v9761 = vmax.f32 %v9519, %v9657
      %v9762 = vmax.f32 %v9520, %v9659
      %v9763 = vmax.f32 %v9521, %v9661
      %v9764 = vmax.f32 %v9522, %v9663
      %v9765 = vmax.f32 %v9523, %v9665
      %v9766 = vmax.f32 %v9524, %v9667
      %v9767 = vmax.f32 %v9525, %v9669
      %v9768 = vmax.f32 %v9526, %v9671
      %v9769 = vmax.f32 %v9527, %v9673
      %v9770 = vmax.f32 %v9528, %v9675
      %v9771 = vmax.f32 %v9529, %v9677
      %v9775 = vrot.slane %v9531, 1
      %v9776 = vsel %vm9582, %v9676, %v9775
      %v9777 = vrot.slane %v9532, 1
      %v9778 = vsel %vm9582, %v9775, %v9777
      %v9779 = vrot.slane %v9533, 1
      %v9780 = vsel %vm9582, %v9777, %v9779
      %v9784 = vmax.f32 %v9530, %v9776
      %v9785 = vmax.f32 %v9531, %v9778
      %v9786 = vmax.f32 %v9532, %v9780
      %v9787 = vmax.f32 %v9725, %v9728
      %v9788 = vmax.f32 %v9726, %v9729
      %v9789 = vmax.f32 %v9727, %v9730
      %v9790 = vmax.f32 %v9728, %v9731
      %v9791 = vmax.f32 %v9729, %v9732
      %v9792 = vmax.f32 %v9730, %v9733
      %v9793 = vmax.f32 %v9731, %v9734
      %v9794 = vmax.f32 %v9732, %v9735
      %v9795 = vmax.f32 %v9733, %v9736
      %v9796 = vmax.f32 %v9734, %v9737
      %v9797 = vmax.f32 %v9735, %v9738
      %v9798 = vmax.f32 %v9736, %v9739
      %v9799 = vmax.f32 %v9737, %v9740
      %v9800 = vmax.f32 %v9738, %v9741
      %v9801 = vmax.f32 %v9739, %v9742
      %v9802 = vmax.f32 %v9740, %v9743
      %v9803 = vmax.f32 %v9741, %v9744
      %v9804 = vmax.f32 %v9742, %v9745
      %v9805 = vmax.f32 %v9743, %v9746
      %v9806 = vmax.f32 %v9744, %v9747
      %v9807 = vmax.f32 %v9745, %v9748
      %v9808 = vmax.f32 %v9746, %v9749
      %v9809 = vmax.f32 %v9747, %v9750
      %v9810 = vmax.f32 %v9748, %v9751
      %v9811 = vmax.f32 %v9749, %v9752
      %v9812 = vmax.f32 %v9750, %v9753
      %v9813 = vmax.f32 %v9751, %v9754
      %v9814 = vmax.f32 %v9752, %v9755
      %v9815 = vmax.f32 %v9753, %v9756
      %v9816 = vmax.f32 %v9754, %v9757
      %v9817 = vmax.f32 %v9755, %v9758
      %v9818 = vmax.f32 %v9756, %v9759
      %v9819 = vmax.f32 %v9757, %v9760
      %v9820 = vmax.f32 %v9758, %v9761
      %v9821 = vmax.f32 %v9759, %v9762
      %v9822 = vmax.f32 %v9760, %v9763
      %v9823 = vmax.f32 %v9761, %v9764
      %v9824 = vmax.f32 %v9762, %v9765
      %v9825 = vmax.f32 %v9763, %v9766
      %v9826 = vmax.f32 %v9764, %v9767
      %v9827 = vmax.f32 %v9765, %v9768
      %v9828 = vmax.f32 %v9766, %v9769
      %v9829 = vmax.f32 %v9767, %v9770
      %v9830 = vmax.f32 %v9768, %v9771
      %v9831 = vmax.f32 %v9769, %v9784
      %v9832 = vmax.f32 %v9770, %v9785
      %v9833 = vmax.f32 %v9771, %v9786
      %v9834 = vpack.c.bf16 %v9788, %v9787
      %v9835 = vpack.c.bf16 %v9790, %v9789
      %v9836 = vpack.c.bf16 %v9792, %v9791
      %v9837 = vpack.c.bf16 %v9794, %v9793
      %v9838 = vpack.c.bf16 %v9796, %v9795
      %v9839 = vpack.c.bf16 %v9798, %v9797
      %v9840 = vpack.c.bf16 %v9800, %v9799
      %v9841 = vpack.c.bf16 %v9802, %v9801
      %v9842 = vpack.c.bf16 %v9804, %v9803
      %v9843 = vpack.c.bf16 %v9806, %v9805
      %v9844 = vpack.c.bf16 %v9808, %v9807
      %v9845 = vpack.c.bf16 %v9810, %v9809
      %v9846 = vpack.c.bf16 %v9812, %v9811
      %v9847 = vpack.c.bf16 %v9814, %v9813
      %v9848 = vpack.c.bf16 %v9816, %v9815
      %v9849 = vpack.c.bf16 %v9818, %v9817
      %v9850 = vpack.c.bf16 %v9820, %v9819
      %v9851 = vpack.c.bf16 %v9822, %v9821
      %v9852 = vpack.c.bf16 %v9824, %v9823
      %v9853 = vpack.c.bf16 %v9826, %v9825
      %v9854 = vpack.c.bf16 %v9828, %v9827
      %v9855 = vpack.c.bf16 %v9830, %v9829
      %v9856 = vpack.c.bf16 %v9832, %v9831
      %v9857 = vpack.c.bf16 %v9833, %v9833
      %v9858 = vld [vmem:[%s6] sm:$0xff]
      %v9859 = vld [vmem:[%s6 + $0x8] sm:$0xf]
      %v9860 = vld [vmem:[%s6 + $0xc] sm:$0xff]
      %v9861 = vld [vmem:[%s6 + $0x14] sm:$0xf]
      %v9862 = vld [vmem:[%s6 + $0x18] sm:$0xff]
      %v9863 = vld [vmem:[%s6 + $0x20] sm:$0xf]
      %v9864 = vld [vmem:[%s6 + $0x24] sm:$0xff]
      %v9865 = vld [vmem:[%s6 + $0x2c] sm:$0xf]
      %v9866 = vld [vmem:[%s6 + $0x30] sm:$0xff]
      %v9867 = vld [vmem:[%s6 + $0x38] sm:$0xf]
      %v9868 = vld [vmem:[%s6 + $0x3c] sm:$0xff]
      %v9869 = vld [vmem:[%s6 + $0x44] sm:$0xf]
      %v9870 = vld [vmem:[%s6 + $0x48] sm:$0xff]
      %v9871 = vld [vmem:[%s6 + $0x50] sm:$0xf]
      %v9872 = vld [vmem:[%s6 + $0x54] sm:$0xff]
      %v9873 = vld [vmem:[%s6 + $0x5c] sm:$0xf]
      %v9890 = vunpack.c.l.b16 %v9858
      %v9891 = vunpack.c.h.b16 %v9858
      %v9892 = vunpack.c.l.b16 %v9859
      %v9893 = vunpack.c.l.b16 %v9860
      %v9894 = vunpack.c.h.b16 %v9860
      %v9895 = vunpack.c.l.b16 %v9861
      %v9896 = vunpack.c.l.b16 %v9862
      %v9897 = vunpack.c.h.b16 %v9862
      %v9898 = vunpack.c.l.b16 %v9863
      %v9899 = vunpack.c.l.b16 %v9864
      %v9900 = vunpack.c.h.b16 %v9864
      %v9901 = vunpack.c.l.b16 %v9865
      %v9902 = vunpack.c.l.b16 %v9866
      %v9903 = vunpack.c.h.b16 %v9866
      %v9904 = vunpack.c.l.b16 %v9867
      %v9905 = vunpack.c.l.b16 %v9868
      %v9906 = vunpack.c.h.b16 %v9868
      %v9907 = vunpack.c.l.b16 %v9869
      %v9908 = vunpack.c.l.b16 %v9870
      %v9909 = vunpack.c.h.b16 %v9870
      %v9910 = vunpack.c.l.b16 %v9871
      %v9911 = vunpack.c.l.b16 %v9872
      %v9912 = vunpack.c.h.b16 %v9872
      %v9913 = vunpack.c.l.b16 %v9873
      %v9914 = vpack.c.b16 %v9893, %v9890
      %v9915 = vpack.c.b16 %v9894, %v9891
      %v9916 = vpack.c.b16 %v9895, %v9892
      %v9917 = vpack.c.b16 %v9899, %v9896
      %v9918 = vpack.c.b16 %v9900, %v9897
      %v9919 = vpack.c.b16 %v9901, %v9898
      %v9920 = vpack.c.b16 %v9905, %v9902
      %v9921 = vpack.c.b16 %v9906, %v9903
      %v9922 = vpack.c.b16 %v9907, %v9904
      %v9923 = vpack.c.b16 %v9911, %v9908
      %v9924 = vpack.c.b16 %v9912, %v9909
      %v9925 = vpack.c.b16 %v9913, %v9910
      %vm9934 = vcmask 982016
      %v9936 = vsel %vm9934, %v9916, 0
      %v9939 = vsel %vm9934, %v9919, 0
      %v9942 = vsel %vm9934, %v9922, 0
      %v9945 = vsel %vm9934, %v9925, 0
      %vm9947 = vcmask 1043456
      %v9949 = vsel %vm9947, %v9857, 0
      %9951 = vmatprep.subr.bf16.mxu0 0
      %9952 = vmatpush1.bf16.msra.mxu0 %v9841
      %9953 = vmatprep.subr.bf16.mxu0 0
      %9954 = vmatpush1.bf16.msra.mxu0 %v9840
      %9955 = vmatprep.subr.bf16.mxu0 0
      %9956 = vmatpush1.bf16.msra.mxu0 %v9839
      %9957 = vmatprep.subr.bf16.mxu0 0
      %9958 = vmatpush1.bf16.msra.mxu0 %v9838
      %9959 = vmatprep.subr.bf16.mxu0 0
      %9960 = vmatpush1.bf16.msra.mxu0 %v9837
      %9961 = vmatprep.subr.bf16.mxu0 0
      %9962 = vmatpush1.bf16.msra.mxu0 %v9836
      %9963 = vmatprep.subr.bf16.mxu0 0
      %9964 = vmatpush1.bf16.msra.mxu0 %v9835
      %9965 = vmatprep.subr.bf16.mxu0 0
      %9966 = vmatpush1.bf16.msra.mxu0 %v9834
      %9967 = vmatprep.subr.bf16.mxu0 0
      %9968 = vmatpush2.bf16.msra.mxu0 %v9849
      %9969 = vmatprep.subr.bf16.mxu0 0
      %9970 = vmatpush2.bf16.msra.mxu0 %v9848
      %9971 = vmatprep.subr.bf16.mxu0 0
      %9972 = vmatpush2.bf16.msra.mxu0 %v9847
      %9973 = vmatprep.subr.bf16.mxu0 0
      %9974 = vmatpush2.bf16.msra.mxu0 %v9846
      %9975 = vmatprep.subr.bf16.mxu0 0
      %9976 = vmatpush2.bf16.msra.mxu0 %v9845
      %9977 = vmatprep.subr.bf16.mxu0 0
      %9978 = vmatpush2.bf16.msra.mxu0 %v9844
      %9979 = vmatprep.subr.bf16.mxu0 0
      %9980 = vmatpush2.bf16.msra.mxu0 %v9843
      %9981 = vmatprep.subr.bf16.mxu0 0
      %9982 = vmatpush2.bf16.msra.mxu0 %v9842
      %9983 = vmatprep.mubr.bf16.mxu0 %v9915
      %9984 = vmatmul.mubr.bf16.gmra.mxu0 %v9914
      %v9985 = vpop.f32.mrf.mxu0
      %v9986 = vadd.f32 0.0, %v9985
      %v9987 = vpop.f32.mrf.mxu0
      %v9988 = vpop.f32.mrf.mxu0
      %v9989 = vadd.f32 0.0, %v9988
      %v9990 = vpop.f32.mrf.mxu0
      %9991 = vmatprep.mubr.bf16.mxu0 %v9918
      %9992 = vmatmul.mubr.bf16.gmra.mxu0 %v9917
      %v9993 = vpop.f32.mrf.mxu0
      %v9994 = vadd.f32 0.0, %v9993
      %v9995 = vpop.f32.mrf.mxu0
      %v9996 = vpop.f32.mrf.mxu0
      %v9997 = vadd.f32 0.0, %v9996
      %v9998 = vpop.f32.mrf.mxu0
      %9999 = vmatprep.mubr.bf16.mxu0 %v9921
      %10000 = vmatmul.mubr.bf16.gmra.mxu0 %v9920
      %v10001 = vpop.f32.mrf.mxu0
      %v10002 = vadd.f32 0.0, %v10001
      %v10003 = vpop.f32.mrf.mxu0
      %v10004 = vpop.f32.mrf.mxu0
      %v10005 = vadd.f32 0.0, %v10004
      %v10006 = vpop.f32.mrf.mxu0
      %10007 = vmatprep.mubr.bf16.mxu0 %v9924
      %10008 = vmatmul.mubr.bf16.gmra.mxu0 %v9923
      %v10009 = vpop.f32.mrf.mxu0
      %v10010 = vadd.f32 0.0, %v10009
      %v10011 = vpop.f32.mrf.mxu0
      %v10012 = vpop.f32.mrf.mxu0
      %v10013 = vadd.f32 0.0, %v10012
      %v10014 = vpop.f32.mrf.mxu0
      %10015 = vdwg.mxu0
      %10016 = vmatprep.subr.bf16.mxu0 0
      %10017 = vmatpush1.bf16.msra.mxu0 %v9949
      %10018 = vmatprep.subr.bf16.mxu0 0
      %10019 = vmatpush1.bf16.msra.mxu0 %v9856
      %10020 = vmatprep.subr.bf16.mxu0 0
      %10021 = vmatpush1.bf16.msra.mxu0 %v9855
      %10022 = vmatprep.subr.bf16.mxu0 0
      %10023 = vmatpush1.bf16.msra.mxu0 %v9854
      %10024 = vmatprep.subr.bf16.mxu0 0
      %10025 = vmatpush1.bf16.msra.mxu0 %v9853
      %10026 = vmatprep.subr.bf16.mxu0 0
      %10027 = vmatpush1.bf16.msra.mxu0 %v9852
      %10028 = vmatprep.subr.bf16.mxu0 0
      %10029 = vmatpush1.bf16.msra.mxu0 %v9851
      %10030 = vmatprep.subr.bf16.mxu0 0
      %10031 = vmatpush1.bf16.msra.mxu0 %v9850
      %10032 = vmatprep.subr.bf16.mxu0 0
      %10033 = vmatpush2.bf16.msra.mxu0 0
      %10034 = vmatprep.subr.bf16.mxu0 0
      %10035 = vmatpush2.bf16.msra.mxu0 0
      %10036 = vmatprep.subr.bf16.mxu0 0
      %10037 = vmatpush2.bf16.msra.mxu0 0
      %10038 = vmatprep.subr.bf16.mxu0 0
      %10039 = vmatpush2.bf16.msra.mxu0 0
      %10040 = vmatprep.subr.bf16.mxu0 0
      %10041 = vmatpush2.bf16.msra.mxu0 0
      %10042 = vmatprep.subr.bf16.mxu0 0
      %10043 = vmatpush2.bf16.msra.mxu0 0
      %10044 = vmatprep.subr.bf16.mxu0 0
      %10045 = vmatpush2.bf16.msra.mxu0 0
      %10046 = vmatprep.subr.bf16.mxu0 0
      %10047 = vmatpush2.bf16.msra.mxu0 0
      %10048 = vmatprep.mubr.bf16.mxu0 0
      %10049 = vmatmul.mubr.bf16.gmra.mxu0 %v9936
      %v10050 = vpop.f32.mrf.mxu0
      %v10051 = vadd.f32 %v9986, %v10050
      %v10052 = vpop.f32.mrf.mxu0
      %v10053 = vpop.f32.mrf.mxu0
      %v10054 = vadd.f32 %v9989, %v10053
      %v10055 = vpop.f32.mrf.mxu0
      %10056 = vmatprep.mubr.bf16.mxu0 0
      %10057 = vmatmul.mubr.bf16.gmra.mxu0 %v9939
      %v10058 = vpop.f32.mrf.mxu0
      %v10059 = vadd.f32 %v9994, %v10058
      %v10060 = vpop.f32.mrf.mxu0
      %v10061 = vpop.f32.mrf.mxu0
      %v10062 = vadd.f32 %v9997, %v10061
      %v10063 = vpop.f32.mrf.mxu0
      %10064 = vmatprep.mubr.bf16.mxu0 0
      %10065 = vmatmul.mubr.bf16.gmra.mxu0 %v9942
      %v10066 = vpop.f32.mrf.mxu0
      %v10067 = vadd.f32 %v10002, %v10066
      %v10068 = vpop.f32.mrf.mxu0
      %v10069 = vpop.f32.mrf.mxu0
      %v10070 = vadd.f32 %v10005, %v10069
      %v10071 = vpop.f32.mrf.mxu0
      %10072 = vmatprep.mubr.bf16.mxu0 0
      %10073 = vmatmul.mubr.bf16.gmra.mxu0 %v9945
      %v10074 = vpop.f32.mrf.mxu0
      %v10075 = vadd.f32 %v10010, %v10074
      %v10076 = vpop.f32.mrf.mxu0
      %v10077 = vpop.f32.mrf.mxu0
      %v10078 = vadd.f32 %v10013, %v10077
      %v10079 = vpop.f32.mrf.mxu0
      %10080 = vdwg.mxu0
      %10081 = vst [vmem:[%s278] sm:$0xff] %v10051
      %10082 = vst [vmem:[%s278 + $0x8] sm:$0xff] %v10054
      %10083 = vst [vmem:[%s278 + $0x10] sm:$0xff] %v10059
      %10084 = vst [vmem:[%s278 + $0x18] sm:$0xff] %v10062
      %10085 = vst [vmem:[%s278 + $0x20] sm:$0xff] %v10067
      %10086 = vst [vmem:[%s278 + $0x28] sm:$0xff] %v10070
      %10087 = vst [vmem:[%s278 + $0x30] sm:$0xff] %v10075
      %10088 = vst [vmem:[%s278 + $0x38] sm:$0xff] %v10078
      %p10089 = scmp.lt.s32.totalorder %s18, 1
      %s10090 = scalar_select %p10089, %s18, 1
      %s10091 = smul.addr %s10090, 8
      %s10092 = smul.addr %s10091, 8
      %s10093 = scalar_lea.vmem %s7, %s10092
      // Predicated region
      $region49: #{unet_down.1} parent=47 // pred_check
        %p10094 = pneg %p188
      $region50: #{unet_down.1} parent=47 // pred_check_branch
        %10096 = sbr.rel (%p10094) target = $region52
      $region51: #{unet_down.1} parent=47 // pred_region
        _
      $region52: #{unet_down.1} parent=47 // pred_fallthru
        _
    $region48: #{unet_down.1} parent=5 // pred_fallthru
      _
    %p10097 = scmp.le.s32.totalorder 2, %s13
    // Predicated region
    $region53: #{unet_down.1} parent=5 // pred_check
      %p10098 = pneg %p10097
    $region54: #{unet_down.1} parent=5 // pred_check_branch
      %10100 = sbr.rel (%p10098) target = $region56
    $region55: #{unet_down.1} parent=5 // pred_region
      %s10101 = ssub.s32 %s13, 2
      // Predicated region
      $region57: #{unet_down.1} parent=55 // pred_check
        %p10102 = pneg %p194
      $region58: #{unet_down.1} parent=55 // pred_check_branch
        %10104 = sbr.rel (%p10102) target = $region60
      $region59: #{unet_down.1} parent=55 // pred_region
        %p10105 = scmp.lt.s32.totalorder %s19, 1
        %s10106 = scalar_select %p10105, %s19, 1
        %s10107 = smul.addr %s10106, 8
        %s10108 = smul.addr %s10107, 8
        %s10109 = scalar_lea.vmem %s7, %s10108
      $region60: #{unet_down.1} parent=55 // pred_fallthru
        _
    $region56: #{unet_down.1} parent=5 // pred_fallthru
      _
  $region6: #{unet_down.1} parent=0 // loop_footer
    %s17 = sadd.s32 1, %s13
  $region7: #{unet_down.1} parent=0 // loop_footer_branch
    %12 = sbr.rel target = $region3
  $region8: #{unet_down.1} parent=0 // loop_exit
    _

</llo_original>
